<compile_context>
chip_gen: v6e
topology: v6e:2x2x1
jax: 0.10.0
libtpu: 0.0.40
codegen_flags: <defaults>
</compile_context>

<pallas_src>
import functools

import jax
import jax.numpy as jnp
from jax.experimental import pallas as pl
from jax.experimental.pallas import tpu as pltpu

EPS = 1e-5
C = 128  # every internal activation is kept at 128 (lane-dense) channels

_VMEM = pl.BlockSpec(memory_space=pltpu.MemorySpace.VMEM)


# ----------------------------------------------------------------------------
# In-kernel helpers (operate on VMEM values only)
# ----------------------------------------------------------------------------
def _upsample2x(x):
    """Nearest-neighbour x2 upsample of an NHWC value via broadcast+reshape."""
    B, H, W, Ch = x.shape
    # duplicate columns (sublane dim) first, while the array is still small
    x = jnp.broadcast_to(x[:, :, :, None, :], (B, H, W, 2, Ch)).reshape(B, H, 2 * W, Ch)
    # duplicate rows (pure outer-dim broadcast + merge)
    x = jnp.broadcast_to(x[:, :, None, :, :], (B, H, 2, 2 * W, Ch)).reshape(B, 2 * H, 2 * W, Ch)
    return x


def _conv3x3(x, w_ref, b_ref):
    """3x3 stride-1 pad-1 conv as 3 accumulating matmuls (one per column shift).

    x:     (B, H, W, Cin) f32 NHWC activation.
    w_ref: (3, 3*Cin, Cout) bf16 ref; w_ref[kx] rows are ky-major (ky, cin).
    b_ref: (1, Cout) f32 ref.
    Returns (B, H, W, Cout) f32.
    """
    B, H, W, Cin = x.shape
    Cout = w_ref.shape[2]
    M = B * H * W
    Hp = H + 2
    Np = B * Hp * W

    # pad H by one zero row on each side (leading-dim concat: cheap, aligned)
    zrow = jnp.zeros((B, 1, W, Cin), dtype=x.dtype)
    xp = jnp.concatenate([zrow, x, zrow], axis=1)              # (B, Hp, W, Cin)
    xpf = xp.reshape(Np, Cin)                                  # flat, rows = (b, h, w)

    # column-index mask helper (sublane iota, full lane width)
    col = jax.lax.broadcasted_iota(jnp.int32, (W, Cin), 0)

    acc = jnp.zeros((M, Cout), jnp.float32)
    for dxi, dx in enumerate((-1, 0, 1)):
        if dx == 0:
            r4 = xp
        else:
            # column shift by dx: sublane roll of the flat array.  The wrapped
            # entries land only on edge columns, which are masked to zero.
            rf = pltpu.roll(xpf, shift=(-dx) % Np, axis=0)
            r4 = rf.reshape(B, Hp, W, Cin)
            keep = (col > 0) if dx == -1 else (col < (W - 1))
            r4 = jnp.where(keep, r4, 0.0)
        # the three row shifts are leading-dim slices of the H-padded copy;
        # concatenate along channels -> K = 3*Cin per matmul (bf16 operand)
        taps = jnp.concatenate(
            [r4[:, 0:H].astype(jnp.bfloat16),        # dy = -1  (ky = 0)
             r4[:, 1:H + 1].astype(jnp.bfloat16),    # dy =  0  (ky = 1)
             r4[:, 2:H + 2].astype(jnp.bfloat16)],   # dy = +1  (ky = 2)
            axis=-1)                                            # (B, H, W, 3*Cin)
        flat = taps.reshape(M, 3 * Cin)
        acc = acc + jax.lax.dot_general(
            flat, w_ref[dxi],
            dimension_numbers=(((1,), (0,)), ((), ())),
            preferred_element_type=jnp.float32)
    return acc.reshape(B, H, W, Cout) + b_ref[...]


def _cond_bn(x, gamma, beta, slope=None):
    """CategoricalConditionalBatchNorm2d (train mode, batch stats, biased var)
    with per-sample gamma/beta; optional fused LeakyReLU epilogue.  All f32."""
    n = x.shape[0] * x.shape[1] * x.shape[2]
    s1 = jnp.sum(x, axis=(0, 1, 2), keepdims=True)
    s2 = jnp.sum(x * x, axis=(0, 1, 2), keepdims=True)
    mean = s1 * (1.0 / n)
    var = jnp.maximum(s2 * (1.0 / n) - mean * mean, 0.0)       # clamp one-pass var
    xhat = (x - mean) * jax.lax.rsqrt(var + EPS)
    y = gamma[:, None, None, :] * xhat + beta[:, None, None, :]
    if slope is not None:
        y = jnp.where(y >= 0.0, y, slope * y)
    return y


def _tanh_bn(x):
    """Tanh followed by BatchNorm2d(affine=False), training mode.  All f32."""
    t = jnp.tanh(x)
    n = t.shape[0] * t.shape[1] * t.shape[2]
    s1 = jnp.sum(t, axis=(0, 1, 2), keepdims=True)
    s2 = jnp.sum(t * t, axis=(0, 1, 2), keepdims=True)
    mean = s1 * (1.0 / n)
    var = jnp.maximum(s2 * (1.0 / n) - mean * mean, 0.0)
    return (t - mean) * jax.lax.rsqrt(var + EPS)


# ----------------------------------------------------------------------------
# The fused kernel
# ----------------------------------------------------------------------------
def gen_kernel(z_ref, w1_ref, b1_ref, g0_ref, bt0_ref,
               wc1_ref, bc1_ref, g1_ref, bt1_ref,
               wc2_ref, bc2_ref, g2_ref, bt2_ref,
               wc3_ref, bc3_ref, out_ref, *, init_size):
    B = z_ref.shape[0]
    s = init_size

    # ---- l1: bf16 matmul, weights pre-permuted so lanes are NHWC order ----
    lin = jax.lax.dot_general(
        z_ref[...].astype(jnp.bfloat16), w1_ref[...],
        dimension_numbers=(((1,), (0,)), ((), ())),
        preferred_element_type=jnp.float32) + b1_ref[...]        # (B, s*s*128) f32
    x = lin.reshape(B, s, s, C)                                  # single NHWC reshape

    # ---- CondBN0 ----
    x = _cond_bn(x, g0_ref[...], bt0_ref[...])

    # ---- up x2 -> conv1 -> CondBN1 + LeakyReLU(0.2) ----
    x = _conv3x3(_upsample2x(x), wc1_ref, bc1_ref)
    x = _cond_bn(x, g1_ref[...], bt1_ref[...], slope=0.2)

    # ---- up x2 -> conv2 -> CondBN2 + LeakyReLU(0.2) ----
    x = _conv3x3(_upsample2x(x), wc2_ref, bc2_ref)
    x = _cond_bn(x, g2_ref[...], bt2_ref[...], slope=0.2)

    # ---- conv3 -> tanh -> BatchNorm2d(affine=False) ----
    x = _conv3x3(x, wc3_ref, bc3_ref)
    out_ref[...] = _tanh_bn(x)


# ----------------------------------------------------------------------------
# Parameter construction (module-layout params -> kernel-ready layout)
# ----------------------------------------------------------------------------
def init_params(key, input_dim, img_size, channels, num_classes=1000):
    s = img_size // 4
    assert channels <= C
    keys = jax.random.split(key, 16)

    def nrm(k, shape, scale):
        return scale * jax.random.normal(k, shape, dtype=jnp.float32)

    # --- "module layout" parameters (deterministic random init) ---
    l1_w = nrm(keys[0], (input_dim, C * s * s), 0.05)   # == torch Linear weight.T
    l1_b = nrm(keys[1], (C * s * s,), 0.05)
    bn0_g = 1.0 + nrm(keys[2], (num_classes, C), 0.02)  # embedding tables
    bn0_b = nrm(keys[3], (num_classes, C), 0.02)
    c1_w = nrm(keys[4], (3, 3, C, C), 0.03)             # HWIO
    c1_b = nrm(keys[5], (C,), 0.02)
    bn1_g = 1.0 + nrm(keys[6], (num_classes, C), 0.02)
    bn1_b = nrm(keys[7], (num_classes, C), 0.02)
    c2_w = nrm(keys[8], (3, 3, C, 64), 0.03)
    c2_b = nrm(keys[9], (64,), 0.02)
    bn2_g = 1.0 + nrm(keys[10], (num_classes, 64), 0.02)
    bn2_b = nrm(keys[11], (num_classes, 64), 0.02)
    c3_w = nrm(keys[12], (3, 3, 64, channels), 0.05)
    c3_b = nrm(keys[13], (channels,), 0.02)

    def pack_conv(w_hwio):
        """(3,3,Cin,Cout) HWIO -> (3[kx], 3*Cin, Cout) bf16, rows ky-major."""
        cin, cout = w_hwio.shape[2], w_hwio.shape[3]
        return (jnp.transpose(w_hwio, (1, 0, 2, 3))
                .reshape(3, 3 * cin, cout).astype(jnp.bfloat16))

    p = {}
    # l1: permute output features from torch's .view order (c, h, w) to (h, w, c)
    p["l1_w"] = (l1_w.reshape(input_dim, C, s, s)
                 .transpose(0, 2, 3, 1).reshape(input_dim, s * s * C)
                 .astype(jnp.bfloat16))
    p["l1_b"] = l1_b.reshape(C, s, s).transpose(1, 2, 0).reshape(1, s * s * C)

    p["bn0_gamma"], p["bn0_beta"] = bn0_g, bn0_b
    p["bn1_gamma"], p["bn1_beta"] = bn1_g, bn1_b
    # pad BN2 tables to 128 channels (beta pad = 0 keeps padded channels at zero)
    p["bn2_gamma"] = jnp.pad(bn2_g, ((0, 0), (0, C - 64)), constant_values=1.0)
    p["bn2_beta"] = jnp.pad(bn2_b, ((0, 0), (0, C - 64)))

    # conv1: 128 -> 128
    p["conv1_w"] = pack_conv(c1_w)
    p["conv1_b"] = c1_b.reshape(1, C)
    # conv2: pad Cout 64 -> 128 (zeros) so every activation stays lane-dense
    p["conv2_w"] = pack_conv(jnp.pad(c2_w, ((0, 0), (0, 0), (0, 0), (0, C - 64))))
    p["conv2_b"] = jnp.pad(c2_b, ((0, C - 64),)).reshape(1, C)
    # conv3: pad Cin 64 -> 128 (zero rows) and Cout channels -> 128 (zeros)
    p["conv3_w"] = pack_conv(
        jnp.pad(c3_w, ((0, 0), (0, 0), (0, C - 64), (0, C - channels))))
    p["conv3_b"] = jnp.pad(c3_b, ((0, C - channels),)).reshape(1, C)
    return p


# ----------------------------------------------------------------------------
# Forward
# ----------------------------------------------------------------------------
@functools.partial(jax.jit, static_argnames=("init_size", "channels"))
def generator_forward(z, labels, params, init_size, channels):
    B = z.shape[0]
    img_size = init_size * 4

    # conditional-BN embedding lookups (tiny gathers, XLA glue)
    g0 = params["bn0_gamma"][labels]
    b0 = params["bn0_beta"][labels]
    g1 = params["bn1_gamma"][labels]
    b1 = params["bn1_beta"][labels]
    g2 = params["bn2_gamma"][labels]
    b2 = params["bn2_beta"][labels]

    # TODO(synk): optional v7x dual-TensorCore split not applied -- it would
    # require exchanging partial BN sums across cores to keep whole-batch stats.
    out = pl.pallas_call(
        functools.partial(gen_kernel, init_size=init_size),
        out_shape=jax.ShapeDtypeStruct((B, img_size, img_size, C), jnp.float32),
        in_specs=[_VMEM] * 15,
        out_specs=_VMEM,
    )(z, params["l1_w"], params["l1_b"], g0, b0,
      params["conv1_w"], params["conv1_b"], g1, b1,
      params["conv2_w"], params["conv2_b"], g2, b2,
      params["conv3_w"], params["conv3_b"])

    img = out[:, :, :, :channels]             # drop lane padding (real channels)
    return jnp.transpose(img, (0, 3, 1, 2))   # NHWC -> NCHW like the torch module


if __name__ == "__main__":
    # Shapes consistent with the module: img_size=16 -> init_size=4,
    # channels=3, input_dim=32, batch=2, 1000 classes.
    input_dim, img_size, channels, batch = 32, 16, 3, 2
    num_classes = 1000

    key = jax.random.PRNGKey(0)
    kz, kp = jax.random.split(key)
    z = jax.random.normal(kz, (batch, input_dim), dtype=jnp.float32)
    labels = jnp.array([3, 917], dtype=jnp.int32)

    params = init_params(kp, input_dim, img_size, channels, num_classes)

    img = generator_forward(z, labels, params, init_size=img_size // 4,
                            channels=channels)
    img = jax.block_until_ready(img)

    assert img.shape == (batch, channels, img_size, img_size), img.shape
    assert bool(jnp.all(jnp.isfinite(img)))
    print("KERNEL_OK")
</pallas_src>

<mosaic_0001>
module attributes {stable_mosaic.version = 11 : i64} {
  func.func @gen_kernel(%arg0: memref<2x32xf32, #tpu.memory_space<vmem>>, %arg1: memref<32x2048xbf16, #tpu.memory_space<vmem>>, %arg2: memref<1x2048xf32, #tpu.memory_space<vmem>>, %arg3: memref<2x128xf32, #tpu.memory_space<vmem>>, %arg4: memref<2x128xf32, #tpu.memory_space<vmem>>, %arg5: memref<3x384x128xbf16, #tpu.memory_space<vmem>>, %arg6: memref<1x128xf32, #tpu.memory_space<vmem>>, %arg7: memref<2x128xf32, #tpu.memory_space<vmem>>, %arg8: memref<2x128xf32, #tpu.memory_space<vmem>>, %arg9: memref<3x384x128xbf16, #tpu.memory_space<vmem>>, %arg10: memref<1x128xf32, #tpu.memory_space<vmem>>, %arg11: memref<2x128xf32, #tpu.memory_space<vmem>>, %arg12: memref<2x128xf32, #tpu.memory_space<vmem>>, %arg13: memref<3x384x128xbf16, #tpu.memory_space<vmem>>, %arg14: memref<1x128xf32, #tpu.memory_space<vmem>>, %arg15: memref<2x16x16x128xf32, #tpu.memory_space<vmem>>) attributes {dimension_semantics = [], scalar_prefetch = 0 : i64, scratch_operands = 0 : i64, tpu.core_type = #tpu.core_type<tc>} {
    %c0 = arith.constant 0 : index
    %c0_0 = arith.constant 0 : index
    %0 = vector.load %arg0[%c0, %c0_0] : memref<2x32xf32, #tpu.memory_space<vmem>>, vector<2x32xf32>
    %1 = arith.truncf %0 : vector<2x32xf32> to vector<2x32xbf16>
    %c0_1 = arith.constant 0 : index
    %c0_2 = arith.constant 0 : index
    %2 = vector.load %arg1[%c0_1, %c0_2] : memref<32x2048xbf16, #tpu.memory_space<vmem>>, vector<32x2048xbf16>
    %cst = arith.constant dense<0.000000e+00> : vector<2x2048xf32>
    %3 = tpu.matmul %1, %2, %cst {dimension_numbers = #tpu.dot_dimension_numbers<[1], [0], [0], [1], [0, 0, 1, 1], [], []>} : vector<2x32xbf16>, vector<32x2048xbf16>, vector<2x2048xf32> -> vector<2x2048xf32>
    %c0_3 = arith.constant 0 : index
    %c0_4 = arith.constant 0 : index
    %4 = vector.load %arg2[%c0_3, %c0_4] : memref<1x2048xf32, #tpu.memory_space<vmem>>, vector<1x2048xf32>
    %5 = vector.broadcast %4 : vector<1x2048xf32> to vector<2x2048xf32>
    %6 = arith.addf %3, %5 : vector<2x2048xf32>
    %7 = vector.shape_cast %6 : vector<2x2048xf32> to vector<2x4x4x128xf32>
    %c0_5 = arith.constant 0 : index
    %c0_6 = arith.constant 0 : index
    %8 = vector.load %arg3[%c0_5, %c0_6] : memref<2x128xf32, #tpu.memory_space<vmem>>, vector<2x128xf32>
    %c0_7 = arith.constant 0 : index
    %c0_8 = arith.constant 0 : index
    %9 = vector.load %arg4[%c0_7, %c0_8] : memref<2x128xf32, #tpu.memory_space<vmem>>, vector<2x128xf32>
    %cst_9 = arith.constant dense<0.000000e+00> : vector<128xf32>
    %10 = vector.multi_reduction <add>, %7, %cst_9 [0, 1, 2] : vector<2x4x4x128xf32> to vector<128xf32>
    %11 = vector.shape_cast %10 : vector<128xf32> to vector<1x1x1x128xf32>
    %12 = arith.mulf %7, %7 : vector<2x4x4x128xf32>
    %cst_10 = arith.constant dense<0.000000e+00> : vector<128xf32>
    %13 = vector.multi_reduction <add>, %12, %cst_10 [0, 1, 2] : vector<2x4x4x128xf32> to vector<128xf32>
    %14 = vector.shape_cast %13 : vector<128xf32> to vector<1x1x1x128xf32>
    %cst_11 = arith.constant 3.125000e-02 : f32
    %15 = vector.broadcast %cst_11 : f32 to vector<1x1x1x128xf32>
    %16 = arith.mulf %11, %15 : vector<1x1x1x128xf32>
    %cst_12 = arith.constant 3.125000e-02 : f32
    %17 = vector.broadcast %cst_12 : f32 to vector<1x1x1x128xf32>
    %18 = arith.mulf %14, %17 : vector<1x1x1x128xf32>
    %19 = arith.mulf %16, %16 : vector<1x1x1x128xf32>
    %20 = arith.subf %18, %19 : vector<1x1x1x128xf32>
    %cst_13 = arith.constant 0.000000e+00 : f32
    %21 = vector.broadcast %cst_13 : f32 to vector<1x1x1x128xf32>
    %22 = arith.maximumf %20, %21 : vector<1x1x1x128xf32>
    %23 = vector.broadcast %16 : vector<1x1x1x128xf32> to vector<2x4x4x128xf32>
    %24 = arith.subf %7, %23 : vector<2x4x4x128xf32>
    %cst_14 = arith.constant 9.99999974E-6 : f32
    %25 = vector.broadcast %cst_14 : f32 to vector<1x1x1x128xf32>
    %26 = arith.addf %22, %25 : vector<1x1x1x128xf32>
    %27 = math.rsqrt %26 : vector<1x1x1x128xf32>
    %28 = vector.broadcast %27 : vector<1x1x1x128xf32> to vector<2x4x4x128xf32>
    %29 = arith.mulf %24, %28 : vector<2x4x4x128xf32>
    %30 = vector.shape_cast %8 : vector<2x128xf32> to vector<2x1x1x128xf32>
    %31 = vector.broadcast %30 : vector<2x1x1x128xf32> to vector<2x4x4x128xf32>
    %32 = arith.mulf %31, %29 : vector<2x4x4x128xf32>
    %33 = vector.shape_cast %9 : vector<2x128xf32> to vector<2x1x1x128xf32>
    %34 = vector.broadcast %33 : vector<2x1x1x128xf32> to vector<2x4x4x128xf32>
    %35 = arith.addf %32, %34 : vector<2x4x4x128xf32>
    %36 = vector.shape_cast %35 : vector<2x4x4x128xf32> to vector<2x4x4x1x128xf32>
    %37 = vector.shape_cast %36 : vector<2x4x4x1x128xf32> to vector<2x4x4x1x128xf32>
    %38 = vector.broadcast %37 : vector<2x4x4x1x128xf32> to vector<2x4x4x2x128xf32>
    %39 = vector.shape_cast %38 : vector<2x4x4x2x128xf32> to vector<2x4x8x128xf32>
    %40 = vector.shape_cast %39 : vector<2x4x8x128xf32> to vector<2x4x1x8x128xf32>
    %41 = vector.shape_cast %40 : vector<2x4x1x8x128xf32> to vector<2x4x1x8x128xf32>
    %42 = vector.broadcast %41 : vector<2x4x1x8x128xf32> to vector<2x4x2x8x128xf32>
    %43 = vector.shape_cast %42 : vector<2x4x2x8x128xf32> to vector<2x8x8x128xf32>
    %cst_15 = arith.constant 0.000000e+00 : f32
    %44 = vector.broadcast %cst_15 : f32 to vector<2x1x8x128xf32>
    %45 = tpu.concatenate %44, %43, %44 in 1 : vector<2x1x8x128xf32>, vector<2x8x8x128xf32>, vector<2x1x8x128xf32> -> vector<2x10x8x128xf32>
    %46 = vector.shape_cast %45 : vector<2x10x8x128xf32> to vector<160x128xf32>
    %47 = tpu.iota {dimensions = array<i32: 0>} : vector<8x128xi32>
    %cst_16 = arith.constant 0.000000e+00 : f32
    %48 = vector.broadcast %cst_16 : f32 to vector<128x128xf32>
    %c1_i32 = arith.constant 1 : i32
    %49 = tpu.dynamic_rotate %46 by %c1_i32 dim 0 : vector<160x128xf32>, i32 -> vector<160x128xf32>
    %50 = vector.shape_cast %49 : vector<160x128xf32> to vector<2x10x8x128xf32>
    %c0_i32 = arith.constant 0 : i32
    %51 = vector.broadcast %c0_i32 : i32 to vector<8x128xi32>
    %52 = arith.cmpi sgt, %47, %51 : vector<8x128xi32>
    %cst_17 = arith.constant 0.000000e+00 : f32
    %53 = vector.shape_cast %52 : vector<8x128xi1> to vector<1x1x8x128xi1>
    %54 = vector.broadcast %53 : vector<1x1x8x128xi1> to vector<2x10x8x128xi1>
    %55 = vector.broadcast %cst_17 : f32 to vector<2x10x8x128xf32>
    %56 = arith.select %54, %50, %55 : vector<2x10x8x128xi1>, vector<2x10x8x128xf32>
    %57 = vector.extract_strided_slice %56 {offsets = [0, 0, 0, 0], sizes = [2, 8, 8, 128], strides = [1, 1, 1, 1]} : vector<2x10x8x128xf32> to vector<2x8x8x128xf32>
    %58 = arith.truncf %57 : vector<2x8x8x128xf32> to vector<2x8x8x128xbf16>
    %59 = vector.extract_strided_slice %56 {offsets = [0, 1, 0, 0], sizes = [2, 8, 8, 128], strides = [1, 1, 1, 1]} : vector<2x10x8x128xf32> to vector<2x8x8x128xf32>
    %60 = arith.truncf %59 : vector<2x8x8x128xf32> to vector<2x8x8x128xbf16>
    %61 = vector.extract_strided_slice %56 {offsets = [0, 2, 0, 0], sizes = [2, 8, 8, 128], strides = [1, 1, 1, 1]} : vector<2x10x8x128xf32> to vector<2x8x8x128xf32>
    %62 = arith.truncf %61 : vector<2x8x8x128xf32> to vector<2x8x8x128xbf16>
    %63 = tpu.concatenate %58, %60, %62 in 3 : vector<2x8x8x128xbf16>, vector<2x8x8x128xbf16>, vector<2x8x8x128xbf16> -> vector<2x8x8x384xbf16>
    %64 = vector.shape_cast %63 : vector<2x8x8x384xbf16> to vector<128x384xbf16>
    %c0_18 = arith.constant 0 : index
    %c0_19 = arith.constant 0 : index
    %c0_20 = arith.constant 0 : index
    %65 = vector.load %arg5[%c0_18, %c0_19, %c0_20] : memref<3x384x128xbf16, #tpu.memory_space<vmem>>, vector<1x384x128xbf16>
    %66 = vector.shape_cast %65 : vector<1x384x128xbf16> to vector<384x128xbf16>
    %cst_21 = arith.constant dense<0.000000e+00> : vector<128x128xf32>
    %67 = tpu.matmul %64, %66, %cst_21 {dimension_numbers = #tpu.dot_dimension_numbers<[1], [0], [0], [1], [0, 0, 1, 1], [], []>} : vector<128x384xbf16>, vector<384x128xbf16>, vector<128x128xf32> -> vector<128x128xf32>
    %68 = arith.addf %48, %67 : vector<128x128xf32>
    %69 = vector.extract_strided_slice %45 {offsets = [0, 0, 0, 0], sizes = [2, 8, 8, 128], strides = [1, 1, 1, 1]} : vector<2x10x8x128xf32> to vector<2x8x8x128xf32>
    %70 = arith.truncf %69 : vector<2x8x8x128xf32> to vector<2x8x8x128xbf16>
    %71 = vector.extract_strided_slice %45 {offsets = [0, 1, 0, 0], sizes = [2, 8, 8, 128], strides = [1, 1, 1, 1]} : vector<2x10x8x128xf32> to vector<2x8x8x128xf32>
    %72 = arith.truncf %71 : vector<2x8x8x128xf32> to vector<2x8x8x128xbf16>
    %73 = vector.extract_strided_slice %45 {offsets = [0, 2, 0, 0], sizes = [2, 8, 8, 128], strides = [1, 1, 1, 1]} : vector<2x10x8x128xf32> to vector<2x8x8x128xf32>
    %74 = arith.truncf %73 : vector<2x8x8x128xf32> to vector<2x8x8x128xbf16>
    %75 = tpu.concatenate %70, %72, %74 in 3 : vector<2x8x8x128xbf16>, vector<2x8x8x128xbf16>, vector<2x8x8x128xbf16> -> vector<2x8x8x384xbf16>
    %76 = vector.shape_cast %75 : vector<2x8x8x384xbf16> to vector<128x384xbf16>
    %c1 = arith.constant 1 : index
    %c0_22 = arith.constant 0 : index
    %c0_23 = arith.constant 0 : index
    %77 = vector.load %arg5[%c1, %c0_22, %c0_23] : memref<3x384x128xbf16, #tpu.memory_space<vmem>>, vector<1x384x128xbf16>
    %78 = vector.shape_cast %77 : vector<1x384x128xbf16> to vector<384x128xbf16>
    %cst_24 = arith.constant dense<0.000000e+00> : vector<128x128xf32>
    %79 = tpu.matmul %76, %78, %cst_24 {dimension_numbers = #tpu.dot_dimension_numbers<[1], [0], [0], [1], [0, 0, 1, 1], [], []>} : vector<128x384xbf16>, vector<384x128xbf16>, vector<128x128xf32> -> vector<128x128xf32>
    %80 = arith.addf %68, %79 : vector<128x128xf32>
    %c159_i32 = arith.constant 159 : i32
    %81 = tpu.dynamic_rotate %46 by %c159_i32 dim 0 : vector<160x128xf32>, i32 -> vector<160x128xf32>
    %82 = vector.shape_cast %81 : vector<160x128xf32> to vector<2x10x8x128xf32>
    %c7_i32 = arith.constant 7 : i32
    %83 = vector.broadcast %c7_i32 : i32 to vector<8x128xi32>
    %84 = arith.cmpi slt, %47, %83 : vector<8x128xi32>
    %cst_25 = arith.constant 0.000000e+00 : f32
    %85 = vector.shape_cast %84 : vector<8x128xi1> to vector<1x1x8x128xi1>
    %86 = vector.broadcast %85 : vector<1x1x8x128xi1> to vector<2x10x8x128xi1>
    %87 = vector.broadcast %cst_25 : f32 to vector<2x10x8x128xf32>
    %88 = arith.select %86, %82, %87 : vector<2x10x8x128xi1>, vector<2x10x8x128xf32>
    %89 = vector.extract_strided_slice %88 {offsets = [0, 0, 0, 0], sizes = [2, 8, 8, 128], strides = [1, 1, 1, 1]} : vector<2x10x8x128xf32> to vector<2x8x8x128xf32>
    %90 = arith.truncf %89 : vector<2x8x8x128xf32> to vector<2x8x8x128xbf16>
    %91 = vector.extract_strided_slice %88 {offsets = [0, 1, 0, 0], sizes = [2, 8, 8, 128], strides = [1, 1, 1, 1]} : vector<2x10x8x128xf32> to vector<2x8x8x128xf32>
    %92 = arith.truncf %91 : vector<2x8x8x128xf32> to vector<2x8x8x128xbf16>
    %93 = vector.extract_strided_slice %88 {offsets = [0, 2, 0, 0], sizes = [2, 8, 8, 128], strides = [1, 1, 1, 1]} : vector<2x10x8x128xf32> to vector<2x8x8x128xf32>
    %94 = arith.truncf %93 : vector<2x8x8x128xf32> to vector<2x8x8x128xbf16>
    %95 = tpu.concatenate %90, %92, %94 in 3 : vector<2x8x8x128xbf16>, vector<2x8x8x128xbf16>, vector<2x8x8x128xbf16> -> vector<2x8x8x384xbf16>
    %96 = vector.shape_cast %95 : vector<2x8x8x384xbf16> to vector<128x384xbf16>
    %c2 = arith.constant 2 : index
    %c0_26 = arith.constant 0 : index
    %c0_27 = arith.constant 0 : index
    %97 = vector.load %arg5[%c2, %c0_26, %c0_27] : memref<3x384x128xbf16, #tpu.memory_space<vmem>>, vector<1x384x128xbf16>
    %98 = vector.shape_cast %97 : vector<1x384x128xbf16> to vector<384x128xbf16>
    %cst_28 = arith.constant dense<0.000000e+00> : vector<128x128xf32>
    %99 = tpu.matmul %96, %98, %cst_28 {dimension_numbers = #tpu.dot_dimension_numbers<[1], [0], [0], [1], [0, 0, 1, 1], [], []>} : vector<128x384xbf16>, vector<384x128xbf16>, vector<128x128xf32> -> vector<128x128xf32>
    %100 = arith.addf %80, %99 : vector<128x128xf32>
    %101 = vector.shape_cast %100 : vector<128x128xf32> to vector<2x8x8x128xf32>
    %c0_29 = arith.constant 0 : index
    %c0_30 = arith.constant 0 : index
    %102 = vector.load %arg6[%c0_29, %c0_30] : memref<1x128xf32, #tpu.memory_space<vmem>>, vector<1x128xf32>
    %103 = vector.shape_cast %102 : vector<1x128xf32> to vector<1x1x1x128xf32>
    %104 = vector.broadcast %103 : vector<1x1x1x128xf32> to vector<2x8x8x128xf32>
    %105 = arith.addf %101, %104 : vector<2x8x8x128xf32>
    %c0_31 = arith.constant 0 : index
    %c0_32 = arith.constant 0 : index
    %106 = vector.load %arg7[%c0_31, %c0_32] : memref<2x128xf32, #tpu.memory_space<vmem>>, vector<2x128xf32>
    %c0_33 = arith.constant 0 : index
    %c0_34 = arith.constant 0 : index
    %107 = vector.load %arg8[%c0_33, %c0_34] : memref<2x128xf32, #tpu.memory_space<vmem>>, vector<2x128xf32>
    %cst_35 = arith.constant dense<0.000000e+00> : vector<128xf32>
    %108 = vector.multi_reduction <add>, %105, %cst_35 [0, 1, 2] : vector<2x8x8x128xf32> to vector<128xf32>
    %109 = vector.shape_cast %108 : vector<128xf32> to vector<1x1x1x128xf32>
    %110 = arith.mulf %105, %105 : vector<2x8x8x128xf32>
    %cst_36 = arith.constant dense<0.000000e+00> : vector<128xf32>
    %111 = vector.multi_reduction <add>, %110, %cst_36 [0, 1, 2] : vector<2x8x8x128xf32> to vector<128xf32>
    %112 = vector.shape_cast %111 : vector<128xf32> to vector<1x1x1x128xf32>
    %cst_37 = arith.constant 7.812500e-03 : f32
    %113 = vector.broadcast %cst_37 : f32 to vector<1x1x1x128xf32>
    %114 = arith.mulf %109, %113 : vector<1x1x1x128xf32>
    %cst_38 = arith.constant 7.812500e-03 : f32
    %115 = vector.broadcast %cst_38 : f32 to vector<1x1x1x128xf32>
    %116 = arith.mulf %112, %115 : vector<1x1x1x128xf32>
    %117 = arith.mulf %114, %114 : vector<1x1x1x128xf32>
    %118 = arith.subf %116, %117 : vector<1x1x1x128xf32>
    %cst_39 = arith.constant 0.000000e+00 : f32
    %119 = vector.broadcast %cst_39 : f32 to vector<1x1x1x128xf32>
    %120 = arith.maximumf %118, %119 : vector<1x1x1x128xf32>
    %121 = vector.broadcast %114 : vector<1x1x1x128xf32> to vector<2x8x8x128xf32>
    %122 = arith.subf %105, %121 : vector<2x8x8x128xf32>
    %cst_40 = arith.constant 9.99999974E-6 : f32
    %123 = vector.broadcast %cst_40 : f32 to vector<1x1x1x128xf32>
    %124 = arith.addf %120, %123 : vector<1x1x1x128xf32>
    %125 = math.rsqrt %124 : vector<1x1x1x128xf32>
    %126 = vector.broadcast %125 : vector<1x1x1x128xf32> to vector<2x8x8x128xf32>
    %127 = arith.mulf %122, %126 : vector<2x8x8x128xf32>
    %128 = vector.shape_cast %106 : vector<2x128xf32> to vector<2x1x1x128xf32>
    %129 = vector.broadcast %128 : vector<2x1x1x128xf32> to vector<2x8x8x128xf32>
    %130 = arith.mulf %129, %127 : vector<2x8x8x128xf32>
    %131 = vector.shape_cast %107 : vector<2x128xf32> to vector<2x1x1x128xf32>
    %132 = vector.broadcast %131 : vector<2x1x1x128xf32> to vector<2x8x8x128xf32>
    %133 = arith.addf %130, %132 : vector<2x8x8x128xf32>
    %cst_41 = arith.constant 0.000000e+00 : f32
    %134 = vector.broadcast %cst_41 : f32 to vector<2x8x8x128xf32>
    %135 = arith.cmpf oge, %133, %134 : vector<2x8x8x128xf32>
    %cst_42 = arith.constant 2.000000e-01 : f32
    %136 = vector.broadcast %cst_42 : f32 to vector<2x8x8x128xf32>
    %137 = arith.mulf %136, %133 : vector<2x8x8x128xf32>
    %138 = arith.select %135, %133, %137 : vector<2x8x8x128xi1>, vector<2x8x8x128xf32>
    %139 = vector.shape_cast %138 : vector<2x8x8x128xf32> to vector<2x8x8x1x128xf32>
    %140 = vector.shape_cast %139 : vector<2x8x8x1x128xf32> to vector<2x8x8x1x128xf32>
    %141 = vector.broadcast %140 : vector<2x8x8x1x128xf32> to vector<2x8x8x2x128xf32>
    %142 = vector.shape_cast %141 : vector<2x8x8x2x128xf32> to vector<2x8x16x128xf32>
    %143 = vector.shape_cast %142 : vector<2x8x16x128xf32> to vector<2x8x1x16x128xf32>
    %144 = vector.shape_cast %143 : vector<2x8x1x16x128xf32> to vector<2x8x1x16x128xf32>
    %145 = vector.broadcast %144 : vector<2x8x1x16x128xf32> to vector<2x8x2x16x128xf32>
    %146 = vector.shape_cast %145 : vector<2x8x2x16x128xf32> to vector<2x16x16x128xf32>
    %cst_43 = arith.constant 0.000000e+00 : f32
    %147 = vector.broadcast %cst_43 : f32 to vector<2x1x16x128xf32>
    %148 = tpu.concatenate %147, %146, %147 in 1 : vector<2x1x16x128xf32>, vector<2x16x16x128xf32>, vector<2x1x16x128xf32> -> vector<2x18x16x128xf32>
    %149 = vector.shape_cast %148 : vector<2x18x16x128xf32> to vector<576x128xf32>
    %150 = tpu.iota {dimensions = array<i32: 0>} : vector<16x128xi32>
    %cst_44 = arith.constant 0.000000e+00 : f32
    %151 = vector.broadcast %cst_44 : f32 to vector<512x128xf32>
    %c1_i32_45 = arith.constant 1 : i32
    %152 = tpu.dynamic_rotate %149 by %c1_i32_45 dim 0 : vector<576x128xf32>, i32 -> vector<576x128xf32>
    %153 = vector.shape_cast %152 : vector<576x128xf32> to vector<2x18x16x128xf32>
    %c0_i32_46 = arith.constant 0 : i32
    %154 = vector.broadcast %c0_i32_46 : i32 to vector<16x128xi32>
    %155 = arith.cmpi sgt, %150, %154 : vector<16x128xi32>
    %cst_47 = arith.constant 0.000000e+00 : f32
    %156 = vector.shape_cast %155 : vector<16x128xi1> to vector<1x1x16x128xi1>
    %157 = vector.broadcast %156 : vector<1x1x16x128xi1> to vector<2x18x16x128xi1>
    %158 = vector.broadcast %cst_47 : f32 to vector<2x18x16x128xf32>
    %159 = arith.select %157, %153, %158 : vector<2x18x16x128xi1>, vector<2x18x16x128xf32>
    %160 = vector.extract_strided_slice %159 {offsets = [0, 0, 0, 0], sizes = [2, 16, 16, 128], strides = [1, 1, 1, 1]} : vector<2x18x16x128xf32> to vector<2x16x16x128xf32>
    %161 = arith.truncf %160 : vector<2x16x16x128xf32> to vector<2x16x16x128xbf16>
    %162 = vector.extract_strided_slice %159 {offsets = [0, 1, 0, 0], sizes = [2, 16, 16, 128], strides = [1, 1, 1, 1]} : vector<2x18x16x128xf32> to vector<2x16x16x128xf32>
    %163 = arith.truncf %162 : vector<2x16x16x128xf32> to vector<2x16x16x128xbf16>
    %164 = vector.extract_strided_slice %159 {offsets = [0, 2, 0, 0], sizes = [2, 16, 16, 128], strides = [1, 1, 1, 1]} : vector<2x18x16x128xf32> to vector<2x16x16x128xf32>
    %165 = arith.truncf %164 : vector<2x16x16x128xf32> to vector<2x16x16x128xbf16>
    %166 = tpu.concatenate %161, %163, %165 in 3 : vector<2x16x16x128xbf16>, vector<2x16x16x128xbf16>, vector<2x16x16x128xbf16> -> vector<2x16x16x384xbf16>
    %167 = vector.shape_cast %166 : vector<2x16x16x384xbf16> to vector<512x384xbf16>
    %c0_48 = arith.constant 0 : index
    %c0_49 = arith.constant 0 : index
    %c0_50 = arith.constant 0 : index
    %168 = vector.load %arg9[%c0_48, %c0_49, %c0_50] : memref<3x384x128xbf16, #tpu.memory_space<vmem>>, vector<1x384x128xbf16>
    %169 = vector.shape_cast %168 : vector<1x384x128xbf16> to vector<384x128xbf16>
    %cst_51 = arith.constant dense<0.000000e+00> : vector<512x128xf32>
    %170 = tpu.matmul %167, %169, %cst_51 {dimension_numbers = #tpu.dot_dimension_numbers<[1], [0], [0], [1], [0, 0, 1, 1], [], []>} : vector<512x384xbf16>, vector<384x128xbf16>, vector<512x128xf32> -> vector<512x128xf32>
    %171 = arith.addf %151, %170 : vector<512x128xf32>
    %172 = vector.extract_strided_slice %148 {offsets = [0, 0, 0, 0], sizes = [2, 16, 16, 128], strides = [1, 1, 1, 1]} : vector<2x18x16x128xf32> to vector<2x16x16x128xf32>
    %173 = arith.truncf %172 : vector<2x16x16x128xf32> to vector<2x16x16x128xbf16>
    %174 = vector.extract_strided_slice %148 {offsets = [0, 1, 0, 0], sizes = [2, 16, 16, 128], strides = [1, 1, 1, 1]} : vector<2x18x16x128xf32> to vector<2x16x16x128xf32>
    %175 = arith.truncf %174 : vector<2x16x16x128xf32> to vector<2x16x16x128xbf16>
    %176 = vector.extract_strided_slice %148 {offsets = [0, 2, 0, 0], sizes = [2, 16, 16, 128], strides = [1, 1, 1, 1]} : vector<2x18x16x128xf32> to vector<2x16x16x128xf32>
    %177 = arith.truncf %176 : vector<2x16x16x128xf32> to vector<2x16x16x128xbf16>
    %178 = tpu.concatenate %173, %175, %177 in 3 : vector<2x16x16x128xbf16>, vector<2x16x16x128xbf16>, vector<2x16x16x128xbf16> -> vector<2x16x16x384xbf16>
    %179 = vector.shape_cast %178 : vector<2x16x16x384xbf16> to vector<512x384xbf16>
    %c1_52 = arith.constant 1 : index
    %c0_53 = arith.constant 0 : index
    %c0_54 = arith.constant 0 : index
    %180 = vector.load %arg9[%c1_52, %c0_53, %c0_54] : memref<3x384x128xbf16, #tpu.memory_space<vmem>>, vector<1x384x128xbf16>
    %181 = vector.shape_cast %180 : vector<1x384x128xbf16> to vector<384x128xbf16>
    %cst_55 = arith.constant dense<0.000000e+00> : vector<512x128xf32>
    %182 = tpu.matmul %179, %181, %cst_55 {dimension_numbers = #tpu.dot_dimension_numbers<[1], [0], [0], [1], [0, 0, 1, 1], [], []>} : vector<512x384xbf16>, vector<384x128xbf16>, vector<512x128xf32> -> vector<512x128xf32>
    %183 = arith.addf %171, %182 : vector<512x128xf32>
    %c575_i32 = arith.constant 575 : i32
    %184 = tpu.dynamic_rotate %149 by %c575_i32 dim 0 : vector<576x128xf32>, i32 -> vector<576x128xf32>
    %185 = vector.shape_cast %184 : vector<576x128xf32> to vector<2x18x16x128xf32>
    %c15_i32 = arith.constant 15 : i32
    %186 = vector.broadcast %c15_i32 : i32 to vector<16x128xi32>
    %187 = arith.cmpi slt, %150, %186 : vector<16x128xi32>
    %cst_56 = arith.constant 0.000000e+00 : f32
    %188 = vector.shape_cast %187 : vector<16x128xi1> to vector<1x1x16x128xi1>
    %189 = vector.broadcast %188 : vector<1x1x16x128xi1> to vector<2x18x16x128xi1>
    %190 = vector.broadcast %cst_56 : f32 to vector<2x18x16x128xf32>
    %191 = arith.select %189, %185, %190 : vector<2x18x16x128xi1>, vector<2x18x16x128xf32>
    %192 = vector.extract_strided_slice %191 {offsets = [0, 0, 0, 0], sizes = [2, 16, 16, 128], strides = [1, 1, 1, 1]} : vector<2x18x16x128xf32> to vector<2x16x16x128xf32>
    %193 = arith.truncf %192 : vector<2x16x16x128xf32> to vector<2x16x16x128xbf16>
    %194 = vector.extract_strided_slice %191 {offsets = [0, 1, 0, 0], sizes = [2, 16, 16, 128], strides = [1, 1, 1, 1]} : vector<2x18x16x128xf32> to vector<2x16x16x128xf32>
    %195 = arith.truncf %194 : vector<2x16x16x128xf32> to vector<2x16x16x128xbf16>
    %196 = vector.extract_strided_slice %191 {offsets = [0, 2, 0, 0], sizes = [2, 16, 16, 128], strides = [1, 1, 1, 1]} : vector<2x18x16x128xf32> to vector<2x16x16x128xf32>
    %197 = arith.truncf %196 : vector<2x16x16x128xf32> to vector<2x16x16x128xbf16>
    %198 = tpu.concatenate %193, %195, %197 in 3 : vector<2x16x16x128xbf16>, vector<2x16x16x128xbf16>, vector<2x16x16x128xbf16> -> vector<2x16x16x384xbf16>
    %199 = vector.shape_cast %198 : vector<2x16x16x384xbf16> to vector<512x384xbf16>
    %c2_57 = arith.constant 2 : index
    %c0_58 = arith.constant 0 : index
    %c0_59 = arith.constant 0 : index
    %200 = vector.load %arg9[%c2_57, %c0_58, %c0_59] : memref<3x384x128xbf16, #tpu.memory_space<vmem>>, vector<1x384x128xbf16>
    %201 = vector.shape_cast %200 : vector<1x384x128xbf16> to vector<384x128xbf16>
    %cst_60 = arith.constant dense<0.000000e+00> : vector<512x128xf32>
    %202 = tpu.matmul %199, %201, %cst_60 {dimension_numbers = #tpu.dot_dimension_numbers<[1], [0], [0], [1], [0, 0, 1, 1], [], []>} : vector<512x384xbf16>, vector<384x128xbf16>, vector<512x128xf32> -> vector<512x128xf32>
    %203 = arith.addf %183, %202 : vector<512x128xf32>
    %204 = vector.shape_cast %203 : vector<512x128xf32> to vector<2x16x16x128xf32>
    %c0_61 = arith.constant 0 : index
    %c0_62 = arith.constant 0 : index
    %205 = vector.load %arg10[%c0_61, %c0_62] : memref<1x128xf32, #tpu.memory_space<vmem>>, vector<1x128xf32>
    %206 = vector.shape_cast %205 : vector<1x128xf32> to vector<1x1x1x128xf32>
    %207 = vector.broadcast %206 : vector<1x1x1x128xf32> to vector<2x16x16x128xf32>
    %208 = arith.addf %204, %207 : vector<2x16x16x128xf32>
    %c0_63 = arith.constant 0 : index
    %c0_64 = arith.constant 0 : index
    %209 = vector.load %arg11[%c0_63, %c0_64] : memref<2x128xf32, #tpu.memory_space<vmem>>, vector<2x128xf32>
    %c0_65 = arith.constant 0 : index
    %c0_66 = arith.constant 0 : index
    %210 = vector.load %arg12[%c0_65, %c0_66] : memref<2x128xf32, #tpu.memory_space<vmem>>, vector<2x128xf32>
    %cst_67 = arith.constant dense<0.000000e+00> : vector<128xf32>
    %211 = vector.multi_reduction <add>, %208, %cst_67 [0, 1, 2] : vector<2x16x16x128xf32> to vector<128xf32>
    %212 = vector.shape_cast %211 : vector<128xf32> to vector<1x1x1x128xf32>
    %213 = arith.mulf %208, %208 : vector<2x16x16x128xf32>
    %cst_68 = arith.constant dense<0.000000e+00> : vector<128xf32>
    %214 = vector.multi_reduction <add>, %213, %cst_68 [0, 1, 2] : vector<2x16x16x128xf32> to vector<128xf32>
    %215 = vector.shape_cast %214 : vector<128xf32> to vector<1x1x1x128xf32>
    %cst_69 = arith.constant 0.001953125 : f32
    %216 = vector.broadcast %cst_69 : f32 to vector<1x1x1x128xf32>
    %217 = arith.mulf %212, %216 : vector<1x1x1x128xf32>
    %cst_70 = arith.constant 0.001953125 : f32
    %218 = vector.broadcast %cst_70 : f32 to vector<1x1x1x128xf32>
    %219 = arith.mulf %215, %218 : vector<1x1x1x128xf32>
    %220 = arith.mulf %217, %217 : vector<1x1x1x128xf32>
    %221 = arith.subf %219, %220 : vector<1x1x1x128xf32>
    %cst_71 = arith.constant 0.000000e+00 : f32
    %222 = vector.broadcast %cst_71 : f32 to vector<1x1x1x128xf32>
    %223 = arith.maximumf %221, %222 : vector<1x1x1x128xf32>
    %224 = vector.broadcast %217 : vector<1x1x1x128xf32> to vector<2x16x16x128xf32>
    %225 = arith.subf %208, %224 : vector<2x16x16x128xf32>
    %cst_72 = arith.constant 9.99999974E-6 : f32
    %226 = vector.broadcast %cst_72 : f32 to vector<1x1x1x128xf32>
    %227 = arith.addf %223, %226 : vector<1x1x1x128xf32>
    %228 = math.rsqrt %227 : vector<1x1x1x128xf32>
    %229 = vector.broadcast %228 : vector<1x1x1x128xf32> to vector<2x16x16x128xf32>
    %230 = arith.mulf %225, %229 : vector<2x16x16x128xf32>
    %231 = vector.shape_cast %209 : vector<2x128xf32> to vector<2x1x1x128xf32>
    %232 = vector.broadcast %231 : vector<2x1x1x128xf32> to vector<2x16x16x128xf32>
    %233 = arith.mulf %232, %230 : vector<2x16x16x128xf32>
    %234 = vector.shape_cast %210 : vector<2x128xf32> to vector<2x1x1x128xf32>
    %235 = vector.broadcast %234 : vector<2x1x1x128xf32> to vector<2x16x16x128xf32>
    %236 = arith.addf %233, %235 : vector<2x16x16x128xf32>
    %cst_73 = arith.constant 0.000000e+00 : f32
    %237 = vector.broadcast %cst_73 : f32 to vector<2x16x16x128xf32>
    %238 = arith.cmpf oge, %236, %237 : vector<2x16x16x128xf32>
    %cst_74 = arith.constant 2.000000e-01 : f32
    %239 = vector.broadcast %cst_74 : f32 to vector<2x16x16x128xf32>
    %240 = arith.mulf %239, %236 : vector<2x16x16x128xf32>
    %241 = arith.select %238, %236, %240 : vector<2x16x16x128xi1>, vector<2x16x16x128xf32>
    %cst_75 = arith.constant 0.000000e+00 : f32
    %242 = vector.broadcast %cst_75 : f32 to vector<2x1x16x128xf32>
    %243 = tpu.concatenate %242, %241, %242 in 1 : vector<2x1x16x128xf32>, vector<2x16x16x128xf32>, vector<2x1x16x128xf32> -> vector<2x18x16x128xf32>
    %244 = vector.shape_cast %243 : vector<2x18x16x128xf32> to vector<576x128xf32>
    %245 = tpu.iota {dimensions = array<i32: 0>} : vector<16x128xi32>
    %cst_76 = arith.constant 0.000000e+00 : f32
    %246 = vector.broadcast %cst_76 : f32 to vector<512x128xf32>
    %c1_i32_77 = arith.constant 1 : i32
    %247 = tpu.dynamic_rotate %244 by %c1_i32_77 dim 0 : vector<576x128xf32>, i32 -> vector<576x128xf32>
    %248 = vector.shape_cast %247 : vector<576x128xf32> to vector<2x18x16x128xf32>
    %c0_i32_78 = arith.constant 0 : i32
    %249 = vector.broadcast %c0_i32_78 : i32 to vector<16x128xi32>
    %250 = arith.cmpi sgt, %245, %249 : vector<16x128xi32>
    %cst_79 = arith.constant 0.000000e+00 : f32
    %251 = vector.shape_cast %250 : vector<16x128xi1> to vector<1x1x16x128xi1>
    %252 = vector.broadcast %251 : vector<1x1x16x128xi1> to vector<2x18x16x128xi1>
    %253 = vector.broadcast %cst_79 : f32 to vector<2x18x16x128xf32>
    %254 = arith.select %252, %248, %253 : vector<2x18x16x128xi1>, vector<2x18x16x128xf32>
    %255 = vector.extract_strided_slice %254 {offsets = [0, 0, 0, 0], sizes = [2, 16, 16, 128], strides = [1, 1, 1, 1]} : vector<2x18x16x128xf32> to vector<2x16x16x128xf32>
    %256 = arith.truncf %255 : vector<2x16x16x128xf32> to vector<2x16x16x128xbf16>
    %257 = vector.extract_strided_slice %254 {offsets = [0, 1, 0, 0], sizes = [2, 16, 16, 128], strides = [1, 1, 1, 1]} : vector<2x18x16x128xf32> to vector<2x16x16x128xf32>
    %258 = arith.truncf %257 : vector<2x16x16x128xf32> to vector<2x16x16x128xbf16>
    %259 = vector.extract_strided_slice %254 {offsets = [0, 2, 0, 0], sizes = [2, 16, 16, 128], strides = [1, 1, 1, 1]} : vector<2x18x16x128xf32> to vector<2x16x16x128xf32>
    %260 = arith.truncf %259 : vector<2x16x16x128xf32> to vector<2x16x16x128xbf16>
    %261 = tpu.concatenate %256, %258, %260 in 3 : vector<2x16x16x128xbf16>, vector<2x16x16x128xbf16>, vector<2x16x16x128xbf16> -> vector<2x16x16x384xbf16>
    %262 = vector.shape_cast %261 : vector<2x16x16x384xbf16> to vector<512x384xbf16>
    %c0_80 = arith.constant 0 : index
    %c0_81 = arith.constant 0 : index
    %c0_82 = arith.constant 0 : index
    %263 = vector.load %arg13[%c0_80, %c0_81, %c0_82] : memref<3x384x128xbf16, #tpu.memory_space<vmem>>, vector<1x384x128xbf16>
    %264 = vector.shape_cast %263 : vector<1x384x128xbf16> to vector<384x128xbf16>
    %cst_83 = arith.constant dense<0.000000e+00> : vector<512x128xf32>
    %265 = tpu.matmul %262, %264, %cst_83 {dimension_numbers = #tpu.dot_dimension_numbers<[1], [0], [0], [1], [0, 0, 1, 1], [], []>} : vector<512x384xbf16>, vector<384x128xbf16>, vector<512x128xf32> -> vector<512x128xf32>
    %266 = arith.addf %246, %265 : vector<512x128xf32>
    %267 = vector.extract_strided_slice %243 {offsets = [0, 0, 0, 0], sizes = [2, 16, 16, 128], strides = [1, 1, 1, 1]} : vector<2x18x16x128xf32> to vector<2x16x16x128xf32>
    %268 = arith.truncf %267 : vector<2x16x16x128xf32> to vector<2x16x16x128xbf16>
    %269 = vector.extract_strided_slice %243 {offsets = [0, 1, 0, 0], sizes = [2, 16, 16, 128], strides = [1, 1, 1, 1]} : vector<2x18x16x128xf32> to vector<2x16x16x128xf32>
    %270 = arith.truncf %269 : vector<2x16x16x128xf32> to vector<2x16x16x128xbf16>
    %271 = vector.extract_strided_slice %243 {offsets = [0, 2, 0, 0], sizes = [2, 16, 16, 128], strides = [1, 1, 1, 1]} : vector<2x18x16x128xf32> to vector<2x16x16x128xf32>
    %272 = arith.truncf %271 : vector<2x16x16x128xf32> to vector<2x16x16x128xbf16>
    %273 = tpu.concatenate %268, %270, %272 in 3 : vector<2x16x16x128xbf16>, vector<2x16x16x128xbf16>, vector<2x16x16x128xbf16> -> vector<2x16x16x384xbf16>
    %274 = vector.shape_cast %273 : vector<2x16x16x384xbf16> to vector<512x384xbf16>
    %c1_84 = arith.constant 1 : index
    %c0_85 = arith.constant 0 : index
    %c0_86 = arith.constant 0 : index
    %275 = vector.load %arg13[%c1_84, %c0_85, %c0_86] : memref<3x384x128xbf16, #tpu.memory_space<vmem>>, vector<1x384x128xbf16>
    %276 = vector.shape_cast %275 : vector<1x384x128xbf16> to vector<384x128xbf16>
    %cst_87 = arith.constant dense<0.000000e+00> : vector<512x128xf32>
    %277 = tpu.matmul %274, %276, %cst_87 {dimension_numbers = #tpu.dot_dimension_numbers<[1], [0], [0], [1], [0, 0, 1, 1], [], []>} : vector<512x384xbf16>, vector<384x128xbf16>, vector<512x128xf32> -> vector<512x128xf32>
    %278 = arith.addf %266, %277 : vector<512x128xf32>
    %c575_i32_88 = arith.constant 575 : i32
    %279 = tpu.dynamic_rotate %244 by %c575_i32_88 dim 0 : vector<576x128xf32>, i32 -> vector<576x128xf32>
    %280 = vector.shape_cast %279 : vector<576x128xf32> to vector<2x18x16x128xf32>
    %c15_i32_89 = arith.constant 15 : i32
    %281 = vector.broadcast %c15_i32_89 : i32 to vector<16x128xi32>
    %282 = arith.cmpi slt, %245, %281 : vector<16x128xi32>
    %cst_90 = arith.constant 0.000000e+00 : f32
    %283 = vector.shape_cast %282 : vector<16x128xi1> to vector<1x1x16x128xi1>
    %284 = vector.broadcast %283 : vector<1x1x16x128xi1> to vector<2x18x16x128xi1>
    %285 = vector.broadcast %cst_90 : f32 to vector<2x18x16x128xf32>
    %286 = arith.select %284, %280, %285 : vector<2x18x16x128xi1>, vector<2x18x16x128xf32>
    %287 = vector.extract_strided_slice %286 {offsets = [0, 0, 0, 0], sizes = [2, 16, 16, 128], strides = [1, 1, 1, 1]} : vector<2x18x16x128xf32> to vector<2x16x16x128xf32>
    %288 = arith.truncf %287 : vector<2x16x16x128xf32> to vector<2x16x16x128xbf16>
    %289 = vector.extract_strided_slice %286 {offsets = [0, 1, 0, 0], sizes = [2, 16, 16, 128], strides = [1, 1, 1, 1]} : vector<2x18x16x128xf32> to vector<2x16x16x128xf32>
    %290 = arith.truncf %289 : vector<2x16x16x128xf32> to vector<2x16x16x128xbf16>
    %291 = vector.extract_strided_slice %286 {offsets = [0, 2, 0, 0], sizes = [2, 16, 16, 128], strides = [1, 1, 1, 1]} : vector<2x18x16x128xf32> to vector<2x16x16x128xf32>
    %292 = arith.truncf %291 : vector<2x16x16x128xf32> to vector<2x16x16x128xbf16>
    %293 = tpu.concatenate %288, %290, %292 in 3 : vector<2x16x16x128xbf16>, vector<2x16x16x128xbf16>, vector<2x16x16x128xbf16> -> vector<2x16x16x384xbf16>
    %294 = vector.shape_cast %293 : vector<2x16x16x384xbf16> to vector<512x384xbf16>
    %c2_91 = arith.constant 2 : index
    %c0_92 = arith.constant 0 : index
    %c0_93 = arith.constant 0 : index
    %295 = vector.load %arg13[%c2_91, %c0_92, %c0_93] : memref<3x384x128xbf16, #tpu.memory_space<vmem>>, vector<1x384x128xbf16>
    %296 = vector.shape_cast %295 : vector<1x384x128xbf16> to vector<384x128xbf16>
    %cst_94 = arith.constant dense<0.000000e+00> : vector<512x128xf32>
    %297 = tpu.matmul %294, %296, %cst_94 {dimension_numbers = #tpu.dot_dimension_numbers<[1], [0], [0], [1], [0, 0, 1, 1], [], []>} : vector<512x384xbf16>, vector<384x128xbf16>, vector<512x128xf32> -> vector<512x128xf32>
    %298 = arith.addf %278, %297 : vector<512x128xf32>
    %299 = vector.shape_cast %298 : vector<512x128xf32> to vector<2x16x16x128xf32>
    %c0_95 = arith.constant 0 : index
    %c0_96 = arith.constant 0 : index
    %300 = vector.load %arg14[%c0_95, %c0_96] : memref<1x128xf32, #tpu.memory_space<vmem>>, vector<1x128xf32>
    %301 = vector.shape_cast %300 : vector<1x128xf32> to vector<1x1x1x128xf32>
    %302 = vector.broadcast %301 : vector<1x1x1x128xf32> to vector<2x16x16x128xf32>
    %303 = arith.addf %299, %302 : vector<2x16x16x128xf32>
    %304 = math.tanh %303 : vector<2x16x16x128xf32>
    %cst_97 = arith.constant dense<0.000000e+00> : vector<128xf32>
    %305 = vector.multi_reduction <add>, %304, %cst_97 [0, 1, 2] : vector<2x16x16x128xf32> to vector<128xf32>
    %306 = vector.shape_cast %305 : vector<128xf32> to vector<1x1x1x128xf32>
    %307 = arith.mulf %304, %304 : vector<2x16x16x128xf32>
    %cst_98 = arith.constant dense<0.000000e+00> : vector<128xf32>
    %308 = vector.multi_reduction <add>, %307, %cst_98 [0, 1, 2] : vector<2x16x16x128xf32> to vector<128xf32>
    %309 = vector.shape_cast %308 : vector<128xf32> to vector<1x1x1x128xf32>
    %cst_99 = arith.constant 0.001953125 : f32
    %310 = vector.broadcast %cst_99 : f32 to vector<1x1x1x128xf32>
    %311 = arith.mulf %306, %310 : vector<1x1x1x128xf32>
    %cst_100 = arith.constant 0.001953125 : f32
    %312 = vector.broadcast %cst_100 : f32 to vector<1x1x1x128xf32>
    %313 = arith.mulf %309, %312 : vector<1x1x1x128xf32>
    %314 = arith.mulf %311, %311 : vector<1x1x1x128xf32>
    %315 = arith.subf %313, %314 : vector<1x1x1x128xf32>
    %cst_101 = arith.constant 0.000000e+00 : f32
    %316 = vector.broadcast %cst_101 : f32 to vector<1x1x1x128xf32>
    %317 = arith.maximumf %315, %316 : vector<1x1x1x128xf32>
    %318 = vector.broadcast %311 : vector<1x1x1x128xf32> to vector<2x16x16x128xf32>
    %319 = arith.subf %304, %318 : vector<2x16x16x128xf32>
    %cst_102 = arith.constant 9.99999974E-6 : f32
    %320 = vector.broadcast %cst_102 : f32 to vector<1x1x1x128xf32>
    %321 = arith.addf %317, %320 : vector<1x1x1x128xf32>
    %322 = math.rsqrt %321 : vector<1x1x1x128xf32>
    %323 = vector.broadcast %322 : vector<1x1x1x128xf32> to vector<2x16x16x128xf32>
    %324 = arith.mulf %319, %323 : vector<2x16x16x128xf32>
    %c0_103 = arith.constant 0 : index
    %c0_104 = arith.constant 0 : index
    %c0_105 = arith.constant 0 : index
    %c0_106 = arith.constant 0 : index
    %325 = vector.load %arg15[%c0_103, %c0_104, %c0_105, %c0_106] : memref<2x16x16x128xf32, #tpu.memory_space<vmem>>, vector<2x16x16x128xf32>
    tpu.vector_store %arg15[%c0_103, %c0_104, %c0_105, %c0_106], %324 {strides = array<i32>} : memref<2x16x16x128xf32, #tpu.memory_space<vmem>>, vector<2x16x16x128xf32>,
    return
  }
}

</mosaic_0001>

<llo_original>
// kernel: generator_forward.1
$region0: #{generator_forward.1}
  #allocation0 [shape = 'u32[]', space=smem, size = 0x4, offset = 0x4, fixed_abs, tag = 'smem constant byte address 0x4 - core index']
  #allocation1 [shape = 'u32[144,128]{1,0:T(1,128)}', space=vmem, size = 0x12000, scoped, tag = 'internal scratch']
  %s0 = inlined_call_operand.vmem [shape: f32[2,32], index: 0, kind: input, shape index: {}]
  %s1 = inlined_call_operand.hbm [shape: bf16[32,2048], index: 1, kind: input, shape index: {}]
  %s2 = inlined_call_operand.vmem [shape: f32[1,2048], index: 2, kind: input, shape index: {}]
  %s3 = inlined_call_operand.vmem [shape: f32[2,128], index: 3, kind: input, shape index: {}]
  %s4 = inlined_call_operand.vmem [shape: f32[2,128], index: 4, kind: input, shape index: {}]
  %s5 = inlined_call_operand.hbm [shape: bf16[3,384,128], index: 5, kind: input, shape index: {}]
  %s6 = inlined_call_operand.vmem [shape: f32[1,128], index: 6, kind: input, shape index: {}]
  %s7 = inlined_call_operand.vmem [shape: f32[2,128], index: 7, kind: input, shape index: {}]
  %s8 = inlined_call_operand.vmem [shape: f32[2,128], index: 8, kind: input, shape index: {}]
  %s9 = inlined_call_operand.hbm [shape: bf16[3,384,128], index: 9, kind: input, shape index: {}]
  %s10 = inlined_call_operand.vmem [shape: f32[1,128], index: 10, kind: input, shape index: {}]
  %s11 = inlined_call_operand.vmem [shape: f32[2,128], index: 11, kind: input, shape index: {}]
  %s12 = inlined_call_operand.vmem [shape: f32[2,128], index: 12, kind: input, shape index: {}]
  %s13 = inlined_call_operand.hbm [shape: bf16[3,384,128], index: 13, kind: input, shape index: {}]
  %s14 = inlined_call_operand.vmem [shape: f32[1,128], index: 14, kind: input, shape index: {}]
  %s15 = inlined_call_operand.vmem [shape: f32[2,16,16,128], index: 15, kind: output, shape index: {}]
  %s16 = sld [smem:[#allocation0]]
  $region86: #{generator_forward.1} parent=0
    _
  %s18 = ssub.s32 1, %s16
  %s19 = scalar_select 0, %s18, %s16
  $region1: #{generator_forward.1} parent=0
    #allocation2 [shape = 'u8[131072]{0}', space=vmem, size = 0x20000, scoped, tag = 'input window, operand 1, single buffered']
    #allocation3 [shape = 's32[1]{0}', space=sflag, size = 0x4, scoped, tag = 'scoped memory for generator_forward.1']
    #allocation4 [shape = 'u8[294912]{0}', space=vmem, size = 0x48000, scoped, tag = 'input window, operand 5, single buffered']
    #allocation5 [shape = 's32[1]{0}', space=sflag, size = 0x4, scoped, tag = 'scoped memory for generator_forward.1']
    #allocation6 [shape = 'u8[294912]{0}', space=vmem, size = 0x48000, scoped, tag = 'input window, operand 9, single buffered']
    #allocation7 [shape = 'u8[294912]{0}', space=vmem, size = 0x48000, scoped, tag = 'input window, operand 13, single buffered']
    #allocation8 [shape = 's32[1]{0}', space=sflag, size = 0x4, scoped, tag = 'scoped memory for generator_forward.1']
    %20 = vsyncpa [#allocation3], 0
    %21 = vsyncpa [#allocation5], 0
    %22 = vsyncpa [#allocation8], 0
    // Predicated region
    $region2: #{generator_forward.1} parent=1 // pred_check
      _
    $region3: #{generator_forward.1} parent=1 // pred_check_branch
      %24 = sbr.rel (0) target = $region5
    $region4: #{generator_forward.1} parent=1 // pred_region
      _
    $region5: #{generator_forward.1} parent=1 // pred_fallthru
      _
    // Predicated region
    $region6: #{generator_forward.1} parent=1 // pred_check
      _
    $region7: #{generator_forward.1} parent=1 // pred_check_branch
      %26 = sbr.rel (0) target = $region9
    $region8: #{generator_forward.1} parent=1 // pred_region
      %s28 = ssub.s32 4096, 4096
      %29 = vsyncadd [#allocation3], %s28
      %s30 = sshll.u32 [#allocation2], 4
      %s31 = int_to_ptr.vmem [resolvable:$true] %s30
      %36 = dma.hbm_to_vmem [thread:$0]  %s1, 4096, %s31, [#allocation3], 1024, 1024, 64
    $region9: #{generator_forward.1} parent=1 // pred_fallthru
      _
    // Predicated region
    $region10: #{generator_forward.1} parent=1 // pred_check
      _
    $region11: #{generator_forward.1} parent=1 // pred_check_branch
      %38 = sbr.rel (0) target = $region13
    $region12: #{generator_forward.1} parent=1 // pred_region
      _
    $region13: #{generator_forward.1} parent=1 // pred_fallthru
      _
    // Predicated region
    $region14: #{generator_forward.1} parent=1 // pred_check
      _
    $region15: #{generator_forward.1} parent=1 // pred_check_branch
      %40 = sbr.rel (0) target = $region17
    $region16: #{generator_forward.1} parent=1 // pred_region
      _
    $region17: #{generator_forward.1} parent=1 // pred_fallthru
      _
    // Predicated region
    $region18: #{generator_forward.1} parent=1 // pred_check
      _
    $region19: #{generator_forward.1} parent=1 // pred_check_branch
      %42 = sbr.rel (0) target = $region21
    $region20: #{generator_forward.1} parent=1 // pred_region
      _
    $region21: #{generator_forward.1} parent=1 // pred_fallthru
      _
    // Predicated region
    $region22: #{generator_forward.1} parent=1 // pred_check
      _
    $region23: #{generator_forward.1} parent=1 // pred_check_branch
      %44 = sbr.rel (0) target = $region25
    $region24: #{generator_forward.1} parent=1 // pred_region
      %s46 = ssub.s32 9216, 9216
      %47 = vsyncadd [#allocation5], %s46
      %s48 = sshll.u32 [#allocation4], 4
      %s49 = int_to_ptr.vmem [resolvable:$true] %s48
      %54 = dma.hbm_to_vmem [thread:$0]  %s5, 9216, %s49, [#allocation5], 64, 64, 4
    $region25: #{generator_forward.1} parent=1 // pred_fallthru
      _
    // Predicated region
    $region26: #{generator_forward.1} parent=1 // pred_check
      _
    $region27: #{generator_forward.1} parent=1 // pred_check_branch
      %56 = sbr.rel (0) target = $region29
    $region28: #{generator_forward.1} parent=1 // pred_region
      _
    $region29: #{generator_forward.1} parent=1 // pred_fallthru
      _
    // Predicated region
    $region30: #{generator_forward.1} parent=1 // pred_check
      _
    $region31: #{generator_forward.1} parent=1 // pred_check_branch
      %58 = sbr.rel (0) target = $region33
    $region32: #{generator_forward.1} parent=1 // pred_region
      _
    $region33: #{generator_forward.1} parent=1 // pred_fallthru
      _
    // Predicated region
    $region34: #{generator_forward.1} parent=1 // pred_check
      _
    $region35: #{generator_forward.1} parent=1 // pred_check_branch
      %60 = sbr.rel (0) target = $region37
    $region36: #{generator_forward.1} parent=1 // pred_region
      _
    $region37: #{generator_forward.1} parent=1 // pred_fallthru
      _
    // Predicated region
    $region38: #{generator_forward.1} parent=1 // pred_check
      _
    $region39: #{generator_forward.1} parent=1 // pred_check_branch
      %62 = sbr.rel (0) target = $region41
    $region40: #{generator_forward.1} parent=1 // pred_region
      %s64 = ssub.s32 9216, 9216
      %65 = vsyncadd [#allocation5], %s64
      %s66 = sshll.u32 [#allocation6], 4
      %s67 = int_to_ptr.vmem [resolvable:$true] %s66
      %72 = dma.hbm_to_vmem [thread:$0]  %s9, 9216, %s67, [#allocation5], 64, 64, 4
    $region41: #{generator_forward.1} parent=1 // pred_fallthru
      _
    // Predicated region
    $region42: #{generator_forward.1} parent=1 // pred_check
      _
    $region43: #{generator_forward.1} parent=1 // pred_check_branch
      %74 = sbr.rel (0) target = $region45
    $region44: #{generator_forward.1} parent=1 // pred_region
      _
    $region45: #{generator_forward.1} parent=1 // pred_fallthru
      _
    // Predicated region
    $region46: #{generator_forward.1} parent=1 // pred_check
      _
    $region47: #{generator_forward.1} parent=1 // pred_check_branch
      %76 = sbr.rel (0) target = $region49
    $region48: #{generator_forward.1} parent=1 // pred_region
      _
    $region49: #{generator_forward.1} parent=1 // pred_fallthru
      _
    // Predicated region
    $region50: #{generator_forward.1} parent=1 // pred_check
      _
    $region51: #{generator_forward.1} parent=1 // pred_check_branch
      %78 = sbr.rel (0) target = $region53
    $region52: #{generator_forward.1} parent=1 // pred_region
      _
    $region53: #{generator_forward.1} parent=1 // pred_fallthru
      _
    // Predicated region
    $region54: #{generator_forward.1} parent=1 // pred_check
      _
    $region55: #{generator_forward.1} parent=1 // pred_check_branch
      %80 = sbr.rel (0) target = $region57
    $region56: #{generator_forward.1} parent=1 // pred_region
      %s82 = ssub.s32 9216, 9216
      %83 = vsyncadd [#allocation8], %s82
      %s84 = sshll.u32 [#allocation7], 4
      %s85 = int_to_ptr.vmem [resolvable:$true] %s84
      %90 = dma.hbm_to_vmem [thread:$0]  %s13, 9216, %s85, [#allocation8], 64, 64, 4
    $region57: #{generator_forward.1} parent=1 // pred_fallthru
      _
    // Predicated region
    $region58: #{generator_forward.1} parent=1 // pred_check
      _
    $region59: #{generator_forward.1} parent=1 // pred_check_branch
      %92 = sbr.rel (0) target = $region61
    $region60: #{generator_forward.1} parent=1 // pred_region
      _
    $region61: #{generator_forward.1} parent=1 // pred_fallthru
      _
    // Predicated region
    $region62: #{generator_forward.1} parent=1 // pred_check
      _
    $region63: #{generator_forward.1} parent=1 // pred_check_branch
      %94 = sbr.rel (0) target = $region65
    $region64: #{generator_forward.1} parent=1 // pred_region
      %95 = dma.done [#allocation3], 4096
    $region65: #{generator_forward.1} parent=1 // pred_fallthru
      _
    // Predicated region
    $region66: #{generator_forward.1} parent=1 // pred_check
      _
    $region67: #{generator_forward.1} parent=1 // pred_check_branch
      %97 = sbr.rel (0) target = $region69
    $region68: #{generator_forward.1} parent=1 // pred_region
      %98 = dma.done [#allocation5], 9216
    $region69: #{generator_forward.1} parent=1 // pred_fallthru
      _
    // Predicated region
    $region70: #{generator_forward.1} parent=1 // pred_check
      _
    $region71: #{generator_forward.1} parent=1 // pred_check_branch
      %100 = sbr.rel (0) target = $region73
    $region72: #{generator_forward.1} parent=1 // pred_region
      %101 = dma.done [#allocation5], 9216
    $region73: #{generator_forward.1} parent=1 // pred_fallthru
      _
    // Predicated region
    $region74: #{generator_forward.1} parent=1 // pred_check
      _
    $region75: #{generator_forward.1} parent=1 // pred_check_branch
      %103 = sbr.rel (0) target = $region77
    $region76: #{generator_forward.1} parent=1 // pred_region
      %104 = dma.done [#allocation8], 9216
    $region77: #{generator_forward.1} parent=1 // pred_fallthru
      _
    %v106 = vld [vmem:[%s0] sm:$0x3]
    %v107 = vpack.c.bf16 %v106, %v106
    %v108 = vld [vmem:[#allocation2] sm:$0xff]
    %v109 = vld [vmem:[#allocation2 + $0x8] sm:$0xff]
    %v110 = vld [vmem:[#allocation2 + $0x10] sm:$0xff]
    %v111 = vld [vmem:[#allocation2 + $0x18] sm:$0xff]
    %v112 = vld [vmem:[#allocation2 + $0x20] sm:$0xff]
    %v113 = vld [vmem:[#allocation2 + $0x28] sm:$0xff]
    %v114 = vld [vmem:[#allocation2 + $0x30] sm:$0xff]
    %v115 = vld [vmem:[#allocation2 + $0x38] sm:$0xff]
    %v116 = vld [vmem:[#allocation2 + $0x40] sm:$0xff]
    %v117 = vld [vmem:[#allocation2 + $0x48] sm:$0xff]
    %v118 = vld [vmem:[#allocation2 + $0x50] sm:$0xff]
    %v119 = vld [vmem:[#allocation2 + $0x58] sm:$0xff]
    %v120 = vld [vmem:[#allocation2 + $0x60] sm:$0xff]
    %v121 = vld [vmem:[#allocation2 + $0x68] sm:$0xff]
    %v122 = vld [vmem:[#allocation2 + $0x70] sm:$0xff]
    %v123 = vld [vmem:[#allocation2 + $0x78] sm:$0xff]
    %v124 = vld [vmem:[#allocation2 + $0x80] sm:$0xff]
    %v125 = vld [vmem:[#allocation2 + $0x88] sm:$0xff]
    %v126 = vld [vmem:[#allocation2 + $0x90] sm:$0xff]
    %v127 = vld [vmem:[#allocation2 + $0x98] sm:$0xff]
    %v128 = vld [vmem:[#allocation2 + $0xa0] sm:$0xff]
    %v129 = vld [vmem:[#allocation2 + $0xa8] sm:$0xff]
    %v130 = vld [vmem:[#allocation2 + $0xb0] sm:$0xff]
    %v131 = vld [vmem:[#allocation2 + $0xb8] sm:$0xff]
    %v132 = vld [vmem:[#allocation2 + $0xc0] sm:$0xff]
    %v133 = vld [vmem:[#allocation2 + $0xc8] sm:$0xff]
    %v134 = vld [vmem:[#allocation2 + $0xd0] sm:$0xff]
    %v135 = vld [vmem:[#allocation2 + $0xd8] sm:$0xff]
    %v136 = vld [vmem:[#allocation2 + $0xe0] sm:$0xff]
    %v137 = vld [vmem:[#allocation2 + $0xe8] sm:$0xff]
    %v138 = vld [vmem:[#allocation2 + $0xf0] sm:$0xff]
    %v139 = vld [vmem:[#allocation2 + $0xf8] sm:$0xff]
    %v140 = vld [vmem:[%s2] sm:$0xff]
    %v141 = vld [vmem:[%s2 + $0x8] sm:$0xff]
    %v144 = vlaneseq
    %v145 = vshrl.u32 %v144, 7
    %v146 = vsub.s32 0, %v145
    %v147 = vrot.slane %v140, %v146
    %v148 = vlaneseq
    %v149 = vshrl.u32 %v148, 7
    %v150 = vsub.s32 1, %v149
    %v151 = vrot.slane %v140, %v150
    %v152 = vlaneseq
    %v153 = vshrl.u32 %v152, 7
    %v154 = vsub.s32 2, %v153
    %v155 = vrot.slane %v140, %v154
    %v156 = vlaneseq
    %v157 = vshrl.u32 %v156, 7
    %v158 = vsub.s32 3, %v157
    %v159 = vrot.slane %v140, %v158
    %v160 = vlaneseq
    %v161 = vshrl.u32 %v160, 7
    %v162 = vsub.s32 4, %v161
    %v163 = vrot.slane %v140, %v162
    %v164 = vlaneseq
    %v165 = vshrl.u32 %v164, 7
    %v166 = vsub.s32 5, %v165
    %v167 = vrot.slane %v140, %v166
    %v168 = vlaneseq
    %v169 = vshrl.u32 %v168, 7
    %v170 = vsub.s32 6, %v169
    %v171 = vrot.slane %v140, %v170
    %v172 = vlaneseq
    %v173 = vshrl.u32 %v172, 7
    %v174 = vsub.s32 7, %v173
    %v175 = vrot.slane %v140, %v174
    %v176 = vlaneseq
    %v177 = vshrl.u32 %v176, 7
    %v178 = vsub.s32 0, %v177
    %v179 = vrot.slane %v141, %v178
    %v180 = vlaneseq
    %v181 = vshrl.u32 %v180, 7
    %v182 = vsub.s32 1, %v181
    %v183 = vrot.slane %v141, %v182
    %v184 = vlaneseq
    %v185 = vshrl.u32 %v184, 7
    %v186 = vsub.s32 2, %v185
    %v187 = vrot.slane %v141, %v186
    %v188 = vlaneseq
    %v189 = vshrl.u32 %v188, 7
    %v190 = vsub.s32 3, %v189
    %v191 = vrot.slane %v141, %v190
    %v192 = vlaneseq
    %v193 = vshrl.u32 %v192, 7
    %v194 = vsub.s32 4, %v193
    %v195 = vrot.slane %v141, %v194
    %v196 = vlaneseq
    %v197 = vshrl.u32 %v196, 7
    %v198 = vsub.s32 5, %v197
    %v199 = vrot.slane %v141, %v198
    %v200 = vlaneseq
    %v201 = vshrl.u32 %v200, 7
    %v202 = vsub.s32 6, %v201
    %v203 = vrot.slane %v141, %v202
    %v204 = vlaneseq
    %v205 = vshrl.u32 %v204, 7
    %v206 = vsub.s32 7, %v205
    %v207 = vrot.slane %v141, %v206
    %v256 = vunpack.c.l.b16 %v108
    %v257 = vunpack.c.h.b16 %v108
    %v258 = vunpack.c.l.b16 %v109
    %v259 = vunpack.c.h.b16 %v109
    %v260 = vunpack.c.l.b16 %v110
    %v261 = vunpack.c.h.b16 %v110
    %v262 = vunpack.c.l.b16 %v111
    %v263 = vunpack.c.h.b16 %v111
    %v264 = vunpack.c.l.b16 %v112
    %v265 = vunpack.c.h.b16 %v112
    %v266 = vunpack.c.l.b16 %v113
    %v267 = vunpack.c.h.b16 %v113
    %v268 = vunpack.c.l.b16 %v114
    %v269 = vunpack.c.h.b16 %v114
    %v270 = vunpack.c.l.b16 %v115
    %v271 = vunpack.c.h.b16 %v115
    %v272 = vunpack.c.l.b16 %v116
    %v273 = vunpack.c.h.b16 %v116
    %v274 = vunpack.c.l.b16 %v117
    %v275 = vunpack.c.h.b16 %v117
    %v276 = vunpack.c.l.b16 %v118
    %v277 = vunpack.c.h.b16 %v118
    %v278 = vunpack.c.l.b16 %v119
    %v279 = vunpack.c.h.b16 %v119
    %v280 = vunpack.c.l.b16 %v120
    %v281 = vunpack.c.h.b16 %v120
    %v282 = vunpack.c.l.b16 %v121
    %v283 = vunpack.c.h.b16 %v121
    %v284 = vunpack.c.l.b16 %v122
    %v285 = vunpack.c.h.b16 %v122
    %v286 = vunpack.c.l.b16 %v123
    %v287 = vunpack.c.h.b16 %v123
    %v288 = vunpack.c.l.b16 %v124
    %v289 = vunpack.c.h.b16 %v124
    %v290 = vunpack.c.l.b16 %v125
    %v291 = vunpack.c.h.b16 %v125
    %v292 = vunpack.c.l.b16 %v126
    %v293 = vunpack.c.h.b16 %v126
    %v294 = vunpack.c.l.b16 %v127
    %v295 = vunpack.c.h.b16 %v127
    %v296 = vunpack.c.l.b16 %v128
    %v297 = vunpack.c.h.b16 %v128
    %v298 = vunpack.c.l.b16 %v129
    %v299 = vunpack.c.h.b16 %v129
    %v300 = vunpack.c.l.b16 %v130
    %v301 = vunpack.c.h.b16 %v130
    %v302 = vunpack.c.l.b16 %v131
    %v303 = vunpack.c.h.b16 %v131
    %v304 = vunpack.c.l.b16 %v132
    %v305 = vunpack.c.h.b16 %v132
    %v306 = vunpack.c.l.b16 %v133
    %v307 = vunpack.c.h.b16 %v133
    %v308 = vunpack.c.l.b16 %v134
    %v309 = vunpack.c.h.b16 %v134
    %v310 = vunpack.c.l.b16 %v135
    %v311 = vunpack.c.h.b16 %v135
    %v312 = vunpack.c.l.b16 %v136
    %v313 = vunpack.c.h.b16 %v136
    %v314 = vunpack.c.l.b16 %v137
    %v315 = vunpack.c.h.b16 %v137
    %v316 = vunpack.c.l.b16 %v138
    %v317 = vunpack.c.h.b16 %v138
    %v318 = vunpack.c.l.b16 %v139
    %v319 = vunpack.c.h.b16 %v139
    %v320 = vpack.c.b16 %v272, %v256
    %v321 = vpack.c.b16 %v273, %v257
    %v322 = vpack.c.b16 %v274, %v258
    %v323 = vpack.c.b16 %v275, %v259
    %v324 = vpack.c.b16 %v276, %v260
    %v325 = vpack.c.b16 %v277, %v261
    %v326 = vpack.c.b16 %v278, %v262
    %v327 = vpack.c.b16 %v279, %v263
    %v328 = vpack.c.b16 %v280, %v264
    %v329 = vpack.c.b16 %v281, %v265
    %v330 = vpack.c.b16 %v282, %v266
    %v331 = vpack.c.b16 %v283, %v267
    %v332 = vpack.c.b16 %v284, %v268
    %v333 = vpack.c.b16 %v285, %v269
    %v334 = vpack.c.b16 %v286, %v270
    %v335 = vpack.c.b16 %v287, %v271
    %v336 = vpack.c.b16 %v304, %v288
    %v337 = vpack.c.b16 %v305, %v289
    %v338 = vpack.c.b16 %v306, %v290
    %v339 = vpack.c.b16 %v307, %v291
    %v340 = vpack.c.b16 %v308, %v292
    %v341 = vpack.c.b16 %v309, %v293
    %v342 = vpack.c.b16 %v310, %v294
    %v343 = vpack.c.b16 %v311, %v295
    %v344 = vpack.c.b16 %v312, %v296
    %v345 = vpack.c.b16 %v313, %v297
    %v346 = vpack.c.b16 %v314, %v298
    %v347 = vpack.c.b16 %v315, %v299
    %v348 = vpack.c.b16 %v316, %v300
    %v349 = vpack.c.b16 %v317, %v301
    %v350 = vpack.c.b16 %v318, %v302
    %v351 = vpack.c.b16 %v319, %v303
    %vm384 = vcmask 261120
    %v386 = vsel %vm384, %v107, 0
    %388 = vmatprep.subr.bf16.mxu0 0
    %389 = vmatpush1.bf16.msra.mxu0 0
    %390 = vmatprep.subr.bf16.mxu0 0
    %391 = vmatpush1.bf16.msra.mxu0 0
    %392 = vmatprep.subr.bf16.mxu0 0
    %393 = vmatpush1.bf16.msra.mxu0 0
    %394 = vmatprep.subr.bf16.mxu0 0
    %395 = vmatpush1.bf16.msra.mxu0 0
    %396 = vmatprep.subr.bf16.mxu0 0
    %397 = vmatpush1.bf16.msra.mxu0 0
    %398 = vmatprep.subr.bf16.mxu0 0
    %399 = vmatpush1.bf16.msra.mxu0 0
    %400 = vmatprep.subr.bf16.mxu0 %v337
    %401 = vmatpush1.bf16.msra.mxu0 %v336
    %402 = vmatprep.subr.bf16.mxu0 %v321
    %403 = vmatpush1.bf16.msra.mxu0 %v320
    %404 = vmatprep.subr.bf16.mxu0 0
    %405 = vmatpush2.bf16.msra.mxu0 0
    %406 = vmatprep.subr.bf16.mxu0 0
    %407 = vmatpush2.bf16.msra.mxu0 0
    %408 = vmatprep.subr.bf16.mxu0 0
    %409 = vmatpush2.bf16.msra.mxu0 0
    %410 = vmatprep.subr.bf16.mxu0 0
    %411 = vmatpush2.bf16.msra.mxu0 0
    %412 = vmatprep.subr.bf16.mxu0 0
    %413 = vmatpush2.bf16.msra.mxu0 0
    %414 = vmatprep.subr.bf16.mxu0 0
    %415 = vmatpush2.bf16.msra.mxu0 0
    %416 = vmatprep.subr.bf16.mxu0 0
    %417 = vmatpush2.bf16.msra.mxu0 0
    %418 = vmatprep.subr.bf16.mxu0 0
    %419 = vmatpush2.bf16.msra.mxu0 0
    %420 = vmatprep.mubr.bf16.mxu0 0
    %421 = vmatmul.mubr.bf16.gmra.mxu0 %v386
    %v422 = vpop.f32.mrf.mxu0
    %v423 = vadd.f32 %v147, %v422
    %v424 = vpop.f32.mrf.mxu0
    %v425 = vadd.f32 %v151, %v424
    %v426 = vpop.f32.mrf.mxu0
    %v427 = vpop.f32.mrf.mxu0
    %428 = vdwg.mxu0
    %429 = vmatprep.subr.bf16.mxu0 0
    %430 = vmatpush1.bf16.msra.mxu0 0
    %431 = vmatprep.subr.bf16.mxu0 0
    %432 = vmatpush1.bf16.msra.mxu0 0
    %433 = vmatprep.subr.bf16.mxu0 0
    %434 = vmatpush1.bf16.msra.mxu0 0
    %435 = vmatprep.subr.bf16.mxu0 0
    %436 = vmatpush1.bf16.msra.mxu0 0
    %437 = vmatprep.subr.bf16.mxu0 0
    %438 = vmatpush1.bf16.msra.mxu0 0
    %439 = vmatprep.subr.bf16.mxu0 0
    %440 = vmatpush1.bf16.msra.mxu0 0
    %441 = vmatprep.subr.bf16.mxu0 %v339
    %442 = vmatpush1.bf16.msra.mxu0 %v338
    %443 = vmatprep.subr.bf16.mxu0 %v323
    %444 = vmatpush1.bf16.msra.mxu0 %v322
    %445 = vmatprep.subr.bf16.mxu0 0
    %446 = vmatpush2.bf16.msra.mxu0 0
    %447 = vmatprep.subr.bf16.mxu0 0
    %448 = vmatpush2.bf16.msra.mxu0 0
    %449 = vmatprep.subr.bf16.mxu0 0
    %450 = vmatpush2.bf16.msra.mxu0 0
    %451 = vmatprep.subr.bf16.mxu0 0
    %452 = vmatpush2.bf16.msra.mxu0 0
    %453 = vmatprep.subr.bf16.mxu0 0
    %454 = vmatpush2.bf16.msra.mxu0 0
    %455 = vmatprep.subr.bf16.mxu0 0
    %456 = vmatpush2.bf16.msra.mxu0 0
    %457 = vmatprep.subr.bf16.mxu0 0
    %458 = vmatpush2.bf16.msra.mxu0 0
    %459 = vmatprep.subr.bf16.mxu0 0
    %460 = vmatpush2.bf16.msra.mxu0 0
    %461 = vmatprep.mubr.bf16.mxu0 0
    %462 = vmatmul.mubr.bf16.gmra.mxu0 %v386
    %v463 = vpop.f32.mrf.mxu0
    %v464 = vadd.f32 %v155, %v463
    %v465 = vpop.f32.mrf.mxu0
    %v466 = vadd.f32 %v159, %v465
    %v467 = vpop.f32.mrf.mxu0
    %v468 = vpop.f32.mrf.mxu0
    %469 = vdwg.mxu0
    %470 = vmatprep.subr.bf16.mxu0 0
    %471 = vmatpush1.bf16.msra.mxu0 0
    %472 = vmatprep.subr.bf16.mxu0 0
    %473 = vmatpush1.bf16.msra.mxu0 0
    %474 = vmatprep.subr.bf16.mxu0 0
    %475 = vmatpush1.bf16.msra.mxu0 0
    %476 = vmatprep.subr.bf16.mxu0 0
    %477 = vmatpush1.bf16.msra.mxu0 0
    %478 = vmatprep.subr.bf16.mxu0 0
    %479 = vmatpush1.bf16.msra.mxu0 0
    %480 = vmatprep.subr.bf16.mxu0 0
    %481 = vmatpush1.bf16.msra.mxu0 0
    %482 = vmatprep.subr.bf16.mxu0 %v341
    %483 = vmatpush1.bf16.msra.mxu0 %v340
    %484 = vmatprep.subr.bf16.mxu0 %v325
    %485 = vmatpush1.bf16.msra.mxu0 %v324
    %486 = vmatprep.subr.bf16.mxu0 0
    %487 = vmatpush2.bf16.msra.mxu0 0
    %488 = vmatprep.subr.bf16.mxu0 0
    %489 = vmatpush2.bf16.msra.mxu0 0
    %490 = vmatprep.subr.bf16.mxu0 0
    %491 = vmatpush2.bf16.msra.mxu0 0
    %492 = vmatprep.subr.bf16.mxu0 0
    %493 = vmatpush2.bf16.msra.mxu0 0
    %494 = vmatprep.subr.bf16.mxu0 0
    %495 = vmatpush2.bf16.msra.mxu0 0
    %496 = vmatprep.subr.bf16.mxu0 0
    %497 = vmatpush2.bf16.msra.mxu0 0
    %498 = vmatprep.subr.bf16.mxu0 0
    %499 = vmatpush2.bf16.msra.mxu0 0
    %500 = vmatprep.subr.bf16.mxu0 0
    %501 = vmatpush2.bf16.msra.mxu0 0
    %502 = vmatprep.mubr.bf16.mxu0 0
    %503 = vmatmul.mubr.bf16.gmra.mxu0 %v386
    %v504 = vpop.f32.mrf.mxu0
    %v505 = vadd.f32 %v163, %v504
    %v506 = vpop.f32.mrf.mxu0
    %v507 = vadd.f32 %v167, %v506
    %v508 = vpop.f32.mrf.mxu0
    %v509 = vpop.f32.mrf.mxu0
    %510 = vdwg.mxu0
    %511 = vmatprep.subr.bf16.mxu0 0
    %512 = vmatpush1.bf16.msra.mxu0 0
    %513 = vmatprep.subr.bf16.mxu0 0
    %514 = vmatpush1.bf16.msra.mxu0 0
    %515 = vmatprep.subr.bf16.mxu0 0
    %516 = vmatpush1.bf16.msra.mxu0 0
    %517 = vmatprep.subr.bf16.mxu0 0
    %518 = vmatpush1.bf16.msra.mxu0 0
    %519 = vmatprep.subr.bf16.mxu0 0
    %520 = vmatpush1.bf16.msra.mxu0 0
    %521 = vmatprep.subr.bf16.mxu0 0
    %522 = vmatpush1.bf16.msra.mxu0 0
    %523 = vmatprep.subr.bf16.mxu0 %v343
    %524 = vmatpush1.bf16.msra.mxu0 %v342
    %525 = vmatprep.subr.bf16.mxu0 %v327
    %526 = vmatpush1.bf16.msra.mxu0 %v326
    %527 = vmatprep.subr.bf16.mxu0 0
    %528 = vmatpush2.bf16.msra.mxu0 0
    %529 = vmatprep.subr.bf16.mxu0 0
    %530 = vmatpush2.bf16.msra.mxu0 0
    %531 = vmatprep.subr.bf16.mxu0 0
    %532 = vmatpush2.bf16.msra.mxu0 0
    %533 = vmatprep.subr.bf16.mxu0 0
    %534 = vmatpush2.bf16.msra.mxu0 0
    %535 = vmatprep.subr.bf16.mxu0 0
    %536 = vmatpush2.bf16.msra.mxu0 0
    %537 = vmatprep.subr.bf16.mxu0 0
    %538 = vmatpush2.bf16.msra.mxu0 0
    %539 = vmatprep.subr.bf16.mxu0 0
    %540 = vmatpush2.bf16.msra.mxu0 0
    %541 = vmatprep.subr.bf16.mxu0 0
    %542 = vmatpush2.bf16.msra.mxu0 0
    %543 = vmatprep.mubr.bf16.mxu0 0
    %544 = vmatmul.mubr.bf16.gmra.mxu0 %v386
    %v545 = vpop.f32.mrf.mxu0
    %v546 = vadd.f32 %v171, %v545
    %v547 = vpop.f32.mrf.mxu0
    %v548 = vadd.f32 %v175, %v547
    %v549 = vpop.f32.mrf.mxu0
    %v550 = vpop.f32.mrf.mxu0
    %551 = vdwg.mxu0
    %552 = vmatprep.subr.bf16.mxu0 0
    %553 = vmatpush1.bf16.msra.mxu0 0
    %554 = vmatprep.subr.bf16.mxu0 0
    %555 = vmatpush1.bf16.msra.mxu0 0
    %556 = vmatprep.subr.bf16.mxu0 0
    %557 = vmatpush1.bf16.msra.mxu0 0
    %558 = vmatprep.subr.bf16.mxu0 0
    %559 = vmatpush1.bf16.msra.mxu0 0
    %560 = vmatprep.subr.bf16.mxu0 0
    %561 = vmatpush1.bf16.msra.mxu0 0
    %562 = vmatprep.subr.bf16.mxu0 0
    %563 = vmatpush1.bf16.msra.mxu0 0
    %564 = vmatprep.subr.bf16.mxu0 %v345
    %565 = vmatpush1.bf16.msra.mxu0 %v344
    %566 = vmatprep.subr.bf16.mxu0 %v329
    %567 = vmatpush1.bf16.msra.mxu0 %v328
    %568 = vmatprep.subr.bf16.mxu0 0
    %569 = vmatpush2.bf16.msra.mxu0 0
    %570 = vmatprep.subr.bf16.mxu0 0
    %571 = vmatpush2.bf16.msra.mxu0 0
    %572 = vmatprep.subr.bf16.mxu0 0
    %573 = vmatpush2.bf16.msra.mxu0 0
    %574 = vmatprep.subr.bf16.mxu0 0
    %575 = vmatpush2.bf16.msra.mxu0 0
    %576 = vmatprep.subr.bf16.mxu0 0
    %577 = vmatpush2.bf16.msra.mxu0 0
    %578 = vmatprep.subr.bf16.mxu0 0
    %579 = vmatpush2.bf16.msra.mxu0 0
    %580 = vmatprep.subr.bf16.mxu0 0
    %581 = vmatpush2.bf16.msra.mxu0 0
    %582 = vmatprep.subr.bf16.mxu0 0
    %583 = vmatpush2.bf16.msra.mxu0 0
    %584 = vmatprep.mubr.bf16.mxu0 0
    %585 = vmatmul.mubr.bf16.gmra.mxu0 %v386
    %v586 = vpop.f32.mrf.mxu0
    %v587 = vadd.f32 %v179, %v586
    %v588 = vpop.f32.mrf.mxu0
    %v589 = vadd.f32 %v183, %v588
    %v590 = vpop.f32.mrf.mxu0
    %v591 = vpop.f32.mrf.mxu0
    %592 = vdwg.mxu0
    %593 = vmatprep.subr.bf16.mxu0 0
    %594 = vmatpush1.bf16.msra.mxu0 0
    %595 = vmatprep.subr.bf16.mxu0 0
    %596 = vmatpush1.bf16.msra.mxu0 0
    %597 = vmatprep.subr.bf16.mxu0 0
    %598 = vmatpush1.bf16.msra.mxu0 0
    %599 = vmatprep.subr.bf16.mxu0 0
    %600 = vmatpush1.bf16.msra.mxu0 0
    %601 = vmatprep.subr.bf16.mxu0 0
    %602 = vmatpush1.bf16.msra.mxu0 0
    %603 = vmatprep.subr.bf16.mxu0 0
    %604 = vmatpush1.bf16.msra.mxu0 0
    %605 = vmatprep.subr.bf16.mxu0 %v347
    %606 = vmatpush1.bf16.msra.mxu0 %v346
    %607 = vmatprep.subr.bf16.mxu0 %v331
    %608 = vmatpush1.bf16.msra.mxu0 %v330
    %609 = vmatprep.subr.bf16.mxu0 0
    %610 = vmatpush2.bf16.msra.mxu0 0
    %611 = vmatprep.subr.bf16.mxu0 0
    %612 = vmatpush2.bf16.msra.mxu0 0
    %613 = vmatprep.subr.bf16.mxu0 0
    %614 = vmatpush2.bf16.msra.mxu0 0
    %615 = vmatprep.subr.bf16.mxu0 0
    %616 = vmatpush2.bf16.msra.mxu0 0
    %617 = vmatprep.subr.bf16.mxu0 0
    %618 = vmatpush2.bf16.msra.mxu0 0
    %619 = vmatprep.subr.bf16.mxu0 0
    %620 = vmatpush2.bf16.msra.mxu0 0
    %621 = vmatprep.subr.bf16.mxu0 0
    %622 = vmatpush2.bf16.msra.mxu0 0
    %623 = vmatprep.subr.bf16.mxu0 0
    %624 = vmatpush2.bf16.msra.mxu0 0
    %625 = vmatprep.mubr.bf16.mxu0 0
    %626 = vmatmul.mubr.bf16.gmra.mxu0 %v386
    %v627 = vpop.f32.mrf.mxu0
    %v628 = vadd.f32 %v187, %v627
    %v629 = vpop.f32.mrf.mxu0
    %v630 = vadd.f32 %v191, %v629
    %v631 = vpop.f32.mrf.mxu0
    %v632 = vpop.f32.mrf.mxu0
    %633 = vdwg.mxu0
    %634 = vmatprep.subr.bf16.mxu0 0
    %635 = vmatpush1.bf16.msra.mxu0 0
    %636 = vmatprep.subr.bf16.mxu0 0
    %637 = vmatpush1.bf16.msra.mxu0 0
    %638 = vmatprep.subr.bf16.mxu0 0
    %639 = vmatpush1.bf16.msra.mxu0 0
    %640 = vmatprep.subr.bf16.mxu0 0
    %641 = vmatpush1.bf16.msra.mxu0 0
    %642 = vmatprep.subr.bf16.mxu0 0
    %643 = vmatpush1.bf16.msra.mxu0 0
    %644 = vmatprep.subr.bf16.mxu0 0
    %645 = vmatpush1.bf16.msra.mxu0 0
    %646 = vmatprep.subr.bf16.mxu0 %v349
    %647 = vmatpush1.bf16.msra.mxu0 %v348
    %648 = vmatprep.subr.bf16.mxu0 %v333
    %649 = vmatpush1.bf16.msra.mxu0 %v332
    %650 = vmatprep.subr.bf16.mxu0 0
    %651 = vmatpush2.bf16.msra.mxu0 0
    %652 = vmatprep.subr.bf16.mxu0 0
    %653 = vmatpush2.bf16.msra.mxu0 0
    %654 = vmatprep.subr.bf16.mxu0 0
    %655 = vmatpush2.bf16.msra.mxu0 0
    %656 = vmatprep.subr.bf16.mxu0 0
    %657 = vmatpush2.bf16.msra.mxu0 0
    %658 = vmatprep.subr.bf16.mxu0 0
    %659 = vmatpush2.bf16.msra.mxu0 0
    %660 = vmatprep.subr.bf16.mxu0 0
    %661 = vmatpush2.bf16.msra.mxu0 0
    %662 = vmatprep.subr.bf16.mxu0 0
    %663 = vmatpush2.bf16.msra.mxu0 0
    %664 = vmatprep.subr.bf16.mxu0 0
    %665 = vmatpush2.bf16.msra.mxu0 0
    %666 = vmatprep.mubr.bf16.mxu0 0
    %667 = vmatmul.mubr.bf16.gmra.mxu0 %v386
    %v668 = vpop.f32.mrf.mxu0
    %v669 = vadd.f32 %v195, %v668
    %v670 = vpop.f32.mrf.mxu0
    %v671 = vadd.f32 %v199, %v670
    %v672 = vpop.f32.mrf.mxu0
    %v673 = vpop.f32.mrf.mxu0
    %674 = vdwg.mxu0
    %675 = vmatprep.subr.bf16.mxu0 0
    %676 = vmatpush1.bf16.msra.mxu0 0
    %677 = vmatprep.subr.bf16.mxu0 0
    %678 = vmatpush1.bf16.msra.mxu0 0
    %679 = vmatprep.subr.bf16.mxu0 0
    %680 = vmatpush1.bf16.msra.mxu0 0
    %681 = vmatprep.subr.bf16.mxu0 0
    %682 = vmatpush1.bf16.msra.mxu0 0
    %683 = vmatprep.subr.bf16.mxu0 0
    %684 = vmatpush1.bf16.msra.mxu0 0
    %685 = vmatprep.subr.bf16.mxu0 0
    %686 = vmatpush1.bf16.msra.mxu0 0
    %687 = vmatprep.subr.bf16.mxu0 %v351
    %688 = vmatpush1.bf16.msra.mxu0 %v350
    %689 = vmatprep.subr.bf16.mxu0 %v335
    %690 = vmatpush1.bf16.msra.mxu0 %v334
    %691 = vmatprep.subr.bf16.mxu0 0
    %692 = vmatpush2.bf16.msra.mxu0 0
    %693 = vmatprep.subr.bf16.mxu0 0
    %694 = vmatpush2.bf16.msra.mxu0 0
    %695 = vmatprep.subr.bf16.mxu0 0
    %696 = vmatpush2.bf16.msra.mxu0 0
    %697 = vmatprep.subr.bf16.mxu0 0
    %698 = vmatpush2.bf16.msra.mxu0 0
    %699 = vmatprep.subr.bf16.mxu0 0
    %700 = vmatpush2.bf16.msra.mxu0 0
    %701 = vmatprep.subr.bf16.mxu0 0
    %702 = vmatpush2.bf16.msra.mxu0 0
    %703 = vmatprep.subr.bf16.mxu0 0
    %704 = vmatpush2.bf16.msra.mxu0 0
    %705 = vmatprep.subr.bf16.mxu0 0
    %706 = vmatpush2.bf16.msra.mxu0 0
    %707 = vmatprep.mubr.bf16.mxu0 0
    %708 = vmatmul.mubr.bf16.gmra.mxu0 %v386
    %v709 = vpop.f32.mrf.mxu0
    %v710 = vadd.f32 %v203, %v709
    %v711 = vpop.f32.mrf.mxu0
    %v712 = vadd.f32 %v207, %v711
    %v713 = vpop.f32.mrf.mxu0
    %v714 = vpop.f32.mrf.mxu0
    %715 = vdwg.mxu0
    %vm716 = vcmask 1040384
    %v717 = vsel %vm716, %v423, 0.0
    %v718 = vrot.slane %v425, 7
    %vm719 = vcmask 1041409
    %v720 = vsel %vm719, %v718, %v717
    %v721 = vrot.slane %v464, 6
    %vm722 = vcmask 1042434
    %v723 = vsel %vm722, %v721, %v720
    %v724 = vrot.slane %v466, 5
    %vm725 = vcmask 1043459
    %v726 = vsel %vm725, %v724, %v723
    %v727 = vsel %vm716, %v505, 0.0
    %v728 = vrot.slane %v507, 7
    %v729 = vsel %vm719, %v728, %v727
    %v730 = vrot.slane %v546, 6
    %v731 = vsel %vm722, %v730, %v729
    %v732 = vrot.slane %v548, 5
    %v733 = vsel %vm725, %v732, %v731
    %v734 = vsel %vm716, %v587, 0.0
    %v735 = vrot.slane %v589, 7
    %v736 = vsel %vm719, %v735, %v734
    %v737 = vrot.slane %v628, 6
    %v738 = vsel %vm722, %v737, %v736
    %v739 = vrot.slane %v630, 5
    %v740 = vsel %vm725, %v739, %v738
    %v741 = vsel %vm716, %v669, 0.0
    %v742 = vrot.slane %v671, 7
    %v743 = vsel %vm719, %v742, %v741
    %v744 = vrot.slane %v710, 6
    %v745 = vsel %vm722, %v744, %v743
    %v746 = vrot.slane %v712, 5
    %v747 = vsel %vm725, %v746, %v745
    %v748 = vrot.slane %v423, 1
    %v749 = vsel %vm716, %v748, 0.0
    %v750 = vsel %vm719, %v425, %v749
    %v751 = vrot.slane %v464, 7
    %v752 = vsel %vm722, %v751, %v750
    %v753 = vrot.slane %v466, 6
    %v754 = vsel %vm725, %v753, %v752
    %v755 = vrot.slane %v505, 1
    %v756 = vsel %vm716, %v755, 0.0
    %v757 = vsel %vm719, %v507, %v756
    %v758 = vrot.slane %v546, 7
    %v759 = vsel %vm722, %v758, %v757
    %v760 = vrot.slane %v548, 6
    %v761 = vsel %vm725, %v760, %v759
    %v762 = vrot.slane %v587, 1
    %v763 = vsel %vm716, %v762, 0.0
    %v764 = vsel %vm719, %v589, %v763
    %v765 = vrot.slane %v628, 7
    %v766 = vsel %vm722, %v765, %v764
    %v767 = vrot.slane %v630, 6
    %v768 = vsel %vm725, %v767, %v766
    %v769 = vrot.slane %v669, 1
    %v770 = vsel %vm716, %v769, 0.0
    %v771 = vsel %vm719, %v671, %v770
    %v772 = vrot.slane %v710, 7
    %v773 = vsel %vm722, %v772, %v771
    %v774 = vrot.slane %v712, 6
    %v775 = vsel %vm725, %v774, %v773
    %v776 = vld [vmem:[%s3] sm:$0x3]
    %v777 = vld [vmem:[%s4] sm:$0x3]
    %vm778 = vcmask 1043456
    %v779 = vsel %vm778, %v726, 0.0
    %v780 = vsel %vm778, %v733, 0.0
    %v781 = vadd.f32 %v779, %v780
    %v782 = vsel %vm778, %v740, 0.0
    %v783 = vadd.f32 %v781, %v782
    %v784 = vsel %vm778, %v747, 0.0
    %v785 = vadd.f32 %v783, %v784
    %v786 = vsel %vm778, %v754, 0.0
    %v787 = vadd.f32 %v785, %v786
    %v788 = vsel %vm778, %v761, 0.0
    %v789 = vadd.f32 %v787, %v788
    %v790 = vsel %vm778, %v768, 0.0
    %v791 = vadd.f32 %v789, %v790
    %v792 = vsel %vm778, %v775, 0.0
    %v793 = vadd.f32 %v791, %v792
    %v794 = vrot.slane %v793, 4
    %v795 = vadd.f32 %v793, %v794
    %v796 = vrot.slane %v795, 2
    %v797 = vadd.f32 %v795, %v796
    %v798 = vrot.slane %v797, 1
    %v799 = vadd.f32 %v797, %v798
    %v800 = vmul.f32 %v726, %v726
    %v801 = vmul.f32 %v733, %v733
    %v802 = vmul.f32 %v740, %v740
    %v803 = vmul.f32 %v747, %v747
    %v804 = vmul.f32 %v754, %v754
    %v805 = vmul.f32 %v761, %v761
    %v806 = vmul.f32 %v768, %v768
    %v807 = vmul.f32 %v775, %v775
    %v808 = vsel %vm778, %v800, 0.0
    %v809 = vsel %vm778, %v801, 0.0
    %v810 = vadd.f32 %v808, %v809
    %v811 = vsel %vm778, %v802, 0.0
    %v812 = vadd.f32 %v810, %v811
    %v813 = vsel %vm778, %v803, 0.0
    %v814 = vadd.f32 %v812, %v813
    %v815 = vsel %vm778, %v804, 0.0
    %v816 = vadd.f32 %v814, %v815
    %v817 = vsel %vm778, %v805, 0.0
    %v818 = vadd.f32 %v816, %v817
    %v819 = vsel %vm778, %v806, 0.0
    %v820 = vadd.f32 %v818, %v819
    %v821 = vsel %vm778, %v807, 0.0
    %v822 = vadd.f32 %v820, %v821
    %v823 = vrot.slane %v822, 4
    %v824 = vadd.f32 %v822, %v823
    %v825 = vrot.slane %v824, 2
    %v826 = vadd.f32 %v824, %v825
    %v827 = vrot.slane %v826, 1
    %v828 = vadd.f32 %v826, %v827
    %v829 = vmul.f32 %v799, 0.03125
    %v830 = vmul.f32 %v828, 0.03125
    %v831 = vmul.f32 %v829, %v829
    %v832 = vsub.f32 %v830, %v831
    %v833 = vmax.f32 %v832, 0.0
    %v834 = vsub.f32 %v726, %v829
    %v835 = vsub.f32 %v733, %v829
    %v836 = vsub.f32 %v740, %v829
    %v837 = vsub.f32 %v747, %v829
    %v838 = vsub.f32 %v754, %v829
    %v839 = vsub.f32 %v761, %v829
    %v840 = vsub.f32 %v768, %v829
    %v841 = vsub.f32 %v775, %v829
    %v842 = vadd.f32 %v833, 1e-05
    %v843 = vrsqrt.pop %v842
    %v844 = vmul.f32 %v834, %v843
    %v845 = vmul.f32 %v835, %v843
    %v846 = vmul.f32 %v836, %v843
    %v847 = vmul.f32 %v837, %v843
    %v848 = vmul.f32 %v838, %v843
    %v849 = vmul.f32 %v839, %v843
    %v850 = vmul.f32 %v840, %v843
    %v851 = vmul.f32 %v841, %v843
    %v854 = vunpack.c.l.s4 1966171168
    %v855 = vunpack.c.0.s8 %v854
    %v856 = vlaneseq
    %v857 = vshrl.u32 %v856, 7
    %v858 = vsub.s32 %v855, %v857
    %v859 = vrot.slane %v776, %v858
    %v860 = vcombine.high %v859, %v859
    %v862 = vunpack.c.l.s4 1966171168
    %v863 = vunpack.c.0.s8 %v862
    %v864 = vlaneseq
    %v865 = vshrl.u32 %v864, 7
    %v866 = vsub.s32 %v863, %v865
    %v867 = vrot.slane %v859, %v866
    %v869 = vunpack.c.l.s4 1966171168
    %v870 = vunpack.c.0.s8 %v869
    %v871 = vlaneseq
    %v872 = vshrl.u32 %v871, 7
    %v873 = vsub.s32 %v870, %v872
    %v874 = vrot.slane %v860, %v873
    %v875 = vlaneseq
    %v876 = vshrl.u32 %v875, 7
    %v877 = vsub.s32 0, %v876
    %v878 = vrot.slane %v867, %v877
    %v879 = vlaneseq
    %v880 = vshrl.u32 %v879, 7
    %v881 = vsub.s32 0, %v880
    %v882 = vrot.slane %v874, %v881
    %v885 = vmul.f32 %v878, %v844
    %v886 = vmul.f32 %v878, %v845
    %v887 = vmul.f32 %v878, %v846
    %v888 = vmul.f32 %v878, %v847
    %v889 = vmul.f32 %v882, %v848
    %v890 = vmul.f32 %v882, %v849
    %v891 = vmul.f32 %v882, %v850
    %v892 = vmul.f32 %v882, %v851
    %v895 = vunpack.c.l.s4 1966171168
    %v896 = vunpack.c.0.s8 %v895
    %v897 = vlaneseq
    %v898 = vshrl.u32 %v897, 7
    %v899 = vsub.s32 %v896, %v898
    %v900 = vrot.slane %v777, %v899
    %v901 = vcombine.high %v900, %v900
    %v903 = vunpack.c.l.s4 1966171168
    %v904 = vunpack.c.0.s8 %v903
    %v905 = vlaneseq
    %v906 = vshrl.u32 %v905, 7
    %v907 = vsub.s32 %v904, %v906
    %v908 = vrot.slane %v900, %v907
    %v910 = vunpack.c.l.s4 1966171168
    %v911 = vunpack.c.0.s8 %v910
    %v912 = vlaneseq
    %v913 = vshrl.u32 %v912, 7
    %v914 = vsub.s32 %v911, %v913
    %v915 = vrot.slane %v901, %v914
    %v916 = vlaneseq
    %v917 = vshrl.u32 %v916, 7
    %v918 = vsub.s32 0, %v917
    %v919 = vrot.slane %v908, %v918
    %v920 = vlaneseq
    %v921 = vshrl.u32 %v920, 7
    %v922 = vsub.s32 0, %v921
    %v923 = vrot.slane %v915, %v922
    %v926 = vadd.f32 %v885, %v919
    %v927 = vadd.f32 %v886, %v919
    %v928 = vadd.f32 %v887, %v919
    %v929 = vadd.f32 %v888, %v919
    %v930 = vadd.f32 %v889, %v923
    %v931 = vadd.f32 %v890, %v923
    %v932 = vadd.f32 %v891, %v923
    %v933 = vadd.f32 %v892, %v923
    %v943 = vunpack.c.l.s4 1966171168
    %v944 = vunpack.c.0.s8 %v943
    %v945 = vlaneseq
    %v946 = vshrl.u32 %v945, 7
    %v947 = vsub.s32 %v944, %v946
    %v948 = vrot.slane %v926, %v947
    %v949 = vcombine.high %v948, %v948
    %v951 = vunpack.c.l.s4 1966171168
    %v952 = vunpack.c.0.s8 %v951
    %v953 = vlaneseq
    %v954 = vshrl.u32 %v953, 7
    %v955 = vsub.s32 %v952, %v954
    %v956 = vrot.slane %v948, %v955
    %v958 = vunpack.c.l.s4 1966171168
    %v959 = vunpack.c.0.s8 %v958
    %v960 = vlaneseq
    %v961 = vshrl.u32 %v960, 7
    %v962 = vsub.s32 %v959, %v961
    %v963 = vrot.slane %v949, %v962
    %v964 = vcombine.high %v956, %v956
    %v965 = vcombine.high %v963, %v963
    %v967 = vunpack.c.l.s4 1966171168
    %v968 = vunpack.c.0.s8 %v967
    %v969 = vlaneseq
    %v970 = vshrl.u32 %v969, 7
    %v971 = vsub.s32 %v968, %v970
    %v972 = vrot.slane %v927, %v971
    %v973 = vcombine.high %v972, %v972
    %v975 = vunpack.c.l.s4 1966171168
    %v976 = vunpack.c.0.s8 %v975
    %v977 = vlaneseq
    %v978 = vshrl.u32 %v977, 7
    %v979 = vsub.s32 %v976, %v978
    %v980 = vrot.slane %v972, %v979
    %v982 = vunpack.c.l.s4 1966171168
    %v983 = vunpack.c.0.s8 %v982
    %v984 = vlaneseq
    %v985 = vshrl.u32 %v984, 7
    %v986 = vsub.s32 %v983, %v985
    %v987 = vrot.slane %v973, %v986
    %v988 = vcombine.high %v980, %v980
    %v989 = vcombine.high %v987, %v987
    %v991 = vunpack.c.l.s4 1966171168
    %v992 = vunpack.c.0.s8 %v991
    %v993 = vlaneseq
    %v994 = vshrl.u32 %v993, 7
    %v995 = vsub.s32 %v992, %v994
    %v996 = vrot.slane %v928, %v995
    %v997 = vcombine.high %v996, %v996
    %v999 = vunpack.c.l.s4 1966171168
    %v1000 = vunpack.c.0.s8 %v999
    %v1001 = vlaneseq
    %v1002 = vshrl.u32 %v1001, 7
    %v1003 = vsub.s32 %v1000, %v1002
    %v1004 = vrot.slane %v996, %v1003
    %v1006 = vunpack.c.l.s4 1966171168
    %v1007 = vunpack.c.0.s8 %v1006
    %v1008 = vlaneseq
    %v1009 = vshrl.u32 %v1008, 7
    %v1010 = vsub.s32 %v1007, %v1009
    %v1011 = vrot.slane %v997, %v1010
    %v1012 = vcombine.high %v1004, %v1004
    %v1013 = vcombine.high %v1011, %v1011
    %v1015 = vunpack.c.l.s4 1966171168
    %v1016 = vunpack.c.0.s8 %v1015
    %v1017 = vlaneseq
    %v1018 = vshrl.u32 %v1017, 7
    %v1019 = vsub.s32 %v1016, %v1018
    %v1020 = vrot.slane %v929, %v1019
    %v1021 = vcombine.high %v1020, %v1020
    %v1023 = vunpack.c.l.s4 1966171168
    %v1024 = vunpack.c.0.s8 %v1023
    %v1025 = vlaneseq
    %v1026 = vshrl.u32 %v1025, 7
    %v1027 = vsub.s32 %v1024, %v1026
    %v1028 = vrot.slane %v1020, %v1027
    %v1030 = vunpack.c.l.s4 1966171168
    %v1031 = vunpack.c.0.s8 %v1030
    %v1032 = vlaneseq
    %v1033 = vshrl.u32 %v1032, 7
    %v1034 = vsub.s32 %v1031, %v1033
    %v1035 = vrot.slane %v1021, %v1034
    %v1036 = vcombine.high %v1028, %v1028
    %v1037 = vcombine.high %v1035, %v1035
    %v1039 = vunpack.c.l.s4 1966171168
    %v1040 = vunpack.c.0.s8 %v1039
    %v1041 = vlaneseq
    %v1042 = vshrl.u32 %v1041, 7
    %v1043 = vsub.s32 %v1040, %v1042
    %v1044 = vrot.slane %v930, %v1043
    %v1045 = vcombine.high %v1044, %v1044
    %v1047 = vunpack.c.l.s4 1966171168
    %v1048 = vunpack.c.0.s8 %v1047
    %v1049 = vlaneseq
    %v1050 = vshrl.u32 %v1049, 7
    %v1051 = vsub.s32 %v1048, %v1050
    %v1052 = vrot.slane %v1044, %v1051
    %v1054 = vunpack.c.l.s4 1966171168
    %v1055 = vunpack.c.0.s8 %v1054
    %v1056 = vlaneseq
    %v1057 = vshrl.u32 %v1056, 7
    %v1058 = vsub.s32 %v1055, %v1057
    %v1059 = vrot.slane %v1045, %v1058
    %v1060 = vcombine.high %v1052, %v1052
    %v1061 = vcombine.high %v1059, %v1059
    %v1063 = vunpack.c.l.s4 1966171168
    %v1064 = vunpack.c.0.s8 %v1063
    %v1065 = vlaneseq
    %v1066 = vshrl.u32 %v1065, 7
    %v1067 = vsub.s32 %v1064, %v1066
    %v1068 = vrot.slane %v931, %v1067
    %v1069 = vcombine.high %v1068, %v1068
    %v1071 = vunpack.c.l.s4 1966171168
    %v1072 = vunpack.c.0.s8 %v1071
    %v1073 = vlaneseq
    %v1074 = vshrl.u32 %v1073, 7
    %v1075 = vsub.s32 %v1072, %v1074
    %v1076 = vrot.slane %v1068, %v1075
    %v1078 = vunpack.c.l.s4 1966171168
    %v1079 = vunpack.c.0.s8 %v1078
    %v1080 = vlaneseq
    %v1081 = vshrl.u32 %v1080, 7
    %v1082 = vsub.s32 %v1079, %v1081
    %v1083 = vrot.slane %v1069, %v1082
    %v1084 = vcombine.high %v1076, %v1076
    %v1085 = vcombine.high %v1083, %v1083
    %v1087 = vunpack.c.l.s4 1966171168
    %v1088 = vunpack.c.0.s8 %v1087
    %v1089 = vlaneseq
    %v1090 = vshrl.u32 %v1089, 7
    %v1091 = vsub.s32 %v1088, %v1090
    %v1092 = vrot.slane %v932, %v1091
    %v1093 = vcombine.high %v1092, %v1092
    %v1095 = vunpack.c.l.s4 1966171168
    %v1096 = vunpack.c.0.s8 %v1095
    %v1097 = vlaneseq
    %v1098 = vshrl.u32 %v1097, 7
    %v1099 = vsub.s32 %v1096, %v1098
    %v1100 = vrot.slane %v1092, %v1099
    %v1102 = vunpack.c.l.s4 1966171168
    %v1103 = vunpack.c.0.s8 %v1102
    %v1104 = vlaneseq
    %v1105 = vshrl.u32 %v1104, 7
    %v1106 = vsub.s32 %v1103, %v1105
    %v1107 = vrot.slane %v1093, %v1106
    %v1108 = vcombine.high %v1100, %v1100
    %v1109 = vcombine.high %v1107, %v1107
    %v1111 = vunpack.c.l.s4 1966171168
    %v1112 = vunpack.c.0.s8 %v1111
    %v1113 = vlaneseq
    %v1114 = vshrl.u32 %v1113, 7
    %v1115 = vsub.s32 %v1112, %v1114
    %v1116 = vrot.slane %v933, %v1115
    %v1117 = vcombine.high %v1116, %v1116
    %v1119 = vunpack.c.l.s4 1966171168
    %v1120 = vunpack.c.0.s8 %v1119
    %v1121 = vlaneseq
    %v1122 = vshrl.u32 %v1121, 7
    %v1123 = vsub.s32 %v1120, %v1122
    %v1124 = vrot.slane %v1116, %v1123
    %v1126 = vunpack.c.l.s4 1966171168
    %v1127 = vunpack.c.0.s8 %v1126
    %v1128 = vlaneseq
    %v1129 = vshrl.u32 %v1128, 7
    %v1130 = vsub.s32 %v1127, %v1129
    %v1131 = vrot.slane %v1117, %v1130
    %v1132 = vcombine.high %v1124, %v1124
    %v1133 = vcombine.high %v1131, %v1131
    %v1134 = vlaneseq
    %v1135 = vshrl.u32 %v1134, 7
    %v1136 = vsub.s32 0, %v1135
    %v1137 = vrot.slane %v956, %v1136
    %v1138 = vlaneseq
    %v1139 = vshrl.u32 %v1138, 7
    %v1140 = vsub.s32 0, %v1139
    %v1141 = vrot.slane %v963, %v1140
    %v1142 = vlaneseq
    %v1143 = vshrl.u32 %v1142, 7
    %v1144 = vsub.s32 0, %v1143
    %v1145 = vrot.slane %v964, %v1144
    %v1146 = vlaneseq
    %v1147 = vshrl.u32 %v1146, 7
    %v1148 = vsub.s32 0, %v1147
    %v1149 = vrot.slane %v965, %v1148
    %v1150 = vlaneseq
    %v1151 = vshrl.u32 %v1150, 7
    %v1152 = vsub.s32 0, %v1151
    %v1153 = vrot.slane %v980, %v1152
    %v1154 = vlaneseq
    %v1155 = vshrl.u32 %v1154, 7
    %v1156 = vsub.s32 0, %v1155
    %v1157 = vrot.slane %v987, %v1156
    %v1158 = vlaneseq
    %v1159 = vshrl.u32 %v1158, 7
    %v1160 = vsub.s32 0, %v1159
    %v1161 = vrot.slane %v988, %v1160
    %v1162 = vlaneseq
    %v1163 = vshrl.u32 %v1162, 7
    %v1164 = vsub.s32 0, %v1163
    %v1165 = vrot.slane %v989, %v1164
    %v1166 = vlaneseq
    %v1167 = vshrl.u32 %v1166, 7
    %v1168 = vsub.s32 0, %v1167
    %v1169 = vrot.slane %v1004, %v1168
    %v1170 = vlaneseq
    %v1171 = vshrl.u32 %v1170, 7
    %v1172 = vsub.s32 0, %v1171
    %v1173 = vrot.slane %v1011, %v1172
    %v1174 = vlaneseq
    %v1175 = vshrl.u32 %v1174, 7
    %v1176 = vsub.s32 0, %v1175
    %v1177 = vrot.slane %v1012, %v1176
    %v1178 = vlaneseq
    %v1179 = vshrl.u32 %v1178, 7
    %v1180 = vsub.s32 0, %v1179
    %v1181 = vrot.slane %v1013, %v1180
    %v1182 = vlaneseq
    %v1183 = vshrl.u32 %v1182, 7
    %v1184 = vsub.s32 0, %v1183
    %v1185 = vrot.slane %v1028, %v1184
    %v1186 = vlaneseq
    %v1187 = vshrl.u32 %v1186, 7
    %v1188 = vsub.s32 0, %v1187
    %v1189 = vrot.slane %v1035, %v1188
    %v1190 = vlaneseq
    %v1191 = vshrl.u32 %v1190, 7
    %v1192 = vsub.s32 0, %v1191
    %v1193 = vrot.slane %v1036, %v1192
    %v1194 = vlaneseq
    %v1195 = vshrl.u32 %v1194, 7
    %v1196 = vsub.s32 0, %v1195
    %v1197 = vrot.slane %v1037, %v1196
    %v1198 = vlaneseq
    %v1199 = vshrl.u32 %v1198, 7
    %v1200 = vsub.s32 0, %v1199
    %v1201 = vrot.slane %v1052, %v1200
    %v1202 = vlaneseq
    %v1203 = vshrl.u32 %v1202, 7
    %v1204 = vsub.s32 0, %v1203
    %v1205 = vrot.slane %v1059, %v1204
    %v1206 = vlaneseq
    %v1207 = vshrl.u32 %v1206, 7
    %v1208 = vsub.s32 0, %v1207
    %v1209 = vrot.slane %v1060, %v1208
    %v1210 = vlaneseq
    %v1211 = vshrl.u32 %v1210, 7
    %v1212 = vsub.s32 0, %v1211
    %v1213 = vrot.slane %v1061, %v1212
    %v1214 = vlaneseq
    %v1215 = vshrl.u32 %v1214, 7
    %v1216 = vsub.s32 0, %v1215
    %v1217 = vrot.slane %v1076, %v1216
    %v1218 = vlaneseq
    %v1219 = vshrl.u32 %v1218, 7
    %v1220 = vsub.s32 0, %v1219
    %v1221 = vrot.slane %v1083, %v1220
    %v1222 = vlaneseq
    %v1223 = vshrl.u32 %v1222, 7
    %v1224 = vsub.s32 0, %v1223
    %v1225 = vrot.slane %v1084, %v1224
    %v1226 = vlaneseq
    %v1227 = vshrl.u32 %v1226, 7
    %v1228 = vsub.s32 0, %v1227
    %v1229 = vrot.slane %v1085, %v1228
    %v1230 = vlaneseq
    %v1231 = vshrl.u32 %v1230, 7
    %v1232 = vsub.s32 0, %v1231
    %v1233 = vrot.slane %v1100, %v1232
    %v1234 = vlaneseq
    %v1235 = vshrl.u32 %v1234, 7
    %v1236 = vsub.s32 0, %v1235
    %v1237 = vrot.slane %v1107, %v1236
    %v1238 = vlaneseq
    %v1239 = vshrl.u32 %v1238, 7
    %v1240 = vsub.s32 0, %v1239
    %v1241 = vrot.slane %v1108, %v1240
    %v1242 = vlaneseq
    %v1243 = vshrl.u32 %v1242, 7
    %v1244 = vsub.s32 0, %v1243
    %v1245 = vrot.slane %v1109, %v1244
    %v1246 = vlaneseq
    %v1247 = vshrl.u32 %v1246, 7
    %v1248 = vsub.s32 0, %v1247
    %v1249 = vrot.slane %v1124, %v1248
    %v1250 = vlaneseq
    %v1251 = vshrl.u32 %v1250, 7
    %v1252 = vsub.s32 0, %v1251
    %v1253 = vrot.slane %v1131, %v1252
    %v1254 = vlaneseq
    %v1255 = vshrl.u32 %v1254, 7
    %v1256 = vsub.s32 0, %v1255
    %v1257 = vrot.slane %v1132, %v1256
    %v1258 = vlaneseq
    %v1259 = vshrl.u32 %v1258, 7
    %v1260 = vsub.s32 0, %v1259
    %v1261 = vrot.slane %v1133, %v1260
    %v1262 = vcombine.low %v1137, %v1141
    %v1263 = vcombine.low %v1145, %v1149
    %v1265 = vunpack.c.l.s4 1983009808
    %v1266 = vunpack.c.0.s8 %v1265
    %v1267 = vlaneseq
    %v1268 = vshrl.u32 %v1267, 7
    %v1269 = vsub.s32 %v1266, %v1268
    %v1270 = vrot.slane %v1262, %v1269
    %v1272 = vunpack.c.l.s4 1983009808
    %v1273 = vunpack.c.0.s8 %v1272
    %v1274 = vlaneseq
    %v1275 = vshrl.u32 %v1274, 7
    %v1276 = vsub.s32 %v1273, %v1275
    %v1277 = vrot.slane %v1263, %v1276
    %v1278 = vcombine.low %v1270, %v1277
    %v1279 = vcombine.low %v1153, %v1157
    %v1280 = vcombine.low %v1161, %v1165
    %v1282 = vunpack.c.l.s4 1983009808
    %v1283 = vunpack.c.0.s8 %v1282
    %v1284 = vlaneseq
    %v1285 = vshrl.u32 %v1284, 7
    %v1286 = vsub.s32 %v1283, %v1285
    %v1287 = vrot.slane %v1279, %v1286
    %v1289 = vunpack.c.l.s4 1983009808
    %v1290 = vunpack.c.0.s8 %v1289
    %v1291 = vlaneseq
    %v1292 = vshrl.u32 %v1291, 7
    %v1293 = vsub.s32 %v1290, %v1292
    %v1294 = vrot.slane %v1280, %v1293
    %v1295 = vcombine.low %v1287, %v1294
    %v1296 = vcombine.low %v1169, %v1173
    %v1297 = vcombine.low %v1177, %v1181
    %v1299 = vunpack.c.l.s4 1983009808
    %v1300 = vunpack.c.0.s8 %v1299
    %v1301 = vlaneseq
    %v1302 = vshrl.u32 %v1301, 7
    %v1303 = vsub.s32 %v1300, %v1302
    %v1304 = vrot.slane %v1296, %v1303
    %v1306 = vunpack.c.l.s4 1983009808
    %v1307 = vunpack.c.0.s8 %v1306
    %v1308 = vlaneseq
    %v1309 = vshrl.u32 %v1308, 7
    %v1310 = vsub.s32 %v1307, %v1309
    %v1311 = vrot.slane %v1297, %v1310
    %v1312 = vcombine.low %v1304, %v1311
    %v1313 = vcombine.low %v1185, %v1189
    %v1314 = vcombine.low %v1193, %v1197
    %v1316 = vunpack.c.l.s4 1983009808
    %v1317 = vunpack.c.0.s8 %v1316
    %v1318 = vlaneseq
    %v1319 = vshrl.u32 %v1318, 7
    %v1320 = vsub.s32 %v1317, %v1319
    %v1321 = vrot.slane %v1313, %v1320
    %v1323 = vunpack.c.l.s4 1983009808
    %v1324 = vunpack.c.0.s8 %v1323
    %v1325 = vlaneseq
    %v1326 = vshrl.u32 %v1325, 7
    %v1327 = vsub.s32 %v1324, %v1326
    %v1328 = vrot.slane %v1314, %v1327
    %v1329 = vcombine.low %v1321, %v1328
    %v1330 = vcombine.low %v1201, %v1205
    %v1331 = vcombine.low %v1209, %v1213
    %v1333 = vunpack.c.l.s4 1983009808
    %v1334 = vunpack.c.0.s8 %v1333
    %v1335 = vlaneseq
    %v1336 = vshrl.u32 %v1335, 7
    %v1337 = vsub.s32 %v1334, %v1336
    %v1338 = vrot.slane %v1330, %v1337
    %v1340 = vunpack.c.l.s4 1983009808
    %v1341 = vunpack.c.0.s8 %v1340
    %v1342 = vlaneseq
    %v1343 = vshrl.u32 %v1342, 7
    %v1344 = vsub.s32 %v1341, %v1343
    %v1345 = vrot.slane %v1331, %v1344
    %v1346 = vcombine.low %v1338, %v1345
    %v1347 = vcombine.low %v1217, %v1221
    %v1348 = vcombine.low %v1225, %v1229
    %v1350 = vunpack.c.l.s4 1983009808
    %v1351 = vunpack.c.0.s8 %v1350
    %v1352 = vlaneseq
    %v1353 = vshrl.u32 %v1352, 7
    %v1354 = vsub.s32 %v1351, %v1353
    %v1355 = vrot.slane %v1347, %v1354
    %v1357 = vunpack.c.l.s4 1983009808
    %v1358 = vunpack.c.0.s8 %v1357
    %v1359 = vlaneseq
    %v1360 = vshrl.u32 %v1359, 7
    %v1361 = vsub.s32 %v1358, %v1360
    %v1362 = vrot.slane %v1348, %v1361
    %v1363 = vcombine.low %v1355, %v1362
    %v1364 = vcombine.low %v1233, %v1237
    %v1365 = vcombine.low %v1241, %v1245
    %v1367 = vunpack.c.l.s4 1983009808
    %v1368 = vunpack.c.0.s8 %v1367
    %v1369 = vlaneseq
    %v1370 = vshrl.u32 %v1369, 7
    %v1371 = vsub.s32 %v1368, %v1370
    %v1372 = vrot.slane %v1364, %v1371
    %v1374 = vunpack.c.l.s4 1983009808
    %v1375 = vunpack.c.0.s8 %v1374
    %v1376 = vlaneseq
    %v1377 = vshrl.u32 %v1376, 7
    %v1378 = vsub.s32 %v1375, %v1377
    %v1379 = vrot.slane %v1365, %v1378
    %v1380 = vcombine.low %v1372, %v1379
    %v1381 = vcombine.low %v1249, %v1253
    %v1382 = vcombine.low %v1257, %v1261
    %v1384 = vunpack.c.l.s4 1983009808
    %v1385 = vunpack.c.0.s8 %v1384
    %v1386 = vlaneseq
    %v1387 = vshrl.u32 %v1386, 7
    %v1388 = vsub.s32 %v1385, %v1387
    %v1389 = vrot.slane %v1381, %v1388
    %v1391 = vunpack.c.l.s4 1983009808
    %v1392 = vunpack.c.0.s8 %v1391
    %v1393 = vlaneseq
    %v1394 = vshrl.u32 %v1393, 7
    %v1395 = vsub.s32 %v1392, %v1394
    %v1396 = vrot.slane %v1382, %v1395
    %v1397 = vcombine.low %v1389, %v1396
    %v1406 = vlaneseq
    %v1407 = vshrl.u32 %v1406, 7
    %v1408 = vrot.slane %v1278, 7
    %v1409 = vrot.slane %v1295, 7
    %v1410 = vrot.slane %v1312, 7
    %v1411 = vrot.slane %v1329, 7
    %v1412 = vrot.slane %v1346, 7
    %v1413 = vrot.slane %v1363, 7
    %v1414 = vrot.slane %v1380, 7
    %v1415 = vrot.slane %v1397, 7
    %vm1416 = vcmp.lt.s32.totalorder %v1407, 1
    %v1417 = vsel %vm1416, %v1415, 0.0
    %v1418 = vsel %vm1416, %v1415, %v1415
    %v1419 = vsel %vm1416, %v1414, %v1415
    %v1420 = vsel %vm1416, %v1414, %v1414
    %v1421 = vsel %vm1416, %v1413, %v1414
    %v1422 = vsel %vm1416, %v1413, %v1413
    %v1423 = vsel %vm1416, %v1412, %v1413
    %v1424 = vsel %vm1416, %v1412, %v1412
    %v1425 = vsel %vm1416, 0.0, %v1412
    %v1426 = vsel %vm1416, %v1411, 0.0
    %v1427 = vsel %vm1416, %v1411, %v1411
    %v1428 = vsel %vm1416, %v1410, %v1411
    %v1429 = vsel %vm1416, %v1410, %v1410
    %v1430 = vsel %vm1416, %v1409, %v1410
    %v1431 = vsel %vm1416, %v1409, %v1409
    %v1432 = vsel %vm1416, %v1408, %v1409
    %v1433 = vsel %vm1416, %v1408, %v1408
    %v1434 = vsel %vm1416, 0.0, %v1408
    %vm1435 = vcmp.gt.s32.totalorder %v1407, 0
    %v1436 = vsel %vm1435, 1, 0
    %vm1437 = vcmp.eq.s32.totalorder %v1436, 1
    %v1438 = vsel %vm1437, 0.0, 0.0
    %v1439 = vsel %vm1437, %v1434, 0.0
    %v1440 = vsel %vm1437, %v1433, 0.0
    %v1441 = vsel %vm1437, %v1432, 0.0
    %v1442 = vsel %vm1437, %v1431, 0.0
    %v1443 = vsel %vm1437, %v1430, 0.0
    %v1444 = vsel %vm1437, %v1429, 0.0
    %v1445 = vsel %vm1437, %v1428, 0.0
    %v1446 = vsel %vm1437, %v1427, 0.0
    %v1447 = vsel %vm1437, %v1426, 0.0
    %v1448 = vsel %vm1437, %v1425, 0.0
    %v1449 = vsel %vm1437, %v1424, 0.0
    %v1450 = vsel %vm1437, %v1423, 0.0
    %v1451 = vsel %vm1437, %v1422, 0.0
    %v1452 = vsel %vm1437, %v1421, 0.0
    %v1453 = vsel %vm1437, %v1420, 0.0
    %v1454 = vsel %vm1437, %v1419, 0.0
    %v1455 = vsel %vm1437, %v1418, 0.0
    %v1456 = vsel %vm1437, %v1417, 0.0
    %v1457 = vpack.c.bf16 %v1438, %v1438
    %v1458 = vpack.c.bf16 %v1439, %v1439
    %v1459 = vpack.c.bf16 %v1440, %v1440
    %v1460 = vpack.c.bf16 %v1441, %v1441
    %v1461 = vpack.c.bf16 %v1442, %v1442
    %v1462 = vpack.c.bf16 %v1443, %v1443
    %v1463 = vpack.c.bf16 %v1444, %v1444
    %v1464 = vpack.c.bf16 %v1445, %v1445
    %v1465 = vpack.c.bf16 %v1448, %v1448
    %v1466 = vpack.c.bf16 %v1449, %v1449
    %v1467 = vpack.c.bf16 %v1450, %v1450
    %v1468 = vpack.c.bf16 %v1451, %v1451
    %v1469 = vpack.c.bf16 %v1452, %v1452
    %v1470 = vpack.c.bf16 %v1453, %v1453
    %v1471 = vpack.c.bf16 %v1454, %v1454
    %v1472 = vpack.c.bf16 %v1446, %v1446
    %v1473 = vpack.c.bf16 %v1455, %v1455
    %v1474 = vpack.c.bf16 %v1447, %v1447
    %v1475 = vpack.c.bf16 %v1456, %v1456
    %v1495 = vunpack.c.l.b16 %v1457
    %v1496 = vunpack.c.l.b16 %v1458
    %v1497 = vunpack.c.l.b16 %v1459
    %v1498 = vunpack.c.l.b16 %v1460
    %v1499 = vunpack.c.l.b16 %v1461
    %v1500 = vunpack.c.l.b16 %v1462
    %v1501 = vunpack.c.l.b16 %v1463
    %v1502 = vunpack.c.l.b16 %v1464
    %v1503 = vunpack.c.l.b16 %v1472
    %v1504 = vunpack.c.l.b16 %v1474
    %v1505 = vunpack.c.l.b16 %v1465
    %v1506 = vunpack.c.l.b16 %v1466
    %v1507 = vunpack.c.l.b16 %v1467
    %v1508 = vunpack.c.l.b16 %v1468
    %v1509 = vunpack.c.l.b16 %v1469
    %v1510 = vunpack.c.l.b16 %v1470
    %v1511 = vunpack.c.l.b16 %v1471
    %v1512 = vunpack.c.l.b16 %v1473
    %v1513 = vunpack.c.l.b16 %v1475
    %v1514 = vld [vmem:[#allocation4] sm:$0xf]
    %v1515 = vld [vmem:[#allocation4 + $0x4] sm:$0xf]
    %v1516 = vld [vmem:[#allocation4 + $0x8] sm:$0xf]
    %v1517 = vld [vmem:[#allocation4 + $0xc] sm:$0xf]
    %v1518 = vld [vmem:[#allocation4 + $0x10] sm:$0xf]
    %v1519 = vld [vmem:[#allocation4 + $0x14] sm:$0xf]
    %v1520 = vld [vmem:[#allocation4 + $0x18] sm:$0xf]
    %v1521 = vld [vmem:[#allocation4 + $0x1c] sm:$0xf]
    %v1522 = vld [vmem:[#allocation4 + $0x20] sm:$0xf]
    %v1523 = vld [vmem:[#allocation4 + $0x24] sm:$0xf]
    %v1524 = vld [vmem:[#allocation4 + $0x28] sm:$0xf]
    %v1525 = vld [vmem:[#allocation4 + $0x2c] sm:$0xf]
    %v1526 = vld [vmem:[#allocation4 + $0x30] sm:$0xf]
    %v1527 = vld [vmem:[#allocation4 + $0x34] sm:$0xf]
    %v1528 = vld [vmem:[#allocation4 + $0x38] sm:$0xf]
    %v1529 = vld [vmem:[#allocation4 + $0x3c] sm:$0xf]
    %v1530 = vld [vmem:[#allocation4 + $0x40] sm:$0xf]
    %v1531 = vld [vmem:[#allocation4 + $0x44] sm:$0xf]
    %v1532 = vld [vmem:[#allocation4 + $0x48] sm:$0xf]
    %v1533 = vld [vmem:[#allocation4 + $0x4c] sm:$0xf]
    %v1534 = vld [vmem:[#allocation4 + $0x50] sm:$0xf]
    %v1535 = vld [vmem:[#allocation4 + $0x54] sm:$0xf]
    %v1536 = vld [vmem:[#allocation4 + $0x58] sm:$0xf]
    %v1537 = vld [vmem:[#allocation4 + $0x5c] sm:$0xf]
    %v1538 = vld [vmem:[#allocation4 + $0x60] sm:$0xf]
    %v1539 = vld [vmem:[#allocation4 + $0x64] sm:$0xf]
    %v1540 = vld [vmem:[#allocation4 + $0x68] sm:$0xf]
    %v1541 = vld [vmem:[#allocation4 + $0x6c] sm:$0xf]
    %v1542 = vld [vmem:[#allocation4 + $0x70] sm:$0xf]
    %v1543 = vld [vmem:[#allocation4 + $0x74] sm:$0xf]
    %v1544 = vld [vmem:[#allocation4 + $0x78] sm:$0xf]
    %v1545 = vld [vmem:[#allocation4 + $0x7c] sm:$0xf]
    %v1546 = vld [vmem:[#allocation4 + $0x80] sm:$0xf]
    %v1547 = vld [vmem:[#allocation4 + $0x84] sm:$0xf]
    %v1548 = vld [vmem:[#allocation4 + $0x88] sm:$0xf]
    %v1549 = vld [vmem:[#allocation4 + $0x8c] sm:$0xf]
    %v1550 = vld [vmem:[#allocation4 + $0x90] sm:$0xf]
    %v1551 = vld [vmem:[#allocation4 + $0x94] sm:$0xf]
    %v1552 = vld [vmem:[#allocation4 + $0x98] sm:$0xf]
    %v1553 = vld [vmem:[#allocation4 + $0x9c] sm:$0xf]
    %v1554 = vld [vmem:[#allocation4 + $0xa0] sm:$0xf]
    %v1555 = vld [vmem:[#allocation4 + $0xa4] sm:$0xf]
    %v1556 = vld [vmem:[#allocation4 + $0xa8] sm:$0xf]
    %v1557 = vld [vmem:[#allocation4 + $0xac] sm:$0xf]
    %v1558 = vld [vmem:[#allocation4 + $0xb0] sm:$0xf]
    %v1559 = vld [vmem:[#allocation4 + $0xb4] sm:$0xf]
    %v1560 = vld [vmem:[#allocation4 + $0xb8] sm:$0xf]
    %v1561 = vld [vmem:[#allocation4 + $0xbc] sm:$0xf]
    %v1562 = vpack.c.bf16 0.0, 0.0
    %v1563 = vpack.c.bf16 %v1278, %v1278
    %v1564 = vpack.c.bf16 %v1295, %v1295
    %v1565 = vpack.c.bf16 %v1312, %v1312
    %v1566 = vpack.c.bf16 %v1329, %v1329
    %v1567 = vpack.c.bf16 %v1346, %v1346
    %v1568 = vpack.c.bf16 %v1363, %v1363
    %v1569 = vpack.c.bf16 %v1380, %v1380
    %v1570 = vpack.c.bf16 %v1397, %v1397
    %v1580 = vunpack.c.l.b16 %v1562
    %v1581 = vunpack.c.l.b16 %v1563
    %v1582 = vunpack.c.l.b16 %v1564
    %v1583 = vunpack.c.l.b16 %v1565
    %v1584 = vunpack.c.l.b16 %v1566
    %v1585 = vunpack.c.l.b16 %v1567
    %v1586 = vunpack.c.l.b16 %v1568
    %v1587 = vunpack.c.l.b16 %v1569
    %v1588 = vunpack.c.l.b16 %v1570
    %s1589 = scalar_lea.vmem [#allocation4], 192
    %v1590 = vld [vmem:[%s1589] sm:$0xf]
    %v1591 = vld [vmem:[%s1589 + $0x4] sm:$0xf]
    %v1592 = vld [vmem:[%s1589 + $0x8] sm:$0xf]
    %v1593 = vld [vmem:[%s1589 + $0xc] sm:$0xf]
    %v1594 = vld [vmem:[%s1589 + $0x10] sm:$0xf]
    %v1595 = vld [vmem:[%s1589 + $0x14] sm:$0xf]
    %v1596 = vld [vmem:[%s1589 + $0x18] sm:$0xf]
    %v1597 = vld [vmem:[%s1589 + $0x1c] sm:$0xf]
    %v1598 = vld [vmem:[%s1589 + $0x20] sm:$0xf]
    %v1599 = vld [vmem:[%s1589 + $0x24] sm:$0xf]
    %v1600 = vld [vmem:[%s1589 + $0x28] sm:$0xf]
    %v1601 = vld [vmem:[%s1589 + $0x2c] sm:$0xf]
    %v1602 = vld [vmem:[%s1589 + $0x30] sm:$0xf]
    %v1603 = vld [vmem:[%s1589 + $0x34] sm:$0xf]
    %v1604 = vld [vmem:[%s1589 + $0x38] sm:$0xf]
    %v1605 = vld [vmem:[%s1589 + $0x3c] sm:$0xf]
    %v1606 = vld [vmem:[%s1589 + $0x40] sm:$0xf]
    %v1607 = vld [vmem:[%s1589 + $0x44] sm:$0xf]
    %v1608 = vld [vmem:[%s1589 + $0x48] sm:$0xf]
    %v1609 = vld [vmem:[%s1589 + $0x4c] sm:$0xf]
    %v1610 = vld [vmem:[%s1589 + $0x50] sm:$0xf]
    %v1611 = vld [vmem:[%s1589 + $0x54] sm:$0xf]
    %v1612 = vld [vmem:[%s1589 + $0x58] sm:$0xf]
    %v1613 = vld [vmem:[%s1589 + $0x5c] sm:$0xf]
    %v1614 = vld [vmem:[%s1589 + $0x60] sm:$0xf]
    %v1615 = vld [vmem:[%s1589 + $0x64] sm:$0xf]
    %v1616 = vld [vmem:[%s1589 + $0x68] sm:$0xf]
    %v1617 = vld [vmem:[%s1589 + $0x6c] sm:$0xf]
    %v1618 = vld [vmem:[%s1589 + $0x70] sm:$0xf]
    %v1619 = vld [vmem:[%s1589 + $0x74] sm:$0xf]
    %v1620 = vld [vmem:[%s1589 + $0x78] sm:$0xf]
    %v1621 = vld [vmem:[%s1589 + $0x7c] sm:$0xf]
    %v1622 = vld [vmem:[%s1589 + $0x80] sm:$0xf]
    %v1623 = vld [vmem:[%s1589 + $0x84] sm:$0xf]
    %v1624 = vld [vmem:[%s1589 + $0x88] sm:$0xf]
    %v1625 = vld [vmem:[%s1589 + $0x8c] sm:$0xf]
    %v1626 = vld [vmem:[%s1589 + $0x90] sm:$0xf]
    %v1627 = vld [vmem:[%s1589 + $0x94] sm:$0xf]
    %v1628 = vld [vmem:[%s1589 + $0x98] sm:$0xf]
    %v1629 = vld [vmem:[%s1589 + $0x9c] sm:$0xf]
    %v1630 = vld [vmem:[%s1589 + $0xa0] sm:$0xf]
    %v1631 = vld [vmem:[%s1589 + $0xa4] sm:$0xf]
    %v1632 = vld [vmem:[%s1589 + $0xa8] sm:$0xf]
    %v1633 = vld [vmem:[%s1589 + $0xac] sm:$0xf]
    %v1634 = vld [vmem:[%s1589 + $0xb0] sm:$0xf]
    %v1635 = vld [vmem:[%s1589 + $0xb4] sm:$0xf]
    %v1636 = vld [vmem:[%s1589 + $0xb8] sm:$0xf]
    %v1637 = vld [vmem:[%s1589 + $0xbc] sm:$0xf]
    %v1638 = vpack.c.b16 %v1581, %v1580
    %v1639 = vpack.c.b16 %v1581, %v1581
    %v1640 = vpack.c.b16 %v1582, %v1581
    %v1641 = vpack.c.b16 %v1582, %v1582
    %v1642 = vpack.c.b16 %v1583, %v1582
    %v1643 = vpack.c.b16 %v1583, %v1583
    %v1644 = vpack.c.b16 %v1584, %v1583
    %v1645 = vpack.c.b16 %v1584, %v1584
    %v1646 = vpack.c.b16 %v1580, %v1584
    %v1647 = vpack.c.b16 %v1585, %v1580
    %v1648 = vpack.c.b16 %v1585, %v1585
    %v1649 = vpack.c.b16 %v1586, %v1585
    %v1650 = vpack.c.b16 %v1586, %v1586
    %v1651 = vpack.c.b16 %v1587, %v1586
    %v1652 = vpack.c.b16 %v1587, %v1587
    %v1653 = vpack.c.b16 %v1588, %v1587
    %v1654 = vpack.c.b16 %v1588, %v1588
    %v1655 = vpack.c.b16 %v1580, %v1588
    %v1722 = vunpack.c.l.b16 %v1590
    %v1723 = vunpack.c.l.b16 %v1591
    %v1724 = vunpack.c.l.b16 %v1592
    %v1725 = vunpack.c.l.b16 %v1593
    %v1726 = vunpack.c.l.b16 %v1594
    %v1727 = vunpack.c.l.b16 %v1595
    %v1728 = vunpack.c.l.b16 %v1596
    %v1729 = vunpack.c.l.b16 %v1597
    %v1730 = vunpack.c.l.b16 %v1598
    %v1731 = vunpack.c.l.b16 %v1599
    %v1732 = vunpack.c.l.b16 %v1600
    %v1733 = vunpack.c.l.b16 %v1601
    %v1734 = vunpack.c.l.b16 %v1602
    %v1735 = vunpack.c.l.b16 %v1603
    %v1736 = vunpack.c.l.b16 %v1604
    %v1737 = vunpack.c.l.b16 %v1605
    %v1738 = vunpack.c.l.b16 %v1606
    %v1739 = vunpack.c.l.b16 %v1607
    %v1740 = vunpack.c.l.b16 %v1608
    %v1741 = vunpack.c.l.b16 %v1609
    %v1742 = vunpack.c.l.b16 %v1610
    %v1743 = vunpack.c.l.b16 %v1611
    %v1744 = vunpack.c.l.b16 %v1612
    %v1745 = vunpack.c.l.b16 %v1613
    %v1746 = vunpack.c.l.b16 %v1614
    %v1747 = vunpack.c.l.b16 %v1615
    %v1748 = vunpack.c.l.b16 %v1616
    %v1749 = vunpack.c.l.b16 %v1617
    %v1750 = vunpack.c.l.b16 %v1618
    %v1751 = vunpack.c.l.b16 %v1619
    %v1752 = vunpack.c.l.b16 %v1620
    %v1753 = vunpack.c.l.b16 %v1621
    %v1754 = vunpack.c.l.b16 %v1622
    %v1755 = vunpack.c.l.b16 %v1623
    %v1756 = vunpack.c.l.b16 %v1624
    %v1757 = vunpack.c.l.b16 %v1625
    %v1758 = vunpack.c.l.b16 %v1626
    %v1759 = vunpack.c.l.b16 %v1627
    %v1760 = vunpack.c.l.b16 %v1628
    %v1761 = vunpack.c.l.b16 %v1629
    %v1762 = vunpack.c.l.b16 %v1630
    %v1763 = vunpack.c.l.b16 %v1631
    %v1764 = vunpack.c.l.b16 %v1632
    %v1765 = vunpack.c.l.b16 %v1633
    %v1766 = vunpack.c.l.b16 %v1634
    %v1767 = vunpack.c.l.b16 %v1635
    %v1768 = vunpack.c.l.b16 %v1636
    %v1769 = vunpack.c.l.b16 %v1637
    %v1770 = vpack.c.b16 %v1723, %v1722
    %v1771 = vpack.c.b16 %v1725, %v1724
    %v1772 = vpack.c.b16 %v1727, %v1726
    %v1773 = vpack.c.b16 %v1729, %v1728
    %v1774 = vpack.c.b16 %v1731, %v1730
    %v1775 = vpack.c.b16 %v1733, %v1732
    %v1776 = vpack.c.b16 %v1735, %v1734
    %v1777 = vpack.c.b16 %v1737, %v1736
    %v1778 = vpack.c.b16 %v1739, %v1738
    %v1779 = vpack.c.b16 %v1741, %v1740
    %v1780 = vpack.c.b16 %v1743, %v1742
    %v1781 = vpack.c.b16 %v1745, %v1744
    %v1782 = vpack.c.b16 %v1747, %v1746
    %v1783 = vpack.c.b16 %v1749, %v1748
    %v1784 = vpack.c.b16 %v1751, %v1750
    %v1785 = vpack.c.b16 %v1753, %v1752
    %v1786 = vpack.c.b16 %v1755, %v1754
    %v1787 = vpack.c.b16 %v1757, %v1756
    %v1788 = vpack.c.b16 %v1759, %v1758
    %v1789 = vpack.c.b16 %v1761, %v1760
    %v1790 = vpack.c.b16 %v1763, %v1762
    %v1791 = vpack.c.b16 %v1765, %v1764
    %v1792 = vpack.c.b16 %v1767, %v1766
    %v1793 = vpack.c.b16 %v1769, %v1768
    %1818 = vmatprep.subr.bf16.mxu0 0
    %1819 = vmatpush1.bf16.msra.mxu0 %v1777
    %1820 = vmatprep.subr.bf16.mxu0 0
    %1821 = vmatpush1.bf16.msra.mxu0 %v1776
    %1822 = vmatprep.subr.bf16.mxu0 0
    %1823 = vmatpush1.bf16.msra.mxu0 %v1775
    %1824 = vmatprep.subr.bf16.mxu0 0
    %1825 = vmatpush1.bf16.msra.mxu0 %v1774
    %1826 = vmatprep.subr.bf16.mxu0 0
    %1827 = vmatpush1.bf16.msra.mxu0 %v1773
    %1828 = vmatprep.subr.bf16.mxu0 0
    %1829 = vmatpush1.bf16.msra.mxu0 %v1772
    %1830 = vmatprep.subr.bf16.mxu0 0
    %1831 = vmatpush1.bf16.msra.mxu0 %v1771
    %1832 = vmatprep.subr.bf16.mxu0 0
    %1833 = vmatpush1.bf16.msra.mxu0 %v1770
    %1834 = vmatprep.subr.bf16.mxu0 0
    %1835 = vmatpush2.bf16.msra.mxu0 %v1785
    %1836 = vmatprep.subr.bf16.mxu0 0
    %1837 = vmatpush2.bf16.msra.mxu0 %v1784
    %1838 = vmatprep.subr.bf16.mxu0 0
    %1839 = vmatpush2.bf16.msra.mxu0 %v1783
    %1840 = vmatprep.subr.bf16.mxu0 0
    %1841 = vmatpush2.bf16.msra.mxu0 %v1782
    %1842 = vmatprep.subr.bf16.mxu0 0
    %1843 = vmatpush2.bf16.msra.mxu0 %v1781
    %1844 = vmatprep.subr.bf16.mxu0 0
    %1845 = vmatpush2.bf16.msra.mxu0 %v1780
    %1846 = vmatprep.subr.bf16.mxu0 0
    %1847 = vmatpush2.bf16.msra.mxu0 %v1779
    %1848 = vmatprep.subr.bf16.mxu0 0
    %1849 = vmatpush2.bf16.msra.mxu0 %v1778
    %1850 = vmatprep.mubr.bf16.mxu0 %v1639
    %1851 = vmatmul.mubr.bf16.gmra.mxu0 %v1638
    %v1852 = vpop.f32.mrf.mxu0
    %v1853 = vadd.f32 0.0, %v1852
    %v1854 = vpop.f32.mrf.mxu0
    %v1855 = vpop.f32.mrf.mxu0
    %v1856 = vadd.f32 0.0, %v1855
    %v1857 = vpop.f32.mrf.mxu0
    %1858 = vmatprep.mubr.bf16.mxu0 %v1641
    %1859 = vmatmul.mubr.bf16.gmra.mxu0 %v1640
    %v1860 = vpop.f32.mrf.mxu0
    %v1861 = vadd.f32 0.0, %v1860
    %v1862 = vpop.f32.mrf.mxu0
    %v1863 = vpop.f32.mrf.mxu0
    %v1864 = vadd.f32 0.0, %v1863
    %v1865 = vpop.f32.mrf.mxu0
    %1866 = vmatprep.mubr.bf16.mxu0 %v1643
    %1867 = vmatmul.mubr.bf16.gmra.mxu0 %v1642
    %v1868 = vpop.f32.mrf.mxu0
    %v1869 = vadd.f32 0.0, %v1868
    %v1870 = vpop.f32.mrf.mxu0
    %v1871 = vpop.f32.mrf.mxu0
    %v1872 = vadd.f32 0.0, %v1871
    %v1873 = vpop.f32.mrf.mxu0
    %1874 = vmatprep.mubr.bf16.mxu0 %v1645
    %1875 = vmatmul.mubr.bf16.gmra.mxu0 %v1644
    %v1876 = vpop.f32.mrf.mxu0
    %v1877 = vadd.f32 0.0, %v1876
    %v1878 = vpop.f32.mrf.mxu0
    %v1879 = vpop.f32.mrf.mxu0
    %v1880 = vadd.f32 0.0, %v1879
    %v1881 = vpop.f32.mrf.mxu0
    %1882 = vmatprep.mubr.bf16.mxu0 %v1648
    %1883 = vmatmul.mubr.bf16.gmra.mxu0 %v1647
    %v1884 = vpop.f32.mrf.mxu0
    %v1885 = vadd.f32 0.0, %v1884
    %v1886 = vpop.f32.mrf.mxu0
    %v1887 = vpop.f32.mrf.mxu0
    %v1888 = vadd.f32 0.0, %v1887
    %v1889 = vpop.f32.mrf.mxu0
    %1890 = vmatprep.mubr.bf16.mxu0 %v1650
    %1891 = vmatmul.mubr.bf16.gmra.mxu0 %v1649
    %v1892 = vpop.f32.mrf.mxu0
    %v1893 = vadd.f32 0.0, %v1892
    %v1894 = vpop.f32.mrf.mxu0
    %v1895 = vpop.f32.mrf.mxu0
    %v1896 = vadd.f32 0.0, %v1895
    %v1897 = vpop.f32.mrf.mxu0
    %1898 = vmatprep.mubr.bf16.mxu0 %v1652
    %1899 = vmatmul.mubr.bf16.gmra.mxu0 %v1651
    %v1900 = vpop.f32.mrf.mxu0
    %v1901 = vadd.f32 0.0, %v1900
    %v1902 = vpop.f32.mrf.mxu0
    %v1903 = vpop.f32.mrf.mxu0
    %v1904 = vadd.f32 0.0, %v1903
    %v1905 = vpop.f32.mrf.mxu0
    %1906 = vmatprep.mubr.bf16.mxu0 %v1654
    %1907 = vmatmul.mubr.bf16.gmra.mxu0 %v1653
    %v1908 = vpop.f32.mrf.mxu0
    %v1909 = vadd.f32 0.0, %v1908
    %v1910 = vpop.f32.mrf.mxu0
    %v1911 = vpop.f32.mrf.mxu0
    %v1912 = vadd.f32 0.0, %v1911
    %v1913 = vpop.f32.mrf.mxu0
    %1914 = vdwg.mxu0
    %1915 = vmatprep.subr.bf16.mxu0 0
    %1916 = vmatpush1.bf16.msra.mxu0 %v1793
    %1917 = vmatprep.subr.bf16.mxu0 0
    %1918 = vmatpush1.bf16.msra.mxu0 %v1792
    %1919 = vmatprep.subr.bf16.mxu0 0
    %1920 = vmatpush1.bf16.msra.mxu0 %v1791
    %1921 = vmatprep.subr.bf16.mxu0 0
    %1922 = vmatpush1.bf16.msra.mxu0 %v1790
    %1923 = vmatprep.subr.bf16.mxu0 0
    %1924 = vmatpush1.bf16.msra.mxu0 %v1789
    %1925 = vmatprep.subr.bf16.mxu0 0
    %1926 = vmatpush1.bf16.msra.mxu0 %v1788
    %1927 = vmatprep.subr.bf16.mxu0 0
    %1928 = vmatpush1.bf16.msra.mxu0 %v1787
    %1929 = vmatprep.subr.bf16.mxu0 0
    %1930 = vmatpush1.bf16.msra.mxu0 %v1786
    %1931 = vmatprep.subr.bf16.mxu0 0
    %1932 = vmatpush2.bf16.msra.mxu0 0
    %1933 = vmatprep.subr.bf16.mxu0 0
    %1934 = vmatpush2.bf16.msra.mxu0 0
    %1935 = vmatprep.subr.bf16.mxu0 0
    %1936 = vmatpush2.bf16.msra.mxu0 0
    %1937 = vmatprep.subr.bf16.mxu0 0
    %1938 = vmatpush2.bf16.msra.mxu0 0
    %1939 = vmatprep.subr.bf16.mxu0 0
    %1940 = vmatpush2.bf16.msra.mxu0 0
    %1941 = vmatprep.subr.bf16.mxu0 0
    %1942 = vmatpush2.bf16.msra.mxu0 0
    %1943 = vmatprep.subr.bf16.mxu0 0
    %1944 = vmatpush2.bf16.msra.mxu0 0
    %1945 = vmatprep.subr.bf16.mxu0 0
    %1946 = vmatpush2.bf16.msra.mxu0 0
    %1947 = vmatprep.mubr.bf16.mxu0 0
    %1948 = vmatmul.mubr.bf16.gmra.mxu0 %v1640
    %v1949 = vpop.f32.mrf.mxu0
    %v1950 = vadd.f32 %v1853, %v1949
    %v1951 = vpop.f32.mrf.mxu0
    %v1952 = vpop.f32.mrf.mxu0
    %v1953 = vadd.f32 %v1856, %v1952
    %v1954 = vpop.f32.mrf.mxu0
    %1955 = vmatprep.mubr.bf16.mxu0 0
    %1956 = vmatmul.mubr.bf16.gmra.mxu0 %v1642
    %v1957 = vpop.f32.mrf.mxu0
    %v1958 = vadd.f32 %v1861, %v1957
    %v1959 = vpop.f32.mrf.mxu0
    %v1960 = vpop.f32.mrf.mxu0
    %v1961 = vadd.f32 %v1864, %v1960
    %v1962 = vpop.f32.mrf.mxu0
    %1963 = vmatprep.mubr.bf16.mxu0 0
    %1964 = vmatmul.mubr.bf16.gmra.mxu0 %v1644
    %v1965 = vpop.f32.mrf.mxu0
    %v1966 = vadd.f32 %v1869, %v1965
    %v1967 = vpop.f32.mrf.mxu0
    %v1968 = vpop.f32.mrf.mxu0
    %v1969 = vadd.f32 %v1872, %v1968
    %v1970 = vpop.f32.mrf.mxu0
    %1971 = vmatprep.mubr.bf16.mxu0 0
    %1972 = vmatmul.mubr.bf16.gmra.mxu0 %v1646
    %v1973 = vpop.f32.mrf.mxu0
    %v1974 = vadd.f32 %v1877, %v1973
    %v1975 = vpop.f32.mrf.mxu0
    %v1976 = vpop.f32.mrf.mxu0
    %v1977 = vadd.f32 %v1880, %v1976
    %v1978 = vpop.f32.mrf.mxu0
    %1979 = vmatprep.mubr.bf16.mxu0 0
    %1980 = vmatmul.mubr.bf16.gmra.mxu0 %v1649
    %v1981 = vpop.f32.mrf.mxu0
    %v1982 = vadd.f32 %v1885, %v1981
    %v1983 = vpop.f32.mrf.mxu0
    %v1984 = vpop.f32.mrf.mxu0
    %v1985 = vadd.f32 %v1888, %v1984
    %v1986 = vpop.f32.mrf.mxu0
    %1987 = vmatprep.mubr.bf16.mxu0 0
    %1988 = vmatmul.mubr.bf16.gmra.mxu0 %v1651
    %v1989 = vpop.f32.mrf.mxu0
    %v1990 = vadd.f32 %v1893, %v1989
    %v1991 = vpop.f32.mrf.mxu0
    %v1992 = vpop.f32.mrf.mxu0
    %v1993 = vadd.f32 %v1896, %v1992
    %v1994 = vpop.f32.mrf.mxu0
    %1995 = vmatprep.mubr.bf16.mxu0 0
    %1996 = vmatmul.mubr.bf16.gmra.mxu0 %v1653
    %v1997 = vpop.f32.mrf.mxu0
    %v1998 = vadd.f32 %v1901, %v1997
    %v1999 = vpop.f32.mrf.mxu0
    %v2000 = vpop.f32.mrf.mxu0
    %v2001 = vadd.f32 %v1904, %v2000
    %v2002 = vpop.f32.mrf.mxu0
    %2003 = vmatprep.mubr.bf16.mxu0 0
    %2004 = vmatmul.mubr.bf16.gmra.mxu0 %v1655
    %v2005 = vpop.f32.mrf.mxu0
    %v2006 = vadd.f32 %v1909, %v2005
    %v2007 = vpop.f32.mrf.mxu0
    %v2008 = vpop.f32.mrf.mxu0
    %v2009 = vadd.f32 %v1912, %v2008
    %v2010 = vpop.f32.mrf.mxu0
    %2011 = vdwg.mxu0
    %v2012 = vpack.c.b16 %v1496, %v1495
    %v2013 = vpack.c.b16 %v1497, %v1496
    %v2014 = vpack.c.b16 %v1498, %v1497
    %v2015 = vpack.c.b16 %v1499, %v1498
    %v2016 = vpack.c.b16 %v1500, %v1499
    %v2017 = vpack.c.b16 %v1501, %v1500
    %v2018 = vpack.c.b16 %v1502, %v1501
    %v2019 = vpack.c.b16 %v1503, %v1502
    %v2020 = vpack.c.b16 %v1504, %v1503
    %v2021 = vpack.c.b16 %v1505, %v1495
    %v2022 = vpack.c.b16 %v1506, %v1505
    %v2023 = vpack.c.b16 %v1507, %v1506
    %v2024 = vpack.c.b16 %v1508, %v1507
    %v2025 = vpack.c.b16 %v1509, %v1508
    %v2026 = vpack.c.b16 %v1510, %v1509
    %v2027 = vpack.c.b16 %v1511, %v1510
    %v2028 = vpack.c.b16 %v1512, %v1511
    %v2029 = vpack.c.b16 %v1513, %v1512
    %v2096 = vunpack.c.l.b16 %v1514
    %v2097 = vunpack.c.l.b16 %v1515
    %v2098 = vunpack.c.l.b16 %v1516
    %v2099 = vunpack.c.l.b16 %v1517
    %v2100 = vunpack.c.l.b16 %v1518
    %v2101 = vunpack.c.l.b16 %v1519
    %v2102 = vunpack.c.l.b16 %v1520
    %v2103 = vunpack.c.l.b16 %v1521
    %v2104 = vunpack.c.l.b16 %v1522
    %v2105 = vunpack.c.l.b16 %v1523
    %v2106 = vunpack.c.l.b16 %v1524
    %v2107 = vunpack.c.l.b16 %v1525
    %v2108 = vunpack.c.l.b16 %v1526
    %v2109 = vunpack.c.l.b16 %v1527
    %v2110 = vunpack.c.l.b16 %v1528
    %v2111 = vunpack.c.l.b16 %v1529
    %v2112 = vunpack.c.l.b16 %v1530
    %v2113 = vunpack.c.l.b16 %v1531
    %v2114 = vunpack.c.l.b16 %v1532
    %v2115 = vunpack.c.l.b16 %v1533
    %v2116 = vunpack.c.l.b16 %v1534
    %v2117 = vunpack.c.l.b16 %v1535
    %v2118 = vunpack.c.l.b16 %v1536
    %v2119 = vunpack.c.l.b16 %v1537
    %v2120 = vunpack.c.l.b16 %v1538
    %v2121 = vunpack.c.l.b16 %v1539
    %v2122 = vunpack.c.l.b16 %v1540
    %v2123 = vunpack.c.l.b16 %v1541
    %v2124 = vunpack.c.l.b16 %v1542
    %v2125 = vunpack.c.l.b16 %v1543
    %v2126 = vunpack.c.l.b16 %v1544
    %v2127 = vunpack.c.l.b16 %v1545
    %v2128 = vunpack.c.l.b16 %v1546
    %v2129 = vunpack.c.l.b16 %v1547
    %v2130 = vunpack.c.l.b16 %v1548
    %v2131 = vunpack.c.l.b16 %v1549
    %v2132 = vunpack.c.l.b16 %v1550
    %v2133 = vunpack.c.l.b16 %v1551
    %v2134 = vunpack.c.l.b16 %v1552
    %v2135 = vunpack.c.l.b16 %v1553
    %v2136 = vunpack.c.l.b16 %v1554
    %v2137 = vunpack.c.l.b16 %v1555
    %v2138 = vunpack.c.l.b16 %v1556
    %v2139 = vunpack.c.l.b16 %v1557
    %v2140 = vunpack.c.l.b16 %v1558
    %v2141 = vunpack.c.l.b16 %v1559
    %v2142 = vunpack.c.l.b16 %v1560
    %v2143 = vunpack.c.l.b16 %v1561
    %v2144 = vpack.c.b16 %v2097, %v2096
    %v2145 = vpack.c.b16 %v2099, %v2098
    %v2146 = vpack.c.b16 %v2101, %v2100
    %v2147 = vpack.c.b16 %v2103, %v2102
    %v2148 = vpack.c.b16 %v2105, %v2104
    %v2149 = vpack.c.b16 %v2107, %v2106
    %v2150 = vpack.c.b16 %v2109, %v2108
    %v2151 = vpack.c.b16 %v2111, %v2110
    %v2152 = vpack.c.b16 %v2113, %v2112
    %v2153 = vpack.c.b16 %v2115, %v2114
    %v2154 = vpack.c.b16 %v2117, %v2116
    %v2155 = vpack.c.b16 %v2119, %v2118
    %v2156 = vpack.c.b16 %v2121, %v2120
    %v2157 = vpack.c.b16 %v2123, %v2122
    %v2158 = vpack.c.b16 %v2125, %v2124
    %v2159 = vpack.c.b16 %v2127, %v2126
    %v2160 = vpack.c.b16 %v2129, %v2128
    %v2161 = vpack.c.b16 %v2131, %v2130
    %v2162 = vpack.c.b16 %v2133, %v2132
    %v2163 = vpack.c.b16 %v2135, %v2134
    %v2164 = vpack.c.b16 %v2137, %v2136
    %v2165 = vpack.c.b16 %v2139, %v2138
    %v2166 = vpack.c.b16 %v2141, %v2140
    %v2167 = vpack.c.b16 %v2143, %v2142
    %2192 = vmatprep.subr.bf16.mxu0 0
    %2193 = vmatpush1.bf16.msra.mxu0 %v2151
    %2194 = vmatprep.subr.bf16.mxu0 0
    %2195 = vmatpush1.bf16.msra.mxu0 %v2150
    %2196 = vmatprep.subr.bf16.mxu0 0
    %2197 = vmatpush1.bf16.msra.mxu0 %v2149
    %2198 = vmatprep.subr.bf16.mxu0 0
    %2199 = vmatpush1.bf16.msra.mxu0 %v2148
    %2200 = vmatprep.subr.bf16.mxu0 0
    %2201 = vmatpush1.bf16.msra.mxu0 %v2147
    %2202 = vmatprep.subr.bf16.mxu0 0
    %2203 = vmatpush1.bf16.msra.mxu0 %v2146
    %2204 = vmatprep.subr.bf16.mxu0 0
    %2205 = vmatpush1.bf16.msra.mxu0 %v2145
    %2206 = vmatprep.subr.bf16.mxu0 0
    %2207 = vmatpush1.bf16.msra.mxu0 %v2144
    %2208 = vmatprep.subr.bf16.mxu0 0
    %2209 = vmatpush2.bf16.msra.mxu0 %v2159
    %2210 = vmatprep.subr.bf16.mxu0 0
    %2211 = vmatpush2.bf16.msra.mxu0 %v2158
    %2212 = vmatprep.subr.bf16.mxu0 0
    %2213 = vmatpush2.bf16.msra.mxu0 %v2157
    %2214 = vmatprep.subr.bf16.mxu0 0
    %2215 = vmatpush2.bf16.msra.mxu0 %v2156
    %2216 = vmatprep.subr.bf16.mxu0 0
    %2217 = vmatpush2.bf16.msra.mxu0 %v2155
    %2218 = vmatprep.subr.bf16.mxu0 0
    %2219 = vmatpush2.bf16.msra.mxu0 %v2154
    %2220 = vmatprep.subr.bf16.mxu0 0
    %2221 = vmatpush2.bf16.msra.mxu0 %v2153
    %2222 = vmatprep.subr.bf16.mxu0 0
    %2223 = vmatpush2.bf16.msra.mxu0 %v2152
    %2224 = vmatprep.mubr.bf16.mxu0 %v2013
    %2225 = vmatmul.mubr.bf16.gmra.mxu0 %v2012
    %v2226 = vpop.f32.mrf.mxu0
    %v2227 = vadd.f32 %v1950, %v2226
    %v2228 = vpop.f32.mrf.mxu0
    %v2229 = vpop.f32.mrf.mxu0
    %v2230 = vadd.f32 %v1953, %v2229
    %v2231 = vpop.f32.mrf.mxu0
    %2232 = vmatprep.mubr.bf16.mxu0 %v2015
    %2233 = vmatmul.mubr.bf16.gmra.mxu0 %v2014
    %v2234 = vpop.f32.mrf.mxu0
    %v2235 = vadd.f32 %v1958, %v2234
    %v2236 = vpop.f32.mrf.mxu0
    %v2237 = vpop.f32.mrf.mxu0
    %v2238 = vadd.f32 %v1961, %v2237
    %v2239 = vpop.f32.mrf.mxu0
    %2240 = vmatprep.mubr.bf16.mxu0 %v2017
    %2241 = vmatmul.mubr.bf16.gmra.mxu0 %v2016
    %v2242 = vpop.f32.mrf.mxu0
    %v2243 = vadd.f32 %v1966, %v2242
    %v2244 = vpop.f32.mrf.mxu0
    %v2245 = vpop.f32.mrf.mxu0
    %v2246 = vadd.f32 %v1969, %v2245
    %v2247 = vpop.f32.mrf.mxu0
    %2248 = vmatprep.mubr.bf16.mxu0 %v2019
    %2249 = vmatmul.mubr.bf16.gmra.mxu0 %v2018
    %v2250 = vpop.f32.mrf.mxu0
    %v2251 = vadd.f32 %v1974, %v2250
    %v2252 = vpop.f32.mrf.mxu0
    %v2253 = vpop.f32.mrf.mxu0
    %v2254 = vadd.f32 %v1977, %v2253
    %v2255 = vpop.f32.mrf.mxu0
    %2256 = vmatprep.mubr.bf16.mxu0 %v2022
    %2257 = vmatmul.mubr.bf16.gmra.mxu0 %v2021
    %v2258 = vpop.f32.mrf.mxu0
    %v2259 = vadd.f32 %v1982, %v2258
    %v2260 = vpop.f32.mrf.mxu0
    %v2261 = vpop.f32.mrf.mxu0
    %v2262 = vadd.f32 %v1985, %v2261
    %v2263 = vpop.f32.mrf.mxu0
    %2264 = vmatprep.mubr.bf16.mxu0 %v2024
    %2265 = vmatmul.mubr.bf16.gmra.mxu0 %v2023
    %v2266 = vpop.f32.mrf.mxu0
    %v2267 = vadd.f32 %v1990, %v2266
    %v2268 = vpop.f32.mrf.mxu0
    %v2269 = vpop.f32.mrf.mxu0
    %v2270 = vadd.f32 %v1993, %v2269
    %v2271 = vpop.f32.mrf.mxu0
    %2272 = vmatprep.mubr.bf16.mxu0 %v2026
    %2273 = vmatmul.mubr.bf16.gmra.mxu0 %v2025
    %v2274 = vpop.f32.mrf.mxu0
    %v2275 = vadd.f32 %v1998, %v2274
    %v2276 = vpop.f32.mrf.mxu0
    %v2277 = vpop.f32.mrf.mxu0
    %v2278 = vadd.f32 %v2001, %v2277
    %v2279 = vpop.f32.mrf.mxu0
    %2280 = vmatprep.mubr.bf16.mxu0 %v2028
    %2281 = vmatmul.mubr.bf16.gmra.mxu0 %v2027
    %v2282 = vpop.f32.mrf.mxu0
    %v2283 = vadd.f32 %v2006, %v2282
    %v2284 = vpop.f32.mrf.mxu0
    %v2285 = vpop.f32.mrf.mxu0
    %v2286 = vadd.f32 %v2009, %v2285
    %v2287 = vpop.f32.mrf.mxu0
    %2288 = vdwg.mxu0
    %2289 = vmatprep.subr.bf16.mxu0 0
    %2290 = vmatpush1.bf16.msra.mxu0 %v2167
    %2291 = vmatprep.subr.bf16.mxu0 0
    %2292 = vmatpush1.bf16.msra.mxu0 %v2166
    %2293 = vmatprep.subr.bf16.mxu0 0
    %2294 = vmatpush1.bf16.msra.mxu0 %v2165
    %2295 = vmatprep.subr.bf16.mxu0 0
    %2296 = vmatpush1.bf16.msra.mxu0 %v2164
    %2297 = vmatprep.subr.bf16.mxu0 0
    %2298 = vmatpush1.bf16.msra.mxu0 %v2163
    %2299 = vmatprep.subr.bf16.mxu0 0
    %2300 = vmatpush1.bf16.msra.mxu0 %v2162
    %2301 = vmatprep.subr.bf16.mxu0 0
    %2302 = vmatpush1.bf16.msra.mxu0 %v2161
    %2303 = vmatprep.subr.bf16.mxu0 0
    %2304 = vmatpush1.bf16.msra.mxu0 %v2160
    %2305 = vmatprep.subr.bf16.mxu0 0
    %2306 = vmatpush2.bf16.msra.mxu0 0
    %2307 = vmatprep.subr.bf16.mxu0 0
    %2308 = vmatpush2.bf16.msra.mxu0 0
    %2309 = vmatprep.subr.bf16.mxu0 0
    %2310 = vmatpush2.bf16.msra.mxu0 0
    %2311 = vmatprep.subr.bf16.mxu0 0
    %2312 = vmatpush2.bf16.msra.mxu0 0
    %2313 = vmatprep.subr.bf16.mxu0 0
    %2314 = vmatpush2.bf16.msra.mxu0 0
    %2315 = vmatprep.subr.bf16.mxu0 0
    %2316 = vmatpush2.bf16.msra.mxu0 0
    %2317 = vmatprep.subr.bf16.mxu0 0
    %2318 = vmatpush2.bf16.msra.mxu0 0
    %2319 = vmatprep.subr.bf16.mxu0 0
    %2320 = vmatpush2.bf16.msra.mxu0 0
    %2321 = vmatprep.mubr.bf16.mxu0 0
    %2322 = vmatmul.mubr.bf16.gmra.mxu0 %v2014
    %v2323 = vpop.f32.mrf.mxu0
    %v2324 = vadd.f32 %v2227, %v2323
    %v2325 = vpop.f32.mrf.mxu0
    %v2326 = vpop.f32.mrf.mxu0
    %v2327 = vadd.f32 %v2230, %v2326
    %v2328 = vpop.f32.mrf.mxu0
    %2329 = vmatprep.mubr.bf16.mxu0 0
    %2330 = vmatmul.mubr.bf16.gmra.mxu0 %v2016
    %v2331 = vpop.f32.mrf.mxu0
    %v2332 = vadd.f32 %v2235, %v2331
    %v2333 = vpop.f32.mrf.mxu0
    %v2334 = vpop.f32.mrf.mxu0
    %v2335 = vadd.f32 %v2238, %v2334
    %v2336 = vpop.f32.mrf.mxu0
    %2337 = vmatprep.mubr.bf16.mxu0 0
    %2338 = vmatmul.mubr.bf16.gmra.mxu0 %v2018
    %v2339 = vpop.f32.mrf.mxu0
    %v2340 = vadd.f32 %v2243, %v2339
    %v2341 = vpop.f32.mrf.mxu0
    %v2342 = vpop.f32.mrf.mxu0
    %v2343 = vadd.f32 %v2246, %v2342
    %v2344 = vpop.f32.mrf.mxu0
    %2345 = vmatprep.mubr.bf16.mxu0 0
    %2346 = vmatmul.mubr.bf16.gmra.mxu0 %v2020
    %v2347 = vpop.f32.mrf.mxu0
    %v2348 = vadd.f32 %v2251, %v2347
    %v2349 = vpop.f32.mrf.mxu0
    %v2350 = vpop.f32.mrf.mxu0
    %v2351 = vadd.f32 %v2254, %v2350
    %v2352 = vpop.f32.mrf.mxu0
    %2353 = vmatprep.mubr.bf16.mxu0 0
    %2354 = vmatmul.mubr.bf16.gmra.mxu0 %v2023
    %v2355 = vpop.f32.mrf.mxu0
    %v2356 = vadd.f32 %v2259, %v2355
    %v2357 = vpop.f32.mrf.mxu0
    %v2358 = vpop.f32.mrf.mxu0
    %v2359 = vadd.f32 %v2262, %v2358
    %v2360 = vpop.f32.mrf.mxu0
    %2361 = vmatprep.mubr.bf16.mxu0 0
    %2362 = vmatmul.mubr.bf16.gmra.mxu0 %v2025
    %v2363 = vpop.f32.mrf.mxu0
    %v2364 = vadd.f32 %v2267, %v2363
    %v2365 = vpop.f32.mrf.mxu0
    %v2366 = vpop.f32.mrf.mxu0
    %v2367 = vadd.f32 %v2270, %v2366
    %v2368 = vpop.f32.mrf.mxu0
    %2369 = vmatprep.mubr.bf16.mxu0 0
    %2370 = vmatmul.mubr.bf16.gmra.mxu0 %v2027
    %v2371 = vpop.f32.mrf.mxu0
    %v2372 = vadd.f32 %v2275, %v2371
    %v2373 = vpop.f32.mrf.mxu0
    %v2374 = vpop.f32.mrf.mxu0
    %v2375 = vadd.f32 %v2278, %v2374
    %v2376 = vpop.f32.mrf.mxu0
    %2377 = vmatprep.mubr.bf16.mxu0 0
    %2378 = vmatmul.mubr.bf16.gmra.mxu0 %v2029
    %v2379 = vpop.f32.mrf.mxu0
    %v2380 = vadd.f32 %v2283, %v2379
    %v2381 = vpop.f32.mrf.mxu0
    %v2382 = vpop.f32.mrf.mxu0
    %v2383 = vadd.f32 %v2286, %v2382
    %v2384 = vpop.f32.mrf.mxu0
    %2385 = vdwg.mxu0
    %v2386 = vrot.slane %v1278, 1
    %v2387 = vrot.slane %v1295, 1
    %v2388 = vrot.slane %v1312, 1
    %v2389 = vrot.slane %v1329, 1
    %v2390 = vrot.slane %v1346, 1
    %v2391 = vrot.slane %v1363, 1
    %v2392 = vrot.slane %v1380, 1
    %v2393 = vrot.slane %v1397, 1
    %vm2394 = vcmp.lt.s32.totalorder %v1407, 7
    %v2395 = vsel %vm2394, %v2393, 0.0
    %v2396 = vsel %vm2394, %v2393, %v2393
    %v2397 = vsel %vm2394, %v2392, %v2393
    %v2398 = vsel %vm2394, %v2392, %v2392
    %v2399 = vsel %vm2394, %v2391, %v2392
    %v2400 = vsel %vm2394, %v2391, %v2391
    %v2401 = vsel %vm2394, %v2390, %v2391
    %v2402 = vsel %vm2394, %v2390, %v2390
    %v2403 = vsel %vm2394, 0.0, %v2390
    %v2404 = vsel %vm2394, %v2389, 0.0
    %v2405 = vsel %vm2394, %v2389, %v2389
    %v2406 = vsel %vm2394, %v2388, %v2389
    %v2407 = vsel %vm2394, %v2388, %v2388
    %v2408 = vsel %vm2394, %v2387, %v2388
    %v2409 = vsel %vm2394, %v2387, %v2387
    %v2410 = vsel %vm2394, %v2386, %v2387
    %v2411 = vsel %vm2394, %v2386, %v2386
    %v2412 = vsel %vm2394, 0.0, %v2386
    %v2413 = vsel %vm2394, 1, 0
    %vm2414 = vcmp.eq.s32.totalorder %v2413, 1
    %v2415 = vsel %vm2414, %v2412, 0.0
    %v2416 = vsel %vm2414, %v2411, 0.0
    %v2417 = vsel %vm2414, %v2410, 0.0
    %v2418 = vsel %vm2414, %v2409, 0.0
    %v2419 = vsel %vm2414, %v2408, 0.0
    %v2420 = vsel %vm2414, %v2407, 0.0
    %v2421 = vsel %vm2414, %v2406, 0.0
    %v2422 = vsel %vm2414, %v2405, 0.0
    %v2423 = vsel %vm2414, %v2404, 0.0
    %v2424 = vsel %vm2414, 0.0, 0.0
    %v2425 = vsel %vm2414, %v2403, 0.0
    %v2426 = vsel %vm2414, %v2402, 0.0
    %v2427 = vsel %vm2414, %v2401, 0.0
    %v2428 = vsel %vm2414, %v2400, 0.0
    %v2429 = vsel %vm2414, %v2399, 0.0
    %v2430 = vsel %vm2414, %v2398, 0.0
    %v2431 = vsel %vm2414, %v2397, 0.0
    %v2432 = vsel %vm2414, %v2396, 0.0
    %v2433 = vsel %vm2414, %v2395, 0.0
    %v2434 = vpack.c.bf16 %v2415, %v2415
    %v2435 = vpack.c.bf16 %v2416, %v2416
    %v2436 = vpack.c.bf16 %v2417, %v2417
    %v2437 = vpack.c.bf16 %v2418, %v2418
    %v2438 = vpack.c.bf16 %v2419, %v2419
    %v2439 = vpack.c.bf16 %v2420, %v2420
    %v2440 = vpack.c.bf16 %v2421, %v2421
    %v2441 = vpack.c.bf16 %v2422, %v2422
    %v2442 = vpack.c.bf16 %v2425, %v2425
    %v2443 = vpack.c.bf16 %v2426, %v2426
    %v2444 = vpack.c.bf16 %v2427, %v2427
    %v2445 = vpack.c.bf16 %v2428, %v2428
    %v2446 = vpack.c.bf16 %v2429, %v2429
    %v2447 = vpack.c.bf16 %v2430, %v2430
    %v2448 = vpack.c.bf16 %v2431, %v2431
    %v2449 = vpack.c.bf16 %v2432, %v2432
    %v2450 = vpack.c.bf16 %v2423, %v2423
    %v2451 = vpack.c.bf16 %v2433, %v2433
    %v2452 = vpack.c.bf16 %v2424, %v2424
    %v2472 = vunpack.c.l.b16 %v2434
    %v2473 = vunpack.c.l.b16 %v2435
    %v2474 = vunpack.c.l.b16 %v2436
    %v2475 = vunpack.c.l.b16 %v2437
    %v2476 = vunpack.c.l.b16 %v2438
    %v2477 = vunpack.c.l.b16 %v2439
    %v2478 = vunpack.c.l.b16 %v2440
    %v2479 = vunpack.c.l.b16 %v2441
    %v2480 = vunpack.c.l.b16 %v2450
    %v2481 = vunpack.c.l.b16 %v2452
    %v2482 = vunpack.c.l.b16 %v2442
    %v2483 = vunpack.c.l.b16 %v2443
    %v2484 = vunpack.c.l.b16 %v2444
    %v2485 = vunpack.c.l.b16 %v2445
    %v2486 = vunpack.c.l.b16 %v2446
    %v2487 = vunpack.c.l.b16 %v2447
    %v2488 = vunpack.c.l.b16 %v2448
    %v2489 = vunpack.c.l.b16 %v2449
    %v2490 = vunpack.c.l.b16 %v2451
    %s2491 = scalar_lea.vmem [#allocation4], 384
    %v2492 = vld [vmem:[%s2491] sm:$0xf]
    %v2493 = vld [vmem:[%s2491 + $0x4] sm:$0xf]
    %v2494 = vld [vmem:[%s2491 + $0x8] sm:$0xf]
    %v2495 = vld [vmem:[%s2491 + $0xc] sm:$0xf]
    %v2496 = vld [vmem:[%s2491 + $0x10] sm:$0xf]
    %v2497 = vld [vmem:[%s2491 + $0x14] sm:$0xf]
    %v2498 = vld [vmem:[%s2491 + $0x18] sm:$0xf]
    %v2499 = vld [vmem:[%s2491 + $0x1c] sm:$0xf]
    %v2500 = vld [vmem:[%s2491 + $0x20] sm:$0xf]
    %v2501 = vld [vmem:[%s2491 + $0x24] sm:$0xf]
    %v2502 = vld [vmem:[%s2491 + $0x28] sm:$0xf]
    %v2503 = vld [vmem:[%s2491 + $0x2c] sm:$0xf]
    %v2504 = vld [vmem:[%s2491 + $0x30] sm:$0xf]
    %v2505 = vld [vmem:[%s2491 + $0x34] sm:$0xf]
    %v2506 = vld [vmem:[%s2491 + $0x38] sm:$0xf]
    %v2507 = vld [vmem:[%s2491 + $0x3c] sm:$0xf]
    %v2508 = vld [vmem:[%s2491 + $0x40] sm:$0xf]
    %v2509 = vld [vmem:[%s2491 + $0x44] sm:$0xf]
    %v2510 = vld [vmem:[%s2491 + $0x48] sm:$0xf]
    %v2511 = vld [vmem:[%s2491 + $0x4c] sm:$0xf]
    %v2512 = vld [vmem:[%s2491 + $0x50] sm:$0xf]
    %v2513 = vld [vmem:[%s2491 + $0x54] sm:$0xf]
    %v2514 = vld [vmem:[%s2491 + $0x58] sm:$0xf]
    %v2515 = vld [vmem:[%s2491 + $0x5c] sm:$0xf]
    %v2516 = vld [vmem:[%s2491 + $0x60] sm:$0xf]
    %v2517 = vld [vmem:[%s2491 + $0x64] sm:$0xf]
    %v2518 = vld [vmem:[%s2491 + $0x68] sm:$0xf]
    %v2519 = vld [vmem:[%s2491 + $0x6c] sm:$0xf]
    %v2520 = vld [vmem:[%s2491 + $0x70] sm:$0xf]
    %v2521 = vld [vmem:[%s2491 + $0x74] sm:$0xf]
    %v2522 = vld [vmem:[%s2491 + $0x78] sm:$0xf]
    %v2523 = vld [vmem:[%s2491 + $0x7c] sm:$0xf]
    %v2524 = vld [vmem:[%s2491 + $0x80] sm:$0xf]
    %v2525 = vld [vmem:[%s2491 + $0x84] sm:$0xf]
    %v2526 = vld [vmem:[%s2491 + $0x88] sm:$0xf]
    %v2527 = vld [vmem:[%s2491 + $0x8c] sm:$0xf]
    %v2528 = vld [vmem:[%s2491 + $0x90] sm:$0xf]
    %v2529 = vld [vmem:[%s2491 + $0x94] sm:$0xf]
    %v2530 = vld [vmem:[%s2491 + $0x98] sm:$0xf]
    %v2531 = vld [vmem:[%s2491 + $0x9c] sm:$0xf]
    %v2532 = vld [vmem:[%s2491 + $0xa0] sm:$0xf]
    %v2533 = vld [vmem:[%s2491 + $0xa4] sm:$0xf]
    %v2534 = vld [vmem:[%s2491 + $0xa8] sm:$0xf]
    %v2535 = vld [vmem:[%s2491 + $0xac] sm:$0xf]
    %v2536 = vld [vmem:[%s2491 + $0xb0] sm:$0xf]
    %v2537 = vld [vmem:[%s2491 + $0xb4] sm:$0xf]
    %v2538 = vld [vmem:[%s2491 + $0xb8] sm:$0xf]
    %v2539 = vld [vmem:[%s2491 + $0xbc] sm:$0xf]
    %v2540 = vpack.c.b16 %v2473, %v2472
    %v2541 = vpack.c.b16 %v2474, %v2473
    %v2542 = vpack.c.b16 %v2475, %v2474
    %v2543 = vpack.c.b16 %v2476, %v2475
    %v2544 = vpack.c.b16 %v2477, %v2476
    %v2545 = vpack.c.b16 %v2478, %v2477
    %v2546 = vpack.c.b16 %v2479, %v2478
    %v2547 = vpack.c.b16 %v2480, %v2479
    %v2548 = vpack.c.b16 %v2481, %v2480
    %v2549 = vpack.c.b16 %v2483, %v2482
    %v2550 = vpack.c.b16 %v2484, %v2483
    %v2551 = vpack.c.b16 %v2485, %v2484
    %v2552 = vpack.c.b16 %v2486, %v2485
    %v2553 = vpack.c.b16 %v2487, %v2486
    %v2554 = vpack.c.b16 %v2488, %v2487
    %v2555 = vpack.c.b16 %v2489, %v2488
    %v2556 = vpack.c.b16 %v2490, %v2489
    %v2557 = vpack.c.b16 %v2481, %v2490
    %v2624 = vunpack.c.l.b16 %v2492
    %v2625 = vunpack.c.l.b16 %v2493
    %v2626 = vunpack.c.l.b16 %v2494
    %v2627 = vunpack.c.l.b16 %v2495
    %v2628 = vunpack.c.l.b16 %v2496
    %v2629 = vunpack.c.l.b16 %v2497
    %v2630 = vunpack.c.l.b16 %v2498
    %v2631 = vunpack.c.l.b16 %v2499
    %v2632 = vunpack.c.l.b16 %v2500
    %v2633 = vunpack.c.l.b16 %v2501
    %v2634 = vunpack.c.l.b16 %v2502
    %v2635 = vunpack.c.l.b16 %v2503
    %v2636 = vunpack.c.l.b16 %v2504
    %v2637 = vunpack.c.l.b16 %v2505
    %v2638 = vunpack.c.l.b16 %v2506
    %v2639 = vunpack.c.l.b16 %v2507
    %v2640 = vunpack.c.l.b16 %v2508
    %v2641 = vunpack.c.l.b16 %v2509
    %v2642 = vunpack.c.l.b16 %v2510
    %v2643 = vunpack.c.l.b16 %v2511
    %v2644 = vunpack.c.l.b16 %v2512
    %v2645 = vunpack.c.l.b16 %v2513
    %v2646 = vunpack.c.l.b16 %v2514
    %v2647 = vunpack.c.l.b16 %v2515
    %v2648 = vunpack.c.l.b16 %v2516
    %v2649 = vunpack.c.l.b16 %v2517
    %v2650 = vunpack.c.l.b16 %v2518
    %v2651 = vunpack.c.l.b16 %v2519
    %v2652 = vunpack.c.l.b16 %v2520
    %v2653 = vunpack.c.l.b16 %v2521
    %v2654 = vunpack.c.l.b16 %v2522
    %v2655 = vunpack.c.l.b16 %v2523
    %v2656 = vunpack.c.l.b16 %v2524
    %v2657 = vunpack.c.l.b16 %v2525
    %v2658 = vunpack.c.l.b16 %v2526
    %v2659 = vunpack.c.l.b16 %v2527
    %v2660 = vunpack.c.l.b16 %v2528
    %v2661 = vunpack.c.l.b16 %v2529
    %v2662 = vunpack.c.l.b16 %v2530
    %v2663 = vunpack.c.l.b16 %v2531
    %v2664 = vunpack.c.l.b16 %v2532
    %v2665 = vunpack.c.l.b16 %v2533
    %v2666 = vunpack.c.l.b16 %v2534
    %v2667 = vunpack.c.l.b16 %v2535
    %v2668 = vunpack.c.l.b16 %v2536
    %v2669 = vunpack.c.l.b16 %v2537
    %v2670 = vunpack.c.l.b16 %v2538
    %v2671 = vunpack.c.l.b16 %v2539
    %v2672 = vpack.c.b16 %v2625, %v2624
    %v2673 = vpack.c.b16 %v2627, %v2626
    %v2674 = vpack.c.b16 %v2629, %v2628
    %v2675 = vpack.c.b16 %v2631, %v2630
    %v2676 = vpack.c.b16 %v2633, %v2632
    %v2677 = vpack.c.b16 %v2635, %v2634
    %v2678 = vpack.c.b16 %v2637, %v2636
    %v2679 = vpack.c.b16 %v2639, %v2638
    %v2680 = vpack.c.b16 %v2641, %v2640
    %v2681 = vpack.c.b16 %v2643, %v2642
    %v2682 = vpack.c.b16 %v2645, %v2644
    %v2683 = vpack.c.b16 %v2647, %v2646
    %v2684 = vpack.c.b16 %v2649, %v2648
    %v2685 = vpack.c.b16 %v2651, %v2650
    %v2686 = vpack.c.b16 %v2653, %v2652
    %v2687 = vpack.c.b16 %v2655, %v2654
    %v2688 = vpack.c.b16 %v2657, %v2656
    %v2689 = vpack.c.b16 %v2659, %v2658
    %v2690 = vpack.c.b16 %v2661, %v2660
    %v2691 = vpack.c.b16 %v2663, %v2662
    %v2692 = vpack.c.b16 %v2665, %v2664
    %v2693 = vpack.c.b16 %v2667, %v2666
    %v2694 = vpack.c.b16 %v2669, %v2668
    %v2695 = vpack.c.b16 %v2671, %v2670
    %2720 = vmatprep.subr.bf16.mxu0 0
    %2721 = vmatpush1.bf16.msra.mxu0 %v2679
    %2722 = vmatprep.subr.bf16.mxu0 0
    %2723 = vmatpush1.bf16.msra.mxu0 %v2678
    %2724 = vmatprep.subr.bf16.mxu0 0
    %2725 = vmatpush1.bf16.msra.mxu0 %v2677
    %2726 = vmatprep.subr.bf16.mxu0 0
    %2727 = vmatpush1.bf16.msra.mxu0 %v2676
    %2728 = vmatprep.subr.bf16.mxu0 0
    %2729 = vmatpush1.bf16.msra.mxu0 %v2675
    %2730 = vmatprep.subr.bf16.mxu0 0
    %2731 = vmatpush1.bf16.msra.mxu0 %v2674
    %2732 = vmatprep.subr.bf16.mxu0 0
    %2733 = vmatpush1.bf16.msra.mxu0 %v2673
    %2734 = vmatprep.subr.bf16.mxu0 0
    %2735 = vmatpush1.bf16.msra.mxu0 %v2672
    %2736 = vmatprep.subr.bf16.mxu0 0
    %2737 = vmatpush2.bf16.msra.mxu0 %v2687
    %2738 = vmatprep.subr.bf16.mxu0 0
    %2739 = vmatpush2.bf16.msra.mxu0 %v2686
    %2740 = vmatprep.subr.bf16.mxu0 0
    %2741 = vmatpush2.bf16.msra.mxu0 %v2685
    %2742 = vmatprep.subr.bf16.mxu0 0
    %2743 = vmatpush2.bf16.msra.mxu0 %v2684
    %2744 = vmatprep.subr.bf16.mxu0 0
    %2745 = vmatpush2.bf16.msra.mxu0 %v2683
    %2746 = vmatprep.subr.bf16.mxu0 0
    %2747 = vmatpush2.bf16.msra.mxu0 %v2682
    %2748 = vmatprep.subr.bf16.mxu0 0
    %2749 = vmatpush2.bf16.msra.mxu0 %v2681
    %2750 = vmatprep.subr.bf16.mxu0 0
    %2751 = vmatpush2.bf16.msra.mxu0 %v2680
    %2752 = vmatprep.mubr.bf16.mxu0 %v2541
    %2753 = vmatmul.mubr.bf16.gmra.mxu0 %v2540
    %v2754 = vpop.f32.mrf.mxu0
    %v2755 = vadd.f32 0.0, %v2754
    %v2756 = vpop.f32.mrf.mxu0
    %v2757 = vpop.f32.mrf.mxu0
    %v2758 = vadd.f32 0.0, %v2757
    %v2759 = vpop.f32.mrf.mxu0
    %2760 = vmatprep.mubr.bf16.mxu0 %v2543
    %2761 = vmatmul.mubr.bf16.gmra.mxu0 %v2542
    %v2762 = vpop.f32.mrf.mxu0
    %v2763 = vadd.f32 0.0, %v2762
    %v2764 = vpop.f32.mrf.mxu0
    %v2765 = vpop.f32.mrf.mxu0
    %v2766 = vadd.f32 0.0, %v2765
    %v2767 = vpop.f32.mrf.mxu0
    %2768 = vmatprep.mubr.bf16.mxu0 %v2545
    %2769 = vmatmul.mubr.bf16.gmra.mxu0 %v2544
    %v2770 = vpop.f32.mrf.mxu0
    %v2771 = vadd.f32 0.0, %v2770
    %v2772 = vpop.f32.mrf.mxu0
    %v2773 = vpop.f32.mrf.mxu0
    %v2774 = vadd.f32 0.0, %v2773
    %v2775 = vpop.f32.mrf.mxu0
    %2776 = vmatprep.mubr.bf16.mxu0 %v2547
    %2777 = vmatmul.mubr.bf16.gmra.mxu0 %v2546
    %v2778 = vpop.f32.mrf.mxu0
    %v2779 = vadd.f32 0.0, %v2778
    %v2780 = vpop.f32.mrf.mxu0
    %v2781 = vpop.f32.mrf.mxu0
    %v2782 = vadd.f32 0.0, %v2781
    %v2783 = vpop.f32.mrf.mxu0
    %2784 = vmatprep.mubr.bf16.mxu0 %v2550
    %2785 = vmatmul.mubr.bf16.gmra.mxu0 %v2549
    %v2786 = vpop.f32.mrf.mxu0
    %v2787 = vadd.f32 0.0, %v2786
    %v2788 = vpop.f32.mrf.mxu0
    %v2789 = vpop.f32.mrf.mxu0
    %v2790 = vadd.f32 0.0, %v2789
    %v2791 = vpop.f32.mrf.mxu0
    %2792 = vmatprep.mubr.bf16.mxu0 %v2552
    %2793 = vmatmul.mubr.bf16.gmra.mxu0 %v2551
    %v2794 = vpop.f32.mrf.mxu0
    %v2795 = vadd.f32 0.0, %v2794
    %v2796 = vpop.f32.mrf.mxu0
    %v2797 = vpop.f32.mrf.mxu0
    %v2798 = vadd.f32 0.0, %v2797
    %v2799 = vpop.f32.mrf.mxu0
    %2800 = vmatprep.mubr.bf16.mxu0 %v2554
    %2801 = vmatmul.mubr.bf16.gmra.mxu0 %v2553
    %v2802 = vpop.f32.mrf.mxu0
    %v2803 = vadd.f32 0.0, %v2802
    %v2804 = vpop.f32.mrf.mxu0
    %v2805 = vpop.f32.mrf.mxu0
    %v2806 = vadd.f32 0.0, %v2805
    %v2807 = vpop.f32.mrf.mxu0
    %2808 = vmatprep.mubr.bf16.mxu0 %v2556
    %2809 = vmatmul.mubr.bf16.gmra.mxu0 %v2555
    %v2810 = vpop.f32.mrf.mxu0
    %v2811 = vadd.f32 0.0, %v2810
    %v2812 = vpop.f32.mrf.mxu0
    %v2813 = vpop.f32.mrf.mxu0
    %v2814 = vadd.f32 0.0, %v2813
    %v2815 = vpop.f32.mrf.mxu0
    %2816 = vdwg.mxu0
    %2817 = vmatprep.subr.bf16.mxu0 0
    %2818 = vmatpush1.bf16.msra.mxu0 %v2695
    %2819 = vmatprep.subr.bf16.mxu0 0
    %2820 = vmatpush1.bf16.msra.mxu0 %v2694
    %2821 = vmatprep.subr.bf16.mxu0 0
    %2822 = vmatpush1.bf16.msra.mxu0 %v2693
    %2823 = vmatprep.subr.bf16.mxu0 0
    %2824 = vmatpush1.bf16.msra.mxu0 %v2692
    %2825 = vmatprep.subr.bf16.mxu0 0
    %2826 = vmatpush1.bf16.msra.mxu0 %v2691
    %2827 = vmatprep.subr.bf16.mxu0 0
    %2828 = vmatpush1.bf16.msra.mxu0 %v2690
    %2829 = vmatprep.subr.bf16.mxu0 0
    %2830 = vmatpush1.bf16.msra.mxu0 %v2689
    %2831 = vmatprep.subr.bf16.mxu0 0
    %2832 = vmatpush1.bf16.msra.mxu0 %v2688
    %2833 = vmatprep.subr.bf16.mxu0 0
    %2834 = vmatpush2.bf16.msra.mxu0 0
    %2835 = vmatprep.subr.bf16.mxu0 0
    %2836 = vmatpush2.bf16.msra.mxu0 0
    %2837 = vmatprep.subr.bf16.mxu0 0
    %2838 = vmatpush2.bf16.msra.mxu0 0
    %2839 = vmatprep.subr.bf16.mxu0 0
    %2840 = vmatpush2.bf16.msra.mxu0 0
    %2841 = vmatprep.subr.bf16.mxu0 0
    %2842 = vmatpush2.bf16.msra.mxu0 0
    %2843 = vmatprep.subr.bf16.mxu0 0
    %2844 = vmatpush2.bf16.msra.mxu0 0
    %2845 = vmatprep.subr.bf16.mxu0 0
    %2846 = vmatpush2.bf16.msra.mxu0 0
    %2847 = vmatprep.subr.bf16.mxu0 0
    %2848 = vmatpush2.bf16.msra.mxu0 0
    %2849 = vmatprep.mubr.bf16.mxu0 0
    %2850 = vmatmul.mubr.bf16.gmra.mxu0 %v2542
    %v2851 = vpop.f32.mrf.mxu0
    %v2852 = vadd.f32 %v2755, %v2851
    %v2853 = vpop.f32.mrf.mxu0
    %v2854 = vpop.f32.mrf.mxu0
    %v2855 = vadd.f32 %v2758, %v2854
    %v2856 = vpop.f32.mrf.mxu0
    %2857 = vmatprep.mubr.bf16.mxu0 0
    %2858 = vmatmul.mubr.bf16.gmra.mxu0 %v2544
    %v2859 = vpop.f32.mrf.mxu0
    %v2860 = vadd.f32 %v2763, %v2859
    %v2861 = vpop.f32.mrf.mxu0
    %v2862 = vpop.f32.mrf.mxu0
    %v2863 = vadd.f32 %v2766, %v2862
    %v2864 = vpop.f32.mrf.mxu0
    %2865 = vmatprep.mubr.bf16.mxu0 0
    %2866 = vmatmul.mubr.bf16.gmra.mxu0 %v2546
    %v2867 = vpop.f32.mrf.mxu0
    %v2868 = vadd.f32 %v2771, %v2867
    %v2869 = vpop.f32.mrf.mxu0
    %v2870 = vpop.f32.mrf.mxu0
    %v2871 = vadd.f32 %v2774, %v2870
    %v2872 = vpop.f32.mrf.mxu0
    %2873 = vmatprep.mubr.bf16.mxu0 0
    %2874 = vmatmul.mubr.bf16.gmra.mxu0 %v2548
    %v2875 = vpop.f32.mrf.mxu0
    %v2876 = vadd.f32 %v2779, %v2875
    %v2877 = vpop.f32.mrf.mxu0
    %v2878 = vpop.f32.mrf.mxu0
    %v2879 = vadd.f32 %v2782, %v2878
    %v2880 = vpop.f32.mrf.mxu0
    %2881 = vmatprep.mubr.bf16.mxu0 0
    %2882 = vmatmul.mubr.bf16.gmra.mxu0 %v2551
    %v2883 = vpop.f32.mrf.mxu0
    %v2884 = vadd.f32 %v2787, %v2883
    %v2885 = vpop.f32.mrf.mxu0
    %v2886 = vpop.f32.mrf.mxu0
    %v2887 = vadd.f32 %v2790, %v2886
    %v2888 = vpop.f32.mrf.mxu0
    %2889 = vmatprep.mubr.bf16.mxu0 0
    %2890 = vmatmul.mubr.bf16.gmra.mxu0 %v2553
    %v2891 = vpop.f32.mrf.mxu0
    %v2892 = vadd.f32 %v2795, %v2891
    %v2893 = vpop.f32.mrf.mxu0
    %v2894 = vpop.f32.mrf.mxu0
    %v2895 = vadd.f32 %v2798, %v2894
    %v2896 = vpop.f32.mrf.mxu0
    %2897 = vmatprep.mubr.bf16.mxu0 0
    %2898 = vmatmul.mubr.bf16.gmra.mxu0 %v2555
    %v2899 = vpop.f32.mrf.mxu0
    %v2900 = vadd.f32 %v2803, %v2899
    %v2901 = vpop.f32.mrf.mxu0
    %v2902 = vpop.f32.mrf.mxu0
    %v2903 = vadd.f32 %v2806, %v2902
    %v2904 = vpop.f32.mrf.mxu0
    %2905 = vmatprep.mubr.bf16.mxu0 0
    %2906 = vmatmul.mubr.bf16.gmra.mxu0 %v2557
    %v2907 = vpop.f32.mrf.mxu0
    %v2908 = vadd.f32 %v2811, %v2907
    %v2909 = vpop.f32.mrf.mxu0
    %v2910 = vpop.f32.mrf.mxu0
    %v2911 = vadd.f32 %v2814, %v2910
    %v2912 = vpop.f32.mrf.mxu0
    %2913 = vdwg.mxu0
    %v2914 = vadd.f32 %v2324, %v2852
    %v2915 = vadd.f32 %v2327, %v2855
    %v2916 = vadd.f32 %v2332, %v2860
    %v2917 = vadd.f32 %v2335, %v2863
    %v2918 = vadd.f32 %v2340, %v2868
    %v2919 = vadd.f32 %v2343, %v2871
    %v2920 = vadd.f32 %v2348, %v2876
    %v2921 = vadd.f32 %v2351, %v2879
    %v2922 = vadd.f32 %v2356, %v2884
    %v2923 = vadd.f32 %v2359, %v2887
    %v2924 = vadd.f32 %v2364, %v2892
    %v2925 = vadd.f32 %v2367, %v2895
    %v2926 = vadd.f32 %v2372, %v2900
    %v2927 = vadd.f32 %v2375, %v2903
    %v2928 = vadd.f32 %v2380, %v2908
    %v2929 = vadd.f32 %v2383, %v2911
    %v2930 = vld [vmem:[%s6] sm:$0x1]
    %v2932 = vlaneseq
    %v2933 = vshrl.u32 %v2932, 7
    %v2934 = vsub.s32 0, %v2933
    %v2935 = vrot.slane %v2930, %v2934
    %v2937 = vadd.f32 %v2914, %v2935
    %v2938 = vadd.f32 %v2915, %v2935
    %v2939 = vadd.f32 %v2916, %v2935
    %v2940 = vadd.f32 %v2917, %v2935
    %v2941 = vadd.f32 %v2918, %v2935
    %v2942 = vadd.f32 %v2919, %v2935
    %v2943 = vadd.f32 %v2920, %v2935
    %v2944 = vadd.f32 %v2921, %v2935
    %v2945 = vadd.f32 %v2922, %v2935
    %v2946 = vadd.f32 %v2923, %v2935
    %v2947 = vadd.f32 %v2924, %v2935
    %v2948 = vadd.f32 %v2925, %v2935
    %v2949 = vadd.f32 %v2926, %v2935
    %v2950 = vadd.f32 %v2927, %v2935
    %v2951 = vadd.f32 %v2928, %v2935
    %v2952 = vadd.f32 %v2929, %v2935
    %v2953 = vld [vmem:[%s7] sm:$0x3]
    %v2954 = vld [vmem:[%s8] sm:$0x3]
    %v2955 = vadd.f32 %v2937, %v2938
    %v2956 = vadd.f32 %v2955, %v2939
    %v2957 = vadd.f32 %v2956, %v2940
    %v2958 = vadd.f32 %v2957, %v2941
    %v2959 = vadd.f32 %v2958, %v2942
    %v2960 = vadd.f32 %v2959, %v2943
    %v2961 = vadd.f32 %v2960, %v2944
    %v2962 = vadd.f32 %v2961, %v2945
    %v2963 = vadd.f32 %v2962, %v2946
    %v2964 = vadd.f32 %v2963, %v2947
    %v2965 = vadd.f32 %v2964, %v2948
    %v2966 = vadd.f32 %v2965, %v2949
    %v2967 = vadd.f32 %v2966, %v2950
    %v2968 = vadd.f32 %v2967, %v2951
    %v2969 = vadd.f32 %v2968, %v2952
    %v2970 = vrot.slane %v2969, 4
    %v2971 = vadd.f32 %v2969, %v2970
    %v2972 = vrot.slane %v2971, 2
    %v2973 = vadd.f32 %v2971, %v2972
    %v2974 = vrot.slane %v2973, 1
    %v2975 = vadd.f32 %v2973, %v2974
    %v2976 = vmul.f32 %v2937, %v2937
    %v2977 = vmul.f32 %v2938, %v2938
    %v2978 = vmul.f32 %v2939, %v2939
    %v2979 = vmul.f32 %v2940, %v2940
    %v2980 = vmul.f32 %v2941, %v2941
    %v2981 = vmul.f32 %v2942, %v2942
    %v2982 = vmul.f32 %v2943, %v2943
    %v2983 = vmul.f32 %v2944, %v2944
    %v2984 = vmul.f32 %v2945, %v2945
    %v2985 = vmul.f32 %v2946, %v2946
    %v2986 = vmul.f32 %v2947, %v2947
    %v2987 = vmul.f32 %v2948, %v2948
    %v2988 = vmul.f32 %v2949, %v2949
    %v2989 = vmul.f32 %v2950, %v2950
    %v2990 = vmul.f32 %v2951, %v2951
    %v2991 = vmul.f32 %v2952, %v2952
    %v2992 = vadd.f32 %v2976, %v2977
    %v2993 = vadd.f32 %v2992, %v2978
    %v2994 = vadd.f32 %v2993, %v2979
    %v2995 = vadd.f32 %v2994, %v2980
    %v2996 = vadd.f32 %v2995, %v2981
    %v2997 = vadd.f32 %v2996, %v2982
    %v2998 = vadd.f32 %v2997, %v2983
    %v2999 = vadd.f32 %v2998, %v2984
    %v3000 = vadd.f32 %v2999, %v2985
    %v3001 = vadd.f32 %v3000, %v2986
    %v3002 = vadd.f32 %v3001, %v2987
    %v3003 = vadd.f32 %v3002, %v2988
    %v3004 = vadd.f32 %v3003, %v2989
    %v3005 = vadd.f32 %v3004, %v2990
    %v3006 = vadd.f32 %v3005, %v2991
    %v3007 = vrot.slane %v3006, 4
    %v3008 = vadd.f32 %v3006, %v3007
    %v3009 = vrot.slane %v3008, 2
    %v3010 = vadd.f32 %v3008, %v3009
    %v3011 = vrot.slane %v3010, 1
    %v3012 = vadd.f32 %v3010, %v3011
    %v3013 = vmul.f32 %v2975, 0.0078125
    %v3014 = vmul.f32 %v3012, 0.0078125
    %v3015 = vmul.f32 %v3013, %v3013
    %v3016 = vsub.f32 %v3014, %v3015
    %v3017 = vmax.f32 %v3016, 0.0
    %v3018 = vsub.f32 %v2937, %v3013
    %v3019 = vsub.f32 %v2938, %v3013
    %v3020 = vsub.f32 %v2939, %v3013
    %v3021 = vsub.f32 %v2940, %v3013
    %v3022 = vsub.f32 %v2941, %v3013
    %v3023 = vsub.f32 %v2942, %v3013
    %v3024 = vsub.f32 %v2943, %v3013
    %v3025 = vsub.f32 %v2944, %v3013
    %v3026 = vsub.f32 %v2945, %v3013
    %v3027 = vsub.f32 %v2946, %v3013
    %v3028 = vsub.f32 %v2947, %v3013
    %v3029 = vsub.f32 %v2948, %v3013
    %v3030 = vsub.f32 %v2949, %v3013
    %v3031 = vsub.f32 %v2950, %v3013
    %v3032 = vsub.f32 %v2951, %v3013
    %v3033 = vsub.f32 %v2952, %v3013
    %v3034 = vadd.f32 %v3017, 1e-05
    %v3035 = vrsqrt.pop %v3034
    %v3036 = vmul.f32 %v3018, %v3035
    %v3037 = vmul.f32 %v3019, %v3035
    %v3038 = vmul.f32 %v3020, %v3035
    %v3039 = vmul.f32 %v3021, %v3035
    %v3040 = vmul.f32 %v3022, %v3035
    %v3041 = vmul.f32 %v3023, %v3035
    %v3042 = vmul.f32 %v3024, %v3035
    %v3043 = vmul.f32 %v3025, %v3035
    %v3044 = vmul.f32 %v3026, %v3035
    %v3045 = vmul.f32 %v3027, %v3035
    %v3046 = vmul.f32 %v3028, %v3035
    %v3047 = vmul.f32 %v3029, %v3035
    %v3048 = vmul.f32 %v3030, %v3035
    %v3049 = vmul.f32 %v3031, %v3035
    %v3050 = vmul.f32 %v3032, %v3035
    %v3051 = vmul.f32 %v3033, %v3035
    %v3054 = vunpack.c.l.s4 1966171168
    %v3055 = vunpack.c.0.s8 %v3054
    %v3056 = vlaneseq
    %v3057 = vshrl.u32 %v3056, 7
    %v3058 = vsub.s32 %v3055, %v3057
    %v3059 = vrot.slane %v2953, %v3058
    %v3060 = vcombine.high %v3059, %v3059
    %v3062 = vunpack.c.l.s4 1966171168
    %v3063 = vunpack.c.0.s8 %v3062
    %v3064 = vlaneseq
    %v3065 = vshrl.u32 %v3064, 7
    %v3066 = vsub.s32 %v3063, %v3065
    %v3067 = vrot.slane %v3059, %v3066
    %v3069 = vunpack.c.l.s4 1966171168
    %v3070 = vunpack.c.0.s8 %v3069
    %v3071 = vlaneseq
    %v3072 = vshrl.u32 %v3071, 7
    %v3073 = vsub.s32 %v3070, %v3072
    %v3074 = vrot.slane %v3060, %v3073
    %v3075 = vlaneseq
    %v3076 = vshrl.u32 %v3075, 7
    %v3077 = vsub.s32 0, %v3076
    %v3078 = vrot.slane %v3067, %v3077
    %v3079 = vlaneseq
    %v3080 = vshrl.u32 %v3079, 7
    %v3081 = vsub.s32 0, %v3080
    %v3082 = vrot.slane %v3074, %v3081
    %v3085 = vmul.f32 %v3078, %v3036
    %v3086 = vmul.f32 %v3078, %v3037
    %v3087 = vmul.f32 %v3078, %v3038
    %v3088 = vmul.f32 %v3078, %v3039
    %v3089 = vmul.f32 %v3078, %v3040
    %v3090 = vmul.f32 %v3078, %v3041
    %v3091 = vmul.f32 %v3078, %v3042
    %v3092 = vmul.f32 %v3078, %v3043
    %v3093 = vmul.f32 %v3082, %v3044
    %v3094 = vmul.f32 %v3082, %v3045
    %v3095 = vmul.f32 %v3082, %v3046
    %v3096 = vmul.f32 %v3082, %v3047
    %v3097 = vmul.f32 %v3082, %v3048
    %v3098 = vmul.f32 %v3082, %v3049
    %v3099 = vmul.f32 %v3082, %v3050
    %v3100 = vmul.f32 %v3082, %v3051
    %v3103 = vunpack.c.l.s4 1966171168
    %v3104 = vunpack.c.0.s8 %v3103
    %v3105 = vlaneseq
    %v3106 = vshrl.u32 %v3105, 7
    %v3107 = vsub.s32 %v3104, %v3106
    %v3108 = vrot.slane %v2954, %v3107
    %v3109 = vcombine.high %v3108, %v3108
    %v3111 = vunpack.c.l.s4 1966171168
    %v3112 = vunpack.c.0.s8 %v3111
    %v3113 = vlaneseq
    %v3114 = vshrl.u32 %v3113, 7
    %v3115 = vsub.s32 %v3112, %v3114
    %v3116 = vrot.slane %v3108, %v3115
    %v3118 = vunpack.c.l.s4 1966171168
    %v3119 = vunpack.c.0.s8 %v3118
    %v3120 = vlaneseq
    %v3121 = vshrl.u32 %v3120, 7
    %v3122 = vsub.s32 %v3119, %v3121
    %v3123 = vrot.slane %v3109, %v3122
    %v3124 = vlaneseq
    %v3125 = vshrl.u32 %v3124, 7
    %v3126 = vsub.s32 0, %v3125
    %v3127 = vrot.slane %v3116, %v3126
    %v3128 = vlaneseq
    %v3129 = vshrl.u32 %v3128, 7
    %v3130 = vsub.s32 0, %v3129
    %v3131 = vrot.slane %v3123, %v3130
    %v3134 = vadd.f32 %v3085, %v3127
    %v3135 = vadd.f32 %v3086, %v3127
    %v3136 = vadd.f32 %v3087, %v3127
    %v3137 = vadd.f32 %v3088, %v3127
    %v3138 = vadd.f32 %v3089, %v3127
    %v3139 = vadd.f32 %v3090, %v3127
    %v3140 = vadd.f32 %v3091, %v3127
    %v3141 = vadd.f32 %v3092, %v3127
    %v3142 = vadd.f32 %v3093, %v3131
    %v3143 = vadd.f32 %v3094, %v3131
    %v3144 = vadd.f32 %v3095, %v3131
    %v3145 = vadd.f32 %v3096, %v3131
    %v3146 = vadd.f32 %v3097, %v3131
    %v3147 = vadd.f32 %v3098, %v3131
    %v3148 = vadd.f32 %v3099, %v3131
    %v3149 = vadd.f32 %v3100, %v3131
    %vm3150 = vcmp.ge.f32.partialorder %v3134, 0.0
    %vm3151 = vcmp.ge.f32.partialorder %v3135, 0.0
    %vm3152 = vcmp.ge.f32.partialorder %v3136, 0.0
    %vm3153 = vcmp.ge.f32.partialorder %v3137, 0.0
    %vm3154 = vcmp.ge.f32.partialorder %v3138, 0.0
    %vm3155 = vcmp.ge.f32.partialorder %v3139, 0.0
    %vm3156 = vcmp.ge.f32.partialorder %v3140, 0.0
    %vm3157 = vcmp.ge.f32.partialorder %v3141, 0.0
    %vm3158 = vcmp.ge.f32.partialorder %v3142, 0.0
    %vm3159 = vcmp.ge.f32.partialorder %v3143, 0.0
    %vm3160 = vcmp.ge.f32.partialorder %v3144, 0.0
    %vm3161 = vcmp.ge.f32.partialorder %v3145, 0.0
    %vm3162 = vcmp.ge.f32.partialorder %v3146, 0.0
    %vm3163 = vcmp.ge.f32.partialorder %v3147, 0.0
    %vm3164 = vcmp.ge.f32.partialorder %v3148, 0.0
    %vm3165 = vcmp.ge.f32.partialorder %v3149, 0.0
    %v3166 = vmul.f32 %v3134, 0.2
    %v3167 = vmul.f32 %v3135, 0.2
    %v3168 = vmul.f32 %v3136, 0.2
    %v3169 = vmul.f32 %v3137, 0.2
    %v3170 = vmul.f32 %v3138, 0.2
    %v3171 = vmul.f32 %v3139, 0.2
    %v3172 = vmul.f32 %v3140, 0.2
    %v3173 = vmul.f32 %v3141, 0.2
    %v3174 = vmul.f32 %v3142, 0.2
    %v3175 = vmul.f32 %v3143, 0.2
    %v3176 = vmul.f32 %v3144, 0.2
    %v3177 = vmul.f32 %v3145, 0.2
    %v3178 = vmul.f32 %v3146, 0.2
    %v3179 = vmul.f32 %v3147, 0.2
    %v3180 = vmul.f32 %v3148, 0.2
    %v3181 = vmul.f32 %v3149, 0.2
    %v3182 = vsel %vm3150, %v3134, %v3166
    %v3183 = vsel %vm3151, %v3135, %v3167
    %v3184 = vsel %vm3152, %v3136, %v3168
    %v3185 = vsel %vm3153, %v3137, %v3169
    %v3186 = vsel %vm3154, %v3138, %v3170
    %v3187 = vsel %vm3155, %v3139, %v3171
    %v3188 = vsel %vm3156, %v3140, %v3172
    %v3189 = vsel %vm3157, %v3141, %v3173
    %v3190 = vsel %vm3158, %v3142, %v3174
    %v3191 = vsel %vm3159, %v3143, %v3175
    %v3192 = vsel %vm3160, %v3144, %v3176
    %v3193 = vsel %vm3161, %v3145, %v3177
    %v3194 = vsel %vm3162, %v3146, %v3178
    %v3195 = vsel %vm3163, %v3147, %v3179
    %v3196 = vsel %vm3164, %v3148, %v3180
    %v3197 = vsel %vm3165, %v3149, %v3181
    %v3214 = vcombine.high %v3182, %v3182
    %v3216 = vunpack.c.l.s4 1966171168
    %v3217 = vunpack.c.0.s8 %v3216
    %v3218 = vlaneseq
    %v3219 = vshrl.u32 %v3218, 7
    %v3220 = vsub.s32 %v3217, %v3219
    %v3221 = vrot.slane %v3182, %v3220
    %v3223 = vunpack.c.l.s4 1966171168
    %v3224 = vunpack.c.0.s8 %v3223
    %v3225 = vlaneseq
    %v3226 = vshrl.u32 %v3225, 7
    %v3227 = vsub.s32 %v3224, %v3226
    %v3228 = vrot.slane %v3214, %v3227
    %v3229 = vcombine.high %v3221, %v3221
    %v3230 = vcombine.high %v3228, %v3228
    %v3232 = vunpack.c.l.s4 1966171168
    %v3233 = vunpack.c.0.s8 %v3232
    %v3234 = vlaneseq
    %v3235 = vshrl.u32 %v3234, 7
    %v3236 = vsub.s32 %v3233, %v3235
    %v3237 = vrot.slane %v3221, %v3236
    %v3239 = vunpack.c.l.s4 1966171168
    %v3240 = vunpack.c.0.s8 %v3239
    %v3241 = vlaneseq
    %v3242 = vshrl.u32 %v3241, 7
    %v3243 = vsub.s32 %v3240, %v3242
    %v3244 = vrot.slane %v3228, %v3243
    %v3246 = vunpack.c.l.s4 1966171168
    %v3247 = vunpack.c.0.s8 %v3246
    %v3248 = vlaneseq
    %v3249 = vshrl.u32 %v3248, 7
    %v3250 = vsub.s32 %v3247, %v3249
    %v3251 = vrot.slane %v3229, %v3250
    %v3253 = vunpack.c.l.s4 1966171168
    %v3254 = vunpack.c.0.s8 %v3253
    %v3255 = vlaneseq
    %v3256 = vshrl.u32 %v3255, 7
    %v3257 = vsub.s32 %v3254, %v3256
    %v3258 = vrot.slane %v3230, %v3257
    %v3259 = vcombine.high %v3237, %v3237
    %v3260 = vcombine.high %v3244, %v3244
    %v3261 = vcombine.high %v3251, %v3251
    %v3262 = vcombine.high %v3258, %v3258
    %v3263 = vcombine.high %v3183, %v3183
    %v3265 = vunpack.c.l.s4 1966171168
    %v3266 = vunpack.c.0.s8 %v3265
    %v3267 = vlaneseq
    %v3268 = vshrl.u32 %v3267, 7
    %v3269 = vsub.s32 %v3266, %v3268
    %v3270 = vrot.slane %v3183, %v3269
    %v3272 = vunpack.c.l.s4 1966171168
    %v3273 = vunpack.c.0.s8 %v3272
    %v3274 = vlaneseq
    %v3275 = vshrl.u32 %v3274, 7
    %v3276 = vsub.s32 %v3273, %v3275
    %v3277 = vrot.slane %v3263, %v3276
    %v3278 = vcombine.high %v3270, %v3270
    %v3279 = vcombine.high %v3277, %v3277
    %v3281 = vunpack.c.l.s4 1966171168
    %v3282 = vunpack.c.0.s8 %v3281
    %v3283 = vlaneseq
    %v3284 = vshrl.u32 %v3283, 7
    %v3285 = vsub.s32 %v3282, %v3284
    %v3286 = vrot.slane %v3270, %v3285
    %v3288 = vunpack.c.l.s4 1966171168
    %v3289 = vunpack.c.0.s8 %v3288
    %v3290 = vlaneseq
    %v3291 = vshrl.u32 %v3290, 7
    %v3292 = vsub.s32 %v3289, %v3291
    %v3293 = vrot.slane %v3277, %v3292
    %v3295 = vunpack.c.l.s4 1966171168
    %v3296 = vunpack.c.0.s8 %v3295
    %v3297 = vlaneseq
    %v3298 = vshrl.u32 %v3297, 7
    %v3299 = vsub.s32 %v3296, %v3298
    %v3300 = vrot.slane %v3278, %v3299
    %v3302 = vunpack.c.l.s4 1966171168
    %v3303 = vunpack.c.0.s8 %v3302
    %v3304 = vlaneseq
    %v3305 = vshrl.u32 %v3304, 7
    %v3306 = vsub.s32 %v3303, %v3305
    %v3307 = vrot.slane %v3279, %v3306
    %v3308 = vcombine.high %v3286, %v3286
    %v3309 = vcombine.high %v3293, %v3293
    %v3310 = vcombine.high %v3300, %v3300
    %v3311 = vcombine.high %v3307, %v3307
    %v3312 = vcombine.high %v3184, %v3184
    %v3314 = vunpack.c.l.s4 1966171168
    %v3315 = vunpack.c.0.s8 %v3314
    %v3316 = vlaneseq
    %v3317 = vshrl.u32 %v3316, 7
    %v3318 = vsub.s32 %v3315, %v3317
    %v3319 = vrot.slane %v3184, %v3318
    %v3321 = vunpack.c.l.s4 1966171168
    %v3322 = vunpack.c.0.s8 %v3321
    %v3323 = vlaneseq
    %v3324 = vshrl.u32 %v3323, 7
    %v3325 = vsub.s32 %v3322, %v3324
    %v3326 = vrot.slane %v3312, %v3325
    %v3327 = vcombine.high %v3319, %v3319
    %v3328 = vcombine.high %v3326, %v3326
    %v3330 = vunpack.c.l.s4 1966171168
    %v3331 = vunpack.c.0.s8 %v3330
    %v3332 = vlaneseq
    %v3333 = vshrl.u32 %v3332, 7
    %v3334 = vsub.s32 %v3331, %v3333
    %v3335 = vrot.slane %v3319, %v3334
    %v3337 = vunpack.c.l.s4 1966171168
    %v3338 = vunpack.c.0.s8 %v3337
    %v3339 = vlaneseq
    %v3340 = vshrl.u32 %v3339, 7
    %v3341 = vsub.s32 %v3338, %v3340
    %v3342 = vrot.slane %v3326, %v3341
    %v3344 = vunpack.c.l.s4 1966171168
    %v3345 = vunpack.c.0.s8 %v3344
    %v3346 = vlaneseq
    %v3347 = vshrl.u32 %v3346, 7
    %v3348 = vsub.s32 %v3345, %v3347
    %v3349 = vrot.slane %v3327, %v3348
    %v3351 = vunpack.c.l.s4 1966171168
    %v3352 = vunpack.c.0.s8 %v3351
    %v3353 = vlaneseq
    %v3354 = vshrl.u32 %v3353, 7
    %v3355 = vsub.s32 %v3352, %v3354
    %v3356 = vrot.slane %v3328, %v3355
    %v3357 = vcombine.high %v3335, %v3335
    %v3358 = vcombine.high %v3342, %v3342
    %v3359 = vcombine.high %v3349, %v3349
    %v3360 = vcombine.high %v3356, %v3356
    %v3361 = vcombine.high %v3185, %v3185
    %v3363 = vunpack.c.l.s4 1966171168
    %v3364 = vunpack.c.0.s8 %v3363
    %v3365 = vlaneseq
    %v3366 = vshrl.u32 %v3365, 7
    %v3367 = vsub.s32 %v3364, %v3366
    %v3368 = vrot.slane %v3185, %v3367
    %v3370 = vunpack.c.l.s4 1966171168
    %v3371 = vunpack.c.0.s8 %v3370
    %v3372 = vlaneseq
    %v3373 = vshrl.u32 %v3372, 7
    %v3374 = vsub.s32 %v3371, %v3373
    %v3375 = vrot.slane %v3361, %v3374
    %v3376 = vcombine.high %v3368, %v3368
    %v3377 = vcombine.high %v3375, %v3375
    %v3379 = vunpack.c.l.s4 1966171168
    %v3380 = vunpack.c.0.s8 %v3379
    %v3381 = vlaneseq
    %v3382 = vshrl.u32 %v3381, 7
    %v3383 = vsub.s32 %v3380, %v3382
    %v3384 = vrot.slane %v3368, %v3383
    %v3386 = vunpack.c.l.s4 1966171168
    %v3387 = vunpack.c.0.s8 %v3386
    %v3388 = vlaneseq
    %v3389 = vshrl.u32 %v3388, 7
    %v3390 = vsub.s32 %v3387, %v3389
    %v3391 = vrot.slane %v3375, %v3390
    %v3393 = vunpack.c.l.s4 1966171168
    %v3394 = vunpack.c.0.s8 %v3393
    %v3395 = vlaneseq
    %v3396 = vshrl.u32 %v3395, 7
    %v3397 = vsub.s32 %v3394, %v3396
    %v3398 = vrot.slane %v3376, %v3397
    %v3400 = vunpack.c.l.s4 1966171168
    %v3401 = vunpack.c.0.s8 %v3400
    %v3402 = vlaneseq
    %v3403 = vshrl.u32 %v3402, 7
    %v3404 = vsub.s32 %v3401, %v3403
    %v3405 = vrot.slane %v3377, %v3404
    %v3406 = vcombine.high %v3384, %v3384
    %v3407 = vcombine.high %v3391, %v3391
    %v3408 = vcombine.high %v3398, %v3398
    %v3409 = vcombine.high %v3405, %v3405
    %v3410 = vcombine.high %v3186, %v3186
    %v3412 = vunpack.c.l.s4 1966171168
    %v3413 = vunpack.c.0.s8 %v3412
    %v3414 = vlaneseq
    %v3415 = vshrl.u32 %v3414, 7
    %v3416 = vsub.s32 %v3413, %v3415
    %v3417 = vrot.slane %v3186, %v3416
    %v3419 = vunpack.c.l.s4 1966171168
    %v3420 = vunpack.c.0.s8 %v3419
    %v3421 = vlaneseq
    %v3422 = vshrl.u32 %v3421, 7
    %v3423 = vsub.s32 %v3420, %v3422
    %v3424 = vrot.slane %v3410, %v3423
    %v3425 = vcombine.high %v3417, %v3417
    %v3426 = vcombine.high %v3424, %v3424
    %v3428 = vunpack.c.l.s4 1966171168
    %v3429 = vunpack.c.0.s8 %v3428
    %v3430 = vlaneseq
    %v3431 = vshrl.u32 %v3430, 7
    %v3432 = vsub.s32 %v3429, %v3431
    %v3433 = vrot.slane %v3417, %v3432
    %v3435 = vunpack.c.l.s4 1966171168
    %v3436 = vunpack.c.0.s8 %v3435
    %v3437 = vlaneseq
    %v3438 = vshrl.u32 %v3437, 7
    %v3439 = vsub.s32 %v3436, %v3438
    %v3440 = vrot.slane %v3424, %v3439
    %v3442 = vunpack.c.l.s4 1966171168
    %v3443 = vunpack.c.0.s8 %v3442
    %v3444 = vlaneseq
    %v3445 = vshrl.u32 %v3444, 7
    %v3446 = vsub.s32 %v3443, %v3445
    %v3447 = vrot.slane %v3425, %v3446
    %v3449 = vunpack.c.l.s4 1966171168
    %v3450 = vunpack.c.0.s8 %v3449
    %v3451 = vlaneseq
    %v3452 = vshrl.u32 %v3451, 7
    %v3453 = vsub.s32 %v3450, %v3452
    %v3454 = vrot.slane %v3426, %v3453
    %v3455 = vcombine.high %v3433, %v3433
    %v3456 = vcombine.high %v3440, %v3440
    %v3457 = vcombine.high %v3447, %v3447
    %v3458 = vcombine.high %v3454, %v3454
    %v3459 = vcombine.high %v3187, %v3187
    %v3461 = vunpack.c.l.s4 1966171168
    %v3462 = vunpack.c.0.s8 %v3461
    %v3463 = vlaneseq
    %v3464 = vshrl.u32 %v3463, 7
    %v3465 = vsub.s32 %v3462, %v3464
    %v3466 = vrot.slane %v3187, %v3465
    %v3468 = vunpack.c.l.s4 1966171168
    %v3469 = vunpack.c.0.s8 %v3468
    %v3470 = vlaneseq
    %v3471 = vshrl.u32 %v3470, 7
    %v3472 = vsub.s32 %v3469, %v3471
    %v3473 = vrot.slane %v3459, %v3472
    %v3474 = vcombine.high %v3466, %v3466
    %v3475 = vcombine.high %v3473, %v3473
    %v3477 = vunpack.c.l.s4 1966171168
    %v3478 = vunpack.c.0.s8 %v3477
    %v3479 = vlaneseq
    %v3480 = vshrl.u32 %v3479, 7
    %v3481 = vsub.s32 %v3478, %v3480
    %v3482 = vrot.slane %v3466, %v3481
    %v3484 = vunpack.c.l.s4 1966171168
    %v3485 = vunpack.c.0.s8 %v3484
    %v3486 = vlaneseq
    %v3487 = vshrl.u32 %v3486, 7
    %v3488 = vsub.s32 %v3485, %v3487
    %v3489 = vrot.slane %v3473, %v3488
    %v3491 = vunpack.c.l.s4 1966171168
    %v3492 = vunpack.c.0.s8 %v3491
    %v3493 = vlaneseq
    %v3494 = vshrl.u32 %v3493, 7
    %v3495 = vsub.s32 %v3492, %v3494
    %v3496 = vrot.slane %v3474, %v3495
    %v3498 = vunpack.c.l.s4 1966171168
    %v3499 = vunpack.c.0.s8 %v3498
    %v3500 = vlaneseq
    %v3501 = vshrl.u32 %v3500, 7
    %v3502 = vsub.s32 %v3499, %v3501
    %v3503 = vrot.slane %v3475, %v3502
    %v3504 = vcombine.high %v3482, %v3482
    %v3505 = vcombine.high %v3489, %v3489
    %v3506 = vcombine.high %v3496, %v3496
    %v3507 = vcombine.high %v3503, %v3503
    %v3508 = vcombine.high %v3188, %v3188
    %v3510 = vunpack.c.l.s4 1966171168
    %v3511 = vunpack.c.0.s8 %v3510
    %v3512 = vlaneseq
    %v3513 = vshrl.u32 %v3512, 7
    %v3514 = vsub.s32 %v3511, %v3513
    %v3515 = vrot.slane %v3188, %v3514
    %v3517 = vunpack.c.l.s4 1966171168
    %v3518 = vunpack.c.0.s8 %v3517
    %v3519 = vlaneseq
    %v3520 = vshrl.u32 %v3519, 7
    %v3521 = vsub.s32 %v3518, %v3520
    %v3522 = vrot.slane %v3508, %v3521
    %v3523 = vcombine.high %v3515, %v3515
    %v3524 = vcombine.high %v3522, %v3522
    %v3526 = vunpack.c.l.s4 1966171168
    %v3527 = vunpack.c.0.s8 %v3526
    %v3528 = vlaneseq
    %v3529 = vshrl.u32 %v3528, 7
    %v3530 = vsub.s32 %v3527, %v3529
    %v3531 = vrot.slane %v3515, %v3530
    %v3533 = vunpack.c.l.s4 1966171168
    %v3534 = vunpack.c.0.s8 %v3533
    %v3535 = vlaneseq
    %v3536 = vshrl.u32 %v3535, 7
    %v3537 = vsub.s32 %v3534, %v3536
    %v3538 = vrot.slane %v3522, %v3537
    %v3540 = vunpack.c.l.s4 1966171168
    %v3541 = vunpack.c.0.s8 %v3540
    %v3542 = vlaneseq
    %v3543 = vshrl.u32 %v3542, 7
    %v3544 = vsub.s32 %v3541, %v3543
    %v3545 = vrot.slane %v3523, %v3544
    %v3547 = vunpack.c.l.s4 1966171168
    %v3548 = vunpack.c.0.s8 %v3547
    %v3549 = vlaneseq
    %v3550 = vshrl.u32 %v3549, 7
    %v3551 = vsub.s32 %v3548, %v3550
    %v3552 = vrot.slane %v3524, %v3551
    %v3553 = vcombine.high %v3531, %v3531
    %v3554 = vcombine.high %v3538, %v3538
    %v3555 = vcombine.high %v3545, %v3545
    %v3556 = vcombine.high %v3552, %v3552
    %v3557 = vcombine.high %v3189, %v3189
    %v3559 = vunpack.c.l.s4 1966171168
    %v3560 = vunpack.c.0.s8 %v3559
    %v3561 = vlaneseq
    %v3562 = vshrl.u32 %v3561, 7
    %v3563 = vsub.s32 %v3560, %v3562
    %v3564 = vrot.slane %v3189, %v3563
    %v3566 = vunpack.c.l.s4 1966171168
    %v3567 = vunpack.c.0.s8 %v3566
    %v3568 = vlaneseq
    %v3569 = vshrl.u32 %v3568, 7
    %v3570 = vsub.s32 %v3567, %v3569
    %v3571 = vrot.slane %v3557, %v3570
    %v3572 = vcombine.high %v3564, %v3564
    %v3573 = vcombine.high %v3571, %v3571
    %v3575 = vunpack.c.l.s4 1966171168
    %v3576 = vunpack.c.0.s8 %v3575
    %v3577 = vlaneseq
    %v3578 = vshrl.u32 %v3577, 7
    %v3579 = vsub.s32 %v3576, %v3578
    %v3580 = vrot.slane %v3564, %v3579
    %v3582 = vunpack.c.l.s4 1966171168
    %v3583 = vunpack.c.0.s8 %v3582
    %v3584 = vlaneseq
    %v3585 = vshrl.u32 %v3584, 7
    %v3586 = vsub.s32 %v3583, %v3585
    %v3587 = vrot.slane %v3571, %v3586
    %v3589 = vunpack.c.l.s4 1966171168
    %v3590 = vunpack.c.0.s8 %v3589
    %v3591 = vlaneseq
    %v3592 = vshrl.u32 %v3591, 7
    %v3593 = vsub.s32 %v3590, %v3592
    %v3594 = vrot.slane %v3572, %v3593
    %v3596 = vunpack.c.l.s4 1966171168
    %v3597 = vunpack.c.0.s8 %v3596
    %v3598 = vlaneseq
    %v3599 = vshrl.u32 %v3598, 7
    %v3600 = vsub.s32 %v3597, %v3599
    %v3601 = vrot.slane %v3573, %v3600
    %v3602 = vcombine.high %v3580, %v3580
    %v3603 = vcombine.high %v3587, %v3587
    %v3604 = vcombine.high %v3594, %v3594
    %v3605 = vcombine.high %v3601, %v3601
    %v3606 = vcombine.high %v3190, %v3190
    %v3608 = vunpack.c.l.s4 1966171168
    %v3609 = vunpack.c.0.s8 %v3608
    %v3610 = vlaneseq
    %v3611 = vshrl.u32 %v3610, 7
    %v3612 = vsub.s32 %v3609, %v3611
    %v3613 = vrot.slane %v3190, %v3612
    %v3615 = vunpack.c.l.s4 1966171168
    %v3616 = vunpack.c.0.s8 %v3615
    %v3617 = vlaneseq
    %v3618 = vshrl.u32 %v3617, 7
    %v3619 = vsub.s32 %v3616, %v3618
    %v3620 = vrot.slane %v3606, %v3619
    %v3621 = vcombine.high %v3613, %v3613
    %v3622 = vcombine.high %v3620, %v3620
    %v3624 = vunpack.c.l.s4 1966171168
    %v3625 = vunpack.c.0.s8 %v3624
    %v3626 = vlaneseq
    %v3627 = vshrl.u32 %v3626, 7
    %v3628 = vsub.s32 %v3625, %v3627
    %v3629 = vrot.slane %v3613, %v3628
    %v3631 = vunpack.c.l.s4 1966171168
    %v3632 = vunpack.c.0.s8 %v3631
    %v3633 = vlaneseq
    %v3634 = vshrl.u32 %v3633, 7
    %v3635 = vsub.s32 %v3632, %v3634
    %v3636 = vrot.slane %v3620, %v3635
    %v3638 = vunpack.c.l.s4 1966171168
    %v3639 = vunpack.c.0.s8 %v3638
    %v3640 = vlaneseq
    %v3641 = vshrl.u32 %v3640, 7
    %v3642 = vsub.s32 %v3639, %v3641
    %v3643 = vrot.slane %v3621, %v3642
    %v3645 = vunpack.c.l.s4 1966171168
    %v3646 = vunpack.c.0.s8 %v3645
    %v3647 = vlaneseq
    %v3648 = vshrl.u32 %v3647, 7
    %v3649 = vsub.s32 %v3646, %v3648
    %v3650 = vrot.slane %v3622, %v3649
    %v3651 = vcombine.high %v3629, %v3629
    %v3652 = vcombine.high %v3636, %v3636
    %v3653 = vcombine.high %v3643, %v3643
    %v3654 = vcombine.high %v3650, %v3650
    %v3655 = vcombine.high %v3191, %v3191
    %v3657 = vunpack.c.l.s4 1966171168
    %v3658 = vunpack.c.0.s8 %v3657
    %v3659 = vlaneseq
    %v3660 = vshrl.u32 %v3659, 7
    %v3661 = vsub.s32 %v3658, %v3660
    %v3662 = vrot.slane %v3191, %v3661
    %v3664 = vunpack.c.l.s4 1966171168
    %v3665 = vunpack.c.0.s8 %v3664
    %v3666 = vlaneseq
    %v3667 = vshrl.u32 %v3666, 7
    %v3668 = vsub.s32 %v3665, %v3667
    %v3669 = vrot.slane %v3655, %v3668
    %v3670 = vcombine.high %v3662, %v3662
    %v3671 = vcombine.high %v3669, %v3669
    %v3673 = vunpack.c.l.s4 1966171168
    %v3674 = vunpack.c.0.s8 %v3673
    %v3675 = vlaneseq
    %v3676 = vshrl.u32 %v3675, 7
    %v3677 = vsub.s32 %v3674, %v3676
    %v3678 = vrot.slane %v3662, %v3677
    %v3680 = vunpack.c.l.s4 1966171168
    %v3681 = vunpack.c.0.s8 %v3680
    %v3682 = vlaneseq
    %v3683 = vshrl.u32 %v3682, 7
    %v3684 = vsub.s32 %v3681, %v3683
    %v3685 = vrot.slane %v3669, %v3684
    %v3687 = vunpack.c.l.s4 1966171168
    %v3688 = vunpack.c.0.s8 %v3687
    %v3689 = vlaneseq
    %v3690 = vshrl.u32 %v3689, 7
    %v3691 = vsub.s32 %v3688, %v3690
    %v3692 = vrot.slane %v3670, %v3691
    %v3694 = vunpack.c.l.s4 1966171168
    %v3695 = vunpack.c.0.s8 %v3694
    %v3696 = vlaneseq
    %v3697 = vshrl.u32 %v3696, 7
    %v3698 = vsub.s32 %v3695, %v3697
    %v3699 = vrot.slane %v3671, %v3698
    %v3700 = vcombine.high %v3678, %v3678
    %v3701 = vcombine.high %v3685, %v3685
    %v3702 = vcombine.high %v3692, %v3692
    %v3703 = vcombine.high %v3699, %v3699
    %v3704 = vcombine.high %v3192, %v3192
    %v3706 = vunpack.c.l.s4 1966171168
    %v3707 = vunpack.c.0.s8 %v3706
    %v3708 = vlaneseq
    %v3709 = vshrl.u32 %v3708, 7
    %v3710 = vsub.s32 %v3707, %v3709
    %v3711 = vrot.slane %v3192, %v3710
    %v3713 = vunpack.c.l.s4 1966171168
    %v3714 = vunpack.c.0.s8 %v3713
    %v3715 = vlaneseq
    %v3716 = vshrl.u32 %v3715, 7
    %v3717 = vsub.s32 %v3714, %v3716
    %v3718 = vrot.slane %v3704, %v3717
    %v3719 = vcombine.high %v3711, %v3711
    %v3720 = vcombine.high %v3718, %v3718
    %v3722 = vunpack.c.l.s4 1966171168
    %v3723 = vunpack.c.0.s8 %v3722
    %v3724 = vlaneseq
    %v3725 = vshrl.u32 %v3724, 7
    %v3726 = vsub.s32 %v3723, %v3725
    %v3727 = vrot.slane %v3711, %v3726
    %v3729 = vunpack.c.l.s4 1966171168
    %v3730 = vunpack.c.0.s8 %v3729
    %v3731 = vlaneseq
    %v3732 = vshrl.u32 %v3731, 7
    %v3733 = vsub.s32 %v3730, %v3732
    %v3734 = vrot.slane %v3718, %v3733
    %v3736 = vunpack.c.l.s4 1966171168
    %v3737 = vunpack.c.0.s8 %v3736
    %v3738 = vlaneseq
    %v3739 = vshrl.u32 %v3738, 7
    %v3740 = vsub.s32 %v3737, %v3739
    %v3741 = vrot.slane %v3719, %v3740
    %v3743 = vunpack.c.l.s4 1966171168
    %v3744 = vunpack.c.0.s8 %v3743
    %v3745 = vlaneseq
    %v3746 = vshrl.u32 %v3745, 7
    %v3747 = vsub.s32 %v3744, %v3746
    %v3748 = vrot.slane %v3720, %v3747
    %v3749 = vcombine.high %v3727, %v3727
    %v3750 = vcombine.high %v3734, %v3734
    %v3751 = vcombine.high %v3741, %v3741
    %v3752 = vcombine.high %v3748, %v3748
    %v3753 = vcombine.high %v3193, %v3193
    %v3755 = vunpack.c.l.s4 1966171168
    %v3756 = vunpack.c.0.s8 %v3755
    %v3757 = vlaneseq
    %v3758 = vshrl.u32 %v3757, 7
    %v3759 = vsub.s32 %v3756, %v3758
    %v3760 = vrot.slane %v3193, %v3759
    %v3762 = vunpack.c.l.s4 1966171168
    %v3763 = vunpack.c.0.s8 %v3762
    %v3764 = vlaneseq
    %v3765 = vshrl.u32 %v3764, 7
    %v3766 = vsub.s32 %v3763, %v3765
    %v3767 = vrot.slane %v3753, %v3766
    %v3768 = vcombine.high %v3760, %v3760
    %v3769 = vcombine.high %v3767, %v3767
    %v3771 = vunpack.c.l.s4 1966171168
    %v3772 = vunpack.c.0.s8 %v3771
    %v3773 = vlaneseq
    %v3774 = vshrl.u32 %v3773, 7
    %v3775 = vsub.s32 %v3772, %v3774
    %v3776 = vrot.slane %v3760, %v3775
    %v3778 = vunpack.c.l.s4 1966171168
    %v3779 = vunpack.c.0.s8 %v3778
    %v3780 = vlaneseq
    %v3781 = vshrl.u32 %v3780, 7
    %v3782 = vsub.s32 %v3779, %v3781
    %v3783 = vrot.slane %v3767, %v3782
    %v3785 = vunpack.c.l.s4 1966171168
    %v3786 = vunpack.c.0.s8 %v3785
    %v3787 = vlaneseq
    %v3788 = vshrl.u32 %v3787, 7
    %v3789 = vsub.s32 %v3786, %v3788
    %v3790 = vrot.slane %v3768, %v3789
    %v3792 = vunpack.c.l.s4 1966171168
    %v3793 = vunpack.c.0.s8 %v3792
    %v3794 = vlaneseq
    %v3795 = vshrl.u32 %v3794, 7
    %v3796 = vsub.s32 %v3793, %v3795
    %v3797 = vrot.slane %v3769, %v3796
    %v3798 = vcombine.high %v3776, %v3776
    %v3799 = vcombine.high %v3783, %v3783
    %v3800 = vcombine.high %v3790, %v3790
    %v3801 = vcombine.high %v3797, %v3797
    %v3802 = vcombine.high %v3194, %v3194
    %v3804 = vunpack.c.l.s4 1966171168
    %v3805 = vunpack.c.0.s8 %v3804
    %v3806 = vlaneseq
    %v3807 = vshrl.u32 %v3806, 7
    %v3808 = vsub.s32 %v3805, %v3807
    %v3809 = vrot.slane %v3194, %v3808
    %v3811 = vunpack.c.l.s4 1966171168
    %v3812 = vunpack.c.0.s8 %v3811
    %v3813 = vlaneseq
    %v3814 = vshrl.u32 %v3813, 7
    %v3815 = vsub.s32 %v3812, %v3814
    %v3816 = vrot.slane %v3802, %v3815
    %v3817 = vcombine.high %v3809, %v3809
    %v3818 = vcombine.high %v3816, %v3816
    %v3820 = vunpack.c.l.s4 1966171168
    %v3821 = vunpack.c.0.s8 %v3820
    %v3822 = vlaneseq
    %v3823 = vshrl.u32 %v3822, 7
    %v3824 = vsub.s32 %v3821, %v3823
    %v3825 = vrot.slane %v3809, %v3824
    %v3827 = vunpack.c.l.s4 1966171168
    %v3828 = vunpack.c.0.s8 %v3827
    %v3829 = vlaneseq
    %v3830 = vshrl.u32 %v3829, 7
    %v3831 = vsub.s32 %v3828, %v3830
    %v3832 = vrot.slane %v3816, %v3831
    %v3834 = vunpack.c.l.s4 1966171168
    %v3835 = vunpack.c.0.s8 %v3834
    %v3836 = vlaneseq
    %v3837 = vshrl.u32 %v3836, 7
    %v3838 = vsub.s32 %v3835, %v3837
    %v3839 = vrot.slane %v3817, %v3838
    %v3841 = vunpack.c.l.s4 1966171168
    %v3842 = vunpack.c.0.s8 %v3841
    %v3843 = vlaneseq
    %v3844 = vshrl.u32 %v3843, 7
    %v3845 = vsub.s32 %v3842, %v3844
    %v3846 = vrot.slane %v3818, %v3845
    %v3847 = vcombine.high %v3825, %v3825
    %v3848 = vcombine.high %v3832, %v3832
    %v3849 = vcombine.high %v3839, %v3839
    %v3850 = vcombine.high %v3846, %v3846
    %v3851 = vcombine.high %v3195, %v3195
    %v3853 = vunpack.c.l.s4 1966171168
    %v3854 = vunpack.c.0.s8 %v3853
    %v3855 = vlaneseq
    %v3856 = vshrl.u32 %v3855, 7
    %v3857 = vsub.s32 %v3854, %v3856
    %v3858 = vrot.slane %v3195, %v3857
    %v3860 = vunpack.c.l.s4 1966171168
    %v3861 = vunpack.c.0.s8 %v3860
    %v3862 = vlaneseq
    %v3863 = vshrl.u32 %v3862, 7
    %v3864 = vsub.s32 %v3861, %v3863
    %v3865 = vrot.slane %v3851, %v3864
    %v3866 = vcombine.high %v3858, %v3858
    %v3867 = vcombine.high %v3865, %v3865
    %v3869 = vunpack.c.l.s4 1966171168
    %v3870 = vunpack.c.0.s8 %v3869
    %v3871 = vlaneseq
    %v3872 = vshrl.u32 %v3871, 7
    %v3873 = vsub.s32 %v3870, %v3872
    %v3874 = vrot.slane %v3858, %v3873
    %v3876 = vunpack.c.l.s4 1966171168
    %v3877 = vunpack.c.0.s8 %v3876
    %v3878 = vlaneseq
    %v3879 = vshrl.u32 %v3878, 7
    %v3880 = vsub.s32 %v3877, %v3879
    %v3881 = vrot.slane %v3865, %v3880
    %v3883 = vunpack.c.l.s4 1966171168
    %v3884 = vunpack.c.0.s8 %v3883
    %v3885 = vlaneseq
    %v3886 = vshrl.u32 %v3885, 7
    %v3887 = vsub.s32 %v3884, %v3886
    %v3888 = vrot.slane %v3866, %v3887
    %v3890 = vunpack.c.l.s4 1966171168
    %v3891 = vunpack.c.0.s8 %v3890
    %v3892 = vlaneseq
    %v3893 = vshrl.u32 %v3892, 7
    %v3894 = vsub.s32 %v3891, %v3893
    %v3895 = vrot.slane %v3867, %v3894
    %v3896 = vcombine.high %v3874, %v3874
    %v3897 = vcombine.high %v3881, %v3881
    %v3898 = vcombine.high %v3888, %v3888
    %v3899 = vcombine.high %v3895, %v3895
    %v3900 = vcombine.high %v3196, %v3196
    %v3902 = vunpack.c.l.s4 1966171168
    %v3903 = vunpack.c.0.s8 %v3902
    %v3904 = vlaneseq
    %v3905 = vshrl.u32 %v3904, 7
    %v3906 = vsub.s32 %v3903, %v3905
    %v3907 = vrot.slane %v3196, %v3906
    %v3909 = vunpack.c.l.s4 1966171168
    %v3910 = vunpack.c.0.s8 %v3909
    %v3911 = vlaneseq
    %v3912 = vshrl.u32 %v3911, 7
    %v3913 = vsub.s32 %v3910, %v3912
    %v3914 = vrot.slane %v3900, %v3913
    %v3915 = vcombine.high %v3907, %v3907
    %v3916 = vcombine.high %v3914, %v3914
    %v3918 = vunpack.c.l.s4 1966171168
    %v3919 = vunpack.c.0.s8 %v3918
    %v3920 = vlaneseq
    %v3921 = vshrl.u32 %v3920, 7
    %v3922 = vsub.s32 %v3919, %v3921
    %v3923 = vrot.slane %v3907, %v3922
    %v3925 = vunpack.c.l.s4 1966171168
    %v3926 = vunpack.c.0.s8 %v3925
    %v3927 = vlaneseq
    %v3928 = vshrl.u32 %v3927, 7
    %v3929 = vsub.s32 %v3926, %v3928
    %v3930 = vrot.slane %v3914, %v3929
    %v3932 = vunpack.c.l.s4 1966171168
    %v3933 = vunpack.c.0.s8 %v3932
    %v3934 = vlaneseq
    %v3935 = vshrl.u32 %v3934, 7
    %v3936 = vsub.s32 %v3933, %v3935
    %v3937 = vrot.slane %v3915, %v3936
    %v3939 = vunpack.c.l.s4 1966171168
    %v3940 = vunpack.c.0.s8 %v3939
    %v3941 = vlaneseq
    %v3942 = vshrl.u32 %v3941, 7
    %v3943 = vsub.s32 %v3940, %v3942
    %v3944 = vrot.slane %v3916, %v3943
    %v3945 = vcombine.high %v3923, %v3923
    %v3946 = vcombine.high %v3930, %v3930
    %v3947 = vcombine.high %v3937, %v3937
    %v3948 = vcombine.high %v3944, %v3944
    %v3949 = vcombine.high %v3197, %v3197
    %v3951 = vunpack.c.l.s4 1966171168
    %v3952 = vunpack.c.0.s8 %v3951
    %v3953 = vlaneseq
    %v3954 = vshrl.u32 %v3953, 7
    %v3955 = vsub.s32 %v3952, %v3954
    %v3956 = vrot.slane %v3197, %v3955
    %v3958 = vunpack.c.l.s4 1966171168
    %v3959 = vunpack.c.0.s8 %v3958
    %v3960 = vlaneseq
    %v3961 = vshrl.u32 %v3960, 7
    %v3962 = vsub.s32 %v3959, %v3961
    %v3963 = vrot.slane %v3949, %v3962
    %v3964 = vcombine.high %v3956, %v3956
    %v3965 = vcombine.high %v3963, %v3963
    %v3967 = vunpack.c.l.s4 1966171168
    %v3968 = vunpack.c.0.s8 %v3967
    %v3969 = vlaneseq
    %v3970 = vshrl.u32 %v3969, 7
    %v3971 = vsub.s32 %v3968, %v3970
    %v3972 = vrot.slane %v3956, %v3971
    %v3974 = vunpack.c.l.s4 1966171168
    %v3975 = vunpack.c.0.s8 %v3974
    %v3976 = vlaneseq
    %v3977 = vshrl.u32 %v3976, 7
    %v3978 = vsub.s32 %v3975, %v3977
    %v3979 = vrot.slane %v3963, %v3978
    %v3981 = vunpack.c.l.s4 1966171168
    %v3982 = vunpack.c.0.s8 %v3981
    %v3983 = vlaneseq
    %v3984 = vshrl.u32 %v3983, 7
    %v3985 = vsub.s32 %v3982, %v3984
    %v3986 = vrot.slane %v3964, %v3985
    %v3988 = vunpack.c.l.s4 1966171168
    %v3989 = vunpack.c.0.s8 %v3988
    %v3990 = vlaneseq
    %v3991 = vshrl.u32 %v3990, 7
    %v3992 = vsub.s32 %v3989, %v3991
    %v3993 = vrot.slane %v3965, %v3992
    %v3994 = vcombine.high %v3972, %v3972
    %v3995 = vcombine.high %v3979, %v3979
    %v3996 = vcombine.high %v3986, %v3986
    %v3997 = vcombine.high %v3993, %v3993
    %v3998 = vlaneseq
    %v3999 = vshrl.u32 %v3998, 7
    %v4000 = vsub.s32 0, %v3999
    %v4001 = vrot.slane %v3237, %v4000
    %v4002 = vlaneseq
    %v4003 = vshrl.u32 %v4002, 7
    %v4004 = vsub.s32 0, %v4003
    %v4005 = vrot.slane %v3251, %v4004
    %v4006 = vlaneseq
    %v4007 = vshrl.u32 %v4006, 7
    %v4008 = vsub.s32 0, %v4007
    %v4009 = vrot.slane %v3259, %v4008
    %v4010 = vlaneseq
    %v4011 = vshrl.u32 %v4010, 7
    %v4012 = vsub.s32 0, %v4011
    %v4013 = vrot.slane %v3261, %v4012
    %v4014 = vlaneseq
    %v4015 = vshrl.u32 %v4014, 7
    %v4016 = vsub.s32 0, %v4015
    %v4017 = vrot.slane %v3244, %v4016
    %v4018 = vlaneseq
    %v4019 = vshrl.u32 %v4018, 7
    %v4020 = vsub.s32 0, %v4019
    %v4021 = vrot.slane %v3258, %v4020
    %v4022 = vlaneseq
    %v4023 = vshrl.u32 %v4022, 7
    %v4024 = vsub.s32 0, %v4023
    %v4025 = vrot.slane %v3260, %v4024
    %v4026 = vlaneseq
    %v4027 = vshrl.u32 %v4026, 7
    %v4028 = vsub.s32 0, %v4027
    %v4029 = vrot.slane %v3262, %v4028
    %v4030 = vlaneseq
    %v4031 = vshrl.u32 %v4030, 7
    %v4032 = vsub.s32 0, %v4031
    %v4033 = vrot.slane %v3286, %v4032
    %v4034 = vlaneseq
    %v4035 = vshrl.u32 %v4034, 7
    %v4036 = vsub.s32 0, %v4035
    %v4037 = vrot.slane %v3300, %v4036
    %v4038 = vlaneseq
    %v4039 = vshrl.u32 %v4038, 7
    %v4040 = vsub.s32 0, %v4039
    %v4041 = vrot.slane %v3308, %v4040
    %v4042 = vlaneseq
    %v4043 = vshrl.u32 %v4042, 7
    %v4044 = vsub.s32 0, %v4043
    %v4045 = vrot.slane %v3310, %v4044
    %v4046 = vlaneseq
    %v4047 = vshrl.u32 %v4046, 7
    %v4048 = vsub.s32 0, %v4047
    %v4049 = vrot.slane %v3293, %v4048
    %v4050 = vlaneseq
    %v4051 = vshrl.u32 %v4050, 7
    %v4052 = vsub.s32 0, %v4051
    %v4053 = vrot.slane %v3307, %v4052
    %v4054 = vlaneseq
    %v4055 = vshrl.u32 %v4054, 7
    %v4056 = vsub.s32 0, %v4055
    %v4057 = vrot.slane %v3309, %v4056
    %v4058 = vlaneseq
    %v4059 = vshrl.u32 %v4058, 7
    %v4060 = vsub.s32 0, %v4059
    %v4061 = vrot.slane %v3311, %v4060
    %v4062 = vlaneseq
    %v4063 = vshrl.u32 %v4062, 7
    %v4064 = vsub.s32 0, %v4063
    %v4065 = vrot.slane %v3335, %v4064
    %v4066 = vlaneseq
    %v4067 = vshrl.u32 %v4066, 7
    %v4068 = vsub.s32 0, %v4067
    %v4069 = vrot.slane %v3349, %v4068
    %v4070 = vlaneseq
    %v4071 = vshrl.u32 %v4070, 7
    %v4072 = vsub.s32 0, %v4071
    %v4073 = vrot.slane %v3357, %v4072
    %v4074 = vlaneseq
    %v4075 = vshrl.u32 %v4074, 7
    %v4076 = vsub.s32 0, %v4075
    %v4077 = vrot.slane %v3359, %v4076
    %v4078 = vlaneseq
    %v4079 = vshrl.u32 %v4078, 7
    %v4080 = vsub.s32 0, %v4079
    %v4081 = vrot.slane %v3342, %v4080
    %v4082 = vlaneseq
    %v4083 = vshrl.u32 %v4082, 7
    %v4084 = vsub.s32 0, %v4083
    %v4085 = vrot.slane %v3356, %v4084
    %v4086 = vlaneseq
    %v4087 = vshrl.u32 %v4086, 7
    %v4088 = vsub.s32 0, %v4087
    %v4089 = vrot.slane %v3358, %v4088
    %v4090 = vlaneseq
    %v4091 = vshrl.u32 %v4090, 7
    %v4092 = vsub.s32 0, %v4091
    %v4093 = vrot.slane %v3360, %v4092
    %v4094 = vlaneseq
    %v4095 = vshrl.u32 %v4094, 7
    %v4096 = vsub.s32 0, %v4095
    %v4097 = vrot.slane %v3384, %v4096
    %v4098 = vlaneseq
    %v4099 = vshrl.u32 %v4098, 7
    %v4100 = vsub.s32 0, %v4099
    %v4101 = vrot.slane %v3398, %v4100
    %v4102 = vlaneseq
    %v4103 = vshrl.u32 %v4102, 7
    %v4104 = vsub.s32 0, %v4103
    %v4105 = vrot.slane %v3406, %v4104
    %v4106 = vlaneseq
    %v4107 = vshrl.u32 %v4106, 7
    %v4108 = vsub.s32 0, %v4107
    %v4109 = vrot.slane %v3408, %v4108
    %v4110 = vlaneseq
    %v4111 = vshrl.u32 %v4110, 7
    %v4112 = vsub.s32 0, %v4111
    %v4113 = vrot.slane %v3391, %v4112
    %v4114 = vlaneseq
    %v4115 = vshrl.u32 %v4114, 7
    %v4116 = vsub.s32 0, %v4115
    %v4117 = vrot.slane %v3405, %v4116
    %v4118 = vlaneseq
    %v4119 = vshrl.u32 %v4118, 7
    %v4120 = vsub.s32 0, %v4119
    %v4121 = vrot.slane %v3407, %v4120
    %v4122 = vlaneseq
    %v4123 = vshrl.u32 %v4122, 7
    %v4124 = vsub.s32 0, %v4123
    %v4125 = vrot.slane %v3409, %v4124
    %v4126 = vlaneseq
    %v4127 = vshrl.u32 %v4126, 7
    %v4128 = vsub.s32 0, %v4127
    %v4129 = vrot.slane %v3433, %v4128
    %v4130 = vlaneseq
    %v4131 = vshrl.u32 %v4130, 7
    %v4132 = vsub.s32 0, %v4131
    %v4133 = vrot.slane %v3447, %v4132
    %v4134 = vlaneseq
    %v4135 = vshrl.u32 %v4134, 7
    %v4136 = vsub.s32 0, %v4135
    %v4137 = vrot.slane %v3455, %v4136
    %v4138 = vlaneseq
    %v4139 = vshrl.u32 %v4138, 7
    %v4140 = vsub.s32 0, %v4139
    %v4141 = vrot.slane %v3457, %v4140
    %v4142 = vlaneseq
    %v4143 = vshrl.u32 %v4142, 7
    %v4144 = vsub.s32 0, %v4143
    %v4145 = vrot.slane %v3440, %v4144
    %v4146 = vlaneseq
    %v4147 = vshrl.u32 %v4146, 7
    %v4148 = vsub.s32 0, %v4147
    %v4149 = vrot.slane %v3454, %v4148
    %v4150 = vlaneseq
    %v4151 = vshrl.u32 %v4150, 7
    %v4152 = vsub.s32 0, %v4151
    %v4153 = vrot.slane %v3456, %v4152
    %v4154 = vlaneseq
    %v4155 = vshrl.u32 %v4154, 7
    %v4156 = vsub.s32 0, %v4155
    %v4157 = vrot.slane %v3458, %v4156
    %v4158 = vlaneseq
    %v4159 = vshrl.u32 %v4158, 7
    %v4160 = vsub.s32 0, %v4159
    %v4161 = vrot.slane %v3482, %v4160
    %v4162 = vlaneseq
    %v4163 = vshrl.u32 %v4162, 7
    %v4164 = vsub.s32 0, %v4163
    %v4165 = vrot.slane %v3496, %v4164
    %v4166 = vlaneseq
    %v4167 = vshrl.u32 %v4166, 7
    %v4168 = vsub.s32 0, %v4167
    %v4169 = vrot.slane %v3504, %v4168
    %v4170 = vlaneseq
    %v4171 = vshrl.u32 %v4170, 7
    %v4172 = vsub.s32 0, %v4171
    %v4173 = vrot.slane %v3506, %v4172
    %v4174 = vlaneseq
    %v4175 = vshrl.u32 %v4174, 7
    %v4176 = vsub.s32 0, %v4175
    %v4177 = vrot.slane %v3489, %v4176
    %v4178 = vlaneseq
    %v4179 = vshrl.u32 %v4178, 7
    %v4180 = vsub.s32 0, %v4179
    %v4181 = vrot.slane %v3503, %v4180
    %v4182 = vlaneseq
    %v4183 = vshrl.u32 %v4182, 7
    %v4184 = vsub.s32 0, %v4183
    %v4185 = vrot.slane %v3505, %v4184
    %v4186 = vlaneseq
    %v4187 = vshrl.u32 %v4186, 7
    %v4188 = vsub.s32 0, %v4187
    %v4189 = vrot.slane %v3507, %v4188
    %v4190 = vlaneseq
    %v4191 = vshrl.u32 %v4190, 7
    %v4192 = vsub.s32 0, %v4191
    %v4193 = vrot.slane %v3531, %v4192
    %v4194 = vlaneseq
    %v4195 = vshrl.u32 %v4194, 7
    %v4196 = vsub.s32 0, %v4195
    %v4197 = vrot.slane %v3545, %v4196
    %v4198 = vlaneseq
    %v4199 = vshrl.u32 %v4198, 7
    %v4200 = vsub.s32 0, %v4199
    %v4201 = vrot.slane %v3553, %v4200
    %v4202 = vlaneseq
    %v4203 = vshrl.u32 %v4202, 7
    %v4204 = vsub.s32 0, %v4203
    %v4205 = vrot.slane %v3555, %v4204
    %v4206 = vlaneseq
    %v4207 = vshrl.u32 %v4206, 7
    %v4208 = vsub.s32 0, %v4207
    %v4209 = vrot.slane %v3538, %v4208
    %v4210 = vlaneseq
    %v4211 = vshrl.u32 %v4210, 7
    %v4212 = vsub.s32 0, %v4211
    %v4213 = vrot.slane %v3552, %v4212
    %v4214 = vlaneseq
    %v4215 = vshrl.u32 %v4214, 7
    %v4216 = vsub.s32 0, %v4215
    %v4217 = vrot.slane %v3554, %v4216
    %v4218 = vlaneseq
    %v4219 = vshrl.u32 %v4218, 7
    %v4220 = vsub.s32 0, %v4219
    %v4221 = vrot.slane %v3556, %v4220
    %v4222 = vlaneseq
    %v4223 = vshrl.u32 %v4222, 7
    %v4224 = vsub.s32 0, %v4223
    %v4225 = vrot.slane %v3580, %v4224
    %v4226 = vlaneseq
    %v4227 = vshrl.u32 %v4226, 7
    %v4228 = vsub.s32 0, %v4227
    %v4229 = vrot.slane %v3594, %v4228
    %v4230 = vlaneseq
    %v4231 = vshrl.u32 %v4230, 7
    %v4232 = vsub.s32 0, %v4231
    %v4233 = vrot.slane %v3602, %v4232
    %v4234 = vlaneseq
    %v4235 = vshrl.u32 %v4234, 7
    %v4236 = vsub.s32 0, %v4235
    %v4237 = vrot.slane %v3604, %v4236
    %v4238 = vlaneseq
    %v4239 = vshrl.u32 %v4238, 7
    %v4240 = vsub.s32 0, %v4239
    %v4241 = vrot.slane %v3587, %v4240
    %v4242 = vlaneseq
    %v4243 = vshrl.u32 %v4242, 7
    %v4244 = vsub.s32 0, %v4243
    %v4245 = vrot.slane %v3601, %v4244
    %v4246 = vlaneseq
    %v4247 = vshrl.u32 %v4246, 7
    %v4248 = vsub.s32 0, %v4247
    %v4249 = vrot.slane %v3603, %v4248
    %v4250 = vlaneseq
    %v4251 = vshrl.u32 %v4250, 7
    %v4252 = vsub.s32 0, %v4251
    %v4253 = vrot.slane %v3605, %v4252
    %v4254 = vlaneseq
    %v4255 = vshrl.u32 %v4254, 7
    %v4256 = vsub.s32 0, %v4255
    %v4257 = vrot.slane %v3629, %v4256
    %v4258 = vlaneseq
    %v4259 = vshrl.u32 %v4258, 7
    %v4260 = vsub.s32 0, %v4259
    %v4261 = vrot.slane %v3643, %v4260
    %v4262 = vlaneseq
    %v4263 = vshrl.u32 %v4262, 7
    %v4264 = vsub.s32 0, %v4263
    %v4265 = vrot.slane %v3651, %v4264
    %v4266 = vlaneseq
    %v4267 = vshrl.u32 %v4266, 7
    %v4268 = vsub.s32 0, %v4267
    %v4269 = vrot.slane %v3653, %v4268
    %v4270 = vlaneseq
    %v4271 = vshrl.u32 %v4270, 7
    %v4272 = vsub.s32 0, %v4271
    %v4273 = vrot.slane %v3636, %v4272
    %v4274 = vlaneseq
    %v4275 = vshrl.u32 %v4274, 7
    %v4276 = vsub.s32 0, %v4275
    %v4277 = vrot.slane %v3650, %v4276
    %v4278 = vlaneseq
    %v4279 = vshrl.u32 %v4278, 7
    %v4280 = vsub.s32 0, %v4279
    %v4281 = vrot.slane %v3652, %v4280
    %v4282 = vlaneseq
    %v4283 = vshrl.u32 %v4282, 7
    %v4284 = vsub.s32 0, %v4283
    %v4285 = vrot.slane %v3654, %v4284
    %v4286 = vlaneseq
    %v4287 = vshrl.u32 %v4286, 7
    %v4288 = vsub.s32 0, %v4287
    %v4289 = vrot.slane %v3678, %v4288
    %v4290 = vlaneseq
    %v4291 = vshrl.u32 %v4290, 7
    %v4292 = vsub.s32 0, %v4291
    %v4293 = vrot.slane %v3692, %v4292
    %v4294 = vlaneseq
    %v4295 = vshrl.u32 %v4294, 7
    %v4296 = vsub.s32 0, %v4295
    %v4297 = vrot.slane %v3700, %v4296
    %v4298 = vlaneseq
    %v4299 = vshrl.u32 %v4298, 7
    %v4300 = vsub.s32 0, %v4299
    %v4301 = vrot.slane %v3702, %v4300
    %v4302 = vlaneseq
    %v4303 = vshrl.u32 %v4302, 7
    %v4304 = vsub.s32 0, %v4303
    %v4305 = vrot.slane %v3685, %v4304
    %v4306 = vlaneseq
    %v4307 = vshrl.u32 %v4306, 7
    %v4308 = vsub.s32 0, %v4307
    %v4309 = vrot.slane %v3699, %v4308
    %v4310 = vlaneseq
    %v4311 = vshrl.u32 %v4310, 7
    %v4312 = vsub.s32 0, %v4311
    %v4313 = vrot.slane %v3701, %v4312
    %v4314 = vlaneseq
    %v4315 = vshrl.u32 %v4314, 7
    %v4316 = vsub.s32 0, %v4315
    %v4317 = vrot.slane %v3703, %v4316
    %v4318 = vlaneseq
    %v4319 = vshrl.u32 %v4318, 7
    %v4320 = vsub.s32 0, %v4319
    %v4321 = vrot.slane %v3727, %v4320
    %v4322 = vlaneseq
    %v4323 = vshrl.u32 %v4322, 7
    %v4324 = vsub.s32 0, %v4323
    %v4325 = vrot.slane %v3741, %v4324
    %v4326 = vlaneseq
    %v4327 = vshrl.u32 %v4326, 7
    %v4328 = vsub.s32 0, %v4327
    %v4329 = vrot.slane %v3749, %v4328
    %v4330 = vlaneseq
    %v4331 = vshrl.u32 %v4330, 7
    %v4332 = vsub.s32 0, %v4331
    %v4333 = vrot.slane %v3751, %v4332
    %v4334 = vlaneseq
    %v4335 = vshrl.u32 %v4334, 7
    %v4336 = vsub.s32 0, %v4335
    %v4337 = vrot.slane %v3734, %v4336
    %v4338 = vlaneseq
    %v4339 = vshrl.u32 %v4338, 7
    %v4340 = vsub.s32 0, %v4339
    %v4341 = vrot.slane %v3748, %v4340
    %v4342 = vlaneseq
    %v4343 = vshrl.u32 %v4342, 7
    %v4344 = vsub.s32 0, %v4343
    %v4345 = vrot.slane %v3750, %v4344
    %v4346 = vlaneseq
    %v4347 = vshrl.u32 %v4346, 7
    %v4348 = vsub.s32 0, %v4347
    %v4349 = vrot.slane %v3752, %v4348
    %v4350 = vlaneseq
    %v4351 = vshrl.u32 %v4350, 7
    %v4352 = vsub.s32 0, %v4351
    %v4353 = vrot.slane %v3776, %v4352
    %v4354 = vlaneseq
    %v4355 = vshrl.u32 %v4354, 7
    %v4356 = vsub.s32 0, %v4355
    %v4357 = vrot.slane %v3790, %v4356
    %v4358 = vlaneseq
    %v4359 = vshrl.u32 %v4358, 7
    %v4360 = vsub.s32 0, %v4359
    %v4361 = vrot.slane %v3798, %v4360
    %v4362 = vlaneseq
    %v4363 = vshrl.u32 %v4362, 7
    %v4364 = vsub.s32 0, %v4363
    %v4365 = vrot.slane %v3800, %v4364
    %v4366 = vlaneseq
    %v4367 = vshrl.u32 %v4366, 7
    %v4368 = vsub.s32 0, %v4367
    %v4369 = vrot.slane %v3783, %v4368
    %v4370 = vlaneseq
    %v4371 = vshrl.u32 %v4370, 7
    %v4372 = vsub.s32 0, %v4371
    %v4373 = vrot.slane %v3797, %v4372
    %v4374 = vlaneseq
    %v4375 = vshrl.u32 %v4374, 7
    %v4376 = vsub.s32 0, %v4375
    %v4377 = vrot.slane %v3799, %v4376
    %v4378 = vlaneseq
    %v4379 = vshrl.u32 %v4378, 7
    %v4380 = vsub.s32 0, %v4379
    %v4381 = vrot.slane %v3801, %v4380
    %v4382 = vlaneseq
    %v4383 = vshrl.u32 %v4382, 7
    %v4384 = vsub.s32 0, %v4383
    %v4385 = vrot.slane %v3825, %v4384
    %v4386 = vlaneseq
    %v4387 = vshrl.u32 %v4386, 7
    %v4388 = vsub.s32 0, %v4387
    %v4389 = vrot.slane %v3839, %v4388
    %v4390 = vlaneseq
    %v4391 = vshrl.u32 %v4390, 7
    %v4392 = vsub.s32 0, %v4391
    %v4393 = vrot.slane %v3847, %v4392
    %v4394 = vlaneseq
    %v4395 = vshrl.u32 %v4394, 7
    %v4396 = vsub.s32 0, %v4395
    %v4397 = vrot.slane %v3849, %v4396
    %v4398 = vlaneseq
    %v4399 = vshrl.u32 %v4398, 7
    %v4400 = vsub.s32 0, %v4399
    %v4401 = vrot.slane %v3832, %v4400
    %v4402 = vlaneseq
    %v4403 = vshrl.u32 %v4402, 7
    %v4404 = vsub.s32 0, %v4403
    %v4405 = vrot.slane %v3846, %v4404
    %v4406 = vlaneseq
    %v4407 = vshrl.u32 %v4406, 7
    %v4408 = vsub.s32 0, %v4407
    %v4409 = vrot.slane %v3848, %v4408
    %v4410 = vlaneseq
    %v4411 = vshrl.u32 %v4410, 7
    %v4412 = vsub.s32 0, %v4411
    %v4413 = vrot.slane %v3850, %v4412
    %v4414 = vlaneseq
    %v4415 = vshrl.u32 %v4414, 7
    %v4416 = vsub.s32 0, %v4415
    %v4417 = vrot.slane %v3874, %v4416
    %v4418 = vlaneseq
    %v4419 = vshrl.u32 %v4418, 7
    %v4420 = vsub.s32 0, %v4419
    %v4421 = vrot.slane %v3888, %v4420
    %v4422 = vlaneseq
    %v4423 = vshrl.u32 %v4422, 7
    %v4424 = vsub.s32 0, %v4423
    %v4425 = vrot.slane %v3896, %v4424
    %v4426 = vlaneseq
    %v4427 = vshrl.u32 %v4426, 7
    %v4428 = vsub.s32 0, %v4427
    %v4429 = vrot.slane %v3898, %v4428
    %v4430 = vlaneseq
    %v4431 = vshrl.u32 %v4430, 7
    %v4432 = vsub.s32 0, %v4431
    %v4433 = vrot.slane %v3881, %v4432
    %v4434 = vlaneseq
    %v4435 = vshrl.u32 %v4434, 7
    %v4436 = vsub.s32 0, %v4435
    %v4437 = vrot.slane %v3895, %v4436
    %v4438 = vlaneseq
    %v4439 = vshrl.u32 %v4438, 7
    %v4440 = vsub.s32 0, %v4439
    %v4441 = vrot.slane %v3897, %v4440
    %v4442 = vlaneseq
    %v4443 = vshrl.u32 %v4442, 7
    %v4444 = vsub.s32 0, %v4443
    %v4445 = vrot.slane %v3899, %v4444
    %v4446 = vlaneseq
    %v4447 = vshrl.u32 %v4446, 7
    %v4448 = vsub.s32 0, %v4447
    %v4449 = vrot.slane %v3923, %v4448
    %v4450 = vlaneseq
    %v4451 = vshrl.u32 %v4450, 7
    %v4452 = vsub.s32 0, %v4451
    %v4453 = vrot.slane %v3937, %v4452
    %v4454 = vlaneseq
    %v4455 = vshrl.u32 %v4454, 7
    %v4456 = vsub.s32 0, %v4455
    %v4457 = vrot.slane %v3945, %v4456
    %v4458 = vlaneseq
    %v4459 = vshrl.u32 %v4458, 7
    %v4460 = vsub.s32 0, %v4459
    %v4461 = vrot.slane %v3947, %v4460
    %v4462 = vlaneseq
    %v4463 = vshrl.u32 %v4462, 7
    %v4464 = vsub.s32 0, %v4463
    %v4465 = vrot.slane %v3930, %v4464
    %v4466 = vlaneseq
    %v4467 = vshrl.u32 %v4466, 7
    %v4468 = vsub.s32 0, %v4467
    %v4469 = vrot.slane %v3944, %v4468
    %v4470 = vlaneseq
    %v4471 = vshrl.u32 %v4470, 7
    %v4472 = vsub.s32 0, %v4471
    %v4473 = vrot.slane %v3946, %v4472
    %v4474 = vlaneseq
    %v4475 = vshrl.u32 %v4474, 7
    %v4476 = vsub.s32 0, %v4475
    %v4477 = vrot.slane %v3948, %v4476
    %v4478 = vlaneseq
    %v4479 = vshrl.u32 %v4478, 7
    %v4480 = vsub.s32 0, %v4479
    %v4481 = vrot.slane %v3972, %v4480
    %v4482 = vlaneseq
    %v4483 = vshrl.u32 %v4482, 7
    %v4484 = vsub.s32 0, %v4483
    %v4485 = vrot.slane %v3986, %v4484
    %v4486 = vlaneseq
    %v4487 = vshrl.u32 %v4486, 7
    %v4488 = vsub.s32 0, %v4487
    %v4489 = vrot.slane %v3994, %v4488
    %v4490 = vlaneseq
    %v4491 = vshrl.u32 %v4490, 7
    %v4492 = vsub.s32 0, %v4491
    %v4493 = vrot.slane %v3996, %v4492
    %v4494 = vlaneseq
    %v4495 = vshrl.u32 %v4494, 7
    %v4496 = vsub.s32 0, %v4495
    %v4497 = vrot.slane %v3979, %v4496
    %v4498 = vlaneseq
    %v4499 = vshrl.u32 %v4498, 7
    %v4500 = vsub.s32 0, %v4499
    %v4501 = vrot.slane %v3993, %v4500
    %v4502 = vlaneseq
    %v4503 = vshrl.u32 %v4502, 7
    %v4504 = vsub.s32 0, %v4503
    %v4505 = vrot.slane %v3995, %v4504
    %v4506 = vlaneseq
    %v4507 = vshrl.u32 %v4506, 7
    %v4508 = vsub.s32 0, %v4507
    %v4509 = vrot.slane %v3997, %v4508
    %v4510 = vcombine.low %v4001, %v4005
    %v4511 = vcombine.low %v4009, %v4013
    %v4513 = vunpack.c.l.s4 1983009808
    %v4514 = vunpack.c.0.s8 %v4513
    %v4515 = vlaneseq
    %v4516 = vshrl.u32 %v4515, 7
    %v4517 = vsub.s32 %v4514, %v4516
    %v4518 = vrot.slane %v4510, %v4517
    %v4520 = vunpack.c.l.s4 1983009808
    %v4521 = vunpack.c.0.s8 %v4520
    %v4522 = vlaneseq
    %v4523 = vshrl.u32 %v4522, 7
    %v4524 = vsub.s32 %v4521, %v4523
    %v4525 = vrot.slane %v4511, %v4524
    %v4526 = vcombine.low %v4518, %v4525
    %v4527 = vcombine.low %v4017, %v4021
    %v4528 = vcombine.low %v4025, %v4029
    %v4530 = vunpack.c.l.s4 1983009808
    %v4531 = vunpack.c.0.s8 %v4530
    %v4532 = vlaneseq
    %v4533 = vshrl.u32 %v4532, 7
    %v4534 = vsub.s32 %v4531, %v4533
    %v4535 = vrot.slane %v4527, %v4534
    %v4537 = vunpack.c.l.s4 1983009808
    %v4538 = vunpack.c.0.s8 %v4537
    %v4539 = vlaneseq
    %v4540 = vshrl.u32 %v4539, 7
    %v4541 = vsub.s32 %v4538, %v4540
    %v4542 = vrot.slane %v4528, %v4541
    %v4543 = vcombine.low %v4535, %v4542
    %v4544 = vcombine.low %v4033, %v4037
    %v4545 = vcombine.low %v4041, %v4045
    %v4547 = vunpack.c.l.s4 1983009808
    %v4548 = vunpack.c.0.s8 %v4547
    %v4549 = vlaneseq
    %v4550 = vshrl.u32 %v4549, 7
    %v4551 = vsub.s32 %v4548, %v4550
    %v4552 = vrot.slane %v4544, %v4551
    %v4554 = vunpack.c.l.s4 1983009808
    %v4555 = vunpack.c.0.s8 %v4554
    %v4556 = vlaneseq
    %v4557 = vshrl.u32 %v4556, 7
    %v4558 = vsub.s32 %v4555, %v4557
    %v4559 = vrot.slane %v4545, %v4558
    %v4560 = vcombine.low %v4552, %v4559
    %v4561 = vcombine.low %v4049, %v4053
    %v4562 = vcombine.low %v4057, %v4061
    %v4564 = vunpack.c.l.s4 1983009808
    %v4565 = vunpack.c.0.s8 %v4564
    %v4566 = vlaneseq
    %v4567 = vshrl.u32 %v4566, 7
    %v4568 = vsub.s32 %v4565, %v4567
    %v4569 = vrot.slane %v4561, %v4568
    %v4571 = vunpack.c.l.s4 1983009808
    %v4572 = vunpack.c.0.s8 %v4571
    %v4573 = vlaneseq
    %v4574 = vshrl.u32 %v4573, 7
    %v4575 = vsub.s32 %v4572, %v4574
    %v4576 = vrot.slane %v4562, %v4575
    %v4577 = vcombine.low %v4569, %v4576
    %v4578 = vcombine.low %v4065, %v4069
    %v4579 = vcombine.low %v4073, %v4077
    %v4581 = vunpack.c.l.s4 1983009808
    %v4582 = vunpack.c.0.s8 %v4581
    %v4583 = vlaneseq
    %v4584 = vshrl.u32 %v4583, 7
    %v4585 = vsub.s32 %v4582, %v4584
    %v4586 = vrot.slane %v4578, %v4585
    %v4588 = vunpack.c.l.s4 1983009808
    %v4589 = vunpack.c.0.s8 %v4588
    %v4590 = vlaneseq
    %v4591 = vshrl.u32 %v4590, 7
    %v4592 = vsub.s32 %v4589, %v4591
    %v4593 = vrot.slane %v4579, %v4592
    %v4594 = vcombine.low %v4586, %v4593
    %v4595 = vcombine.low %v4081, %v4085
    %v4596 = vcombine.low %v4089, %v4093
    %v4598 = vunpack.c.l.s4 1983009808
    %v4599 = vunpack.c.0.s8 %v4598
    %v4600 = vlaneseq
    %v4601 = vshrl.u32 %v4600, 7
    %v4602 = vsub.s32 %v4599, %v4601
    %v4603 = vrot.slane %v4595, %v4602
    %v4605 = vunpack.c.l.s4 1983009808
    %v4606 = vunpack.c.0.s8 %v4605
    %v4607 = vlaneseq
    %v4608 = vshrl.u32 %v4607, 7
    %v4609 = vsub.s32 %v4606, %v4608
    %v4610 = vrot.slane %v4596, %v4609
    %v4611 = vcombine.low %v4603, %v4610
    %v4612 = vcombine.low %v4097, %v4101
    %v4613 = vcombine.low %v4105, %v4109
    %v4615 = vunpack.c.l.s4 1983009808
    %v4616 = vunpack.c.0.s8 %v4615
    %v4617 = vlaneseq
    %v4618 = vshrl.u32 %v4617, 7
    %v4619 = vsub.s32 %v4616, %v4618
    %v4620 = vrot.slane %v4612, %v4619
    %v4622 = vunpack.c.l.s4 1983009808
    %v4623 = vunpack.c.0.s8 %v4622
    %v4624 = vlaneseq
    %v4625 = vshrl.u32 %v4624, 7
    %v4626 = vsub.s32 %v4623, %v4625
    %v4627 = vrot.slane %v4613, %v4626
    %v4628 = vcombine.low %v4620, %v4627
    %v4629 = vcombine.low %v4113, %v4117
    %v4630 = vcombine.low %v4121, %v4125
    %v4632 = vunpack.c.l.s4 1983009808
    %v4633 = vunpack.c.0.s8 %v4632
    %v4634 = vlaneseq
    %v4635 = vshrl.u32 %v4634, 7
    %v4636 = vsub.s32 %v4633, %v4635
    %v4637 = vrot.slane %v4629, %v4636
    %v4639 = vunpack.c.l.s4 1983009808
    %v4640 = vunpack.c.0.s8 %v4639
    %v4641 = vlaneseq
    %v4642 = vshrl.u32 %v4641, 7
    %v4643 = vsub.s32 %v4640, %v4642
    %v4644 = vrot.slane %v4630, %v4643
    %v4645 = vcombine.low %v4637, %v4644
    %v4646 = vcombine.low %v4129, %v4133
    %v4647 = vcombine.low %v4137, %v4141
    %v4649 = vunpack.c.l.s4 1983009808
    %v4650 = vunpack.c.0.s8 %v4649
    %v4651 = vlaneseq
    %v4652 = vshrl.u32 %v4651, 7
    %v4653 = vsub.s32 %v4650, %v4652
    %v4654 = vrot.slane %v4646, %v4653
    %v4656 = vunpack.c.l.s4 1983009808
    %v4657 = vunpack.c.0.s8 %v4656
    %v4658 = vlaneseq
    %v4659 = vshrl.u32 %v4658, 7
    %v4660 = vsub.s32 %v4657, %v4659
    %v4661 = vrot.slane %v4647, %v4660
    %v4662 = vcombine.low %v4654, %v4661
    %v4663 = vcombine.low %v4145, %v4149
    %v4664 = vcombine.low %v4153, %v4157
    %v4666 = vunpack.c.l.s4 1983009808
    %v4667 = vunpack.c.0.s8 %v4666
    %v4668 = vlaneseq
    %v4669 = vshrl.u32 %v4668, 7
    %v4670 = vsub.s32 %v4667, %v4669
    %v4671 = vrot.slane %v4663, %v4670
    %v4673 = vunpack.c.l.s4 1983009808
    %v4674 = vunpack.c.0.s8 %v4673
    %v4675 = vlaneseq
    %v4676 = vshrl.u32 %v4675, 7
    %v4677 = vsub.s32 %v4674, %v4676
    %v4678 = vrot.slane %v4664, %v4677
    %v4679 = vcombine.low %v4671, %v4678
    %v4680 = vcombine.low %v4161, %v4165
    %v4681 = vcombine.low %v4169, %v4173
    %v4683 = vunpack.c.l.s4 1983009808
    %v4684 = vunpack.c.0.s8 %v4683
    %v4685 = vlaneseq
    %v4686 = vshrl.u32 %v4685, 7
    %v4687 = vsub.s32 %v4684, %v4686
    %v4688 = vrot.slane %v4680, %v4687
    %v4690 = vunpack.c.l.s4 1983009808
    %v4691 = vunpack.c.0.s8 %v4690
    %v4692 = vlaneseq
    %v4693 = vshrl.u32 %v4692, 7
    %v4694 = vsub.s32 %v4691, %v4693
    %v4695 = vrot.slane %v4681, %v4694
    %v4696 = vcombine.low %v4688, %v4695
    %v4697 = vcombine.low %v4177, %v4181
    %v4698 = vcombine.low %v4185, %v4189
    %v4700 = vunpack.c.l.s4 1983009808
    %v4701 = vunpack.c.0.s8 %v4700
    %v4702 = vlaneseq
    %v4703 = vshrl.u32 %v4702, 7
    %v4704 = vsub.s32 %v4701, %v4703
    %v4705 = vrot.slane %v4697, %v4704
    %v4707 = vunpack.c.l.s4 1983009808
    %v4708 = vunpack.c.0.s8 %v4707
    %v4709 = vlaneseq
    %v4710 = vshrl.u32 %v4709, 7
    %v4711 = vsub.s32 %v4708, %v4710
    %v4712 = vrot.slane %v4698, %v4711
    %v4713 = vcombine.low %v4705, %v4712
    %v4714 = vcombine.low %v4193, %v4197
    %v4715 = vcombine.low %v4201, %v4205
    %v4717 = vunpack.c.l.s4 1983009808
    %v4718 = vunpack.c.0.s8 %v4717
    %v4719 = vlaneseq
    %v4720 = vshrl.u32 %v4719, 7
    %v4721 = vsub.s32 %v4718, %v4720
    %v4722 = vrot.slane %v4714, %v4721
    %v4724 = vunpack.c.l.s4 1983009808
    %v4725 = vunpack.c.0.s8 %v4724
    %v4726 = vlaneseq
    %v4727 = vshrl.u32 %v4726, 7
    %v4728 = vsub.s32 %v4725, %v4727
    %v4729 = vrot.slane %v4715, %v4728
    %v4730 = vcombine.low %v4722, %v4729
    %v4731 = vcombine.low %v4209, %v4213
    %v4732 = vcombine.low %v4217, %v4221
    %v4734 = vunpack.c.l.s4 1983009808
    %v4735 = vunpack.c.0.s8 %v4734
    %v4736 = vlaneseq
    %v4737 = vshrl.u32 %v4736, 7
    %v4738 = vsub.s32 %v4735, %v4737
    %v4739 = vrot.slane %v4731, %v4738
    %v4741 = vunpack.c.l.s4 1983009808
    %v4742 = vunpack.c.0.s8 %v4741
    %v4743 = vlaneseq
    %v4744 = vshrl.u32 %v4743, 7
    %v4745 = vsub.s32 %v4742, %v4744
    %v4746 = vrot.slane %v4732, %v4745
    %v4747 = vcombine.low %v4739, %v4746
    %v4748 = vcombine.low %v4225, %v4229
    %v4749 = vcombine.low %v4233, %v4237
    %v4751 = vunpack.c.l.s4 1983009808
    %v4752 = vunpack.c.0.s8 %v4751
    %v4753 = vlaneseq
    %v4754 = vshrl.u32 %v4753, 7
    %v4755 = vsub.s32 %v4752, %v4754
    %v4756 = vrot.slane %v4748, %v4755
    %v4758 = vunpack.c.l.s4 1983009808
    %v4759 = vunpack.c.0.s8 %v4758
    %v4760 = vlaneseq
    %v4761 = vshrl.u32 %v4760, 7
    %v4762 = vsub.s32 %v4759, %v4761
    %v4763 = vrot.slane %v4749, %v4762
    %v4764 = vcombine.low %v4756, %v4763
    %v4765 = vcombine.low %v4241, %v4245
    %v4766 = vcombine.low %v4249, %v4253
    %v4768 = vunpack.c.l.s4 1983009808
    %v4769 = vunpack.c.0.s8 %v4768
    %v4770 = vlaneseq
    %v4771 = vshrl.u32 %v4770, 7
    %v4772 = vsub.s32 %v4769, %v4771
    %v4773 = vrot.slane %v4765, %v4772
    %v4775 = vunpack.c.l.s4 1983009808
    %v4776 = vunpack.c.0.s8 %v4775
    %v4777 = vlaneseq
    %v4778 = vshrl.u32 %v4777, 7
    %v4779 = vsub.s32 %v4776, %v4778
    %v4780 = vrot.slane %v4766, %v4779
    %v4781 = vcombine.low %v4773, %v4780
    %v4782 = vcombine.low %v4257, %v4261
    %v4783 = vcombine.low %v4265, %v4269
    %v4785 = vunpack.c.l.s4 1983009808
    %v4786 = vunpack.c.0.s8 %v4785
    %v4787 = vlaneseq
    %v4788 = vshrl.u32 %v4787, 7
    %v4789 = vsub.s32 %v4786, %v4788
    %v4790 = vrot.slane %v4782, %v4789
    %v4792 = vunpack.c.l.s4 1983009808
    %v4793 = vunpack.c.0.s8 %v4792
    %v4794 = vlaneseq
    %v4795 = vshrl.u32 %v4794, 7
    %v4796 = vsub.s32 %v4793, %v4795
    %v4797 = vrot.slane %v4783, %v4796
    %v4798 = vcombine.low %v4790, %v4797
    %v4799 = vcombine.low %v4273, %v4277
    %v4800 = vcombine.low %v4281, %v4285
    %v4802 = vunpack.c.l.s4 1983009808
    %v4803 = vunpack.c.0.s8 %v4802
    %v4804 = vlaneseq
    %v4805 = vshrl.u32 %v4804, 7
    %v4806 = vsub.s32 %v4803, %v4805
    %v4807 = vrot.slane %v4799, %v4806
    %v4809 = vunpack.c.l.s4 1983009808
    %v4810 = vunpack.c.0.s8 %v4809
    %v4811 = vlaneseq
    %v4812 = vshrl.u32 %v4811, 7
    %v4813 = vsub.s32 %v4810, %v4812
    %v4814 = vrot.slane %v4800, %v4813
    %v4815 = vcombine.low %v4807, %v4814
    %v4816 = vcombine.low %v4289, %v4293
    %v4817 = vcombine.low %v4297, %v4301
    %v4819 = vunpack.c.l.s4 1983009808
    %v4820 = vunpack.c.0.s8 %v4819
    %v4821 = vlaneseq
    %v4822 = vshrl.u32 %v4821, 7
    %v4823 = vsub.s32 %v4820, %v4822
    %v4824 = vrot.slane %v4816, %v4823
    %v4826 = vunpack.c.l.s4 1983009808
    %v4827 = vunpack.c.0.s8 %v4826
    %v4828 = vlaneseq
    %v4829 = vshrl.u32 %v4828, 7
    %v4830 = vsub.s32 %v4827, %v4829
    %v4831 = vrot.slane %v4817, %v4830
    %v4832 = vcombine.low %v4824, %v4831
    %v4833 = vcombine.low %v4305, %v4309
    %v4834 = vcombine.low %v4313, %v4317
    %v4836 = vunpack.c.l.s4 1983009808
    %v4837 = vunpack.c.0.s8 %v4836
    %v4838 = vlaneseq
    %v4839 = vshrl.u32 %v4838, 7
    %v4840 = vsub.s32 %v4837, %v4839
    %v4841 = vrot.slane %v4833, %v4840
    %v4843 = vunpack.c.l.s4 1983009808
    %v4844 = vunpack.c.0.s8 %v4843
    %v4845 = vlaneseq
    %v4846 = vshrl.u32 %v4845, 7
    %v4847 = vsub.s32 %v4844, %v4846
    %v4848 = vrot.slane %v4834, %v4847
    %v4849 = vcombine.low %v4841, %v4848
    %v4850 = vcombine.low %v4321, %v4325
    %v4851 = vcombine.low %v4329, %v4333
    %v4853 = vunpack.c.l.s4 1983009808
    %v4854 = vunpack.c.0.s8 %v4853
    %v4855 = vlaneseq
    %v4856 = vshrl.u32 %v4855, 7
    %v4857 = vsub.s32 %v4854, %v4856
    %v4858 = vrot.slane %v4850, %v4857
    %v4860 = vunpack.c.l.s4 1983009808
    %v4861 = vunpack.c.0.s8 %v4860
    %v4862 = vlaneseq
    %v4863 = vshrl.u32 %v4862, 7
    %v4864 = vsub.s32 %v4861, %v4863
    %v4865 = vrot.slane %v4851, %v4864
    %v4866 = vcombine.low %v4858, %v4865
    %v4867 = vcombine.low %v4337, %v4341
    %v4868 = vcombine.low %v4345, %v4349
    %v4870 = vunpack.c.l.s4 1983009808
    %v4871 = vunpack.c.0.s8 %v4870
    %v4872 = vlaneseq
    %v4873 = vshrl.u32 %v4872, 7
    %v4874 = vsub.s32 %v4871, %v4873
    %v4875 = vrot.slane %v4867, %v4874
    %v4877 = vunpack.c.l.s4 1983009808
    %v4878 = vunpack.c.0.s8 %v4877
    %v4879 = vlaneseq
    %v4880 = vshrl.u32 %v4879, 7
    %v4881 = vsub.s32 %v4878, %v4880
    %v4882 = vrot.slane %v4868, %v4881
    %v4883 = vcombine.low %v4875, %v4882
    %v4884 = vcombine.low %v4353, %v4357
    %v4885 = vcombine.low %v4361, %v4365
    %v4887 = vunpack.c.l.s4 1983009808
    %v4888 = vunpack.c.0.s8 %v4887
    %v4889 = vlaneseq
    %v4890 = vshrl.u32 %v4889, 7
    %v4891 = vsub.s32 %v4888, %v4890
    %v4892 = vrot.slane %v4884, %v4891
    %v4894 = vunpack.c.l.s4 1983009808
    %v4895 = vunpack.c.0.s8 %v4894
    %v4896 = vlaneseq
    %v4897 = vshrl.u32 %v4896, 7
    %v4898 = vsub.s32 %v4895, %v4897
    %v4899 = vrot.slane %v4885, %v4898
    %v4900 = vcombine.low %v4892, %v4899
    %v4901 = vcombine.low %v4369, %v4373
    %v4902 = vcombine.low %v4377, %v4381
    %v4904 = vunpack.c.l.s4 1983009808
    %v4905 = vunpack.c.0.s8 %v4904
    %v4906 = vlaneseq
    %v4907 = vshrl.u32 %v4906, 7
    %v4908 = vsub.s32 %v4905, %v4907
    %v4909 = vrot.slane %v4901, %v4908
    %v4911 = vunpack.c.l.s4 1983009808
    %v4912 = vunpack.c.0.s8 %v4911
    %v4913 = vlaneseq
    %v4914 = vshrl.u32 %v4913, 7
    %v4915 = vsub.s32 %v4912, %v4914
    %v4916 = vrot.slane %v4902, %v4915
    %v4917 = vcombine.low %v4909, %v4916
    %v4918 = vcombine.low %v4385, %v4389
    %v4919 = vcombine.low %v4393, %v4397
    %v4921 = vunpack.c.l.s4 1983009808
    %v4922 = vunpack.c.0.s8 %v4921
    %v4923 = vlaneseq
    %v4924 = vshrl.u32 %v4923, 7
    %v4925 = vsub.s32 %v4922, %v4924
    %v4926 = vrot.slane %v4918, %v4925
    %v4928 = vunpack.c.l.s4 1983009808
    %v4929 = vunpack.c.0.s8 %v4928
    %v4930 = vlaneseq
    %v4931 = vshrl.u32 %v4930, 7
    %v4932 = vsub.s32 %v4929, %v4931
    %v4933 = vrot.slane %v4919, %v4932
    %v4934 = vcombine.low %v4926, %v4933
    %v4935 = vcombine.low %v4401, %v4405
    %v4936 = vcombine.low %v4409, %v4413
    %v4938 = vunpack.c.l.s4 1983009808
    %v4939 = vunpack.c.0.s8 %v4938
    %v4940 = vlaneseq
    %v4941 = vshrl.u32 %v4940, 7
    %v4942 = vsub.s32 %v4939, %v4941
    %v4943 = vrot.slane %v4935, %v4942
    %v4945 = vunpack.c.l.s4 1983009808
    %v4946 = vunpack.c.0.s8 %v4945
    %v4947 = vlaneseq
    %v4948 = vshrl.u32 %v4947, 7
    %v4949 = vsub.s32 %v4946, %v4948
    %v4950 = vrot.slane %v4936, %v4949
    %v4951 = vcombine.low %v4943, %v4950
    %v4952 = vcombine.low %v4417, %v4421
    %v4953 = vcombine.low %v4425, %v4429
    %v4955 = vunpack.c.l.s4 1983009808
    %v4956 = vunpack.c.0.s8 %v4955
    %v4957 = vlaneseq
    %v4958 = vshrl.u32 %v4957, 7
    %v4959 = vsub.s32 %v4956, %v4958
    %v4960 = vrot.slane %v4952, %v4959
    %v4962 = vunpack.c.l.s4 1983009808
    %v4963 = vunpack.c.0.s8 %v4962
    %v4964 = vlaneseq
    %v4965 = vshrl.u32 %v4964, 7
    %v4966 = vsub.s32 %v4963, %v4965
    %v4967 = vrot.slane %v4953, %v4966
    %v4968 = vcombine.low %v4960, %v4967
    %v4969 = vcombine.low %v4433, %v4437
    %v4970 = vcombine.low %v4441, %v4445
    %v4972 = vunpack.c.l.s4 1983009808
    %v4973 = vunpack.c.0.s8 %v4972
    %v4974 = vlaneseq
    %v4975 = vshrl.u32 %v4974, 7
    %v4976 = vsub.s32 %v4973, %v4975
    %v4977 = vrot.slane %v4969, %v4976
    %v4979 = vunpack.c.l.s4 1983009808
    %v4980 = vunpack.c.0.s8 %v4979
    %v4981 = vlaneseq
    %v4982 = vshrl.u32 %v4981, 7
    %v4983 = vsub.s32 %v4980, %v4982
    %v4984 = vrot.slane %v4970, %v4983
    %v4985 = vcombine.low %v4977, %v4984
    %v4986 = vcombine.low %v4449, %v4453
    %v4987 = vcombine.low %v4457, %v4461
    %v4989 = vunpack.c.l.s4 1983009808
    %v4990 = vunpack.c.0.s8 %v4989
    %v4991 = vlaneseq
    %v4992 = vshrl.u32 %v4991, 7
    %v4993 = vsub.s32 %v4990, %v4992
    %v4994 = vrot.slane %v4986, %v4993
    %v4996 = vunpack.c.l.s4 1983009808
    %v4997 = vunpack.c.0.s8 %v4996
    %v4998 = vlaneseq
    %v4999 = vshrl.u32 %v4998, 7
    %v5000 = vsub.s32 %v4997, %v4999
    %v5001 = vrot.slane %v4987, %v5000
    %v5002 = vcombine.low %v4994, %v5001
    %v5003 = vcombine.low %v4465, %v4469
    %v5004 = vcombine.low %v4473, %v4477
    %v5006 = vunpack.c.l.s4 1983009808
    %v5007 = vunpack.c.0.s8 %v5006
    %v5008 = vlaneseq
    %v5009 = vshrl.u32 %v5008, 7
    %v5010 = vsub.s32 %v5007, %v5009
    %v5011 = vrot.slane %v5003, %v5010
    %v5013 = vunpack.c.l.s4 1983009808
    %v5014 = vunpack.c.0.s8 %v5013
    %v5015 = vlaneseq
    %v5016 = vshrl.u32 %v5015, 7
    %v5017 = vsub.s32 %v5014, %v5016
    %v5018 = vrot.slane %v5004, %v5017
    %v5019 = vcombine.low %v5011, %v5018
    %v5020 = vcombine.low %v4481, %v4485
    %v5021 = vcombine.low %v4489, %v4493
    %v5023 = vunpack.c.l.s4 1983009808
    %v5024 = vunpack.c.0.s8 %v5023
    %v5025 = vlaneseq
    %v5026 = vshrl.u32 %v5025, 7
    %v5027 = vsub.s32 %v5024, %v5026
    %v5028 = vrot.slane %v5020, %v5027
    %v5030 = vunpack.c.l.s4 1983009808
    %v5031 = vunpack.c.0.s8 %v5030
    %v5032 = vlaneseq
    %v5033 = vshrl.u32 %v5032, 7
    %v5034 = vsub.s32 %v5031, %v5033
    %v5035 = vrot.slane %v5021, %v5034
    %v5036 = vcombine.low %v5028, %v5035
    %v5037 = vcombine.low %v4497, %v4501
    %v5038 = vcombine.low %v4505, %v4509
    %v5040 = vunpack.c.l.s4 1983009808
    %v5041 = vunpack.c.0.s8 %v5040
    %v5042 = vlaneseq
    %v5043 = vshrl.u32 %v5042, 7
    %v5044 = vsub.s32 %v5041, %v5043
    %v5045 = vrot.slane %v5037, %v5044
    %v5047 = vunpack.c.l.s4 1983009808
    %v5048 = vunpack.c.0.s8 %v5047
    %v5049 = vlaneseq
    %v5050 = vshrl.u32 %v5049, 7
    %v5051 = vsub.s32 %v5048, %v5050
    %v5052 = vrot.slane %v5038, %v5051
    %v5053 = vcombine.low %v5045, %v5052
    %v5086 = vadd.s32 %v1407, 8
    %v5087 = vrot.slane %v4526, 7
    %v5088 = vrot.slane %v4543, 7
    %v5089 = vrot.slane %v4560, 7
    %v5090 = vrot.slane %v4577, 7
    %v5091 = vrot.slane %v4594, 7
    %v5092 = vrot.slane %v4611, 7
    %v5093 = vrot.slane %v4628, 7
    %v5094 = vrot.slane %v4645, 7
    %v5095 = vrot.slane %v4662, 7
    %v5096 = vrot.slane %v4679, 7
    %v5097 = vrot.slane %v4696, 7
    %v5098 = vrot.slane %v4713, 7
    %v5099 = vrot.slane %v4730, 7
    %v5100 = vrot.slane %v4747, 7
    %v5101 = vrot.slane %v4764, 7
    %v5102 = vrot.slane %v4781, 7
    %v5103 = vrot.slane %v4798, 7
    %v5104 = vrot.slane %v4815, 7
    %v5105 = vrot.slane %v4832, 7
    %v5106 = vrot.slane %v4849, 7
    %v5107 = vrot.slane %v4866, 7
    %v5108 = vrot.slane %v4883, 7
    %v5109 = vrot.slane %v4900, 7
    %v5110 = vrot.slane %v4917, 7
    %v5111 = vrot.slane %v4934, 7
    %v5112 = vrot.slane %v4951, 7
    %v5113 = vrot.slane %v4968, 7
    %v5114 = vrot.slane %v4985, 7
    %v5115 = vrot.slane %v5002, 7
    %v5116 = vrot.slane %v5019, 7
    %v5117 = vrot.slane %v5036, 7
    %v5118 = vrot.slane %v5053, 7
    %v5119 = vsel %vm1416, %v5118, 0.0
    %v5120 = vsel %vm1416, %v5117, %v5118
    %v5121 = vsel %vm1416, %v5118, %v5117
    %v5122 = vsel %vm1416, %v5116, %v5117
    %v5123 = vsel %vm1416, %v5115, %v5116
    %v5124 = vsel %vm1416, %v5116, %v5115
    %v5125 = vsel %vm1416, %v5114, %v5115
    %v5126 = vsel %vm1416, %v5113, %v5114
    %v5127 = vsel %vm1416, %v5114, %v5113
    %v5128 = vsel %vm1416, %v5112, %v5113
    %v5129 = vsel %vm1416, %v5111, %v5112
    %v5130 = vsel %vm1416, %v5112, %v5111
    %v5131 = vsel %vm1416, %v5110, %v5111
    %v5132 = vsel %vm1416, %v5109, %v5110
    %v5133 = vsel %vm1416, %v5110, %v5109
    %v5134 = vsel %vm1416, %v5108, %v5109
    %v5135 = vsel %vm1416, %v5107, %v5108
    %v5136 = vsel %vm1416, %v5108, %v5107
    %v5137 = vsel %vm1416, %v5106, %v5107
    %v5138 = vsel %vm1416, %v5105, %v5106
    %v5139 = vsel %vm1416, %v5106, %v5105
    %v5140 = vsel %vm1416, %v5104, %v5105
    %v5141 = vsel %vm1416, %v5103, %v5104
    %v5142 = vsel %vm1416, %v5104, %v5103
    %v5143 = vsel %vm1416, 0.0, %v5103
    %v5144 = vsel %vm1416, %v5102, 0.0
    %v5145 = vsel %vm1416, %v5101, %v5102
    %v5146 = vsel %vm1416, %v5102, %v5101
    %v5147 = vsel %vm1416, %v5100, %v5101
    %v5148 = vsel %vm1416, %v5099, %v5100
    %v5149 = vsel %vm1416, %v5100, %v5099
    %v5150 = vsel %vm1416, %v5098, %v5099
    %v5151 = vsel %vm1416, %v5097, %v5098
    %v5152 = vsel %vm1416, %v5098, %v5097
    %v5153 = vsel %vm1416, %v5096, %v5097
    %v5154 = vsel %vm1416, %v5095, %v5096
    %v5155 = vsel %vm1416, %v5096, %v5095
    %v5156 = vsel %vm1416, %v5094, %v5095
    %v5157 = vsel %vm1416, %v5093, %v5094
    %v5158 = vsel %vm1416, %v5094, %v5093
    %v5159 = vsel %vm1416, %v5092, %v5093
    %v5160 = vsel %vm1416, %v5091, %v5092
    %v5161 = vsel %vm1416, %v5092, %v5091
    %v5162 = vsel %vm1416, %v5090, %v5091
    %v5163 = vsel %vm1416, %v5089, %v5090
    %v5164 = vsel %vm1416, %v5090, %v5089
    %v5165 = vsel %vm1416, %v5088, %v5089
    %v5166 = vsel %vm1416, %v5087, %v5088
    %v5167 = vsel %vm1416, %v5088, %v5087
    %v5168 = vsel %vm1416, 0.0, %v5087
    %vm5169 = vcmp.gt.s32.totalorder %v5086, 0
    %v5170 = vsel %vm5169, 1, 0
    %vm5171 = vcmp.eq.s32.totalorder %v5170, 1
    %v5172 = vsel %vm5171, 0.0, 0.0
    %v5173 = vsel %vm1437, %v5168, 0.0
    %v5174 = vsel %vm5171, %v5166, 0.0
    %v5175 = vsel %vm1437, %v5167, 0.0
    %v5176 = vsel %vm1437, %v5165, 0.0
    %v5177 = vsel %vm5171, %v5163, 0.0
    %v5178 = vsel %vm1437, %v5164, 0.0
    %v5179 = vsel %vm1437, %v5162, 0.0
    %v5180 = vsel %vm5171, %v5160, 0.0
    %v5181 = vsel %vm1437, %v5161, 0.0
    %v5182 = vsel %vm1437, %v5159, 0.0
    %v5183 = vsel %vm5171, %v5157, 0.0
    %v5184 = vsel %vm1437, %v5158, 0.0
    %v5185 = vsel %vm1437, %v5156, 0.0
    %v5186 = vsel %vm5171, %v5154, 0.0
    %v5187 = vsel %vm1437, %v5155, 0.0
    %v5188 = vsel %vm1437, %v5153, 0.0
    %v5189 = vsel %vm5171, %v5151, 0.0
    %v5190 = vsel %vm1437, %v5152, 0.0
    %v5191 = vsel %vm1437, %v5150, 0.0
    %v5192 = vsel %vm5171, %v5148, 0.0
    %v5193 = vsel %vm1437, %v5149, 0.0
    %v5194 = vsel %vm1437, %v5147, 0.0
    %v5195 = vsel %vm5171, %v5145, 0.0
    %v5196 = vsel %vm1437, %v5146, 0.0
    %v5197 = vsel %vm1437, %v5144, 0.0
    %v5198 = vsel %vm1437, %v5143, 0.0
    %v5199 = vsel %vm5171, %v5141, 0.0
    %v5200 = vsel %vm1437, %v5142, 0.0
    %v5201 = vsel %vm1437, %v5140, 0.0
    %v5202 = vsel %vm5171, %v5138, 0.0
    %v5203 = vsel %vm1437, %v5139, 0.0
    %v5204 = vsel %vm1437, %v5137, 0.0
    %v5205 = vsel %vm5171, %v5135, 0.0
    %v5206 = vsel %vm1437, %v5136, 0.0
    %v5207 = vsel %vm1437, %v5134, 0.0
    %v5208 = vsel %vm5171, %v5132, 0.0
    %v5209 = vsel %vm1437, %v5133, 0.0
    %v5210 = vsel %vm1437, %v5131, 0.0
    %v5211 = vsel %vm5171, %v5129, 0.0
    %v5212 = vsel %vm1437, %v5130, 0.0
    %v5213 = vsel %vm1437, %v5128, 0.0
    %v5214 = vsel %vm5171, %v5126, 0.0
    %v5215 = vsel %vm1437, %v5127, 0.0
    %v5216 = vsel %vm1437, %v5125, 0.0
    %v5217 = vsel %vm5171, %v5123, 0.0
    %v5218 = vsel %vm1437, %v5124, 0.0
    %v5219 = vsel %vm1437, %v5122, 0.0
    %v5220 = vsel %vm5171, %v5120, 0.0
    %v5221 = vsel %vm1437, %v5121, 0.0
    %v5222 = vsel %vm1437, %v5119, 0.0
    %v5223 = vpack.c.bf16 %v5172, %v1438
    %v5224 = vpack.c.bf16 %v5174, %v5173
    %v5225 = vpack.c.bf16 %v5174, %v5175
    %v5226 = vpack.c.bf16 %v5177, %v5176
    %v5227 = vpack.c.bf16 %v5177, %v5178
    %v5228 = vpack.c.bf16 %v5180, %v5179
    %v5229 = vpack.c.bf16 %v5180, %v5181
    %v5230 = vpack.c.bf16 %v5183, %v5182
    %v5231 = vpack.c.bf16 %v5183, %v5184
    %v5232 = vpack.c.bf16 %v5186, %v5185
    %v5233 = vpack.c.bf16 %v5186, %v5187
    %v5234 = vpack.c.bf16 %v5189, %v5188
    %v5235 = vpack.c.bf16 %v5189, %v5190
    %v5236 = vpack.c.bf16 %v5192, %v5191
    %v5237 = vpack.c.bf16 %v5192, %v5193
    %v5238 = vpack.c.bf16 %v5195, %v5194
    %v5239 = vpack.c.bf16 %v5199, %v5198
    %v5240 = vpack.c.bf16 %v5199, %v5200
    %v5241 = vpack.c.bf16 %v5202, %v5201
    %v5242 = vpack.c.bf16 %v5202, %v5203
    %v5243 = vpack.c.bf16 %v5205, %v5204
    %v5244 = vpack.c.bf16 %v5205, %v5206
    %v5245 = vpack.c.bf16 %v5208, %v5207
    %v5246 = vpack.c.bf16 %v5208, %v5209
    %v5247 = vpack.c.bf16 %v5211, %v5210
    %v5248 = vpack.c.bf16 %v5211, %v5212
    %v5249 = vpack.c.bf16 %v5214, %v5213
    %v5250 = vpack.c.bf16 %v5214, %v5215
    %v5251 = vpack.c.bf16 %v5217, %v5216
    %v5252 = vpack.c.bf16 %v5217, %v5218
    %v5253 = vpack.c.bf16 %v5220, %v5219
    %v5254 = vpack.c.bf16 %v5195, %v5196
    %v5255 = vpack.c.bf16 %v5220, %v5221
    %v5256 = vpack.c.bf16 %v5172, %v5197
    %v5257 = vpack.c.bf16 %v5172, %v5222
    %v5258 = vld [vmem:[#allocation6] sm:$0xf]
    %v5259 = vld [vmem:[#allocation6 + $0x4] sm:$0xf]
    %v5260 = vld [vmem:[#allocation6 + $0x8] sm:$0xf]
    %v5261 = vld [vmem:[#allocation6 + $0xc] sm:$0xf]
    %v5262 = vld [vmem:[#allocation6 + $0x10] sm:$0xf]
    %v5263 = vld [vmem:[#allocation6 + $0x14] sm:$0xf]
    %v5264 = vld [vmem:[#allocation6 + $0x18] sm:$0xf]
    %v5265 = vld [vmem:[#allocation6 + $0x1c] sm:$0xf]
    %v5266 = vld [vmem:[#allocation6 + $0x20] sm:$0xf]
    %v5267 = vld [vmem:[#allocation6 + $0x24] sm:$0xf]
    %v5268 = vld [vmem:[#allocation6 + $0x28] sm:$0xf]
    %v5269 = vld [vmem:[#allocation6 + $0x2c] sm:$0xf]
    %v5270 = vld [vmem:[#allocation6 + $0x30] sm:$0xf]
    %v5271 = vld [vmem:[#allocation6 + $0x34] sm:$0xf]
    %v5272 = vld [vmem:[#allocation6 + $0x38] sm:$0xf]
    %v5273 = vld [vmem:[#allocation6 + $0x3c] sm:$0xf]
    %v5274 = vld [vmem:[#allocation6 + $0x40] sm:$0xf]
    %v5275 = vld [vmem:[#allocation6 + $0x44] sm:$0xf]
    %v5276 = vld [vmem:[#allocation6 + $0x48] sm:$0xf]
    %v5277 = vld [vmem:[#allocation6 + $0x4c] sm:$0xf]
    %v5278 = vld [vmem:[#allocation6 + $0x50] sm:$0xf]
    %v5279 = vld [vmem:[#allocation6 + $0x54] sm:$0xf]
    %v5280 = vld [vmem:[#allocation6 + $0x58] sm:$0xf]
    %v5281 = vld [vmem:[#allocation6 + $0x5c] sm:$0xf]
    %v5282 = vld [vmem:[#allocation6 + $0x60] sm:$0xf]
    %v5283 = vld [vmem:[#allocation6 + $0x64] sm:$0xf]
    %v5284 = vld [vmem:[#allocation6 + $0x68] sm:$0xf]
    %v5285 = vld [vmem:[#allocation6 + $0x6c] sm:$0xf]
    %v5286 = vld [vmem:[#allocation6 + $0x70] sm:$0xf]
    %v5287 = vld [vmem:[#allocation6 + $0x74] sm:$0xf]
    %v5288 = vld [vmem:[#allocation6 + $0x78] sm:$0xf]
    %v5289 = vld [vmem:[#allocation6 + $0x7c] sm:$0xf]
    %v5290 = vld [vmem:[#allocation6 + $0x80] sm:$0xf]
    %v5291 = vld [vmem:[#allocation6 + $0x84] sm:$0xf]
    %v5292 = vld [vmem:[#allocation6 + $0x88] sm:$0xf]
    %v5293 = vld [vmem:[#allocation6 + $0x8c] sm:$0xf]
    %v5294 = vld [vmem:[#allocation6 + $0x90] sm:$0xf]
    %v5295 = vld [vmem:[#allocation6 + $0x94] sm:$0xf]
    %v5296 = vld [vmem:[#allocation6 + $0x98] sm:$0xf]
    %v5297 = vld [vmem:[#allocation6 + $0x9c] sm:$0xf]
    %v5298 = vld [vmem:[#allocation6 + $0xa0] sm:$0xf]
    %v5299 = vld [vmem:[#allocation6 + $0xa4] sm:$0xf]
    %v5300 = vld [vmem:[#allocation6 + $0xa8] sm:$0xf]
    %v5301 = vld [vmem:[#allocation6 + $0xac] sm:$0xf]
    %v5302 = vld [vmem:[#allocation6 + $0xb0] sm:$0xf]
    %v5303 = vld [vmem:[#allocation6 + $0xb4] sm:$0xf]
    %v5304 = vld [vmem:[#allocation6 + $0xb8] sm:$0xf]
    %v5305 = vld [vmem:[#allocation6 + $0xbc] sm:$0xf]
    %v5306 = vpack.c.bf16 %v4543, %v4526
    %v5307 = vpack.c.bf16 %v4577, %v4560
    %v5308 = vpack.c.bf16 %v4611, %v4594
    %v5309 = vpack.c.bf16 %v4645, %v4628
    %v5310 = vpack.c.bf16 %v4679, %v4662
    %v5311 = vpack.c.bf16 %v4713, %v4696
    %v5312 = vpack.c.bf16 %v4747, %v4730
    %v5313 = vpack.c.bf16 %v4781, %v4764
    %v5314 = vpack.c.bf16 %v4815, %v4798
    %v5315 = vpack.c.bf16 %v4849, %v4832
    %v5316 = vpack.c.bf16 %v4883, %v4866
    %v5317 = vpack.c.bf16 %v4917, %v4900
    %v5318 = vpack.c.bf16 %v4951, %v4934
    %v5319 = vpack.c.bf16 %v4985, %v4968
    %v5320 = vpack.c.bf16 %v5019, %v5002
    %v5321 = vpack.c.bf16 %v5053, %v5036
    %s5322 = scalar_lea.vmem [#allocation6], 192
    %v5323 = vld [vmem:[%s5322] sm:$0xf]
    %v5324 = vld [vmem:[%s5322 + $0x4] sm:$0xf]
    %v5325 = vld [vmem:[%s5322 + $0x8] sm:$0xf]
    %v5326 = vld [vmem:[%s5322 + $0xc] sm:$0xf]
    %v5327 = vld [vmem:[%s5322 + $0x10] sm:$0xf]
    %v5328 = vld [vmem:[%s5322 + $0x14] sm:$0xf]
    %v5329 = vld [vmem:[%s5322 + $0x18] sm:$0xf]
    %v5330 = vld [vmem:[%s5322 + $0x1c] sm:$0xf]
    %v5331 = vld [vmem:[%s5322 + $0x20] sm:$0xf]
    %v5332 = vld [vmem:[%s5322 + $0x24] sm:$0xf]
    %v5333 = vld [vmem:[%s5322 + $0x28] sm:$0xf]
    %v5334 = vld [vmem:[%s5322 + $0x2c] sm:$0xf]
    %v5335 = vld [vmem:[%s5322 + $0x30] sm:$0xf]
    %v5336 = vld [vmem:[%s5322 + $0x34] sm:$0xf]
    %v5337 = vld [vmem:[%s5322 + $0x38] sm:$0xf]
    %v5338 = vld [vmem:[%s5322 + $0x3c] sm:$0xf]
    %v5339 = vld [vmem:[%s5322 + $0x40] sm:$0xf]
    %v5340 = vld [vmem:[%s5322 + $0x44] sm:$0xf]
    %v5341 = vld [vmem:[%s5322 + $0x48] sm:$0xf]
    %v5342 = vld [vmem:[%s5322 + $0x4c] sm:$0xf]
    %v5343 = vld [vmem:[%s5322 + $0x50] sm:$0xf]
    %v5344 = vld [vmem:[%s5322 + $0x54] sm:$0xf]
    %v5345 = vld [vmem:[%s5322 + $0x58] sm:$0xf]
    %v5346 = vld [vmem:[%s5322 + $0x5c] sm:$0xf]
    %v5347 = vld [vmem:[%s5322 + $0x60] sm:$0xf]
    %v5348 = vld [vmem:[%s5322 + $0x64] sm:$0xf]
    %v5349 = vld [vmem:[%s5322 + $0x68] sm:$0xf]
    %v5350 = vld [vmem:[%s5322 + $0x6c] sm:$0xf]
    %v5351 = vld [vmem:[%s5322 + $0x70] sm:$0xf]
    %v5352 = vld [vmem:[%s5322 + $0x74] sm:$0xf]
    %v5353 = vld [vmem:[%s5322 + $0x78] sm:$0xf]
    %v5354 = vld [vmem:[%s5322 + $0x7c] sm:$0xf]
    %v5355 = vld [vmem:[%s5322 + $0x80] sm:$0xf]
    %v5356 = vld [vmem:[%s5322 + $0x84] sm:$0xf]
    %v5357 = vld [vmem:[%s5322 + $0x88] sm:$0xf]
    %v5358 = vld [vmem:[%s5322 + $0x8c] sm:$0xf]
    %v5359 = vld [vmem:[%s5322 + $0x90] sm:$0xf]
    %v5360 = vld [vmem:[%s5322 + $0x94] sm:$0xf]
    %v5361 = vld [vmem:[%s5322 + $0x98] sm:$0xf]
    %v5362 = vld [vmem:[%s5322 + $0x9c] sm:$0xf]
    %v5363 = vld [vmem:[%s5322 + $0xa0] sm:$0xf]
    %v5364 = vld [vmem:[%s5322 + $0xa4] sm:$0xf]
    %v5365 = vld [vmem:[%s5322 + $0xa8] sm:$0xf]
    %v5366 = vld [vmem:[%s5322 + $0xac] sm:$0xf]
    %v5367 = vld [vmem:[%s5322 + $0xb0] sm:$0xf]
    %v5368 = vld [vmem:[%s5322 + $0xb4] sm:$0xf]
    %v5369 = vld [vmem:[%s5322 + $0xb8] sm:$0xf]
    %v5370 = vld [vmem:[%s5322 + $0xbc] sm:$0xf]
    %v5419 = vunpack.c.l.b16 %v5323
    %v5420 = vunpack.c.l.b16 %v5324
    %v5421 = vunpack.c.l.b16 %v5325
    %v5422 = vunpack.c.l.b16 %v5326
    %v5423 = vunpack.c.l.b16 %v5327
    %v5424 = vunpack.c.l.b16 %v5328
    %v5425 = vunpack.c.l.b16 %v5329
    %v5426 = vunpack.c.l.b16 %v5330
    %v5427 = vunpack.c.l.b16 %v5331
    %v5428 = vunpack.c.l.b16 %v5332
    %v5429 = vunpack.c.l.b16 %v5333
    %v5430 = vunpack.c.l.b16 %v5334
    %v5431 = vunpack.c.l.b16 %v5335
    %v5432 = vunpack.c.l.b16 %v5336
    %v5433 = vunpack.c.l.b16 %v5337
    %v5434 = vunpack.c.l.b16 %v5338
    %v5435 = vunpack.c.l.b16 %v5339
    %v5436 = vunpack.c.l.b16 %v5340
    %v5437 = vunpack.c.l.b16 %v5341
    %v5438 = vunpack.c.l.b16 %v5342
    %v5439 = vunpack.c.l.b16 %v5343
    %v5440 = vunpack.c.l.b16 %v5344
    %v5441 = vunpack.c.l.b16 %v5345
    %v5442 = vunpack.c.l.b16 %v5346
    %v5443 = vunpack.c.l.b16 %v5347
    %v5444 = vunpack.c.l.b16 %v5348
    %v5445 = vunpack.c.l.b16 %v5349
    %v5446 = vunpack.c.l.b16 %v5350
    %v5447 = vunpack.c.l.b16 %v5351
    %v5448 = vunpack.c.l.b16 %v5352
    %v5449 = vunpack.c.l.b16 %v5353
    %v5450 = vunpack.c.l.b16 %v5354
    %v5451 = vunpack.c.l.b16 %v5355
    %v5452 = vunpack.c.l.b16 %v5356
    %v5453 = vunpack.c.l.b16 %v5357
    %v5454 = vunpack.c.l.b16 %v5358
    %v5455 = vunpack.c.l.b16 %v5359
    %v5456 = vunpack.c.l.b16 %v5360
    %v5457 = vunpack.c.l.b16 %v5361
    %v5458 = vunpack.c.l.b16 %v5362
    %v5459 = vunpack.c.l.b16 %v5363
    %v5460 = vunpack.c.l.b16 %v5364
    %v5461 = vunpack.c.l.b16 %v5365
    %v5462 = vunpack.c.l.b16 %v5366
    %v5463 = vunpack.c.l.b16 %v5367
    %v5464 = vunpack.c.l.b16 %v5368
    %v5465 = vunpack.c.l.b16 %v5369
    %v5466 = vunpack.c.l.b16 %v5370
    %v5467 = vpack.c.b16 %v5420, %v5419
    %v5468 = vpack.c.b16 %v5422, %v5421
    %v5469 = vpack.c.b16 %v5424, %v5423
    %v5470 = vpack.c.b16 %v5426, %v5425
    %v5471 = vpack.c.b16 %v5428, %v5427
    %v5472 = vpack.c.b16 %v5430, %v5429
    %v5473 = vpack.c.b16 %v5432, %v5431
    %v5474 = vpack.c.b16 %v5434, %v5433
    %v5475 = vpack.c.b16 %v5436, %v5435
    %v5476 = vpack.c.b16 %v5438, %v5437
    %v5477 = vpack.c.b16 %v5440, %v5439
    %v5478 = vpack.c.b16 %v5442, %v5441
    %v5479 = vpack.c.b16 %v5444, %v5443
    %v5480 = vpack.c.b16 %v5446, %v5445
    %v5481 = vpack.c.b16 %v5448, %v5447
    %v5482 = vpack.c.b16 %v5450, %v5449
    %v5483 = vpack.c.b16 %v5452, %v5451
    %v5484 = vpack.c.b16 %v5454, %v5453
    %v5485 = vpack.c.b16 %v5456, %v5455
    %v5486 = vpack.c.b16 %v5458, %v5457
    %v5487 = vpack.c.b16 %v5460, %v5459
    %v5488 = vpack.c.b16 %v5462, %v5461
    %v5489 = vpack.c.b16 %v5464, %v5463
    %v5490 = vpack.c.b16 %v5466, %v5465
    %5515 = vmatprep.subr.bf16.mxu0 0
    %5516 = vmatpush1.bf16.msra.mxu0 %v5474
    %5517 = vmatprep.subr.bf16.mxu0 0
    %5518 = vmatpush1.bf16.msra.mxu0 %v5473
    %5519 = vmatprep.subr.bf16.mxu0 0
    %5520 = vmatpush1.bf16.msra.mxu0 %v5472
    %5521 = vmatprep.subr.bf16.mxu0 0
    %5522 = vmatpush1.bf16.msra.mxu0 %v5471
    %5523 = vmatprep.subr.bf16.mxu0 0
    %5524 = vmatpush1.bf16.msra.mxu0 %v5470
    %5525 = vmatprep.subr.bf16.mxu0 0
    %5526 = vmatpush1.bf16.msra.mxu0 %v5469
    %5527 = vmatprep.subr.bf16.mxu0 0
    %5528 = vmatpush1.bf16.msra.mxu0 %v5468
    %5529 = vmatprep.subr.bf16.mxu0 0
    %5530 = vmatpush1.bf16.msra.mxu0 %v5467
    %5531 = vmatprep.subr.bf16.mxu0 0
    %5532 = vmatpush2.bf16.msra.mxu0 %v5482
    %5533 = vmatprep.subr.bf16.mxu0 0
    %5534 = vmatpush2.bf16.msra.mxu0 %v5481
    %5535 = vmatprep.subr.bf16.mxu0 0
    %5536 = vmatpush2.bf16.msra.mxu0 %v5480
    %5537 = vmatprep.subr.bf16.mxu0 0
    %5538 = vmatpush2.bf16.msra.mxu0 %v5479
    %5539 = vmatprep.subr.bf16.mxu0 0
    %5540 = vmatpush2.bf16.msra.mxu0 %v5478
    %5541 = vmatprep.subr.bf16.mxu0 0
    %5542 = vmatpush2.bf16.msra.mxu0 %v5477
    %5543 = vmatprep.subr.bf16.mxu0 0
    %5544 = vmatpush2.bf16.msra.mxu0 %v5476
    %5545 = vmatprep.subr.bf16.mxu0 0
    %5546 = vmatpush2.bf16.msra.mxu0 %v5475
    %5547 = vmatprep.mubr.bf16.mxu0 %v5306
    %5548 = vmatmul.mubr.bf16.gmra.mxu0 %v1562
    %v5549 = vpop.f32.mrf.mxu0
    %v5550 = vadd.f32 0.0, %v5549
    %v5551 = vpop.f32.mrf.mxu0
    %v5552 = vpop.f32.mrf.mxu0
    %v5553 = vadd.f32 0.0, %v5552
    %v5554 = vpop.f32.mrf.mxu0
    %5555 = vmatprep.mubr.bf16.mxu0 %v5306
    %5556 = vmatmul.mubr.bf16.gmra.mxu0 %v5306
    %v5557 = vpop.f32.mrf.mxu0
    %v5558 = vadd.f32 0.0, %v5557
    %v5559 = vpop.f32.mrf.mxu0
    %v5560 = vpop.f32.mrf.mxu0
    %v5561 = vadd.f32 0.0, %v5560
    %v5562 = vpop.f32.mrf.mxu0
    %5563 = vmatprep.mubr.bf16.mxu0 %v5307
    %5564 = vmatmul.mubr.bf16.gmra.mxu0 %v5306
    %v5565 = vpop.f32.mrf.mxu0
    %v5566 = vadd.f32 0.0, %v5565
    %v5567 = vpop.f32.mrf.mxu0
    %v5568 = vpop.f32.mrf.mxu0
    %v5569 = vadd.f32 0.0, %v5568
    %v5570 = vpop.f32.mrf.mxu0
    %5571 = vmatprep.mubr.bf16.mxu0 %v5307
    %5572 = vmatmul.mubr.bf16.gmra.mxu0 %v5307
    %v5573 = vpop.f32.mrf.mxu0
    %v5574 = vadd.f32 0.0, %v5573
    %v5575 = vpop.f32.mrf.mxu0
    %v5576 = vpop.f32.mrf.mxu0
    %v5577 = vadd.f32 0.0, %v5576
    %v5578 = vpop.f32.mrf.mxu0
    %5579 = vmatprep.mubr.bf16.mxu0 %v5308
    %5580 = vmatmul.mubr.bf16.gmra.mxu0 %v5307
    %v5581 = vpop.f32.mrf.mxu0
    %v5582 = vadd.f32 0.0, %v5581
    %v5583 = vpop.f32.mrf.mxu0
    %v5584 = vpop.f32.mrf.mxu0
    %v5585 = vadd.f32 0.0, %v5584
    %v5586 = vpop.f32.mrf.mxu0
    %5587 = vmatprep.mubr.bf16.mxu0 %v5308
    %5588 = vmatmul.mubr.bf16.gmra.mxu0 %v5308
    %v5589 = vpop.f32.mrf.mxu0
    %v5590 = vadd.f32 0.0, %v5589
    %v5591 = vpop.f32.mrf.mxu0
    %v5592 = vpop.f32.mrf.mxu0
    %v5593 = vadd.f32 0.0, %v5592
    %v5594 = vpop.f32.mrf.mxu0
    %5595 = vmatprep.mubr.bf16.mxu0 %v5309
    %5596 = vmatmul.mubr.bf16.gmra.mxu0 %v5308
    %v5597 = vpop.f32.mrf.mxu0
    %v5598 = vadd.f32 0.0, %v5597
    %v5599 = vpop.f32.mrf.mxu0
    %v5600 = vpop.f32.mrf.mxu0
    %v5601 = vadd.f32 0.0, %v5600
    %v5602 = vpop.f32.mrf.mxu0
    %5603 = vmatprep.mubr.bf16.mxu0 %v5309
    %5604 = vmatmul.mubr.bf16.gmra.mxu0 %v5309
    %v5605 = vpop.f32.mrf.mxu0
    %v5606 = vadd.f32 0.0, %v5605
    %v5607 = vpop.f32.mrf.mxu0
    %v5608 = vpop.f32.mrf.mxu0
    %v5609 = vadd.f32 0.0, %v5608
    %v5610 = vpop.f32.mrf.mxu0
    %5611 = vmatprep.mubr.bf16.mxu0 %v5310
    %5612 = vmatmul.mubr.bf16.gmra.mxu0 %v5309
    %v5613 = vpop.f32.mrf.mxu0
    %v5614 = vadd.f32 0.0, %v5613
    %v5615 = vpop.f32.mrf.mxu0
    %v5616 = vpop.f32.mrf.mxu0
    %v5617 = vadd.f32 0.0, %v5616
    %v5618 = vpop.f32.mrf.mxu0
    %5619 = vmatprep.mubr.bf16.mxu0 %v5310
    %5620 = vmatmul.mubr.bf16.gmra.mxu0 %v5310
    %v5621 = vpop.f32.mrf.mxu0
    %v5622 = vadd.f32 0.0, %v5621
    %v5623 = vpop.f32.mrf.mxu0
    %v5624 = vpop.f32.mrf.mxu0
    %v5625 = vadd.f32 0.0, %v5624
    %v5626 = vpop.f32.mrf.mxu0
    %5627 = vmatprep.mubr.bf16.mxu0 %v5311
    %5628 = vmatmul.mubr.bf16.gmra.mxu0 %v5310
    %v5629 = vpop.f32.mrf.mxu0
    %v5630 = vadd.f32 0.0, %v5629
    %v5631 = vpop.f32.mrf.mxu0
    %v5632 = vpop.f32.mrf.mxu0
    %v5633 = vadd.f32 0.0, %v5632
    %v5634 = vpop.f32.mrf.mxu0
    %5635 = vmatprep.mubr.bf16.mxu0 %v5311
    %5636 = vmatmul.mubr.bf16.gmra.mxu0 %v5311
    %v5637 = vpop.f32.mrf.mxu0
    %v5638 = vadd.f32 0.0, %v5637
    %v5639 = vpop.f32.mrf.mxu0
    %v5640 = vpop.f32.mrf.mxu0
    %v5641 = vadd.f32 0.0, %v5640
    %v5642 = vpop.f32.mrf.mxu0
    %5643 = vmatprep.mubr.bf16.mxu0 %v5312
    %5644 = vmatmul.mubr.bf16.gmra.mxu0 %v5311
    %v5645 = vpop.f32.mrf.mxu0
    %v5646 = vadd.f32 0.0, %v5645
    %v5647 = vpop.f32.mrf.mxu0
    %v5648 = vpop.f32.mrf.mxu0
    %v5649 = vadd.f32 0.0, %v5648
    %v5650 = vpop.f32.mrf.mxu0
    %5651 = vmatprep.mubr.bf16.mxu0 %v5312
    %5652 = vmatmul.mubr.bf16.gmra.mxu0 %v5312
    %v5653 = vpop.f32.mrf.mxu0
    %v5654 = vadd.f32 0.0, %v5653
    %v5655 = vpop.f32.mrf.mxu0
    %v5656 = vpop.f32.mrf.mxu0
    %v5657 = vadd.f32 0.0, %v5656
    %v5658 = vpop.f32.mrf.mxu0
    %5659 = vmatprep.mubr.bf16.mxu0 %v5313
    %5660 = vmatmul.mubr.bf16.gmra.mxu0 %v5312
    %v5661 = vpop.f32.mrf.mxu0
    %v5662 = vadd.f32 0.0, %v5661
    %v5663 = vpop.f32.mrf.mxu0
    %v5664 = vpop.f32.mrf.mxu0
    %v5665 = vadd.f32 0.0, %v5664
    %v5666 = vpop.f32.mrf.mxu0
    %5667 = vmatprep.mubr.bf16.mxu0 %v5313
    %5668 = vmatmul.mubr.bf16.gmra.mxu0 %v5313
    %v5669 = vpop.f32.mrf.mxu0
    %v5670 = vadd.f32 0.0, %v5669
    %v5671 = vpop.f32.mrf.mxu0
    %v5672 = vpop.f32.mrf.mxu0
    %v5673 = vadd.f32 0.0, %v5672
    %v5674 = vpop.f32.mrf.mxu0
    %5675 = vmatprep.mubr.bf16.mxu0 %v5314
    %5676 = vmatmul.mubr.bf16.gmra.mxu0 %v1562
    %v5677 = vpop.f32.mrf.mxu0
    %v5678 = vadd.f32 0.0, %v5677
    %v5679 = vpop.f32.mrf.mxu0
    %v5680 = vpop.f32.mrf.mxu0
    %v5681 = vadd.f32 0.0, %v5680
    %v5682 = vpop.f32.mrf.mxu0
    %5683 = vmatprep.mubr.bf16.mxu0 %v5314
    %5684 = vmatmul.mubr.bf16.gmra.mxu0 %v5314
    %v5685 = vpop.f32.mrf.mxu0
    %v5686 = vadd.f32 0.0, %v5685
    %v5687 = vpop.f32.mrf.mxu0
    %v5688 = vpop.f32.mrf.mxu0
    %v5689 = vadd.f32 0.0, %v5688
    %v5690 = vpop.f32.mrf.mxu0
    %5691 = vmatprep.mubr.bf16.mxu0 %v5315
    %5692 = vmatmul.mubr.bf16.gmra.mxu0 %v5314
    %v5693 = vpop.f32.mrf.mxu0
    %v5694 = vadd.f32 0.0, %v5693
    %v5695 = vpop.f32.mrf.mxu0
    %v5696 = vpop.f32.mrf.mxu0
    %v5697 = vadd.f32 0.0, %v5696
    %v5698 = vpop.f32.mrf.mxu0
    %5699 = vmatprep.mubr.bf16.mxu0 %v5315
    %5700 = vmatmul.mubr.bf16.gmra.mxu0 %v5315
    %v5701 = vpop.f32.mrf.mxu0
    %v5702 = vadd.f32 0.0, %v5701
    %v5703 = vpop.f32.mrf.mxu0
    %v5704 = vpop.f32.mrf.mxu0
    %v5705 = vadd.f32 0.0, %v5704
    %v5706 = vpop.f32.mrf.mxu0
    %5707 = vmatprep.mubr.bf16.mxu0 %v5316
    %5708 = vmatmul.mubr.bf16.gmra.mxu0 %v5315
    %v5709 = vpop.f32.mrf.mxu0
    %v5710 = vadd.f32 0.0, %v5709
    %v5711 = vpop.f32.mrf.mxu0
    %v5712 = vpop.f32.mrf.mxu0
    %v5713 = vadd.f32 0.0, %v5712
    %v5714 = vpop.f32.mrf.mxu0
    %5715 = vmatprep.mubr.bf16.mxu0 %v5316
    %5716 = vmatmul.mubr.bf16.gmra.mxu0 %v5316
    %v5717 = vpop.f32.mrf.mxu0
    %v5718 = vadd.f32 0.0, %v5717
    %v5719 = vpop.f32.mrf.mxu0
    %v5720 = vpop.f32.mrf.mxu0
    %v5721 = vadd.f32 0.0, %v5720
    %v5722 = vpop.f32.mrf.mxu0
    %5723 = vmatprep.mubr.bf16.mxu0 %v5317
    %5724 = vmatmul.mubr.bf16.gmra.mxu0 %v5316
    %v5725 = vpop.f32.mrf.mxu0
    %v5726 = vadd.f32 0.0, %v5725
    %v5727 = vpop.f32.mrf.mxu0
    %v5728 = vpop.f32.mrf.mxu0
    %v5729 = vadd.f32 0.0, %v5728
    %v5730 = vpop.f32.mrf.mxu0
    %5731 = vmatprep.mubr.bf16.mxu0 %v5317
    %5732 = vmatmul.mubr.bf16.gmra.mxu0 %v5317
    %v5733 = vpop.f32.mrf.mxu0
    %v5734 = vadd.f32 0.0, %v5733
    %v5735 = vpop.f32.mrf.mxu0
    %v5736 = vpop.f32.mrf.mxu0
    %v5737 = vadd.f32 0.0, %v5736
    %v5738 = vpop.f32.mrf.mxu0
    %5739 = vmatprep.mubr.bf16.mxu0 %v5318
    %5740 = vmatmul.mubr.bf16.gmra.mxu0 %v5317
    %v5741 = vpop.f32.mrf.mxu0
    %v5742 = vadd.f32 0.0, %v5741
    %v5743 = vpop.f32.mrf.mxu0
    %v5744 = vpop.f32.mrf.mxu0
    %v5745 = vadd.f32 0.0, %v5744
    %v5746 = vpop.f32.mrf.mxu0
    %5747 = vmatprep.mubr.bf16.mxu0 %v5318
    %5748 = vmatmul.mubr.bf16.gmra.mxu0 %v5318
    %v5749 = vpop.f32.mrf.mxu0
    %v5750 = vadd.f32 0.0, %v5749
    %v5751 = vpop.f32.mrf.mxu0
    %v5752 = vpop.f32.mrf.mxu0
    %v5753 = vadd.f32 0.0, %v5752
    %v5754 = vpop.f32.mrf.mxu0
    %5755 = vmatprep.mubr.bf16.mxu0 %v5319
    %5756 = vmatmul.mubr.bf16.gmra.mxu0 %v5318
    %v5757 = vpop.f32.mrf.mxu0
    %v5758 = vadd.f32 0.0, %v5757
    %v5759 = vpop.f32.mrf.mxu0
    %v5760 = vpop.f32.mrf.mxu0
    %v5761 = vadd.f32 0.0, %v5760
    %v5762 = vpop.f32.mrf.mxu0
    %5763 = vmatprep.mubr.bf16.mxu0 %v5319
    %5764 = vmatmul.mubr.bf16.gmra.mxu0 %v5319
    %v5765 = vpop.f32.mrf.mxu0
    %v5766 = vadd.f32 0.0, %v5765
    %v5767 = vpop.f32.mrf.mxu0
    %v5768 = vpop.f32.mrf.mxu0
    %v5769 = vadd.f32 0.0, %v5768
    %v5770 = vpop.f32.mrf.mxu0
    %5771 = vmatprep.mubr.bf16.mxu0 %v5320
    %5772 = vmatmul.mubr.bf16.gmra.mxu0 %v5319
    %v5773 = vpop.f32.mrf.mxu0
    %v5774 = vadd.f32 0.0, %v5773
    %v5775 = vpop.f32.mrf.mxu0
    %v5776 = vpop.f32.mrf.mxu0
    %v5777 = vadd.f32 0.0, %v5776
    %v5778 = vpop.f32.mrf.mxu0
    %5779 = vmatprep.mubr.bf16.mxu0 %v5320
    %5780 = vmatmul.mubr.bf16.gmra.mxu0 %v5320
    %v5781 = vpop.f32.mrf.mxu0
    %v5782 = vadd.f32 0.0, %v5781
    %v5783 = vpop.f32.mrf.mxu0
    %v5784 = vpop.f32.mrf.mxu0
    %v5785 = vadd.f32 0.0, %v5784
    %v5786 = vpop.f32.mrf.mxu0
    %5787 = vmatprep.mubr.bf16.mxu0 %v5321
    %5788 = vmatmul.mubr.bf16.gmra.mxu0 %v5320
    %v5789 = vpop.f32.mrf.mxu0
    %v5790 = vadd.f32 0.0, %v5789
    %v5791 = vpop.f32.mrf.mxu0
    %v5792 = vpop.f32.mrf.mxu0
    %v5793 = vadd.f32 0.0, %v5792
    %v5794 = vpop.f32.mrf.mxu0
    %5795 = vmatprep.mubr.bf16.mxu0 %v5321
    %5796 = vmatmul.mubr.bf16.gmra.mxu0 %v5321
    %v5797 = vpop.f32.mrf.mxu0
    %v5798 = vadd.f32 0.0, %v5797
    %v5799 = vpop.f32.mrf.mxu0
    %v5800 = vpop.f32.mrf.mxu0
    %v5801 = vadd.f32 0.0, %v5800
    %v5802 = vpop.f32.mrf.mxu0
    %5803 = vdwg.mxu0
    %5804 = vmatprep.subr.bf16.mxu0 0
    %5805 = vmatpush1.bf16.msra.mxu0 %v5490
    %5806 = vmatprep.subr.bf16.mxu0 0
    %5807 = vmatpush1.bf16.msra.mxu0 %v5489
    %5808 = vmatprep.subr.bf16.mxu0 0
    %5809 = vmatpush1.bf16.msra.mxu0 %v5488
    %5810 = vmatprep.subr.bf16.mxu0 0
    %5811 = vmatpush1.bf16.msra.mxu0 %v5487
    %5812 = vmatprep.subr.bf16.mxu0 0
    %5813 = vmatpush1.bf16.msra.mxu0 %v5486
    %5814 = vmatprep.subr.bf16.mxu0 0
    %5815 = vmatpush1.bf16.msra.mxu0 %v5485
    %5816 = vmatprep.subr.bf16.mxu0 0
    %5817 = vmatpush1.bf16.msra.mxu0 %v5484
    %5818 = vmatprep.subr.bf16.mxu0 0
    %5819 = vmatpush1.bf16.msra.mxu0 %v5483
    %5820 = vmatprep.subr.bf16.mxu0 0
    %5821 = vmatpush2.bf16.msra.mxu0 0
    %5822 = vmatprep.subr.bf16.mxu0 0
    %5823 = vmatpush2.bf16.msra.mxu0 0
    %5824 = vmatprep.subr.bf16.mxu0 0
    %5825 = vmatpush2.bf16.msra.mxu0 0
    %5826 = vmatprep.subr.bf16.mxu0 0
    %5827 = vmatpush2.bf16.msra.mxu0 0
    %5828 = vmatprep.subr.bf16.mxu0 0
    %5829 = vmatpush2.bf16.msra.mxu0 0
    %5830 = vmatprep.subr.bf16.mxu0 0
    %5831 = vmatpush2.bf16.msra.mxu0 0
    %5832 = vmatprep.subr.bf16.mxu0 0
    %5833 = vmatpush2.bf16.msra.mxu0 0
    %5834 = vmatprep.subr.bf16.mxu0 0
    %5835 = vmatpush2.bf16.msra.mxu0 0
    %5836 = vmatprep.mubr.bf16.mxu0 0
    %5837 = vmatmul.mubr.bf16.gmra.mxu0 %v5306
    %v5838 = vpop.f32.mrf.mxu0
    %v5839 = vadd.f32 %v5550, %v5838
    %v5840 = vpop.f32.mrf.mxu0
    %v5841 = vpop.f32.mrf.mxu0
    %v5842 = vadd.f32 %v5553, %v5841
    %v5843 = vpop.f32.mrf.mxu0
    %5844 = vmatprep.mubr.bf16.mxu0 0
    %5845 = vmatmul.mubr.bf16.gmra.mxu0 %v5307
    %v5846 = vpop.f32.mrf.mxu0
    %v5847 = vadd.f32 %v5558, %v5846
    %v5848 = vpop.f32.mrf.mxu0
    %v5849 = vpop.f32.mrf.mxu0
    %v5850 = vadd.f32 %v5561, %v5849
    %v5851 = vpop.f32.mrf.mxu0
    %5852 = vmatprep.mubr.bf16.mxu0 0
    %5853 = vmatmul.mubr.bf16.gmra.mxu0 %v5307
    %v5854 = vpop.f32.mrf.mxu0
    %v5855 = vadd.f32 %v5566, %v5854
    %v5856 = vpop.f32.mrf.mxu0
    %v5857 = vpop.f32.mrf.mxu0
    %v5858 = vadd.f32 %v5569, %v5857
    %v5859 = vpop.f32.mrf.mxu0
    %5860 = vmatprep.mubr.bf16.mxu0 0
    %5861 = vmatmul.mubr.bf16.gmra.mxu0 %v5308
    %v5862 = vpop.f32.mrf.mxu0
    %v5863 = vadd.f32 %v5574, %v5862
    %v5864 = vpop.f32.mrf.mxu0
    %v5865 = vpop.f32.mrf.mxu0
    %v5866 = vadd.f32 %v5577, %v5865
    %v5867 = vpop.f32.mrf.mxu0
    %5868 = vmatprep.mubr.bf16.mxu0 0
    %5869 = vmatmul.mubr.bf16.gmra.mxu0 %v5308
    %v5870 = vpop.f32.mrf.mxu0
    %v5871 = vadd.f32 %v5582, %v5870
    %v5872 = vpop.f32.mrf.mxu0
    %v5873 = vpop.f32.mrf.mxu0
    %v5874 = vadd.f32 %v5585, %v5873
    %v5875 = vpop.f32.mrf.mxu0
    %5876 = vmatprep.mubr.bf16.mxu0 0
    %5877 = vmatmul.mubr.bf16.gmra.mxu0 %v5309
    %v5878 = vpop.f32.mrf.mxu0
    %v5879 = vadd.f32 %v5590, %v5878
    %v5880 = vpop.f32.mrf.mxu0
    %v5881 = vpop.f32.mrf.mxu0
    %v5882 = vadd.f32 %v5593, %v5881
    %v5883 = vpop.f32.mrf.mxu0
    %5884 = vmatprep.mubr.bf16.mxu0 0
    %5885 = vmatmul.mubr.bf16.gmra.mxu0 %v5309
    %v5886 = vpop.f32.mrf.mxu0
    %v5887 = vadd.f32 %v5598, %v5886
    %v5888 = vpop.f32.mrf.mxu0
    %v5889 = vpop.f32.mrf.mxu0
    %v5890 = vadd.f32 %v5601, %v5889
    %v5891 = vpop.f32.mrf.mxu0
    %5892 = vmatprep.mubr.bf16.mxu0 0
    %5893 = vmatmul.mubr.bf16.gmra.mxu0 %v5310
    %v5894 = vpop.f32.mrf.mxu0
    %v5895 = vadd.f32 %v5606, %v5894
    %v5896 = vpop.f32.mrf.mxu0
    %v5897 = vpop.f32.mrf.mxu0
    %v5898 = vadd.f32 %v5609, %v5897
    %v5899 = vpop.f32.mrf.mxu0
    %5900 = vmatprep.mubr.bf16.mxu0 0
    %5901 = vmatmul.mubr.bf16.gmra.mxu0 %v5310
    %v5902 = vpop.f32.mrf.mxu0
    %v5903 = vadd.f32 %v5614, %v5902
    %v5904 = vpop.f32.mrf.mxu0
    %v5905 = vpop.f32.mrf.mxu0
    %v5906 = vadd.f32 %v5617, %v5905
    %v5907 = vpop.f32.mrf.mxu0
    %5908 = vmatprep.mubr.bf16.mxu0 0
    %5909 = vmatmul.mubr.bf16.gmra.mxu0 %v5311
    %v5910 = vpop.f32.mrf.mxu0
    %v5911 = vadd.f32 %v5622, %v5910
    %v5912 = vpop.f32.mrf.mxu0
    %v5913 = vpop.f32.mrf.mxu0
    %v5914 = vadd.f32 %v5625, %v5913
    %v5915 = vpop.f32.mrf.mxu0
    %5916 = vmatprep.mubr.bf16.mxu0 0
    %5917 = vmatmul.mubr.bf16.gmra.mxu0 %v5311
    %v5918 = vpop.f32.mrf.mxu0
    %v5919 = vadd.f32 %v5630, %v5918
    %v5920 = vpop.f32.mrf.mxu0
    %v5921 = vpop.f32.mrf.mxu0
    %v5922 = vadd.f32 %v5633, %v5921
    %v5923 = vpop.f32.mrf.mxu0
    %5924 = vmatprep.mubr.bf16.mxu0 0
    %5925 = vmatmul.mubr.bf16.gmra.mxu0 %v5312
    %v5926 = vpop.f32.mrf.mxu0
    %v5927 = vadd.f32 %v5638, %v5926
    %v5928 = vpop.f32.mrf.mxu0
    %v5929 = vpop.f32.mrf.mxu0
    %v5930 = vadd.f32 %v5641, %v5929
    %v5931 = vpop.f32.mrf.mxu0
    %5932 = vmatprep.mubr.bf16.mxu0 0
    %5933 = vmatmul.mubr.bf16.gmra.mxu0 %v5312
    %v5934 = vpop.f32.mrf.mxu0
    %v5935 = vadd.f32 %v5646, %v5934
    %v5936 = vpop.f32.mrf.mxu0
    %v5937 = vpop.f32.mrf.mxu0
    %v5938 = vadd.f32 %v5649, %v5937
    %v5939 = vpop.f32.mrf.mxu0
    %5940 = vmatprep.mubr.bf16.mxu0 0
    %5941 = vmatmul.mubr.bf16.gmra.mxu0 %v5313
    %v5942 = vpop.f32.mrf.mxu0
    %v5943 = vadd.f32 %v5654, %v5942
    %v5944 = vpop.f32.mrf.mxu0
    %v5945 = vpop.f32.mrf.mxu0
    %v5946 = vadd.f32 %v5657, %v5945
    %v5947 = vpop.f32.mrf.mxu0
    %5948 = vmatprep.mubr.bf16.mxu0 0
    %5949 = vmatmul.mubr.bf16.gmra.mxu0 %v5313
    %v5950 = vpop.f32.mrf.mxu0
    %v5951 = vadd.f32 %v5662, %v5950
    %v5952 = vpop.f32.mrf.mxu0
    %v5953 = vpop.f32.mrf.mxu0
    %v5954 = vadd.f32 %v5665, %v5953
    %v5955 = vpop.f32.mrf.mxu0
    %5956 = vmatprep.mubr.bf16.mxu0 0
    %5957 = vmatmul.mubr.bf16.gmra.mxu0 %v1562
    %v5958 = vpop.f32.mrf.mxu0
    %v5959 = vadd.f32 %v5670, %v5958
    %v5960 = vpop.f32.mrf.mxu0
    %v5961 = vpop.f32.mrf.mxu0
    %v5962 = vadd.f32 %v5673, %v5961
    %v5963 = vpop.f32.mrf.mxu0
    %5964 = vmatprep.mubr.bf16.mxu0 0
    %5965 = vmatmul.mubr.bf16.gmra.mxu0 %v5314
    %v5966 = vpop.f32.mrf.mxu0
    %v5967 = vadd.f32 %v5678, %v5966
    %v5968 = vpop.f32.mrf.mxu0
    %v5969 = vpop.f32.mrf.mxu0
    %v5970 = vadd.f32 %v5681, %v5969
    %v5971 = vpop.f32.mrf.mxu0
    %5972 = vmatprep.mubr.bf16.mxu0 0
    %5973 = vmatmul.mubr.bf16.gmra.mxu0 %v5315
    %v5974 = vpop.f32.mrf.mxu0
    %v5975 = vadd.f32 %v5686, %v5974
    %v5976 = vpop.f32.mrf.mxu0
    %v5977 = vpop.f32.mrf.mxu0
    %v5978 = vadd.f32 %v5689, %v5977
    %v5979 = vpop.f32.mrf.mxu0
    %5980 = vmatprep.mubr.bf16.mxu0 0
    %5981 = vmatmul.mubr.bf16.gmra.mxu0 %v5315
    %v5982 = vpop.f32.mrf.mxu0
    %v5983 = vadd.f32 %v5694, %v5982
    %v5984 = vpop.f32.mrf.mxu0
    %v5985 = vpop.f32.mrf.mxu0
    %v5986 = vadd.f32 %v5697, %v5985
    %v5987 = vpop.f32.mrf.mxu0
    %5988 = vmatprep.mubr.bf16.mxu0 0
    %5989 = vmatmul.mubr.bf16.gmra.mxu0 %v5316
    %v5990 = vpop.f32.mrf.mxu0
    %v5991 = vadd.f32 %v5702, %v5990
    %v5992 = vpop.f32.mrf.mxu0
    %v5993 = vpop.f32.mrf.mxu0
    %v5994 = vadd.f32 %v5705, %v5993
    %v5995 = vpop.f32.mrf.mxu0
    %5996 = vmatprep.mubr.bf16.mxu0 0
    %5997 = vmatmul.mubr.bf16.gmra.mxu0 %v5316
    %v5998 = vpop.f32.mrf.mxu0
    %v5999 = vadd.f32 %v5710, %v5998
    %v6000 = vpop.f32.mrf.mxu0
    %v6001 = vpop.f32.mrf.mxu0
    %v6002 = vadd.f32 %v5713, %v6001
    %v6003 = vpop.f32.mrf.mxu0
    %6004 = vmatprep.mubr.bf16.mxu0 0
    %6005 = vmatmul.mubr.bf16.gmra.mxu0 %v5317
    %v6006 = vpop.f32.mrf.mxu0
    %v6007 = vadd.f32 %v5718, %v6006
    %v6008 = vpop.f32.mrf.mxu0
    %v6009 = vpop.f32.mrf.mxu0
    %v6010 = vadd.f32 %v5721, %v6009
    %v6011 = vpop.f32.mrf.mxu0
    %6012 = vmatprep.mubr.bf16.mxu0 0
    %6013 = vmatmul.mubr.bf16.gmra.mxu0 %v5317
    %v6014 = vpop.f32.mrf.mxu0
    %v6015 = vadd.f32 %v5726, %v6014
    %v6016 = vpop.f32.mrf.mxu0
    %v6017 = vpop.f32.mrf.mxu0
    %v6018 = vadd.f32 %v5729, %v6017
    %v6019 = vpop.f32.mrf.mxu0
    %6020 = vmatprep.mubr.bf16.mxu0 0
    %6021 = vmatmul.mubr.bf16.gmra.mxu0 %v5318
    %v6022 = vpop.f32.mrf.mxu0
    %v6023 = vadd.f32 %v5734, %v6022
    %v6024 = vpop.f32.mrf.mxu0
    %v6025 = vpop.f32.mrf.mxu0
    %v6026 = vadd.f32 %v5737, %v6025
    %v6027 = vpop.f32.mrf.mxu0
    %6028 = vmatprep.mubr.bf16.mxu0 0
    %6029 = vmatmul.mubr.bf16.gmra.mxu0 %v5318
    %v6030 = vpop.f32.mrf.mxu0
    %v6031 = vadd.f32 %v5742, %v6030
    %v6032 = vpop.f32.mrf.mxu0
    %v6033 = vpop.f32.mrf.mxu0
    %v6034 = vadd.f32 %v5745, %v6033
    %v6035 = vpop.f32.mrf.mxu0
    %6036 = vmatprep.mubr.bf16.mxu0 0
    %6037 = vmatmul.mubr.bf16.gmra.mxu0 %v5319
    %v6038 = vpop.f32.mrf.mxu0
    %v6039 = vadd.f32 %v5750, %v6038
    %v6040 = vpop.f32.mrf.mxu0
    %v6041 = vpop.f32.mrf.mxu0
    %v6042 = vadd.f32 %v5753, %v6041
    %v6043 = vpop.f32.mrf.mxu0
    %6044 = vmatprep.mubr.bf16.mxu0 0
    %6045 = vmatmul.mubr.bf16.gmra.mxu0 %v5319
    %v6046 = vpop.f32.mrf.mxu0
    %v6047 = vadd.f32 %v5758, %v6046
    %v6048 = vpop.f32.mrf.mxu0
    %v6049 = vpop.f32.mrf.mxu0
    %v6050 = vadd.f32 %v5761, %v6049
    %v6051 = vpop.f32.mrf.mxu0
    %6052 = vmatprep.mubr.bf16.mxu0 0
    %6053 = vmatmul.mubr.bf16.gmra.mxu0 %v5320
    %v6054 = vpop.f32.mrf.mxu0
    %v6055 = vadd.f32 %v5766, %v6054
    %v6056 = vpop.f32.mrf.mxu0
    %v6057 = vpop.f32.mrf.mxu0
    %v6058 = vadd.f32 %v5769, %v6057
    %v6059 = vpop.f32.mrf.mxu0
    %6060 = vmatprep.mubr.bf16.mxu0 0
    %6061 = vmatmul.mubr.bf16.gmra.mxu0 %v5320
    %v6062 = vpop.f32.mrf.mxu0
    %v6063 = vadd.f32 %v5774, %v6062
    %v6064 = vpop.f32.mrf.mxu0
    %v6065 = vpop.f32.mrf.mxu0
    %v6066 = vadd.f32 %v5777, %v6065
    %v6067 = vpop.f32.mrf.mxu0
    %6068 = vmatprep.mubr.bf16.mxu0 0
    %6069 = vmatmul.mubr.bf16.gmra.mxu0 %v5321
    %v6070 = vpop.f32.mrf.mxu0
    %v6071 = vadd.f32 %v5782, %v6070
    %v6072 = vpop.f32.mrf.mxu0
    %v6073 = vpop.f32.mrf.mxu0
    %v6074 = vadd.f32 %v5785, %v6073
    %v6075 = vpop.f32.mrf.mxu0
    %6076 = vmatprep.mubr.bf16.mxu0 0
    %6077 = vmatmul.mubr.bf16.gmra.mxu0 %v5321
    %v6078 = vpop.f32.mrf.mxu0
    %v6079 = vadd.f32 %v5790, %v6078
    %v6080 = vpop.f32.mrf.mxu0
    %v6081 = vpop.f32.mrf.mxu0
    %v6082 = vadd.f32 %v5793, %v6081
    %v6083 = vpop.f32.mrf.mxu0
    %6084 = vmatprep.mubr.bf16.mxu0 0
    %6085 = vmatmul.mubr.bf16.gmra.mxu0 %v1562
    %v6086 = vpop.f32.mrf.mxu0
    %v6087 = vadd.f32 %v5798, %v6086
    %v6088 = vpop.f32.mrf.mxu0
    %v6089 = vpop.f32.mrf.mxu0
    %v6090 = vadd.f32 %v5801, %v6089
    %v6091 = vpop.f32.mrf.mxu0
    %6092 = vdwg.mxu0
    %v6141 = vunpack.c.l.b16 %v5258
    %v6142 = vunpack.c.l.b16 %v5259
    %v6143 = vunpack.c.l.b16 %v5260
    %v6144 = vunpack.c.l.b16 %v5261
    %v6145 = vunpack.c.l.b16 %v5262
    %v6146 = vunpack.c.l.b16 %v5263
    %v6147 = vunpack.c.l.b16 %v5264
    %v6148 = vunpack.c.l.b16 %v5265
    %v6149 = vunpack.c.l.b16 %v5266
    %v6150 = vunpack.c.l.b16 %v5267
    %v6151 = vunpack.c.l.b16 %v5268
    %v6152 = vunpack.c.l.b16 %v5269
    %v6153 = vunpack.c.l.b16 %v5270
    %v6154 = vunpack.c.l.b16 %v5271
    %v6155 = vunpack.c.l.b16 %v5272
    %v6156 = vunpack.c.l.b16 %v5273
    %v6157 = vunpack.c.l.b16 %v5274
    %v6158 = vunpack.c.l.b16 %v5275
    %v6159 = vunpack.c.l.b16 %v5276
    %v6160 = vunpack.c.l.b16 %v5277
    %v6161 = vunpack.c.l.b16 %v5278
    %v6162 = vunpack.c.l.b16 %v5279
    %v6163 = vunpack.c.l.b16 %v5280
    %v6164 = vunpack.c.l.b16 %v5281
    %v6165 = vunpack.c.l.b16 %v5282
    %v6166 = vunpack.c.l.b16 %v5283
    %v6167 = vunpack.c.l.b16 %v5284
    %v6168 = vunpack.c.l.b16 %v5285
    %v6169 = vunpack.c.l.b16 %v5286
    %v6170 = vunpack.c.l.b16 %v5287
    %v6171 = vunpack.c.l.b16 %v5288
    %v6172 = vunpack.c.l.b16 %v5289
    %v6173 = vunpack.c.l.b16 %v5290
    %v6174 = vunpack.c.l.b16 %v5291
    %v6175 = vunpack.c.l.b16 %v5292
    %v6176 = vunpack.c.l.b16 %v5293
    %v6177 = vunpack.c.l.b16 %v5294
    %v6178 = vunpack.c.l.b16 %v5295
    %v6179 = vunpack.c.l.b16 %v5296
    %v6180 = vunpack.c.l.b16 %v5297
    %v6181 = vunpack.c.l.b16 %v5298
    %v6182 = vunpack.c.l.b16 %v5299
    %v6183 = vunpack.c.l.b16 %v5300
    %v6184 = vunpack.c.l.b16 %v5301
    %v6185 = vunpack.c.l.b16 %v5302
    %v6186 = vunpack.c.l.b16 %v5303
    %v6187 = vunpack.c.l.b16 %v5304
    %v6188 = vunpack.c.l.b16 %v5305
    %v6189 = vpack.c.b16 %v6142, %v6141
    %v6190 = vpack.c.b16 %v6144, %v6143
    %v6191 = vpack.c.b16 %v6146, %v6145
    %v6192 = vpack.c.b16 %v6148, %v6147
    %v6193 = vpack.c.b16 %v6150, %v6149
    %v6194 = vpack.c.b16 %v6152, %v6151
    %v6195 = vpack.c.b16 %v6154, %v6153
    %v6196 = vpack.c.b16 %v6156, %v6155
    %v6197 = vpack.c.b16 %v6158, %v6157
    %v6198 = vpack.c.b16 %v6160, %v6159
    %v6199 = vpack.c.b16 %v6162, %v6161
    %v6200 = vpack.c.b16 %v6164, %v6163
    %v6201 = vpack.c.b16 %v6166, %v6165
    %v6202 = vpack.c.b16 %v6168, %v6167
    %v6203 = vpack.c.b16 %v6170, %v6169
    %v6204 = vpack.c.b16 %v6172, %v6171
    %v6205 = vpack.c.b16 %v6174, %v6173
    %v6206 = vpack.c.b16 %v6176, %v6175
    %v6207 = vpack.c.b16 %v6178, %v6177
    %v6208 = vpack.c.b16 %v6180, %v6179
    %v6209 = vpack.c.b16 %v6182, %v6181
    %v6210 = vpack.c.b16 %v6184, %v6183
    %v6211 = vpack.c.b16 %v6186, %v6185
    %v6212 = vpack.c.b16 %v6188, %v6187
    %6237 = vmatprep.subr.bf16.mxu0 0
    %6238 = vmatpush1.bf16.msra.mxu0 %v6196
    %6239 = vmatprep.subr.bf16.mxu0 0
    %6240 = vmatpush1.bf16.msra.mxu0 %v6195
    %6241 = vmatprep.subr.bf16.mxu0 0
    %6242 = vmatpush1.bf16.msra.mxu0 %v6194
    %6243 = vmatprep.subr.bf16.mxu0 0
    %6244 = vmatpush1.bf16.msra.mxu0 %v6193
    %6245 = vmatprep.subr.bf16.mxu0 0
    %6246 = vmatpush1.bf16.msra.mxu0 %v6192
    %6247 = vmatprep.subr.bf16.mxu0 0
    %6248 = vmatpush1.bf16.msra.mxu0 %v6191
    %6249 = vmatprep.subr.bf16.mxu0 0
    %6250 = vmatpush1.bf16.msra.mxu0 %v6190
    %6251 = vmatprep.subr.bf16.mxu0 0
    %6252 = vmatpush1.bf16.msra.mxu0 %v6189
    %6253 = vmatprep.subr.bf16.mxu0 0
    %6254 = vmatpush2.bf16.msra.mxu0 %v6204
    %6255 = vmatprep.subr.bf16.mxu0 0
    %6256 = vmatpush2.bf16.msra.mxu0 %v6203
    %6257 = vmatprep.subr.bf16.mxu0 0
    %6258 = vmatpush2.bf16.msra.mxu0 %v6202
    %6259 = vmatprep.subr.bf16.mxu0 0
    %6260 = vmatpush2.bf16.msra.mxu0 %v6201
    %6261 = vmatprep.subr.bf16.mxu0 0
    %6262 = vmatpush2.bf16.msra.mxu0 %v6200
    %6263 = vmatprep.subr.bf16.mxu0 0
    %6264 = vmatpush2.bf16.msra.mxu0 %v6199
    %6265 = vmatprep.subr.bf16.mxu0 0
    %6266 = vmatpush2.bf16.msra.mxu0 %v6198
    %6267 = vmatprep.subr.bf16.mxu0 0
    %6268 = vmatpush2.bf16.msra.mxu0 %v6197
    %6269 = vmatprep.mubr.bf16.mxu0 %v5224
    %6270 = vmatmul.mubr.bf16.gmra.mxu0 %v5223
    %v6271 = vpop.f32.mrf.mxu0
    %v6272 = vadd.f32 %v5839, %v6271
    %v6273 = vpop.f32.mrf.mxu0
    %v6274 = vpop.f32.mrf.mxu0
    %v6275 = vadd.f32 %v5842, %v6274
    %v6276 = vpop.f32.mrf.mxu0
    %6277 = vmatprep.mubr.bf16.mxu0 %v5225
    %6278 = vmatmul.mubr.bf16.gmra.mxu0 %v5224
    %v6279 = vpop.f32.mrf.mxu0
    %v6280 = vadd.f32 %v5847, %v6279
    %v6281 = vpop.f32.mrf.mxu0
    %v6282 = vpop.f32.mrf.mxu0
    %v6283 = vadd.f32 %v5850, %v6282
    %v6284 = vpop.f32.mrf.mxu0
    %6285 = vmatprep.mubr.bf16.mxu0 %v5226
    %6286 = vmatmul.mubr.bf16.gmra.mxu0 %v5225
    %v6287 = vpop.f32.mrf.mxu0
    %v6288 = vadd.f32 %v5855, %v6287
    %v6289 = vpop.f32.mrf.mxu0
    %v6290 = vpop.f32.mrf.mxu0
    %v6291 = vadd.f32 %v5858, %v6290
    %v6292 = vpop.f32.mrf.mxu0
    %6293 = vmatprep.mubr.bf16.mxu0 %v5227
    %6294 = vmatmul.mubr.bf16.gmra.mxu0 %v5226
    %v6295 = vpop.f32.mrf.mxu0
    %v6296 = vadd.f32 %v5863, %v6295
    %v6297 = vpop.f32.mrf.mxu0
    %v6298 = vpop.f32.mrf.mxu0
    %v6299 = vadd.f32 %v5866, %v6298
    %v6300 = vpop.f32.mrf.mxu0
    %6301 = vmatprep.mubr.bf16.mxu0 %v5228
    %6302 = vmatmul.mubr.bf16.gmra.mxu0 %v5227
    %v6303 = vpop.f32.mrf.mxu0
    %v6304 = vadd.f32 %v5871, %v6303
    %v6305 = vpop.f32.mrf.mxu0
    %v6306 = vpop.f32.mrf.mxu0
    %v6307 = vadd.f32 %v5874, %v6306
    %v6308 = vpop.f32.mrf.mxu0
    %6309 = vmatprep.mubr.bf16.mxu0 %v5229
    %6310 = vmatmul.mubr.bf16.gmra.mxu0 %v5228
    %v6311 = vpop.f32.mrf.mxu0
    %v6312 = vadd.f32 %v5879, %v6311
    %v6313 = vpop.f32.mrf.mxu0
    %v6314 = vpop.f32.mrf.mxu0
    %v6315 = vadd.f32 %v5882, %v6314
    %v6316 = vpop.f32.mrf.mxu0
    %6317 = vmatprep.mubr.bf16.mxu0 %v5230
    %6318 = vmatmul.mubr.bf16.gmra.mxu0 %v5229
    %v6319 = vpop.f32.mrf.mxu0
    %v6320 = vadd.f32 %v5887, %v6319
    %v6321 = vpop.f32.mrf.mxu0
    %v6322 = vpop.f32.mrf.mxu0
    %v6323 = vadd.f32 %v5890, %v6322
    %v6324 = vpop.f32.mrf.mxu0
    %6325 = vmatprep.mubr.bf16.mxu0 %v5231
    %6326 = vmatmul.mubr.bf16.gmra.mxu0 %v5230
    %v6327 = vpop.f32.mrf.mxu0
    %v6328 = vadd.f32 %v5895, %v6327
    %v6329 = vpop.f32.mrf.mxu0
    %v6330 = vpop.f32.mrf.mxu0
    %v6331 = vadd.f32 %v5898, %v6330
    %v6332 = vpop.f32.mrf.mxu0
    %6333 = vmatprep.mubr.bf16.mxu0 %v5232
    %6334 = vmatmul.mubr.bf16.gmra.mxu0 %v5231
    %v6335 = vpop.f32.mrf.mxu0
    %v6336 = vadd.f32 %v5903, %v6335
    %v6337 = vpop.f32.mrf.mxu0
    %v6338 = vpop.f32.mrf.mxu0
    %v6339 = vadd.f32 %v5906, %v6338
    %v6340 = vpop.f32.mrf.mxu0
    %6341 = vmatprep.mubr.bf16.mxu0 %v5233
    %6342 = vmatmul.mubr.bf16.gmra.mxu0 %v5232
    %v6343 = vpop.f32.mrf.mxu0
    %v6344 = vadd.f32 %v5911, %v6343
    %v6345 = vpop.f32.mrf.mxu0
    %v6346 = vpop.f32.mrf.mxu0
    %v6347 = vadd.f32 %v5914, %v6346
    %v6348 = vpop.f32.mrf.mxu0
    %6349 = vmatprep.mubr.bf16.mxu0 %v5234
    %6350 = vmatmul.mubr.bf16.gmra.mxu0 %v5233
    %v6351 = vpop.f32.mrf.mxu0
    %v6352 = vadd.f32 %v5919, %v6351
    %v6353 = vpop.f32.mrf.mxu0
    %v6354 = vpop.f32.mrf.mxu0
    %v6355 = vadd.f32 %v5922, %v6354
    %v6356 = vpop.f32.mrf.mxu0
    %6357 = vmatprep.mubr.bf16.mxu0 %v5235
    %6358 = vmatmul.mubr.bf16.gmra.mxu0 %v5234
    %v6359 = vpop.f32.mrf.mxu0
    %v6360 = vadd.f32 %v5927, %v6359
    %v6361 = vpop.f32.mrf.mxu0
    %v6362 = vpop.f32.mrf.mxu0
    %v6363 = vadd.f32 %v5930, %v6362
    %v6364 = vpop.f32.mrf.mxu0
    %6365 = vmatprep.mubr.bf16.mxu0 %v5236
    %6366 = vmatmul.mubr.bf16.gmra.mxu0 %v5235
    %v6367 = vpop.f32.mrf.mxu0
    %v6368 = vadd.f32 %v5935, %v6367
    %v6369 = vpop.f32.mrf.mxu0
    %v6370 = vpop.f32.mrf.mxu0
    %v6371 = vadd.f32 %v5938, %v6370
    %v6372 = vpop.f32.mrf.mxu0
    %6373 = vmatprep.mubr.bf16.mxu0 %v5237
    %6374 = vmatmul.mubr.bf16.gmra.mxu0 %v5236
    %v6375 = vpop.f32.mrf.mxu0
    %v6376 = vadd.f32 %v5943, %v6375
    %v6377 = vpop.f32.mrf.mxu0
    %v6378 = vpop.f32.mrf.mxu0
    %v6379 = vadd.f32 %v5946, %v6378
    %v6380 = vpop.f32.mrf.mxu0
    %6381 = vmatprep.mubr.bf16.mxu0 %v5238
    %6382 = vmatmul.mubr.bf16.gmra.mxu0 %v5237
    %v6383 = vpop.f32.mrf.mxu0
    %v6384 = vadd.f32 %v5951, %v6383
    %v6385 = vpop.f32.mrf.mxu0
    %v6386 = vpop.f32.mrf.mxu0
    %v6387 = vadd.f32 %v5954, %v6386
    %v6388 = vpop.f32.mrf.mxu0
    %6389 = vmatprep.mubr.bf16.mxu0 %v5254
    %6390 = vmatmul.mubr.bf16.gmra.mxu0 %v5238
    %v6391 = vpop.f32.mrf.mxu0
    %v6392 = vadd.f32 %v5959, %v6391
    %v6393 = vpop.f32.mrf.mxu0
    %v6394 = vpop.f32.mrf.mxu0
    %v6395 = vadd.f32 %v5962, %v6394
    %v6396 = vpop.f32.mrf.mxu0
    %6397 = vmatprep.mubr.bf16.mxu0 %v5239
    %6398 = vmatmul.mubr.bf16.gmra.mxu0 %v5223
    %v6399 = vpop.f32.mrf.mxu0
    %v6400 = vadd.f32 %v5967, %v6399
    %v6401 = vpop.f32.mrf.mxu0
    %v6402 = vpop.f32.mrf.mxu0
    %v6403 = vadd.f32 %v5970, %v6402
    %v6404 = vpop.f32.mrf.mxu0
    %6405 = vmatprep.mubr.bf16.mxu0 %v5240
    %6406 = vmatmul.mubr.bf16.gmra.mxu0 %v5239
    %v6407 = vpop.f32.mrf.mxu0
    %v6408 = vadd.f32 %v5975, %v6407
    %v6409 = vpop.f32.mrf.mxu0
    %v6410 = vpop.f32.mrf.mxu0
    %v6411 = vadd.f32 %v5978, %v6410
    %v6412 = vpop.f32.mrf.mxu0
    %6413 = vmatprep.mubr.bf16.mxu0 %v5241
    %6414 = vmatmul.mubr.bf16.gmra.mxu0 %v5240
    %v6415 = vpop.f32.mrf.mxu0
    %v6416 = vadd.f32 %v5983, %v6415
    %v6417 = vpop.f32.mrf.mxu0
    %v6418 = vpop.f32.mrf.mxu0
    %v6419 = vadd.f32 %v5986, %v6418
    %v6420 = vpop.f32.mrf.mxu0
    %6421 = vmatprep.mubr.bf16.mxu0 %v5242
    %6422 = vmatmul.mubr.bf16.gmra.mxu0 %v5241
    %v6423 = vpop.f32.mrf.mxu0
    %v6424 = vadd.f32 %v5991, %v6423
    %v6425 = vpop.f32.mrf.mxu0
    %v6426 = vpop.f32.mrf.mxu0
    %v6427 = vadd.f32 %v5994, %v6426
    %v6428 = vpop.f32.mrf.mxu0
    %6429 = vmatprep.mubr.bf16.mxu0 %v5243
    %6430 = vmatmul.mubr.bf16.gmra.mxu0 %v5242
    %v6431 = vpop.f32.mrf.mxu0
    %v6432 = vadd.f32 %v5999, %v6431
    %v6433 = vpop.f32.mrf.mxu0
    %v6434 = vpop.f32.mrf.mxu0
    %v6435 = vadd.f32 %v6002, %v6434
    %v6436 = vpop.f32.mrf.mxu0
    %6437 = vmatprep.mubr.bf16.mxu0 %v5244
    %6438 = vmatmul.mubr.bf16.gmra.mxu0 %v5243
    %v6439 = vpop.f32.mrf.mxu0
    %v6440 = vadd.f32 %v6007, %v6439
    %v6441 = vpop.f32.mrf.mxu0
    %v6442 = vpop.f32.mrf.mxu0
    %v6443 = vadd.f32 %v6010, %v6442
    %v6444 = vpop.f32.mrf.mxu0
    %6445 = vmatprep.mubr.bf16.mxu0 %v5245
    %6446 = vmatmul.mubr.bf16.gmra.mxu0 %v5244
    %v6447 = vpop.f32.mrf.mxu0
    %v6448 = vadd.f32 %v6015, %v6447
    %v6449 = vpop.f32.mrf.mxu0
    %v6450 = vpop.f32.mrf.mxu0
    %v6451 = vadd.f32 %v6018, %v6450
    %v6452 = vpop.f32.mrf.mxu0
    %6453 = vmatprep.mubr.bf16.mxu0 %v5246
    %6454 = vmatmul.mubr.bf16.gmra.mxu0 %v5245
    %v6455 = vpop.f32.mrf.mxu0
    %v6456 = vadd.f32 %v6023, %v6455
    %v6457 = vpop.f32.mrf.mxu0
    %v6458 = vpop.f32.mrf.mxu0
    %v6459 = vadd.f32 %v6026, %v6458
    %v6460 = vpop.f32.mrf.mxu0
    %6461 = vmatprep.mubr.bf16.mxu0 %v5247
    %6462 = vmatmul.mubr.bf16.gmra.mxu0 %v5246
    %v6463 = vpop.f32.mrf.mxu0
    %v6464 = vadd.f32 %v6031, %v6463
    %v6465 = vpop.f32.mrf.mxu0
    %v6466 = vpop.f32.mrf.mxu0
    %v6467 = vadd.f32 %v6034, %v6466
    %v6468 = vpop.f32.mrf.mxu0
    %6469 = vmatprep.mubr.bf16.mxu0 %v5248
    %6470 = vmatmul.mubr.bf16.gmra.mxu0 %v5247
    %v6471 = vpop.f32.mrf.mxu0
    %v6472 = vadd.f32 %v6039, %v6471
    %v6473 = vpop.f32.mrf.mxu0
    %v6474 = vpop.f32.mrf.mxu0
    %v6475 = vadd.f32 %v6042, %v6474
    %v6476 = vpop.f32.mrf.mxu0
    %6477 = vmatprep.mubr.bf16.mxu0 %v5249
    %6478 = vmatmul.mubr.bf16.gmra.mxu0 %v5248
    %v6479 = vpop.f32.mrf.mxu0
    %v6480 = vadd.f32 %v6047, %v6479
    %v6481 = vpop.f32.mrf.mxu0
    %v6482 = vpop.f32.mrf.mxu0
    %v6483 = vadd.f32 %v6050, %v6482
    %v6484 = vpop.f32.mrf.mxu0
    %6485 = vmatprep.mubr.bf16.mxu0 %v5250
    %6486 = vmatmul.mubr.bf16.gmra.mxu0 %v5249
    %v6487 = vpop.f32.mrf.mxu0
    %v6488 = vadd.f32 %v6055, %v6487
    %v6489 = vpop.f32.mrf.mxu0
    %v6490 = vpop.f32.mrf.mxu0
    %v6491 = vadd.f32 %v6058, %v6490
    %v6492 = vpop.f32.mrf.mxu0
    %6493 = vmatprep.mubr.bf16.mxu0 %v5251
    %6494 = vmatmul.mubr.bf16.gmra.mxu0 %v5250
    %v6495 = vpop.f32.mrf.mxu0
    %v6496 = vadd.f32 %v6063, %v6495
    %v6497 = vpop.f32.mrf.mxu0
    %v6498 = vpop.f32.mrf.mxu0
    %v6499 = vadd.f32 %v6066, %v6498
    %v6500 = vpop.f32.mrf.mxu0
    %6501 = vmatprep.mubr.bf16.mxu0 %v5252
    %6502 = vmatmul.mubr.bf16.gmra.mxu0 %v5251
    %v6503 = vpop.f32.mrf.mxu0
    %v6504 = vadd.f32 %v6071, %v6503
    %v6505 = vpop.f32.mrf.mxu0
    %v6506 = vpop.f32.mrf.mxu0
    %v6507 = vadd.f32 %v6074, %v6506
    %v6508 = vpop.f32.mrf.mxu0
    %6509 = vmatprep.mubr.bf16.mxu0 %v5253
    %6510 = vmatmul.mubr.bf16.gmra.mxu0 %v5252
    %v6511 = vpop.f32.mrf.mxu0
    %v6512 = vadd.f32 %v6079, %v6511
    %v6513 = vpop.f32.mrf.mxu0
    %v6514 = vpop.f32.mrf.mxu0
    %v6515 = vadd.f32 %v6082, %v6514
    %v6516 = vpop.f32.mrf.mxu0
    %6517 = vmatprep.mubr.bf16.mxu0 %v5255
    %6518 = vmatmul.mubr.bf16.gmra.mxu0 %v5253
    %v6519 = vpop.f32.mrf.mxu0
    %v6520 = vadd.f32 %v6087, %v6519
    %v6521 = vpop.f32.mrf.mxu0
    %v6522 = vpop.f32.mrf.mxu0
    %v6523 = vadd.f32 %v6090, %v6522
    %v6524 = vpop.f32.mrf.mxu0
    %6525 = vdwg.mxu0
    %6526 = vmatprep.subr.bf16.mxu0 0
    %6527 = vmatpush1.bf16.msra.mxu0 %v6212
    %6528 = vmatprep.subr.bf16.mxu0 0
    %6529 = vmatpush1.bf16.msra.mxu0 %v6211
    %6530 = vmatprep.subr.bf16.mxu0 0
    %6531 = vmatpush1.bf16.msra.mxu0 %v6210
    %6532 = vmatprep.subr.bf16.mxu0 0
    %6533 = vmatpush1.bf16.msra.mxu0 %v6209
    %6534 = vmatprep.subr.bf16.mxu0 0
    %6535 = vmatpush1.bf16.msra.mxu0 %v6208
    %6536 = vmatprep.subr.bf16.mxu0 0
    %6537 = vmatpush1.bf16.msra.mxu0 %v6207
    %6538 = vmatprep.subr.bf16.mxu0 0
    %6539 = vmatpush1.bf16.msra.mxu0 %v6206
    %6540 = vmatprep.subr.bf16.mxu0 0
    %6541 = vmatpush1.bf16.msra.mxu0 %v6205
    %6542 = vmatprep.subr.bf16.mxu0 0
    %6543 = vmatpush2.bf16.msra.mxu0 0
    %6544 = vmatprep.subr.bf16.mxu0 0
    %6545 = vmatpush2.bf16.msra.mxu0 0
    %6546 = vmatprep.subr.bf16.mxu0 0
    %6547 = vmatpush2.bf16.msra.mxu0 0
    %6548 = vmatprep.subr.bf16.mxu0 0
    %6549 = vmatpush2.bf16.msra.mxu0 0
    %6550 = vmatprep.subr.bf16.mxu0 0
    %6551 = vmatpush2.bf16.msra.mxu0 0
    %6552 = vmatprep.subr.bf16.mxu0 0
    %6553 = vmatpush2.bf16.msra.mxu0 0
    %6554 = vmatprep.subr.bf16.mxu0 0
    %6555 = vmatpush2.bf16.msra.mxu0 0
    %6556 = vmatprep.subr.bf16.mxu0 0
    %6557 = vmatpush2.bf16.msra.mxu0 0
    %6558 = vmatprep.mubr.bf16.mxu0 0
    %6559 = vmatmul.mubr.bf16.gmra.mxu0 %v5225
    %v6560 = vpop.f32.mrf.mxu0
    %v6561 = vadd.f32 %v6272, %v6560
    %v6562 = vpop.f32.mrf.mxu0
    %v6563 = vpop.f32.mrf.mxu0
    %v6564 = vadd.f32 %v6275, %v6563
    %v6565 = vpop.f32.mrf.mxu0
    %6566 = vmatprep.mubr.bf16.mxu0 0
    %6567 = vmatmul.mubr.bf16.gmra.mxu0 %v5226
    %v6568 = vpop.f32.mrf.mxu0
    %v6569 = vadd.f32 %v6280, %v6568
    %v6570 = vpop.f32.mrf.mxu0
    %v6571 = vpop.f32.mrf.mxu0
    %v6572 = vadd.f32 %v6283, %v6571
    %v6573 = vpop.f32.mrf.mxu0
    %6574 = vmatprep.mubr.bf16.mxu0 0
    %6575 = vmatmul.mubr.bf16.gmra.mxu0 %v5227
    %v6576 = vpop.f32.mrf.mxu0
    %v6577 = vadd.f32 %v6288, %v6576
    %v6578 = vpop.f32.mrf.mxu0
    %v6579 = vpop.f32.mrf.mxu0
    %v6580 = vadd.f32 %v6291, %v6579
    %v6581 = vpop.f32.mrf.mxu0
    %6582 = vmatprep.mubr.bf16.mxu0 0
    %6583 = vmatmul.mubr.bf16.gmra.mxu0 %v5228
    %v6584 = vpop.f32.mrf.mxu0
    %v6585 = vadd.f32 %v6296, %v6584
    %v6586 = vpop.f32.mrf.mxu0
    %v6587 = vpop.f32.mrf.mxu0
    %v6588 = vadd.f32 %v6299, %v6587
    %v6589 = vpop.f32.mrf.mxu0
    %6590 = vmatprep.mubr.bf16.mxu0 0
    %6591 = vmatmul.mubr.bf16.gmra.mxu0 %v5229
    %v6592 = vpop.f32.mrf.mxu0
    %v6593 = vadd.f32 %v6304, %v6592
    %v6594 = vpop.f32.mrf.mxu0
    %v6595 = vpop.f32.mrf.mxu0
    %v6596 = vadd.f32 %v6307, %v6595
    %v6597 = vpop.f32.mrf.mxu0
    %6598 = vmatprep.mubr.bf16.mxu0 0
    %6599 = vmatmul.mubr.bf16.gmra.mxu0 %v5230
    %v6600 = vpop.f32.mrf.mxu0
    %v6601 = vadd.f32 %v6312, %v6600
    %v6602 = vpop.f32.mrf.mxu0
    %v6603 = vpop.f32.mrf.mxu0
    %v6604 = vadd.f32 %v6315, %v6603
    %v6605 = vpop.f32.mrf.mxu0
    %6606 = vmatprep.mubr.bf16.mxu0 0
    %6607 = vmatmul.mubr.bf16.gmra.mxu0 %v5231
    %v6608 = vpop.f32.mrf.mxu0
    %v6609 = vadd.f32 %v6320, %v6608
    %v6610 = vpop.f32.mrf.mxu0
    %v6611 = vpop.f32.mrf.mxu0
    %v6612 = vadd.f32 %v6323, %v6611
    %v6613 = vpop.f32.mrf.mxu0
    %6614 = vmatprep.mubr.bf16.mxu0 0
    %6615 = vmatmul.mubr.bf16.gmra.mxu0 %v5232
    %v6616 = vpop.f32.mrf.mxu0
    %v6617 = vadd.f32 %v6328, %v6616
    %v6618 = vpop.f32.mrf.mxu0
    %v6619 = vpop.f32.mrf.mxu0
    %v6620 = vadd.f32 %v6331, %v6619
    %v6621 = vpop.f32.mrf.mxu0
    %6622 = vmatprep.mubr.bf16.mxu0 0
    %6623 = vmatmul.mubr.bf16.gmra.mxu0 %v5233
    %v6624 = vpop.f32.mrf.mxu0
    %v6625 = vadd.f32 %v6336, %v6624
    %v6626 = vpop.f32.mrf.mxu0
    %v6627 = vpop.f32.mrf.mxu0
    %v6628 = vadd.f32 %v6339, %v6627
    %v6629 = vpop.f32.mrf.mxu0
    %6630 = vmatprep.mubr.bf16.mxu0 0
    %6631 = vmatmul.mubr.bf16.gmra.mxu0 %v5234
    %v6632 = vpop.f32.mrf.mxu0
    %v6633 = vadd.f32 %v6344, %v6632
    %v6634 = vpop.f32.mrf.mxu0
    %v6635 = vpop.f32.mrf.mxu0
    %v6636 = vadd.f32 %v6347, %v6635
    %v6637 = vpop.f32.mrf.mxu0
    %6638 = vmatprep.mubr.bf16.mxu0 0
    %6639 = vmatmul.mubr.bf16.gmra.mxu0 %v5235
    %v6640 = vpop.f32.mrf.mxu0
    %v6641 = vadd.f32 %v6352, %v6640
    %v6642 = vpop.f32.mrf.mxu0
    %v6643 = vpop.f32.mrf.mxu0
    %v6644 = vadd.f32 %v6355, %v6643
    %v6645 = vpop.f32.mrf.mxu0
    %6646 = vmatprep.mubr.bf16.mxu0 0
    %6647 = vmatmul.mubr.bf16.gmra.mxu0 %v5236
    %v6648 = vpop.f32.mrf.mxu0
    %v6649 = vadd.f32 %v6360, %v6648
    %v6650 = vpop.f32.mrf.mxu0
    %v6651 = vpop.f32.mrf.mxu0
    %v6652 = vadd.f32 %v6363, %v6651
    %v6653 = vpop.f32.mrf.mxu0
    %6654 = vmatprep.mubr.bf16.mxu0 0
    %6655 = vmatmul.mubr.bf16.gmra.mxu0 %v5237
    %v6656 = vpop.f32.mrf.mxu0
    %v6657 = vadd.f32 %v6368, %v6656
    %v6658 = vpop.f32.mrf.mxu0
    %v6659 = vpop.f32.mrf.mxu0
    %v6660 = vadd.f32 %v6371, %v6659
    %v6661 = vpop.f32.mrf.mxu0
    %6662 = vmatprep.mubr.bf16.mxu0 0
    %6663 = vmatmul.mubr.bf16.gmra.mxu0 %v5238
    %v6664 = vpop.f32.mrf.mxu0
    %v6665 = vadd.f32 %v6376, %v6664
    %v6666 = vpop.f32.mrf.mxu0
    %v6667 = vpop.f32.mrf.mxu0
    %v6668 = vadd.f32 %v6379, %v6667
    %v6669 = vpop.f32.mrf.mxu0
    %6670 = vmatprep.mubr.bf16.mxu0 0
    %6671 = vmatmul.mubr.bf16.gmra.mxu0 %v5254
    %v6672 = vpop.f32.mrf.mxu0
    %v6673 = vadd.f32 %v6384, %v6672
    %v6674 = vpop.f32.mrf.mxu0
    %v6675 = vpop.f32.mrf.mxu0
    %v6676 = vadd.f32 %v6387, %v6675
    %v6677 = vpop.f32.mrf.mxu0
    %6678 = vmatprep.mubr.bf16.mxu0 0
    %6679 = vmatmul.mubr.bf16.gmra.mxu0 %v5256
    %v6680 = vpop.f32.mrf.mxu0
    %v6681 = vadd.f32 %v6392, %v6680
    %v6682 = vpop.f32.mrf.mxu0
    %v6683 = vpop.f32.mrf.mxu0
    %v6684 = vadd.f32 %v6395, %v6683
    %v6685 = vpop.f32.mrf.mxu0
    %6686 = vmatprep.mubr.bf16.mxu0 0
    %6687 = vmatmul.mubr.bf16.gmra.mxu0 %v5240
    %v6688 = vpop.f32.mrf.mxu0
    %v6689 = vadd.f32 %v6400, %v6688
    %v6690 = vpop.f32.mrf.mxu0
    %v6691 = vpop.f32.mrf.mxu0
    %v6692 = vadd.f32 %v6403, %v6691
    %v6693 = vpop.f32.mrf.mxu0
    %6694 = vmatprep.mubr.bf16.mxu0 0
    %6695 = vmatmul.mubr.bf16.gmra.mxu0 %v5241
    %v6696 = vpop.f32.mrf.mxu0
    %v6697 = vadd.f32 %v6408, %v6696
    %v6698 = vpop.f32.mrf.mxu0
    %v6699 = vpop.f32.mrf.mxu0
    %v6700 = vadd.f32 %v6411, %v6699
    %v6701 = vpop.f32.mrf.mxu0
    %6702 = vmatprep.mubr.bf16.mxu0 0
    %6703 = vmatmul.mubr.bf16.gmra.mxu0 %v5242
    %v6704 = vpop.f32.mrf.mxu0
    %v6705 = vadd.f32 %v6416, %v6704
    %v6706 = vpop.f32.mrf.mxu0
    %v6707 = vpop.f32.mrf.mxu0
    %v6708 = vadd.f32 %v6419, %v6707
    %v6709 = vpop.f32.mrf.mxu0
    %6710 = vmatprep.mubr.bf16.mxu0 0
    %6711 = vmatmul.mubr.bf16.gmra.mxu0 %v5243
    %v6712 = vpop.f32.mrf.mxu0
    %v6713 = vadd.f32 %v6424, %v6712
    %v6714 = vpop.f32.mrf.mxu0
    %v6715 = vpop.f32.mrf.mxu0
    %v6716 = vadd.f32 %v6427, %v6715
    %v6717 = vpop.f32.mrf.mxu0
    %6718 = vmatprep.mubr.bf16.mxu0 0
    %6719 = vmatmul.mubr.bf16.gmra.mxu0 %v5244
    %v6720 = vpop.f32.mrf.mxu0
    %v6721 = vadd.f32 %v6432, %v6720
    %v6722 = vpop.f32.mrf.mxu0
    %v6723 = vpop.f32.mrf.mxu0
    %v6724 = vadd.f32 %v6435, %v6723
    %v6725 = vpop.f32.mrf.mxu0
    %6726 = vmatprep.mubr.bf16.mxu0 0
    %6727 = vmatmul.mubr.bf16.gmra.mxu0 %v5245
    %v6728 = vpop.f32.mrf.mxu0
    %v6729 = vadd.f32 %v6440, %v6728
    %v6730 = vpop.f32.mrf.mxu0
    %v6731 = vpop.f32.mrf.mxu0
    %v6732 = vadd.f32 %v6443, %v6731
    %v6733 = vpop.f32.mrf.mxu0
    %6734 = vmatprep.mubr.bf16.mxu0 0
    %6735 = vmatmul.mubr.bf16.gmra.mxu0 %v5246
    %v6736 = vpop.f32.mrf.mxu0
    %v6737 = vadd.f32 %v6448, %v6736
    %v6738 = vpop.f32.mrf.mxu0
    %v6739 = vpop.f32.mrf.mxu0
    %v6740 = vadd.f32 %v6451, %v6739
    %v6741 = vpop.f32.mrf.mxu0
    %6742 = vmatprep.mubr.bf16.mxu0 0
    %6743 = vmatmul.mubr.bf16.gmra.mxu0 %v5247
    %v6744 = vpop.f32.mrf.mxu0
    %v6745 = vadd.f32 %v6456, %v6744
    %v6746 = vpop.f32.mrf.mxu0
    %v6747 = vpop.f32.mrf.mxu0
    %v6748 = vadd.f32 %v6459, %v6747
    %v6749 = vpop.f32.mrf.mxu0
    %6750 = vmatprep.mubr.bf16.mxu0 0
    %6751 = vmatmul.mubr.bf16.gmra.mxu0 %v5248
    %v6752 = vpop.f32.mrf.mxu0
    %v6753 = vadd.f32 %v6464, %v6752
    %v6754 = vpop.f32.mrf.mxu0
    %v6755 = vpop.f32.mrf.mxu0
    %v6756 = vadd.f32 %v6467, %v6755
    %v6757 = vpop.f32.mrf.mxu0
    %6758 = vmatprep.mubr.bf16.mxu0 0
    %6759 = vmatmul.mubr.bf16.gmra.mxu0 %v5249
    %v6760 = vpop.f32.mrf.mxu0
    %v6761 = vadd.f32 %v6472, %v6760
    %v6762 = vpop.f32.mrf.mxu0
    %v6763 = vpop.f32.mrf.mxu0
    %v6764 = vadd.f32 %v6475, %v6763
    %v6765 = vpop.f32.mrf.mxu0
    %6766 = vmatprep.mubr.bf16.mxu0 0
    %6767 = vmatmul.mubr.bf16.gmra.mxu0 %v5250
    %v6768 = vpop.f32.mrf.mxu0
    %v6769 = vadd.f32 %v6480, %v6768
    %v6770 = vpop.f32.mrf.mxu0
    %v6771 = vpop.f32.mrf.mxu0
    %v6772 = vadd.f32 %v6483, %v6771
    %v6773 = vpop.f32.mrf.mxu0
    %6774 = vmatprep.mubr.bf16.mxu0 0
    %6775 = vmatmul.mubr.bf16.gmra.mxu0 %v5251
    %v6776 = vpop.f32.mrf.mxu0
    %v6777 = vadd.f32 %v6488, %v6776
    %v6778 = vpop.f32.mrf.mxu0
    %v6779 = vpop.f32.mrf.mxu0
    %v6780 = vadd.f32 %v6491, %v6779
    %v6781 = vpop.f32.mrf.mxu0
    %6782 = vmatprep.mubr.bf16.mxu0 0
    %6783 = vmatmul.mubr.bf16.gmra.mxu0 %v5252
    %v6784 = vpop.f32.mrf.mxu0
    %v6785 = vadd.f32 %v6496, %v6784
    %v6786 = vpop.f32.mrf.mxu0
    %v6787 = vpop.f32.mrf.mxu0
    %v6788 = vadd.f32 %v6499, %v6787
    %v6789 = vpop.f32.mrf.mxu0
    %6790 = vmatprep.mubr.bf16.mxu0 0
    %6791 = vmatmul.mubr.bf16.gmra.mxu0 %v5253
    %v6792 = vpop.f32.mrf.mxu0
    %v6793 = vadd.f32 %v6504, %v6792
    %v6794 = vpop.f32.mrf.mxu0
    %v6795 = vpop.f32.mrf.mxu0
    %v6796 = vadd.f32 %v6507, %v6795
    %v6797 = vpop.f32.mrf.mxu0
    %6798 = vmatprep.mubr.bf16.mxu0 0
    %6799 = vmatmul.mubr.bf16.gmra.mxu0 %v5255
    %v6800 = vpop.f32.mrf.mxu0
    %v6801 = vadd.f32 %v6512, %v6800
    %v6802 = vpop.f32.mrf.mxu0
    %v6803 = vpop.f32.mrf.mxu0
    %v6804 = vadd.f32 %v6515, %v6803
    %v6805 = vpop.f32.mrf.mxu0
    %6806 = vmatprep.mubr.bf16.mxu0 0
    %6807 = vmatmul.mubr.bf16.gmra.mxu0 %v5257
    %v6808 = vpop.f32.mrf.mxu0
    %v6809 = vadd.f32 %v6520, %v6808
    %v6810 = vpop.f32.mrf.mxu0
    %v6811 = vpop.f32.mrf.mxu0
    %v6812 = vadd.f32 %v6523, %v6811
    %v6813 = vpop.f32.mrf.mxu0
    %6814 = vdwg.mxu0
    %v6815 = vrot.slane %v4526, 1
    %v6816 = vrot.slane %v4543, 1
    %v6817 = vrot.slane %v4560, 1
    %v6818 = vrot.slane %v4577, 1
    %v6819 = vrot.slane %v4594, 1
    %v6820 = vrot.slane %v4611, 1
    %v6821 = vrot.slane %v4628, 1
    %v6822 = vrot.slane %v4645, 1
    %v6823 = vrot.slane %v4662, 1
    %v6824 = vrot.slane %v4679, 1
    %v6825 = vrot.slane %v4696, 1
    %v6826 = vrot.slane %v4713, 1
    %v6827 = vrot.slane %v4730, 1
    %v6828 = vrot.slane %v4747, 1
    %v6829 = vrot.slane %v4764, 1
    %v6830 = vrot.slane %v4781, 1
    %v6831 = vrot.slane %v4798, 1
    %v6832 = vrot.slane %v4815, 1
    %v6833 = vrot.slane %v4832, 1
    %v6834 = vrot.slane %v4849, 1
    %v6835 = vrot.slane %v4866, 1
    %v6836 = vrot.slane %v4883, 1
    %v6837 = vrot.slane %v4900, 1
    %v6838 = vrot.slane %v4917, 1
    %v6839 = vrot.slane %v4934, 1
    %v6840 = vrot.slane %v4951, 1
    %v6841 = vrot.slane %v4968, 1
    %v6842 = vrot.slane %v4985, 1
    %v6843 = vrot.slane %v5002, 1
    %v6844 = vrot.slane %v5019, 1
    %v6845 = vrot.slane %v5036, 1
    %v6846 = vrot.slane %v5053, 1
    %v6847 = vsel %vm2394, %v6846, 0.0
    %v6848 = vsel %vm2394, %v6845, %v6846
    %v6849 = vsel %vm2394, %v6846, %v6845
    %v6850 = vsel %vm2394, %v6844, %v6845
    %v6851 = vsel %vm2394, %v6843, %v6844
    %v6852 = vsel %vm2394, %v6844, %v6843
    %v6853 = vsel %vm2394, %v6842, %v6843
    %v6854 = vsel %vm2394, %v6841, %v6842
    %v6855 = vsel %vm2394, %v6842, %v6841
    %v6856 = vsel %vm2394, %v6840, %v6841
    %v6857 = vsel %vm2394, %v6839, %v6840
    %v6858 = vsel %vm2394, %v6840, %v6839
    %v6859 = vsel %vm2394, %v6838, %v6839
    %v6860 = vsel %vm2394, %v6837, %v6838
    %v6861 = vsel %vm2394, %v6838, %v6837
    %v6862 = vsel %vm2394, %v6836, %v6837
    %v6863 = vsel %vm2394, %v6835, %v6836
    %v6864 = vsel %vm2394, %v6836, %v6835
    %v6865 = vsel %vm2394, %v6834, %v6835
    %v6866 = vsel %vm2394, %v6833, %v6834
    %v6867 = vsel %vm2394, %v6834, %v6833
    %v6868 = vsel %vm2394, %v6832, %v6833
    %v6869 = vsel %vm2394, %v6831, %v6832
    %v6870 = vsel %vm2394, %v6832, %v6831
    %v6871 = vsel %vm2394, 0.0, %v6831
    %v6872 = vsel %vm2394, %v6830, 0.0
    %v6873 = vsel %vm2394, %v6829, %v6830
    %v6874 = vsel %vm2394, %v6830, %v6829
    %v6875 = vsel %vm2394, %v6828, %v6829
    %v6876 = vsel %vm2394, %v6827, %v6828
    %v6877 = vsel %vm2394, %v6828, %v6827
    %v6878 = vsel %vm2394, %v6826, %v6827
    %v6879 = vsel %vm2394, %v6825, %v6826
    %v6880 = vsel %vm2394, %v6826, %v6825
    %v6881 = vsel %vm2394, %v6824, %v6825
    %v6882 = vsel %vm2394, %v6823, %v6824
    %v6883 = vsel %vm2394, %v6824, %v6823
    %v6884 = vsel %vm2394, %v6822, %v6823
    %v6885 = vsel %vm2394, %v6821, %v6822
    %v6886 = vsel %vm2394, %v6822, %v6821
    %v6887 = vsel %vm2394, %v6820, %v6821
    %v6888 = vsel %vm2394, %v6819, %v6820
    %v6889 = vsel %vm2394, %v6820, %v6819
    %v6890 = vsel %vm2394, %v6818, %v6819
    %v6891 = vsel %vm2394, %v6817, %v6818
    %v6892 = vsel %vm2394, %v6818, %v6817
    %v6893 = vsel %vm2394, %v6816, %v6817
    %v6894 = vsel %vm2394, %v6815, %v6816
    %v6895 = vsel %vm2394, %v6816, %v6815
    %v6896 = vsel %vm2394, 0.0, %v6815
    %vm6897 = vcmp.lt.s32.totalorder %v1407, 15
    %vm6898 = vcmp.lt.s32.totalorder %v5086, 15
    %v6899 = vsel %vm6897, 1, 0
    %v6900 = vsel %vm6898, 1, 0
    %vm6901 = vcmp.eq.s32.totalorder %v6899, 1
    %vm6902 = vcmp.eq.s32.totalorder %v6900, 1
    %v6903 = vsel %vm6901, 0.0, 0.0
    %v6904 = vsel %vm6902, %v6896, 0.0
    %v6905 = vsel %vm6901, %v6894, 0.0
    %v6906 = vsel %vm6902, %v6895, 0.0
    %v6907 = vsel %vm6902, %v6893, 0.0
    %v6908 = vsel %vm6901, %v6891, 0.0
    %v6909 = vsel %vm6902, %v6892, 0.0
    %v6910 = vsel %vm6902, %v6890, 0.0
    %v6911 = vsel %vm6901, %v6888, 0.0
    %v6912 = vsel %vm6902, %v6889, 0.0
    %v6913 = vsel %vm6902, %v6887, 0.0
    %v6914 = vsel %vm6901, %v6885, 0.0
    %v6915 = vsel %vm6902, %v6886, 0.0
    %v6916 = vsel %vm6902, %v6884, 0.0
    %v6917 = vsel %vm6901, %v6882, 0.0
    %v6918 = vsel %vm6902, %v6883, 0.0
    %v6919 = vsel %vm6902, %v6881, 0.0
    %v6920 = vsel %vm6901, %v6879, 0.0
    %v6921 = vsel %vm6902, %v6880, 0.0
    %v6922 = vsel %vm6902, %v6878, 0.0
    %v6923 = vsel %vm6901, %v6876, 0.0
    %v6924 = vsel %vm6902, %v6877, 0.0
    %v6925 = vsel %vm6902, %v6875, 0.0
    %v6926 = vsel %vm6901, %v6873, 0.0
    %v6927 = vsel %vm6902, %v6874, 0.0
    %v6928 = vsel %vm6902, %v6872, 0.0
    %v6929 = vsel %vm6902, 0.0, 0.0
    %v6930 = vsel %vm6902, %v6871, 0.0
    %v6931 = vsel %vm6901, %v6869, 0.0
    %v6932 = vsel %vm6902, %v6870, 0.0
    %v6933 = vsel %vm6902, %v6868, 0.0
    %v6934 = vsel %vm6901, %v6866, 0.0
    %v6935 = vsel %vm6902, %v6867, 0.0
    %v6936 = vsel %vm6902, %v6865, 0.0
    %v6937 = vsel %vm6901, %v6863, 0.0
    %v6938 = vsel %vm6902, %v6864, 0.0
    %v6939 = vsel %vm6902, %v6862, 0.0
    %v6940 = vsel %vm6901, %v6860, 0.0
    %v6941 = vsel %vm6902, %v6861, 0.0
    %v6942 = vsel %vm6902, %v6859, 0.0
    %v6943 = vsel %vm6901, %v6857, 0.0
    %v6944 = vsel %vm6902, %v6858, 0.0
    %v6945 = vsel %vm6902, %v6856, 0.0
    %v6946 = vsel %vm6901, %v6854, 0.0
    %v6947 = vsel %vm6902, %v6855, 0.0
    %v6948 = vsel %vm6902, %v6853, 0.0
    %v6949 = vsel %vm6901, %v6851, 0.0
    %v6950 = vsel %vm6902, %v6852, 0.0
    %v6951 = vsel %vm6902, %v6850, 0.0
    %v6952 = vsel %vm6901, %v6848, 0.0
    %v6953 = vsel %vm6902, %v6849, 0.0
    %v6954 = vsel %vm6902, %v6847, 0.0
    %v6955 = vpack.c.bf16 %v6904, %v6903
    %v6956 = vpack.c.bf16 %v6906, %v6905
    %v6957 = vpack.c.bf16 %v6907, %v6905
    %v6958 = vpack.c.bf16 %v6909, %v6908
    %v6959 = vpack.c.bf16 %v6910, %v6908
    %v6960 = vpack.c.bf16 %v6912, %v6911
    %v6961 = vpack.c.bf16 %v6913, %v6911
    %v6962 = vpack.c.bf16 %v6915, %v6914
    %v6963 = vpack.c.bf16 %v6916, %v6914
    %v6964 = vpack.c.bf16 %v6918, %v6917
    %v6965 = vpack.c.bf16 %v6919, %v6917
    %v6966 = vpack.c.bf16 %v6921, %v6920
    %v6967 = vpack.c.bf16 %v6922, %v6920
    %v6968 = vpack.c.bf16 %v6924, %v6923
    %v6969 = vpack.c.bf16 %v6925, %v6923
    %v6970 = vpack.c.bf16 %v6927, %v6926
    %v6971 = vpack.c.bf16 %v6930, %v6903
    %v6972 = vpack.c.bf16 %v6932, %v6931
    %v6973 = vpack.c.bf16 %v6933, %v6931
    %v6974 = vpack.c.bf16 %v6935, %v6934
    %v6975 = vpack.c.bf16 %v6936, %v6934
    %v6976 = vpack.c.bf16 %v6938, %v6937
    %v6977 = vpack.c.bf16 %v6939, %v6937
    %v6978 = vpack.c.bf16 %v6941, %v6940
    %v6979 = vpack.c.bf16 %v6942, %v6940
    %v6980 = vpack.c.bf16 %v6944, %v6943
    %v6981 = vpack.c.bf16 %v6945, %v6943
    %v6982 = vpack.c.bf16 %v6947, %v6946
    %v6983 = vpack.c.bf16 %v6948, %v6946
    %v6984 = vpack.c.bf16 %v6950, %v6949
    %v6985 = vpack.c.bf16 %v6951, %v6949
    %v6986 = vpack.c.bf16 %v6953, %v6952
    %v6987 = vpack.c.bf16 %v6928, %v6926
    %v6988 = vpack.c.bf16 %v6954, %v6952
    %v6989 = vpack.c.bf16 %v6929, %v6903
    %s6990 = scalar_lea.vmem [#allocation6], 384
    %v6991 = vld [vmem:[%s6990] sm:$0xf]
    %v6992 = vld [vmem:[%s6990 + $0x4] sm:$0xf]
    %v6993 = vld [vmem:[%s6990 + $0x8] sm:$0xf]
    %v6994 = vld [vmem:[%s6990 + $0xc] sm:$0xf]
    %v6995 = vld [vmem:[%s6990 + $0x10] sm:$0xf]
    %v6996 = vld [vmem:[%s6990 + $0x14] sm:$0xf]
    %v6997 = vld [vmem:[%s6990 + $0x18] sm:$0xf]
    %v6998 = vld [vmem:[%s6990 + $0x1c] sm:$0xf]
    %v6999 = vld [vmem:[%s6990 + $0x20] sm:$0xf]
    %v7000 = vld [vmem:[%s6990 + $0x24] sm:$0xf]
    %v7001 = vld [vmem:[%s6990 + $0x28] sm:$0xf]
    %v7002 = vld [vmem:[%s6990 + $0x2c] sm:$0xf]
    %v7003 = vld [vmem:[%s6990 + $0x30] sm:$0xf]
    %v7004 = vld [vmem:[%s6990 + $0x34] sm:$0xf]
    %v7005 = vld [vmem:[%s6990 + $0x38] sm:$0xf]
    %v7006 = vld [vmem:[%s6990 + $0x3c] sm:$0xf]
    %v7007 = vld [vmem:[%s6990 + $0x40] sm:$0xf]
    %v7008 = vld [vmem:[%s6990 + $0x44] sm:$0xf]
    %v7009 = vld [vmem:[%s6990 + $0x48] sm:$0xf]
    %v7010 = vld [vmem:[%s6990 + $0x4c] sm:$0xf]
    %v7011 = vld [vmem:[%s6990 + $0x50] sm:$0xf]
    %v7012 = vld [vmem:[%s6990 + $0x54] sm:$0xf]
    %v7013 = vld [vmem:[%s6990 + $0x58] sm:$0xf]
    %v7014 = vld [vmem:[%s6990 + $0x5c] sm:$0xf]
    %v7015 = vld [vmem:[%s6990 + $0x60] sm:$0xf]
    %v7016 = vld [vmem:[%s6990 + $0x64] sm:$0xf]
    %v7017 = vld [vmem:[%s6990 + $0x68] sm:$0xf]
    %v7018 = vld [vmem:[%s6990 + $0x6c] sm:$0xf]
    %v7019 = vld [vmem:[%s6990 + $0x70] sm:$0xf]
    %v7020 = vld [vmem:[%s6990 + $0x74] sm:$0xf]
    %v7021 = vld [vmem:[%s6990 + $0x78] sm:$0xf]
    %v7022 = vld [vmem:[%s6990 + $0x7c] sm:$0xf]
    %v7023 = vld [vmem:[%s6990 + $0x80] sm:$0xf]
    %v7024 = vld [vmem:[%s6990 + $0x84] sm:$0xf]
    %v7025 = vld [vmem:[%s6990 + $0x88] sm:$0xf]
    %v7026 = vld [vmem:[%s6990 + $0x8c] sm:$0xf]
    %v7027 = vld [vmem:[%s6990 + $0x90] sm:$0xf]
    %v7028 = vld [vmem:[%s6990 + $0x94] sm:$0xf]
    %v7029 = vld [vmem:[%s6990 + $0x98] sm:$0xf]
    %v7030 = vld [vmem:[%s6990 + $0x9c] sm:$0xf]
    %v7031 = vld [vmem:[%s6990 + $0xa0] sm:$0xf]
    %v7032 = vld [vmem:[%s6990 + $0xa4] sm:$0xf]
    %v7033 = vld [vmem:[%s6990 + $0xa8] sm:$0xf]
    %v7034 = vld [vmem:[%s6990 + $0xac] sm:$0xf]
    %v7035 = vld [vmem:[%s6990 + $0xb0] sm:$0xf]
    %v7036 = vld [vmem:[%s6990 + $0xb4] sm:$0xf]
    %v7037 = vld [vmem:[%s6990 + $0xb8] sm:$0xf]
    %v7038 = vld [vmem:[%s6990 + $0xbc] sm:$0xf]
    %v7087 = vunpack.c.l.b16 %v6991
    %v7088 = vunpack.c.l.b16 %v6992
    %v7089 = vunpack.c.l.b16 %v6993
    %v7090 = vunpack.c.l.b16 %v6994
    %v7091 = vunpack.c.l.b16 %v6995
    %v7092 = vunpack.c.l.b16 %v6996
    %v7093 = vunpack.c.l.b16 %v6997
    %v7094 = vunpack.c.l.b16 %v6998
    %v7095 = vunpack.c.l.b16 %v6999
    %v7096 = vunpack.c.l.b16 %v7000
    %v7097 = vunpack.c.l.b16 %v7001
    %v7098 = vunpack.c.l.b16 %v7002
    %v7099 = vunpack.c.l.b16 %v7003
    %v7100 = vunpack.c.l.b16 %v7004
    %v7101 = vunpack.c.l.b16 %v7005
    %v7102 = vunpack.c.l.b16 %v7006
    %v7103 = vunpack.c.l.b16 %v7007
    %v7104 = vunpack.c.l.b16 %v7008
    %v7105 = vunpack.c.l.b16 %v7009
    %v7106 = vunpack.c.l.b16 %v7010
    %v7107 = vunpack.c.l.b16 %v7011
    %v7108 = vunpack.c.l.b16 %v7012
    %v7109 = vunpack.c.l.b16 %v7013
    %v7110 = vunpack.c.l.b16 %v7014
    %v7111 = vunpack.c.l.b16 %v7015
    %v7112 = vunpack.c.l.b16 %v7016
    %v7113 = vunpack.c.l.b16 %v7017
    %v7114 = vunpack.c.l.b16 %v7018
    %v7115 = vunpack.c.l.b16 %v7019
    %v7116 = vunpack.c.l.b16 %v7020
    %v7117 = vunpack.c.l.b16 %v7021
    %v7118 = vunpack.c.l.b16 %v7022
    %v7119 = vunpack.c.l.b16 %v7023
    %v7120 = vunpack.c.l.b16 %v7024
    %v7121 = vunpack.c.l.b16 %v7025
    %v7122 = vunpack.c.l.b16 %v7026
    %v7123 = vunpack.c.l.b16 %v7027
    %v7124 = vunpack.c.l.b16 %v7028
    %v7125 = vunpack.c.l.b16 %v7029
    %v7126 = vunpack.c.l.b16 %v7030
    %v7127 = vunpack.c.l.b16 %v7031
    %v7128 = vunpack.c.l.b16 %v7032
    %v7129 = vunpack.c.l.b16 %v7033
    %v7130 = vunpack.c.l.b16 %v7034
    %v7131 = vunpack.c.l.b16 %v7035
    %v7132 = vunpack.c.l.b16 %v7036
    %v7133 = vunpack.c.l.b16 %v7037
    %v7134 = vunpack.c.l.b16 %v7038
    %v7135 = vpack.c.b16 %v7088, %v7087
    %v7136 = vpack.c.b16 %v7090, %v7089
    %v7137 = vpack.c.b16 %v7092, %v7091
    %v7138 = vpack.c.b16 %v7094, %v7093
    %v7139 = vpack.c.b16 %v7096, %v7095
    %v7140 = vpack.c.b16 %v7098, %v7097
    %v7141 = vpack.c.b16 %v7100, %v7099
    %v7142 = vpack.c.b16 %v7102, %v7101
    %v7143 = vpack.c.b16 %v7104, %v7103
    %v7144 = vpack.c.b16 %v7106, %v7105
    %v7145 = vpack.c.b16 %v7108, %v7107
    %v7146 = vpack.c.b16 %v7110, %v7109
    %v7147 = vpack.c.b16 %v7112, %v7111
    %v7148 = vpack.c.b16 %v7114, %v7113
    %v7149 = vpack.c.b16 %v7116, %v7115
    %v7150 = vpack.c.b16 %v7118, %v7117
    %v7151 = vpack.c.b16 %v7120, %v7119
    %v7152 = vpack.c.b16 %v7122, %v7121
    %v7153 = vpack.c.b16 %v7124, %v7123
    %v7154 = vpack.c.b16 %v7126, %v7125
    %v7155 = vpack.c.b16 %v7128, %v7127
    %v7156 = vpack.c.b16 %v7130, %v7129
    %v7157 = vpack.c.b16 %v7132, %v7131
    %v7158 = vpack.c.b16 %v7134, %v7133
    %7183 = vmatprep.subr.bf16.mxu0 0
    %7184 = vmatpush1.bf16.msra.mxu0 %v7142
    %7185 = vmatprep.subr.bf16.mxu0 0
    %7186 = vmatpush1.bf16.msra.mxu0 %v7141
    %7187 = vmatprep.subr.bf16.mxu0 0
    %7188 = vmatpush1.bf16.msra.mxu0 %v7140
    %7189 = vmatprep.subr.bf16.mxu0 0
    %7190 = vmatpush1.bf16.msra.mxu0 %v7139
    %7191 = vmatprep.subr.bf16.mxu0 0
    %7192 = vmatpush1.bf16.msra.mxu0 %v7138
    %7193 = vmatprep.subr.bf16.mxu0 0
    %7194 = vmatpush1.bf16.msra.mxu0 %v7137
    %7195 = vmatprep.subr.bf16.mxu0 0
    %7196 = vmatpush1.bf16.msra.mxu0 %v7136
    %7197 = vmatprep.subr.bf16.mxu0 0
    %7198 = vmatpush1.bf16.msra.mxu0 %v7135
    %7199 = vmatprep.subr.bf16.mxu0 0
    %7200 = vmatpush2.bf16.msra.mxu0 %v7150
    %7201 = vmatprep.subr.bf16.mxu0 0
    %7202 = vmatpush2.bf16.msra.mxu0 %v7149
    %7203 = vmatprep.subr.bf16.mxu0 0
    %7204 = vmatpush2.bf16.msra.mxu0 %v7148
    %7205 = vmatprep.subr.bf16.mxu0 0
    %7206 = vmatpush2.bf16.msra.mxu0 %v7147
    %7207 = vmatprep.subr.bf16.mxu0 0
    %7208 = vmatpush2.bf16.msra.mxu0 %v7146
    %7209 = vmatprep.subr.bf16.mxu0 0
    %7210 = vmatpush2.bf16.msra.mxu0 %v7145
    %7211 = vmatprep.subr.bf16.mxu0 0
    %7212 = vmatpush2.bf16.msra.mxu0 %v7144
    %7213 = vmatprep.subr.bf16.mxu0 0
    %7214 = vmatpush2.bf16.msra.mxu0 %v7143
    %7215 = vmatprep.mubr.bf16.mxu0 %v6956
    %7216 = vmatmul.mubr.bf16.gmra.mxu0 %v6955
    %v7217 = vpop.f32.mrf.mxu0
    %v7218 = vadd.f32 0.0, %v7217
    %v7219 = vpop.f32.mrf.mxu0
    %v7220 = vpop.f32.mrf.mxu0
    %v7221 = vadd.f32 0.0, %v7220
    %v7222 = vpop.f32.mrf.mxu0
    %7223 = vmatprep.mubr.bf16.mxu0 %v6957
    %7224 = vmatmul.mubr.bf16.gmra.mxu0 %v6956
    %v7225 = vpop.f32.mrf.mxu0
    %v7226 = vadd.f32 0.0, %v7225
    %v7227 = vpop.f32.mrf.mxu0
    %v7228 = vpop.f32.mrf.mxu0
    %v7229 = vadd.f32 0.0, %v7228
    %v7230 = vpop.f32.mrf.mxu0
    %7231 = vmatprep.mubr.bf16.mxu0 %v6958
    %7232 = vmatmul.mubr.bf16.gmra.mxu0 %v6957
    %v7233 = vpop.f32.mrf.mxu0
    %v7234 = vadd.f32 0.0, %v7233
    %v7235 = vpop.f32.mrf.mxu0
    %v7236 = vpop.f32.mrf.mxu0
    %v7237 = vadd.f32 0.0, %v7236
    %v7238 = vpop.f32.mrf.mxu0
    %7239 = vmatprep.mubr.bf16.mxu0 %v6959
    %7240 = vmatmul.mubr.bf16.gmra.mxu0 %v6958
    %v7241 = vpop.f32.mrf.mxu0
    %v7242 = vadd.f32 0.0, %v7241
    %v7243 = vpop.f32.mrf.mxu0
    %v7244 = vpop.f32.mrf.mxu0
    %v7245 = vadd.f32 0.0, %v7244
    %v7246 = vpop.f32.mrf.mxu0
    %7247 = vmatprep.mubr.bf16.mxu0 %v6960
    %7248 = vmatmul.mubr.bf16.gmra.mxu0 %v6959
    %v7249 = vpop.f32.mrf.mxu0
    %v7250 = vadd.f32 0.0, %v7249
    %v7251 = vpop.f32.mrf.mxu0
    %v7252 = vpop.f32.mrf.mxu0
    %v7253 = vadd.f32 0.0, %v7252
    %v7254 = vpop.f32.mrf.mxu0
    %7255 = vmatprep.mubr.bf16.mxu0 %v6961
    %7256 = vmatmul.mubr.bf16.gmra.mxu0 %v6960
    %v7257 = vpop.f32.mrf.mxu0
    %v7258 = vadd.f32 0.0, %v7257
    %v7259 = vpop.f32.mrf.mxu0
    %v7260 = vpop.f32.mrf.mxu0
    %v7261 = vadd.f32 0.0, %v7260
    %v7262 = vpop.f32.mrf.mxu0
    %7263 = vmatprep.mubr.bf16.mxu0 %v6962
    %7264 = vmatmul.mubr.bf16.gmra.mxu0 %v6961
    %v7265 = vpop.f32.mrf.mxu0
    %v7266 = vadd.f32 0.0, %v7265
    %v7267 = vpop.f32.mrf.mxu0
    %v7268 = vpop.f32.mrf.mxu0
    %v7269 = vadd.f32 0.0, %v7268
    %v7270 = vpop.f32.mrf.mxu0
    %7271 = vmatprep.mubr.bf16.mxu0 %v6963
    %7272 = vmatmul.mubr.bf16.gmra.mxu0 %v6962
    %v7273 = vpop.f32.mrf.mxu0
    %v7274 = vadd.f32 0.0, %v7273
    %v7275 = vpop.f32.mrf.mxu0
    %v7276 = vpop.f32.mrf.mxu0
    %v7277 = vadd.f32 0.0, %v7276
    %v7278 = vpop.f32.mrf.mxu0
    %7279 = vmatprep.mubr.bf16.mxu0 %v6964
    %7280 = vmatmul.mubr.bf16.gmra.mxu0 %v6963
    %v7281 = vpop.f32.mrf.mxu0
    %v7282 = vadd.f32 0.0, %v7281
    %v7283 = vpop.f32.mrf.mxu0
    %v7284 = vpop.f32.mrf.mxu0
    %v7285 = vadd.f32 0.0, %v7284
    %v7286 = vpop.f32.mrf.mxu0
    %7287 = vmatprep.mubr.bf16.mxu0 %v6965
    %7288 = vmatmul.mubr.bf16.gmra.mxu0 %v6964
    %v7289 = vpop.f32.mrf.mxu0
    %v7290 = vadd.f32 0.0, %v7289
    %v7291 = vpop.f32.mrf.mxu0
    %v7292 = vpop.f32.mrf.mxu0
    %v7293 = vadd.f32 0.0, %v7292
    %v7294 = vpop.f32.mrf.mxu0
    %7295 = vmatprep.mubr.bf16.mxu0 %v6966
    %7296 = vmatmul.mubr.bf16.gmra.mxu0 %v6965
    %v7297 = vpop.f32.mrf.mxu0
    %v7298 = vadd.f32 0.0, %v7297
    %v7299 = vpop.f32.mrf.mxu0
    %v7300 = vpop.f32.mrf.mxu0
    %v7301 = vadd.f32 0.0, %v7300
    %v7302 = vpop.f32.mrf.mxu0
    %7303 = vmatprep.mubr.bf16.mxu0 %v6967
    %7304 = vmatmul.mubr.bf16.gmra.mxu0 %v6966
    %v7305 = vpop.f32.mrf.mxu0
    %v7306 = vadd.f32 0.0, %v7305
    %v7307 = vpop.f32.mrf.mxu0
    %v7308 = vpop.f32.mrf.mxu0
    %v7309 = vadd.f32 0.0, %v7308
    %v7310 = vpop.f32.mrf.mxu0
    %7311 = vmatprep.mubr.bf16.mxu0 %v6968
    %7312 = vmatmul.mubr.bf16.gmra.mxu0 %v6967
    %v7313 = vpop.f32.mrf.mxu0
    %v7314 = vadd.f32 0.0, %v7313
    %v7315 = vpop.f32.mrf.mxu0
    %v7316 = vpop.f32.mrf.mxu0
    %v7317 = vadd.f32 0.0, %v7316
    %v7318 = vpop.f32.mrf.mxu0
    %7319 = vmatprep.mubr.bf16.mxu0 %v6969
    %7320 = vmatmul.mubr.bf16.gmra.mxu0 %v6968
    %v7321 = vpop.f32.mrf.mxu0
    %v7322 = vadd.f32 0.0, %v7321
    %v7323 = vpop.f32.mrf.mxu0
    %v7324 = vpop.f32.mrf.mxu0
    %v7325 = vadd.f32 0.0, %v7324
    %v7326 = vpop.f32.mrf.mxu0
    %7327 = vmatprep.mubr.bf16.mxu0 %v6970
    %7328 = vmatmul.mubr.bf16.gmra.mxu0 %v6969
    %v7329 = vpop.f32.mrf.mxu0
    %v7330 = vadd.f32 0.0, %v7329
    %v7331 = vpop.f32.mrf.mxu0
    %v7332 = vpop.f32.mrf.mxu0
    %v7333 = vadd.f32 0.0, %v7332
    %v7334 = vpop.f32.mrf.mxu0
    %7335 = vmatprep.mubr.bf16.mxu0 %v6987
    %7336 = vmatmul.mubr.bf16.gmra.mxu0 %v6970
    %v7337 = vpop.f32.mrf.mxu0
    %v7338 = vadd.f32 0.0, %v7337
    %v7339 = vpop.f32.mrf.mxu0
    %v7340 = vpop.f32.mrf.mxu0
    %v7341 = vadd.f32 0.0, %v7340
    %v7342 = vpop.f32.mrf.mxu0
    %7343 = vmatprep.mubr.bf16.mxu0 %v6972
    %7344 = vmatmul.mubr.bf16.gmra.mxu0 %v6971
    %v7345 = vpop.f32.mrf.mxu0
    %v7346 = vadd.f32 0.0, %v7345
    %v7347 = vpop.f32.mrf.mxu0
    %v7348 = vpop.f32.mrf.mxu0
    %v7349 = vadd.f32 0.0, %v7348
    %v7350 = vpop.f32.mrf.mxu0
    %7351 = vmatprep.mubr.bf16.mxu0 %v6973
    %7352 = vmatmul.mubr.bf16.gmra.mxu0 %v6972
    %v7353 = vpop.f32.mrf.mxu0
    %v7354 = vadd.f32 0.0, %v7353
    %v7355 = vpop.f32.mrf.mxu0
    %v7356 = vpop.f32.mrf.mxu0
    %v7357 = vadd.f32 0.0, %v7356
    %v7358 = vpop.f32.mrf.mxu0
    %7359 = vmatprep.mubr.bf16.mxu0 %v6974
    %7360 = vmatmul.mubr.bf16.gmra.mxu0 %v6973
    %v7361 = vpop.f32.mrf.mxu0
    %v7362 = vadd.f32 0.0, %v7361
    %v7363 = vpop.f32.mrf.mxu0
    %v7364 = vpop.f32.mrf.mxu0
    %v7365 = vadd.f32 0.0, %v7364
    %v7366 = vpop.f32.mrf.mxu0
    %7367 = vmatprep.mubr.bf16.mxu0 %v6975
    %7368 = vmatmul.mubr.bf16.gmra.mxu0 %v6974
    %v7369 = vpop.f32.mrf.mxu0
    %v7370 = vadd.f32 0.0, %v7369
    %v7371 = vpop.f32.mrf.mxu0
    %v7372 = vpop.f32.mrf.mxu0
    %v7373 = vadd.f32 0.0, %v7372
    %v7374 = vpop.f32.mrf.mxu0
    %7375 = vmatprep.mubr.bf16.mxu0 %v6976
    %7376 = vmatmul.mubr.bf16.gmra.mxu0 %v6975
    %v7377 = vpop.f32.mrf.mxu0
    %v7378 = vadd.f32 0.0, %v7377
    %v7379 = vpop.f32.mrf.mxu0
    %v7380 = vpop.f32.mrf.mxu0
    %v7381 = vadd.f32 0.0, %v7380
    %v7382 = vpop.f32.mrf.mxu0
    %7383 = vmatprep.mubr.bf16.mxu0 %v6977
    %7384 = vmatmul.mubr.bf16.gmra.mxu0 %v6976
    %v7385 = vpop.f32.mrf.mxu0
    %v7386 = vadd.f32 0.0, %v7385
    %v7387 = vpop.f32.mrf.mxu0
    %v7388 = vpop.f32.mrf.mxu0
    %v7389 = vadd.f32 0.0, %v7388
    %v7390 = vpop.f32.mrf.mxu0
    %7391 = vmatprep.mubr.bf16.mxu0 %v6978
    %7392 = vmatmul.mubr.bf16.gmra.mxu0 %v6977
    %v7393 = vpop.f32.mrf.mxu0
    %v7394 = vadd.f32 0.0, %v7393
    %v7395 = vpop.f32.mrf.mxu0
    %v7396 = vpop.f32.mrf.mxu0
    %v7397 = vadd.f32 0.0, %v7396
    %v7398 = vpop.f32.mrf.mxu0
    %7399 = vmatprep.mubr.bf16.mxu0 %v6979
    %7400 = vmatmul.mubr.bf16.gmra.mxu0 %v6978
    %v7401 = vpop.f32.mrf.mxu0
    %v7402 = vadd.f32 0.0, %v7401
    %v7403 = vpop.f32.mrf.mxu0
    %v7404 = vpop.f32.mrf.mxu0
    %v7405 = vadd.f32 0.0, %v7404
    %v7406 = vpop.f32.mrf.mxu0
    %7407 = vmatprep.mubr.bf16.mxu0 %v6980
    %7408 = vmatmul.mubr.bf16.gmra.mxu0 %v6979
    %v7409 = vpop.f32.mrf.mxu0
    %v7410 = vadd.f32 0.0, %v7409
    %v7411 = vpop.f32.mrf.mxu0
    %v7412 = vpop.f32.mrf.mxu0
    %v7413 = vadd.f32 0.0, %v7412
    %v7414 = vpop.f32.mrf.mxu0
    %7415 = vmatprep.mubr.bf16.mxu0 %v6981
    %7416 = vmatmul.mubr.bf16.gmra.mxu0 %v6980
    %v7417 = vpop.f32.mrf.mxu0
    %v7418 = vadd.f32 0.0, %v7417
    %v7419 = vpop.f32.mrf.mxu0
    %v7420 = vpop.f32.mrf.mxu0
    %v7421 = vadd.f32 0.0, %v7420
    %v7422 = vpop.f32.mrf.mxu0
    %7423 = vmatprep.mubr.bf16.mxu0 %v6982
    %7424 = vmatmul.mubr.bf16.gmra.mxu0 %v6981
    %v7425 = vpop.f32.mrf.mxu0
    %v7426 = vadd.f32 0.0, %v7425
    %v7427 = vpop.f32.mrf.mxu0
    %v7428 = vpop.f32.mrf.mxu0
    %v7429 = vadd.f32 0.0, %v7428
    %v7430 = vpop.f32.mrf.mxu0
    %7431 = vmatprep.mubr.bf16.mxu0 %v6983
    %7432 = vmatmul.mubr.bf16.gmra.mxu0 %v6982
    %v7433 = vpop.f32.mrf.mxu0
    %v7434 = vadd.f32 0.0, %v7433
    %v7435 = vpop.f32.mrf.mxu0
    %v7436 = vpop.f32.mrf.mxu0
    %v7437 = vadd.f32 0.0, %v7436
    %v7438 = vpop.f32.mrf.mxu0
    %7439 = vmatprep.mubr.bf16.mxu0 %v6984
    %7440 = vmatmul.mubr.bf16.gmra.mxu0 %v6983
    %v7441 = vpop.f32.mrf.mxu0
    %v7442 = vadd.f32 0.0, %v7441
    %v7443 = vpop.f32.mrf.mxu0
    %v7444 = vpop.f32.mrf.mxu0
    %v7445 = vadd.f32 0.0, %v7444
    %v7446 = vpop.f32.mrf.mxu0
    %7447 = vmatprep.mubr.bf16.mxu0 %v6985
    %7448 = vmatmul.mubr.bf16.gmra.mxu0 %v6984
    %v7449 = vpop.f32.mrf.mxu0
    %v7450 = vadd.f32 0.0, %v7449
    %v7451 = vpop.f32.mrf.mxu0
    %v7452 = vpop.f32.mrf.mxu0
    %v7453 = vadd.f32 0.0, %v7452
    %v7454 = vpop.f32.mrf.mxu0
    %7455 = vmatprep.mubr.bf16.mxu0 %v6986
    %7456 = vmatmul.mubr.bf16.gmra.mxu0 %v6985
    %v7457 = vpop.f32.mrf.mxu0
    %v7458 = vadd.f32 0.0, %v7457
    %v7459 = vpop.f32.mrf.mxu0
    %v7460 = vpop.f32.mrf.mxu0
    %v7461 = vadd.f32 0.0, %v7460
    %v7462 = vpop.f32.mrf.mxu0
    %7463 = vmatprep.mubr.bf16.mxu0 %v6988
    %7464 = vmatmul.mubr.bf16.gmra.mxu0 %v6986
    %v7465 = vpop.f32.mrf.mxu0
    %v7466 = vadd.f32 0.0, %v7465
    %v7467 = vpop.f32.mrf.mxu0
    %v7468 = vpop.f32.mrf.mxu0
    %v7469 = vadd.f32 0.0, %v7468
    %v7470 = vpop.f32.mrf.mxu0
    %7471 = vdwg.mxu0
    %7472 = vmatprep.subr.bf16.mxu0 0
    %7473 = vmatpush1.bf16.msra.mxu0 %v7158
    %7474 = vmatprep.subr.bf16.mxu0 0
    %7475 = vmatpush1.bf16.msra.mxu0 %v7157
    %7476 = vmatprep.subr.bf16.mxu0 0
    %7477 = vmatpush1.bf16.msra.mxu0 %v7156
    %7478 = vmatprep.subr.bf16.mxu0 0
    %7479 = vmatpush1.bf16.msra.mxu0 %v7155
    %7480 = vmatprep.subr.bf16.mxu0 0
    %7481 = vmatpush1.bf16.msra.mxu0 %v7154
    %7482 = vmatprep.subr.bf16.mxu0 0
    %7483 = vmatpush1.bf16.msra.mxu0 %v7153
    %7484 = vmatprep.subr.bf16.mxu0 0
    %7485 = vmatpush1.bf16.msra.mxu0 %v7152
    %7486 = vmatprep.subr.bf16.mxu0 0
    %7487 = vmatpush1.bf16.msra.mxu0 %v7151
    %7488 = vmatprep.subr.bf16.mxu0 0
    %7489 = vmatpush2.bf16.msra.mxu0 0
    %7490 = vmatprep.subr.bf16.mxu0 0
    %7491 = vmatpush2.bf16.msra.mxu0 0
    %7492 = vmatprep.subr.bf16.mxu0 0
    %7493 = vmatpush2.bf16.msra.mxu0 0
    %7494 = vmatprep.subr.bf16.mxu0 0
    %7495 = vmatpush2.bf16.msra.mxu0 0
    %7496 = vmatprep.subr.bf16.mxu0 0
    %7497 = vmatpush2.bf16.msra.mxu0 0
    %7498 = vmatprep.subr.bf16.mxu0 0
    %7499 = vmatpush2.bf16.msra.mxu0 0
    %7500 = vmatprep.subr.bf16.mxu0 0
    %7501 = vmatpush2.bf16.msra.mxu0 0
    %7502 = vmatprep.subr.bf16.mxu0 0
    %7503 = vmatpush2.bf16.msra.mxu0 0
    %7504 = vmatprep.mubr.bf16.mxu0 0
    %7505 = vmatmul.mubr.bf16.gmra.mxu0 %v6957
    %v7506 = vpop.f32.mrf.mxu0
    %v7507 = vadd.f32 %v7218, %v7506
    %v7508 = vpop.f32.mrf.mxu0
    %v7509 = vpop.f32.mrf.mxu0
    %v7510 = vadd.f32 %v7221, %v7509
    %v7511 = vpop.f32.mrf.mxu0
    %7512 = vmatprep.mubr.bf16.mxu0 0
    %7513 = vmatmul.mubr.bf16.gmra.mxu0 %v6958
    %v7514 = vpop.f32.mrf.mxu0
    %v7515 = vadd.f32 %v7226, %v7514
    %v7516 = vpop.f32.mrf.mxu0
    %v7517 = vpop.f32.mrf.mxu0
    %v7518 = vadd.f32 %v7229, %v7517
    %v7519 = vpop.f32.mrf.mxu0
    %7520 = vmatprep.mubr.bf16.mxu0 0
    %7521 = vmatmul.mubr.bf16.gmra.mxu0 %v6959
    %v7522 = vpop.f32.mrf.mxu0
    %v7523 = vadd.f32 %v7234, %v7522
    %v7524 = vpop.f32.mrf.mxu0
    %v7525 = vpop.f32.mrf.mxu0
    %v7526 = vadd.f32 %v7237, %v7525
    %v7527 = vpop.f32.mrf.mxu0
    %7528 = vmatprep.mubr.bf16.mxu0 0
    %7529 = vmatmul.mubr.bf16.gmra.mxu0 %v6960
    %v7530 = vpop.f32.mrf.mxu0
    %v7531 = vadd.f32 %v7242, %v7530
    %v7532 = vpop.f32.mrf.mxu0
    %v7533 = vpop.f32.mrf.mxu0
    %v7534 = vadd.f32 %v7245, %v7533
    %v7535 = vpop.f32.mrf.mxu0
    %7536 = vmatprep.mubr.bf16.mxu0 0
    %7537 = vmatmul.mubr.bf16.gmra.mxu0 %v6961
    %v7538 = vpop.f32.mrf.mxu0
    %v7539 = vadd.f32 %v7250, %v7538
    %v7540 = vpop.f32.mrf.mxu0
    %v7541 = vpop.f32.mrf.mxu0
    %v7542 = vadd.f32 %v7253, %v7541
    %v7543 = vpop.f32.mrf.mxu0
    %7544 = vmatprep.mubr.bf16.mxu0 0
    %7545 = vmatmul.mubr.bf16.gmra.mxu0 %v6962
    %v7546 = vpop.f32.mrf.mxu0
    %v7547 = vadd.f32 %v7258, %v7546
    %v7548 = vpop.f32.mrf.mxu0
    %v7549 = vpop.f32.mrf.mxu0
    %v7550 = vadd.f32 %v7261, %v7549
    %v7551 = vpop.f32.mrf.mxu0
    %7552 = vmatprep.mubr.bf16.mxu0 0
    %7553 = vmatmul.mubr.bf16.gmra.mxu0 %v6963
    %v7554 = vpop.f32.mrf.mxu0
    %v7555 = vadd.f32 %v7266, %v7554
    %v7556 = vpop.f32.mrf.mxu0
    %v7557 = vpop.f32.mrf.mxu0
    %v7558 = vadd.f32 %v7269, %v7557
    %v7559 = vpop.f32.mrf.mxu0
    %7560 = vmatprep.mubr.bf16.mxu0 0
    %7561 = vmatmul.mubr.bf16.gmra.mxu0 %v6964
    %v7562 = vpop.f32.mrf.mxu0
    %v7563 = vadd.f32 %v7274, %v7562
    %v7564 = vpop.f32.mrf.mxu0
    %v7565 = vpop.f32.mrf.mxu0
    %v7566 = vadd.f32 %v7277, %v7565
    %v7567 = vpop.f32.mrf.mxu0
    %7568 = vmatprep.mubr.bf16.mxu0 0
    %7569 = vmatmul.mubr.bf16.gmra.mxu0 %v6965
    %v7570 = vpop.f32.mrf.mxu0
    %v7571 = vadd.f32 %v7282, %v7570
    %v7572 = vpop.f32.mrf.mxu0
    %v7573 = vpop.f32.mrf.mxu0
    %v7574 = vadd.f32 %v7285, %v7573
    %v7575 = vpop.f32.mrf.mxu0
    %7576 = vmatprep.mubr.bf16.mxu0 0
    %7577 = vmatmul.mubr.bf16.gmra.mxu0 %v6966
    %v7578 = vpop.f32.mrf.mxu0
    %v7579 = vadd.f32 %v7290, %v7578
    %v7580 = vpop.f32.mrf.mxu0
    %v7581 = vpop.f32.mrf.mxu0
    %v7582 = vadd.f32 %v7293, %v7581
    %v7583 = vpop.f32.mrf.mxu0
    %7584 = vmatprep.mubr.bf16.mxu0 0
    %7585 = vmatmul.mubr.bf16.gmra.mxu0 %v6967
    %v7586 = vpop.f32.mrf.mxu0
    %v7587 = vadd.f32 %v7298, %v7586
    %v7588 = vpop.f32.mrf.mxu0
    %v7589 = vpop.f32.mrf.mxu0
    %v7590 = vadd.f32 %v7301, %v7589
    %v7591 = vpop.f32.mrf.mxu0
    %7592 = vmatprep.mubr.bf16.mxu0 0
    %7593 = vmatmul.mubr.bf16.gmra.mxu0 %v6968
    %v7594 = vpop.f32.mrf.mxu0
    %v7595 = vadd.f32 %v7306, %v7594
    %v7596 = vpop.f32.mrf.mxu0
    %v7597 = vpop.f32.mrf.mxu0
    %v7598 = vadd.f32 %v7309, %v7597
    %v7599 = vpop.f32.mrf.mxu0
    %7600 = vmatprep.mubr.bf16.mxu0 0
    %7601 = vmatmul.mubr.bf16.gmra.mxu0 %v6969
    %v7602 = vpop.f32.mrf.mxu0
    %v7603 = vadd.f32 %v7314, %v7602
    %v7604 = vpop.f32.mrf.mxu0
    %v7605 = vpop.f32.mrf.mxu0
    %v7606 = vadd.f32 %v7317, %v7605
    %v7607 = vpop.f32.mrf.mxu0
    %7608 = vmatprep.mubr.bf16.mxu0 0
    %7609 = vmatmul.mubr.bf16.gmra.mxu0 %v6970
    %v7610 = vpop.f32.mrf.mxu0
    %v7611 = vadd.f32 %v7322, %v7610
    %v7612 = vpop.f32.mrf.mxu0
    %v7613 = vpop.f32.mrf.mxu0
    %v7614 = vadd.f32 %v7325, %v7613
    %v7615 = vpop.f32.mrf.mxu0
    %7616 = vmatprep.mubr.bf16.mxu0 0
    %7617 = vmatmul.mubr.bf16.gmra.mxu0 %v6987
    %v7618 = vpop.f32.mrf.mxu0
    %v7619 = vadd.f32 %v7330, %v7618
    %v7620 = vpop.f32.mrf.mxu0
    %v7621 = vpop.f32.mrf.mxu0
    %v7622 = vadd.f32 %v7333, %v7621
    %v7623 = vpop.f32.mrf.mxu0
    %7624 = vmatprep.mubr.bf16.mxu0 0
    %7625 = vmatmul.mubr.bf16.gmra.mxu0 %v6989
    %v7626 = vpop.f32.mrf.mxu0
    %v7627 = vadd.f32 %v7338, %v7626
    %v7628 = vpop.f32.mrf.mxu0
    %v7629 = vpop.f32.mrf.mxu0
    %v7630 = vadd.f32 %v7341, %v7629
    %v7631 = vpop.f32.mrf.mxu0
    %7632 = vmatprep.mubr.bf16.mxu0 0
    %7633 = vmatmul.mubr.bf16.gmra.mxu0 %v6973
    %v7634 = vpop.f32.mrf.mxu0
    %v7635 = vadd.f32 %v7346, %v7634
    %v7636 = vpop.f32.mrf.mxu0
    %v7637 = vpop.f32.mrf.mxu0
    %v7638 = vadd.f32 %v7349, %v7637
    %v7639 = vpop.f32.mrf.mxu0
    %7640 = vmatprep.mubr.bf16.mxu0 0
    %7641 = vmatmul.mubr.bf16.gmra.mxu0 %v6974
    %v7642 = vpop.f32.mrf.mxu0
    %v7643 = vadd.f32 %v7354, %v7642
    %v7644 = vpop.f32.mrf.mxu0
    %v7645 = vpop.f32.mrf.mxu0
    %v7646 = vadd.f32 %v7357, %v7645
    %v7647 = vpop.f32.mrf.mxu0
    %7648 = vmatprep.mubr.bf16.mxu0 0
    %7649 = vmatmul.mubr.bf16.gmra.mxu0 %v6975
    %v7650 = vpop.f32.mrf.mxu0
    %v7651 = vadd.f32 %v7362, %v7650
    %v7652 = vpop.f32.mrf.mxu0
    %v7653 = vpop.f32.mrf.mxu0
    %v7654 = vadd.f32 %v7365, %v7653
    %v7655 = vpop.f32.mrf.mxu0
    %7656 = vmatprep.mubr.bf16.mxu0 0
    %7657 = vmatmul.mubr.bf16.gmra.mxu0 %v6976
    %v7658 = vpop.f32.mrf.mxu0
    %v7659 = vadd.f32 %v7370, %v7658
    %v7660 = vpop.f32.mrf.mxu0
    %v7661 = vpop.f32.mrf.mxu0
    %v7662 = vadd.f32 %v7373, %v7661
    %v7663 = vpop.f32.mrf.mxu0
    %7664 = vmatprep.mubr.bf16.mxu0 0
    %7665 = vmatmul.mubr.bf16.gmra.mxu0 %v6977
    %v7666 = vpop.f32.mrf.mxu0
    %v7667 = vadd.f32 %v7378, %v7666
    %v7668 = vpop.f32.mrf.mxu0
    %v7669 = vpop.f32.mrf.mxu0
    %v7670 = vadd.f32 %v7381, %v7669
    %v7671 = vpop.f32.mrf.mxu0
    %7672 = vmatprep.mubr.bf16.mxu0 0
    %7673 = vmatmul.mubr.bf16.gmra.mxu0 %v6978
    %v7674 = vpop.f32.mrf.mxu0
    %v7675 = vadd.f32 %v7386, %v7674
    %v7676 = vpop.f32.mrf.mxu0
    %v7677 = vpop.f32.mrf.mxu0
    %v7678 = vadd.f32 %v7389, %v7677
    %v7679 = vpop.f32.mrf.mxu0
    %7680 = vmatprep.mubr.bf16.mxu0 0
    %7681 = vmatmul.mubr.bf16.gmra.mxu0 %v6979
    %v7682 = vpop.f32.mrf.mxu0
    %v7683 = vadd.f32 %v7394, %v7682
    %v7684 = vpop.f32.mrf.mxu0
    %v7685 = vpop.f32.mrf.mxu0
    %v7686 = vadd.f32 %v7397, %v7685
    %v7687 = vpop.f32.mrf.mxu0
    %7688 = vmatprep.mubr.bf16.mxu0 0
    %7689 = vmatmul.mubr.bf16.gmra.mxu0 %v6980
    %v7690 = vpop.f32.mrf.mxu0
    %v7691 = vadd.f32 %v7402, %v7690
    %v7692 = vpop.f32.mrf.mxu0
    %v7693 = vpop.f32.mrf.mxu0
    %v7694 = vadd.f32 %v7405, %v7693
    %v7695 = vpop.f32.mrf.mxu0
    %7696 = vmatprep.mubr.bf16.mxu0 0
    %7697 = vmatmul.mubr.bf16.gmra.mxu0 %v6981
    %v7698 = vpop.f32.mrf.mxu0
    %v7699 = vadd.f32 %v7410, %v7698
    %v7700 = vpop.f32.mrf.mxu0
    %v7701 = vpop.f32.mrf.mxu0
    %v7702 = vadd.f32 %v7413, %v7701
    %v7703 = vpop.f32.mrf.mxu0
    %7704 = vmatprep.mubr.bf16.mxu0 0
    %7705 = vmatmul.mubr.bf16.gmra.mxu0 %v6982
    %v7706 = vpop.f32.mrf.mxu0
    %v7707 = vadd.f32 %v7418, %v7706
    %v7708 = vpop.f32.mrf.mxu0
    %v7709 = vpop.f32.mrf.mxu0
    %v7710 = vadd.f32 %v7421, %v7709
    %v7711 = vpop.f32.mrf.mxu0
    %7712 = vmatprep.mubr.bf16.mxu0 0
    %7713 = vmatmul.mubr.bf16.gmra.mxu0 %v6983
    %v7714 = vpop.f32.mrf.mxu0
    %v7715 = vadd.f32 %v7426, %v7714
    %v7716 = vpop.f32.mrf.mxu0
    %v7717 = vpop.f32.mrf.mxu0
    %v7718 = vadd.f32 %v7429, %v7717
    %v7719 = vpop.f32.mrf.mxu0
    %7720 = vmatprep.mubr.bf16.mxu0 0
    %7721 = vmatmul.mubr.bf16.gmra.mxu0 %v6984
    %v7722 = vpop.f32.mrf.mxu0
    %v7723 = vadd.f32 %v7434, %v7722
    %v7724 = vpop.f32.mrf.mxu0
    %v7725 = vpop.f32.mrf.mxu0
    %v7726 = vadd.f32 %v7437, %v7725
    %v7727 = vpop.f32.mrf.mxu0
    %7728 = vmatprep.mubr.bf16.mxu0 0
    %7729 = vmatmul.mubr.bf16.gmra.mxu0 %v6985
    %v7730 = vpop.f32.mrf.mxu0
    %v7731 = vadd.f32 %v7442, %v7730
    %v7732 = vpop.f32.mrf.mxu0
    %v7733 = vpop.f32.mrf.mxu0
    %v7734 = vadd.f32 %v7445, %v7733
    %v7735 = vpop.f32.mrf.mxu0
    %7736 = vmatprep.mubr.bf16.mxu0 0
    %7737 = vmatmul.mubr.bf16.gmra.mxu0 %v6986
    %v7738 = vpop.f32.mrf.mxu0
    %v7739 = vadd.f32 %v7450, %v7738
    %v7740 = vpop.f32.mrf.mxu0
    %v7741 = vpop.f32.mrf.mxu0
    %v7742 = vadd.f32 %v7453, %v7741
    %v7743 = vpop.f32.mrf.mxu0
    %7744 = vmatprep.mubr.bf16.mxu0 0
    %7745 = vmatmul.mubr.bf16.gmra.mxu0 %v6988
    %v7746 = vpop.f32.mrf.mxu0
    %v7747 = vadd.f32 %v7458, %v7746
    %v7748 = vpop.f32.mrf.mxu0
    %v7749 = vpop.f32.mrf.mxu0
    %v7750 = vadd.f32 %v7461, %v7749
    %v7751 = vpop.f32.mrf.mxu0
    %7752 = vmatprep.mubr.bf16.mxu0 0
    %7753 = vmatmul.mubr.bf16.gmra.mxu0 %v6989
    %v7754 = vpop.f32.mrf.mxu0
    %v7755 = vadd.f32 %v7466, %v7754
    %v7756 = vpop.f32.mrf.mxu0
    %v7757 = vpop.f32.mrf.mxu0
    %v7758 = vadd.f32 %v7469, %v7757
    %v7759 = vpop.f32.mrf.mxu0
    %7760 = vdwg.mxu0
    %v7761 = vadd.f32 %v6561, %v7507
    %v7762 = vadd.f32 %v6564, %v7510
    %v7763 = vadd.f32 %v6569, %v7515
    %v7764 = vadd.f32 %v6572, %v7518
    %v7765 = vadd.f32 %v6577, %v7523
    %v7766 = vadd.f32 %v6580, %v7526
    %v7767 = vadd.f32 %v6585, %v7531
    %v7768 = vadd.f32 %v6588, %v7534
    %v7769 = vadd.f32 %v6593, %v7539
    %v7770 = vadd.f32 %v6596, %v7542
    %v7771 = vadd.f32 %v6601, %v7547
    %v7772 = vadd.f32 %v6604, %v7550
    %v7773 = vadd.f32 %v6609, %v7555
    %v7774 = vadd.f32 %v6612, %v7558
    %v7775 = vadd.f32 %v6617, %v7563
    %v7776 = vadd.f32 %v6620, %v7566
    %v7777 = vadd.f32 %v6625, %v7571
    %v7778 = vadd.f32 %v6628, %v7574
    %v7779 = vadd.f32 %v6633, %v7579
    %v7780 = vadd.f32 %v6636, %v7582
    %v7781 = vadd.f32 %v6641, %v7587
    %v7782 = vadd.f32 %v6644, %v7590
    %v7783 = vadd.f32 %v6649, %v7595
    %v7784 = vadd.f32 %v6652, %v7598
    %v7785 = vadd.f32 %v6657, %v7603
    %v7786 = vadd.f32 %v6660, %v7606
    %v7787 = vadd.f32 %v6665, %v7611
    %v7788 = vadd.f32 %v6668, %v7614
    %v7789 = vadd.f32 %v6673, %v7619
    %v7790 = vadd.f32 %v6676, %v7622
    %v7791 = vadd.f32 %v6681, %v7627
    %v7792 = vadd.f32 %v6684, %v7630
    %v7793 = vadd.f32 %v6689, %v7635
    %v7794 = vadd.f32 %v6692, %v7638
    %v7795 = vadd.f32 %v6697, %v7643
    %v7796 = vadd.f32 %v6700, %v7646
    %v7797 = vadd.f32 %v6705, %v7651
    %v7798 = vadd.f32 %v6708, %v7654
    %v7799 = vadd.f32 %v6713, %v7659
    %v7800 = vadd.f32 %v6716, %v7662
    %v7801 = vadd.f32 %v6721, %v7667
    %v7802 = vadd.f32 %v6724, %v7670
    %v7803 = vadd.f32 %v6729, %v7675
    %v7804 = vadd.f32 %v6732, %v7678
    %v7805 = vadd.f32 %v6737, %v7683
    %v7806 = vadd.f32 %v6740, %v7686
    %v7807 = vadd.f32 %v6745, %v7691
    %v7808 = vadd.f32 %v6748, %v7694
    %v7809 = vadd.f32 %v6753, %v7699
    %v7810 = vadd.f32 %v6756, %v7702
    %v7811 = vadd.f32 %v6761, %v7707
    %v7812 = vadd.f32 %v6764, %v7710
    %v7813 = vadd.f32 %v6769, %v7715
    %v7814 = vadd.f32 %v6772, %v7718
    %v7815 = vadd.f32 %v6777, %v7723
    %v7816 = vadd.f32 %v6780, %v7726
    %v7817 = vadd.f32 %v6785, %v7731
    %v7818 = vadd.f32 %v6788, %v7734
    %v7819 = vadd.f32 %v6793, %v7739
    %v7820 = vadd.f32 %v6796, %v7742
    %v7821 = vadd.f32 %v6801, %v7747
    %v7822 = vadd.f32 %v6804, %v7750
    %v7823 = vadd.f32 %v6809, %v7755
    %v7824 = vadd.f32 %v6812, %v7758
    %v7825 = vld [vmem:[%s10] sm:$0x1]
    %v7827 = vlaneseq
    %v7828 = vshrl.u32 %v7827, 7
    %v7829 = vsub.s32 0, %v7828
    %v7830 = vrot.slane %v7825, %v7829
    %v7832 = vadd.f32 %v7761, %v7830
    %v7833 = vadd.f32 %v7762, %v7830
    %v7834 = vadd.f32 %v7763, %v7830
    %v7835 = vadd.f32 %v7764, %v7830
    %v7836 = vadd.f32 %v7765, %v7830
    %v7837 = vadd.f32 %v7766, %v7830
    %v7838 = vadd.f32 %v7767, %v7830
    %v7839 = vadd.f32 %v7768, %v7830
    %v7840 = vadd.f32 %v7769, %v7830
    %v7841 = vadd.f32 %v7770, %v7830
    %v7842 = vadd.f32 %v7771, %v7830
    %v7843 = vadd.f32 %v7772, %v7830
    %v7844 = vadd.f32 %v7773, %v7830
    %v7845 = vadd.f32 %v7774, %v7830
    %v7846 = vadd.f32 %v7775, %v7830
    %v7847 = vadd.f32 %v7776, %v7830
    %v7848 = vadd.f32 %v7777, %v7830
    %v7849 = vadd.f32 %v7778, %v7830
    %v7850 = vadd.f32 %v7779, %v7830
    %v7851 = vadd.f32 %v7780, %v7830
    %v7852 = vadd.f32 %v7781, %v7830
    %v7853 = vadd.f32 %v7782, %v7830
    %v7854 = vadd.f32 %v7783, %v7830
    %v7855 = vadd.f32 %v7784, %v7830
    %v7856 = vadd.f32 %v7785, %v7830
    %v7857 = vadd.f32 %v7786, %v7830
    %v7858 = vadd.f32 %v7787, %v7830
    %v7859 = vadd.f32 %v7788, %v7830
    %v7860 = vadd.f32 %v7789, %v7830
    %v7861 = vadd.f32 %v7790, %v7830
    %v7862 = vadd.f32 %v7791, %v7830
    %v7863 = vadd.f32 %v7792, %v7830
    %v7864 = vadd.f32 %v7793, %v7830
    %v7865 = vadd.f32 %v7794, %v7830
    %v7866 = vadd.f32 %v7795, %v7830
    %v7867 = vadd.f32 %v7796, %v7830
    %v7868 = vadd.f32 %v7797, %v7830
    %v7869 = vadd.f32 %v7798, %v7830
    %v7870 = vadd.f32 %v7799, %v7830
    %v7871 = vadd.f32 %v7800, %v7830
    %v7872 = vadd.f32 %v7801, %v7830
    %v7873 = vadd.f32 %v7802, %v7830
    %v7874 = vadd.f32 %v7803, %v7830
    %v7875 = vadd.f32 %v7804, %v7830
    %v7876 = vadd.f32 %v7805, %v7830
    %v7877 = vadd.f32 %v7806, %v7830
    %v7878 = vadd.f32 %v7807, %v7830
    %v7879 = vadd.f32 %v7808, %v7830
    %v7880 = vadd.f32 %v7809, %v7830
    %v7881 = vadd.f32 %v7810, %v7830
    %v7882 = vadd.f32 %v7811, %v7830
    %v7883 = vadd.f32 %v7812, %v7830
    %v7884 = vadd.f32 %v7813, %v7830
    %v7885 = vadd.f32 %v7814, %v7830
    %v7886 = vadd.f32 %v7815, %v7830
    %v7887 = vadd.f32 %v7816, %v7830
    %v7888 = vadd.f32 %v7817, %v7830
    %v7889 = vadd.f32 %v7818, %v7830
    %v7890 = vadd.f32 %v7819, %v7830
    %v7891 = vadd.f32 %v7820, %v7830
    %v7892 = vadd.f32 %v7821, %v7830
    %v7893 = vadd.f32 %v7822, %v7830
    %v7894 = vadd.f32 %v7823, %v7830
    %v7895 = vadd.f32 %v7824, %v7830
    %v7896 = vld [vmem:[%s11] sm:$0x3]
    %v7897 = vld [vmem:[%s12] sm:$0x3]
    %v7898 = vadd.f32 %v7832, %v7833
    %v7899 = vadd.f32 %v7898, %v7834
    %v7900 = vadd.f32 %v7899, %v7835
    %v7901 = vadd.f32 %v7900, %v7836
    %v7902 = vadd.f32 %v7901, %v7837
    %v7903 = vadd.f32 %v7902, %v7838
    %v7904 = vadd.f32 %v7903, %v7839
    %v7905 = vadd.f32 %v7904, %v7840
    %v7906 = vadd.f32 %v7905, %v7841
    %v7907 = vadd.f32 %v7906, %v7842
    %v7908 = vadd.f32 %v7907, %v7843
    %v7909 = vadd.f32 %v7908, %v7844
    %v7910 = vadd.f32 %v7909, %v7845
    %v7911 = vadd.f32 %v7910, %v7846
    %v7912 = vadd.f32 %v7911, %v7847
    %v7913 = vadd.f32 %v7912, %v7848
    %v7914 = vadd.f32 %v7913, %v7849
    %v7915 = vadd.f32 %v7914, %v7850
    %v7916 = vadd.f32 %v7915, %v7851
    %v7917 = vadd.f32 %v7916, %v7852
    %v7918 = vadd.f32 %v7917, %v7853
    %v7919 = vadd.f32 %v7918, %v7854
    %v7920 = vadd.f32 %v7919, %v7855
    %v7921 = vadd.f32 %v7920, %v7856
    %v7922 = vadd.f32 %v7921, %v7857
    %v7923 = vadd.f32 %v7922, %v7858
    %v7924 = vadd.f32 %v7923, %v7859
    %v7925 = vadd.f32 %v7924, %v7860
    %v7926 = vadd.f32 %v7925, %v7861
    %v7927 = vadd.f32 %v7926, %v7862
    %v7928 = vadd.f32 %v7927, %v7863
    %v7929 = vadd.f32 %v7928, %v7864
    %v7930 = vadd.f32 %v7929, %v7865
    %v7931 = vadd.f32 %v7930, %v7866
    %v7932 = vadd.f32 %v7931, %v7867
    %v7933 = vadd.f32 %v7932, %v7868
    %v7934 = vadd.f32 %v7933, %v7869
    %v7935 = vadd.f32 %v7934, %v7870
    %v7936 = vadd.f32 %v7935, %v7871
    %v7937 = vadd.f32 %v7936, %v7872
    %v7938 = vadd.f32 %v7937, %v7873
    %v7939 = vadd.f32 %v7938, %v7874
    %v7940 = vadd.f32 %v7939, %v7875
    %v7941 = vadd.f32 %v7940, %v7876
    %v7942 = vadd.f32 %v7941, %v7877
    %v7943 = vadd.f32 %v7942, %v7878
    %v7944 = vadd.f32 %v7943, %v7879
    %v7945 = vadd.f32 %v7944, %v7880
    %v7946 = vadd.f32 %v7945, %v7881
    %v7947 = vadd.f32 %v7946, %v7882
    %v7948 = vadd.f32 %v7947, %v7883
    %v7949 = vadd.f32 %v7948, %v7884
    %v7950 = vadd.f32 %v7949, %v7885
    %v7951 = vadd.f32 %v7950, %v7886
    %v7952 = vadd.f32 %v7951, %v7887
    %v7953 = vadd.f32 %v7952, %v7888
    %v7954 = vadd.f32 %v7953, %v7889
    %v7955 = vadd.f32 %v7954, %v7890
    %v7956 = vadd.f32 %v7955, %v7891
    %v7957 = vadd.f32 %v7956, %v7892
    %v7958 = vadd.f32 %v7957, %v7893
    %v7959 = vadd.f32 %v7958, %v7894
    %v7960 = vadd.f32 %v7959, %v7895
    %v7961 = vrot.slane %v7960, 4
    %v7962 = vadd.f32 %v7960, %v7961
    %v7963 = vrot.slane %v7962, 2
    %v7964 = vadd.f32 %v7962, %v7963
    %v7965 = vrot.slane %v7964, 1
    %v7966 = vadd.f32 %v7964, %v7965
    %v7967 = vmul.f32 %v7832, %v7832
    %v7968 = vmul.f32 %v7833, %v7833
    %v7969 = vmul.f32 %v7834, %v7834
    %v7970 = vmul.f32 %v7835, %v7835
    %v7971 = vmul.f32 %v7836, %v7836
    %v7972 = vmul.f32 %v7837, %v7837
    %v7973 = vmul.f32 %v7838, %v7838
    %v7974 = vmul.f32 %v7839, %v7839
    %v7975 = vmul.f32 %v7840, %v7840
    %v7976 = vmul.f32 %v7841, %v7841
    %v7977 = vmul.f32 %v7842, %v7842
    %v7978 = vmul.f32 %v7843, %v7843
    %v7979 = vmul.f32 %v7844, %v7844
    %v7980 = vmul.f32 %v7845, %v7845
    %v7981 = vmul.f32 %v7846, %v7846
    %v7982 = vmul.f32 %v7847, %v7847
    %v7983 = vmul.f32 %v7848, %v7848
    %v7984 = vmul.f32 %v7849, %v7849
    %v7985 = vmul.f32 %v7850, %v7850
    %v7986 = vmul.f32 %v7851, %v7851
    %v7987 = vmul.f32 %v7852, %v7852
    %v7988 = vmul.f32 %v7853, %v7853
    %v7989 = vmul.f32 %v7854, %v7854
    %v7990 = vmul.f32 %v7855, %v7855
    %v7991 = vmul.f32 %v7856, %v7856
    %v7992 = vmul.f32 %v7857, %v7857
    %v7993 = vmul.f32 %v7858, %v7858
    %v7994 = vmul.f32 %v7859, %v7859
    %v7995 = vmul.f32 %v7860, %v7860
    %v7996 = vmul.f32 %v7861, %v7861
    %v7997 = vmul.f32 %v7862, %v7862
    %v7998 = vmul.f32 %v7863, %v7863
    %v7999 = vmul.f32 %v7864, %v7864
    %v8000 = vmul.f32 %v7865, %v7865
    %v8001 = vmul.f32 %v7866, %v7866
    %v8002 = vmul.f32 %v7867, %v7867
    %v8003 = vmul.f32 %v7868, %v7868
    %v8004 = vmul.f32 %v7869, %v7869
    %v8005 = vmul.f32 %v7870, %v7870
    %v8006 = vmul.f32 %v7871, %v7871
    %v8007 = vmul.f32 %v7872, %v7872
    %v8008 = vmul.f32 %v7873, %v7873
    %v8009 = vmul.f32 %v7874, %v7874
    %v8010 = vmul.f32 %v7875, %v7875
    %v8011 = vmul.f32 %v7876, %v7876
    %v8012 = vmul.f32 %v7877, %v7877
    %v8013 = vmul.f32 %v7878, %v7878
    %v8014 = vmul.f32 %v7879, %v7879
    %v8015 = vmul.f32 %v7880, %v7880
    %v8016 = vmul.f32 %v7881, %v7881
    %v8017 = vmul.f32 %v7882, %v7882
    %v8018 = vmul.f32 %v7883, %v7883
    %v8019 = vmul.f32 %v7884, %v7884
    %v8020 = vmul.f32 %v7885, %v7885
    %v8021 = vmul.f32 %v7886, %v7886
    %v8022 = vmul.f32 %v7887, %v7887
    %v8023 = vmul.f32 %v7888, %v7888
    %v8024 = vmul.f32 %v7889, %v7889
    %v8025 = vmul.f32 %v7890, %v7890
    %v8026 = vmul.f32 %v7891, %v7891
    %v8027 = vmul.f32 %v7892, %v7892
    %v8028 = vmul.f32 %v7893, %v7893
    %v8029 = vmul.f32 %v7894, %v7894
    %v8030 = vmul.f32 %v7895, %v7895
    %v8031 = vadd.f32 %v7967, %v7968
    %v8032 = vadd.f32 %v8031, %v7969
    %v8033 = vadd.f32 %v8032, %v7970
    %v8034 = vadd.f32 %v8033, %v7971
    %v8035 = vadd.f32 %v8034, %v7972
    %v8036 = vadd.f32 %v8035, %v7973
    %v8037 = vadd.f32 %v8036, %v7974
    %v8038 = vadd.f32 %v8037, %v7975
    %v8039 = vadd.f32 %v8038, %v7976
    %v8040 = vadd.f32 %v8039, %v7977
    %v8041 = vadd.f32 %v8040, %v7978
    %v8042 = vadd.f32 %v8041, %v7979
    %v8043 = vadd.f32 %v8042, %v7980
    %v8044 = vadd.f32 %v8043, %v7981
    %v8045 = vadd.f32 %v8044, %v7982
    %v8046 = vadd.f32 %v8045, %v7983
    %v8047 = vadd.f32 %v8046, %v7984
    %v8048 = vadd.f32 %v8047, %v7985
    %v8049 = vadd.f32 %v8048, %v7986
    %v8050 = vadd.f32 %v8049, %v7987
    %v8051 = vadd.f32 %v8050, %v7988
    %v8052 = vadd.f32 %v8051, %v7989
    %v8053 = vadd.f32 %v8052, %v7990
    %v8054 = vadd.f32 %v8053, %v7991
    %v8055 = vadd.f32 %v8054, %v7992
    %v8056 = vadd.f32 %v8055, %v7993
    %v8057 = vadd.f32 %v8056, %v7994
    %v8058 = vadd.f32 %v8057, %v7995
    %v8059 = vadd.f32 %v8058, %v7996
    %v8060 = vadd.f32 %v8059, %v7997
    %v8061 = vadd.f32 %v8060, %v7998
    %v8062 = vadd.f32 %v8061, %v7999
    %v8063 = vadd.f32 %v8062, %v8000
    %v8064 = vadd.f32 %v8063, %v8001
    %v8065 = vadd.f32 %v8064, %v8002
    %v8066 = vadd.f32 %v8065, %v8003
    %v8067 = vadd.f32 %v8066, %v8004
    %v8068 = vadd.f32 %v8067, %v8005
    %v8069 = vadd.f32 %v8068, %v8006
    %v8070 = vadd.f32 %v8069, %v8007
    %v8071 = vadd.f32 %v8070, %v8008
    %v8072 = vadd.f32 %v8071, %v8009
    %v8073 = vadd.f32 %v8072, %v8010
    %v8074 = vadd.f32 %v8073, %v8011
    %v8075 = vadd.f32 %v8074, %v8012
    %v8076 = vadd.f32 %v8075, %v8013
    %v8077 = vadd.f32 %v8076, %v8014
    %v8078 = vadd.f32 %v8077, %v8015
    %v8079 = vadd.f32 %v8078, %v8016
    %v8080 = vadd.f32 %v8079, %v8017
    %v8081 = vadd.f32 %v8080, %v8018
    %v8082 = vadd.f32 %v8081, %v8019
    %v8083 = vadd.f32 %v8082, %v8020
    %v8084 = vadd.f32 %v8083, %v8021
    %v8085 = vadd.f32 %v8084, %v8022
    %v8086 = vadd.f32 %v8085, %v8023
    %v8087 = vadd.f32 %v8086, %v8024
    %v8088 = vadd.f32 %v8087, %v8025
    %v8089 = vadd.f32 %v8088, %v8026
    %v8090 = vadd.f32 %v8089, %v8027
    %v8091 = vadd.f32 %v8090, %v8028
    %v8092 = vadd.f32 %v8091, %v8029
    %v8093 = vadd.f32 %v8092, %v8030
    %v8094 = vrot.slane %v8093, 4
    %v8095 = vadd.f32 %v8093, %v8094
    %v8096 = vrot.slane %v8095, 2
    %v8097 = vadd.f32 %v8095, %v8096
    %v8098 = vrot.slane %v8097, 1
    %v8099 = vadd.f32 %v8097, %v8098
    %v8100 = vmul.f32 %v7966, 0.001953125
    %v8101 = vmul.f32 %v8099, 0.001953125
    %v8102 = vmul.f32 %v8100, %v8100
    %v8103 = vsub.f32 %v8101, %v8102
    %v8104 = vmax.f32 %v8103, 0.0
    %v8105 = vsub.f32 %v7832, %v8100
    %v8106 = vsub.f32 %v7833, %v8100
    %v8107 = vsub.f32 %v7834, %v8100
    %v8108 = vsub.f32 %v7835, %v8100
    %v8109 = vsub.f32 %v7836, %v8100
    %v8110 = vsub.f32 %v7837, %v8100
    %v8111 = vsub.f32 %v7838, %v8100
    %v8112 = vsub.f32 %v7839, %v8100
    %v8113 = vsub.f32 %v7840, %v8100
    %v8114 = vsub.f32 %v7841, %v8100
    %v8115 = vsub.f32 %v7842, %v8100
    %v8116 = vsub.f32 %v7843, %v8100
    %v8117 = vsub.f32 %v7844, %v8100
    %v8118 = vsub.f32 %v7845, %v8100
    %v8119 = vsub.f32 %v7846, %v8100
    %v8120 = vsub.f32 %v7847, %v8100
    %v8121 = vsub.f32 %v7848, %v8100
    %v8122 = vsub.f32 %v7849, %v8100
    %v8123 = vsub.f32 %v7850, %v8100
    %v8124 = vsub.f32 %v7851, %v8100
    %v8125 = vsub.f32 %v7852, %v8100
    %v8126 = vsub.f32 %v7853, %v8100
    %v8127 = vsub.f32 %v7854, %v8100
    %v8128 = vsub.f32 %v7855, %v8100
    %v8129 = vsub.f32 %v7856, %v8100
    %v8130 = vsub.f32 %v7857, %v8100
    %v8131 = vsub.f32 %v7858, %v8100
    %v8132 = vsub.f32 %v7859, %v8100
    %v8133 = vsub.f32 %v7860, %v8100
    %v8134 = vsub.f32 %v7861, %v8100
    %v8135 = vsub.f32 %v7862, %v8100
    %v8136 = vsub.f32 %v7863, %v8100
    %v8137 = vsub.f32 %v7864, %v8100
    %v8138 = vsub.f32 %v7865, %v8100
    %v8139 = vsub.f32 %v7866, %v8100
    %v8140 = vsub.f32 %v7867, %v8100
    %v8141 = vsub.f32 %v7868, %v8100
    %v8142 = vsub.f32 %v7869, %v8100
    %v8143 = vsub.f32 %v7870, %v8100
    %v8144 = vsub.f32 %v7871, %v8100
    %v8145 = vsub.f32 %v7872, %v8100
    %v8146 = vsub.f32 %v7873, %v8100
    %v8147 = vsub.f32 %v7874, %v8100
    %v8148 = vsub.f32 %v7875, %v8100
    %v8149 = vsub.f32 %v7876, %v8100
    %v8150 = vsub.f32 %v7877, %v8100
    %v8151 = vsub.f32 %v7878, %v8100
    %v8152 = vsub.f32 %v7879, %v8100
    %v8153 = vsub.f32 %v7880, %v8100
    %v8154 = vsub.f32 %v7881, %v8100
    %v8155 = vsub.f32 %v7882, %v8100
    %v8156 = vsub.f32 %v7883, %v8100
    %v8157 = vsub.f32 %v7884, %v8100
    %v8158 = vsub.f32 %v7885, %v8100
    %v8159 = vsub.f32 %v7886, %v8100
    %v8160 = vsub.f32 %v7887, %v8100
    %v8161 = vsub.f32 %v7888, %v8100
    %v8162 = vsub.f32 %v7889, %v8100
    %v8163 = vsub.f32 %v7890, %v8100
    %v8164 = vsub.f32 %v7891, %v8100
    %v8165 = vsub.f32 %v7892, %v8100
    %v8166 = vsub.f32 %v7893, %v8100
    %v8167 = vsub.f32 %v7894, %v8100
    %v8168 = vsub.f32 %v7895, %v8100
    %v8169 = vadd.f32 %v8104, 1e-05
    %v8170 = vrsqrt.pop %v8169
    %v8171 = vmul.f32 %v8105, %v8170
    %v8172 = vmul.f32 %v8106, %v8170
    %v8173 = vmul.f32 %v8107, %v8170
    %v8174 = vmul.f32 %v8108, %v8170
    %v8175 = vmul.f32 %v8109, %v8170
    %v8176 = vmul.f32 %v8110, %v8170
    %v8177 = vmul.f32 %v8111, %v8170
    %v8178 = vmul.f32 %v8112, %v8170
    %v8179 = vmul.f32 %v8113, %v8170
    %v8180 = vmul.f32 %v8114, %v8170
    %v8181 = vmul.f32 %v8115, %v8170
    %v8182 = vmul.f32 %v8116, %v8170
    %v8183 = vmul.f32 %v8117, %v8170
    %v8184 = vmul.f32 %v8118, %v8170
    %v8185 = vmul.f32 %v8119, %v8170
    %v8186 = vmul.f32 %v8120, %v8170
    %v8187 = vmul.f32 %v8121, %v8170
    %v8188 = vmul.f32 %v8122, %v8170
    %v8189 = vmul.f32 %v8123, %v8170
    %v8190 = vmul.f32 %v8124, %v8170
    %v8191 = vmul.f32 %v8125, %v8170
    %v8192 = vmul.f32 %v8126, %v8170
    %v8193 = vmul.f32 %v8127, %v8170
    %v8194 = vmul.f32 %v8128, %v8170
    %v8195 = vmul.f32 %v8129, %v8170
    %v8196 = vmul.f32 %v8130, %v8170
    %v8197 = vmul.f32 %v8131, %v8170
    %v8198 = vmul.f32 %v8132, %v8170
    %v8199 = vmul.f32 %v8133, %v8170
    %v8200 = vmul.f32 %v8134, %v8170
    %v8201 = vmul.f32 %v8135, %v8170
    %v8202 = vmul.f32 %v8136, %v8170
    %v8203 = vmul.f32 %v8137, %v8170
    %v8204 = vmul.f32 %v8138, %v8170
    %v8205 = vmul.f32 %v8139, %v8170
    %v8206 = vmul.f32 %v8140, %v8170
    %v8207 = vmul.f32 %v8141, %v8170
    %v8208 = vmul.f32 %v8142, %v8170
    %v8209 = vmul.f32 %v8143, %v8170
    %v8210 = vmul.f32 %v8144, %v8170
    %v8211 = vmul.f32 %v8145, %v8170
    %v8212 = vmul.f32 %v8146, %v8170
    %v8213 = vmul.f32 %v8147, %v8170
    %v8214 = vmul.f32 %v8148, %v8170
    %v8215 = vmul.f32 %v8149, %v8170
    %v8216 = vmul.f32 %v8150, %v8170
    %v8217 = vmul.f32 %v8151, %v8170
    %v8218 = vmul.f32 %v8152, %v8170
    %v8219 = vmul.f32 %v8153, %v8170
    %v8220 = vmul.f32 %v8154, %v8170
    %v8221 = vmul.f32 %v8155, %v8170
    %v8222 = vmul.f32 %v8156, %v8170
    %v8223 = vmul.f32 %v8157, %v8170
    %v8224 = vmul.f32 %v8158, %v8170
    %v8225 = vmul.f32 %v8159, %v8170
    %v8226 = vmul.f32 %v8160, %v8170
    %v8227 = vmul.f32 %v8161, %v8170
    %v8228 = vmul.f32 %v8162, %v8170
    %v8229 = vmul.f32 %v8163, %v8170
    %v8230 = vmul.f32 %v8164, %v8170
    %v8231 = vmul.f32 %v8165, %v8170
    %v8232 = vmul.f32 %v8166, %v8170
    %v8233 = vmul.f32 %v8167, %v8170
    %v8234 = vmul.f32 %v8168, %v8170
    %v8237 = vunpack.c.l.s4 1966171168
    %v8238 = vunpack.c.0.s8 %v8237
    %v8239 = vlaneseq
    %v8240 = vshrl.u32 %v8239, 7
    %v8241 = vsub.s32 %v8238, %v8240
    %v8242 = vrot.slane %v7896, %v8241
    %v8243 = vcombine.high %v8242, %v8242
    %v8245 = vunpack.c.l.s4 1966171168
    %v8246 = vunpack.c.0.s8 %v8245
    %v8247 = vlaneseq
    %v8248 = vshrl.u32 %v8247, 7
    %v8249 = vsub.s32 %v8246, %v8248
    %v8250 = vrot.slane %v8242, %v8249
    %v8252 = vunpack.c.l.s4 1966171168
    %v8253 = vunpack.c.0.s8 %v8252
    %v8254 = vlaneseq
    %v8255 = vshrl.u32 %v8254, 7
    %v8256 = vsub.s32 %v8253, %v8255
    %v8257 = vrot.slane %v8243, %v8256
    %v8258 = vlaneseq
    %v8259 = vshrl.u32 %v8258, 7
    %v8260 = vsub.s32 0, %v8259
    %v8261 = vrot.slane %v8250, %v8260
    %v8262 = vlaneseq
    %v8263 = vshrl.u32 %v8262, 7
    %v8264 = vsub.s32 0, %v8263
    %v8265 = vrot.slane %v8257, %v8264
    %v8268 = vmul.f32 %v8261, %v8171
    %v8269 = vmul.f32 %v8261, %v8172
    %v8270 = vmul.f32 %v8261, %v8173
    %v8271 = vmul.f32 %v8261, %v8174
    %v8272 = vmul.f32 %v8261, %v8175
    %v8273 = vmul.f32 %v8261, %v8176
    %v8274 = vmul.f32 %v8261, %v8177
    %v8275 = vmul.f32 %v8261, %v8178
    %v8276 = vmul.f32 %v8261, %v8179
    %v8277 = vmul.f32 %v8261, %v8180
    %v8278 = vmul.f32 %v8261, %v8181
    %v8279 = vmul.f32 %v8261, %v8182
    %v8280 = vmul.f32 %v8261, %v8183
    %v8281 = vmul.f32 %v8261, %v8184
    %v8282 = vmul.f32 %v8261, %v8185
    %v8283 = vmul.f32 %v8261, %v8186
    %v8284 = vmul.f32 %v8261, %v8187
    %v8285 = vmul.f32 %v8261, %v8188
    %v8286 = vmul.f32 %v8261, %v8189
    %v8287 = vmul.f32 %v8261, %v8190
    %v8288 = vmul.f32 %v8261, %v8191
    %v8289 = vmul.f32 %v8261, %v8192
    %v8290 = vmul.f32 %v8261, %v8193
    %v8291 = vmul.f32 %v8261, %v8194
    %v8292 = vmul.f32 %v8261, %v8195
    %v8293 = vmul.f32 %v8261, %v8196
    %v8294 = vmul.f32 %v8261, %v8197
    %v8295 = vmul.f32 %v8261, %v8198
    %v8296 = vmul.f32 %v8261, %v8199
    %v8297 = vmul.f32 %v8261, %v8200
    %v8298 = vmul.f32 %v8261, %v8201
    %v8299 = vmul.f32 %v8261, %v8202
    %v8300 = vmul.f32 %v8265, %v8203
    %v8301 = vmul.f32 %v8265, %v8204
    %v8302 = vmul.f32 %v8265, %v8205
    %v8303 = vmul.f32 %v8265, %v8206
    %v8304 = vmul.f32 %v8265, %v8207
    %v8305 = vmul.f32 %v8265, %v8208
    %v8306 = vmul.f32 %v8265, %v8209
    %v8307 = vmul.f32 %v8265, %v8210
    %v8308 = vmul.f32 %v8265, %v8211
    %v8309 = vmul.f32 %v8265, %v8212
    %v8310 = vmul.f32 %v8265, %v8213
    %v8311 = vmul.f32 %v8265, %v8214
    %v8312 = vmul.f32 %v8265, %v8215
    %v8313 = vmul.f32 %v8265, %v8216
    %v8314 = vmul.f32 %v8265, %v8217
    %v8315 = vmul.f32 %v8265, %v8218
    %v8316 = vmul.f32 %v8265, %v8219
    %v8317 = vmul.f32 %v8265, %v8220
    %v8318 = vmul.f32 %v8265, %v8221
    %v8319 = vmul.f32 %v8265, %v8222
    %v8320 = vmul.f32 %v8265, %v8223
    %v8321 = vmul.f32 %v8265, %v8224
    %v8322 = vmul.f32 %v8265, %v8225
    %v8323 = vmul.f32 %v8265, %v8226
    %v8324 = vmul.f32 %v8265, %v8227
    %v8325 = vmul.f32 %v8265, %v8228
    %v8326 = vmul.f32 %v8265, %v8229
    %v8327 = vmul.f32 %v8265, %v8230
    %v8328 = vmul.f32 %v8265, %v8231
    %v8329 = vmul.f32 %v8265, %v8232
    %v8330 = vmul.f32 %v8265, %v8233
    %v8331 = vmul.f32 %v8265, %v8234
    %v8334 = vunpack.c.l.s4 1966171168
    %v8335 = vunpack.c.0.s8 %v8334
    %v8336 = vlaneseq
    %v8337 = vshrl.u32 %v8336, 7
    %v8338 = vsub.s32 %v8335, %v8337
    %v8339 = vrot.slane %v7897, %v8338
    %v8340 = vcombine.high %v8339, %v8339
    %v8342 = vunpack.c.l.s4 1966171168
    %v8343 = vunpack.c.0.s8 %v8342
    %v8344 = vlaneseq
    %v8345 = vshrl.u32 %v8344, 7
    %v8346 = vsub.s32 %v8343, %v8345
    %v8347 = vrot.slane %v8339, %v8346
    %v8349 = vunpack.c.l.s4 1966171168
    %v8350 = vunpack.c.0.s8 %v8349
    %v8351 = vlaneseq
    %v8352 = vshrl.u32 %v8351, 7
    %v8353 = vsub.s32 %v8350, %v8352
    %v8354 = vrot.slane %v8340, %v8353
    %v8355 = vlaneseq
    %v8356 = vshrl.u32 %v8355, 7
    %v8357 = vsub.s32 0, %v8356
    %v8358 = vrot.slane %v8347, %v8357
    %v8359 = vlaneseq
    %v8360 = vshrl.u32 %v8359, 7
    %v8361 = vsub.s32 0, %v8360
    %v8362 = vrot.slane %v8354, %v8361
    %v8365 = vadd.f32 %v8268, %v8358
    %v8366 = vadd.f32 %v8269, %v8358
    %v8367 = vadd.f32 %v8270, %v8358
    %v8368 = vadd.f32 %v8271, %v8358
    %v8369 = vadd.f32 %v8272, %v8358
    %v8370 = vadd.f32 %v8273, %v8358
    %v8371 = vadd.f32 %v8274, %v8358
    %v8372 = vadd.f32 %v8275, %v8358
    %v8373 = vadd.f32 %v8276, %v8358
    %v8374 = vadd.f32 %v8277, %v8358
    %v8375 = vadd.f32 %v8278, %v8358
    %v8376 = vadd.f32 %v8279, %v8358
    %v8377 = vadd.f32 %v8280, %v8358
    %v8378 = vadd.f32 %v8281, %v8358
    %v8379 = vadd.f32 %v8282, %v8358
    %v8380 = vadd.f32 %v8283, %v8358
    %v8381 = vadd.f32 %v8284, %v8358
    %v8382 = vadd.f32 %v8285, %v8358
    %v8383 = vadd.f32 %v8286, %v8358
    %v8384 = vadd.f32 %v8287, %v8358
    %v8385 = vadd.f32 %v8288, %v8358
    %v8386 = vadd.f32 %v8289, %v8358
    %v8387 = vadd.f32 %v8290, %v8358
    %v8388 = vadd.f32 %v8291, %v8358
    %v8389 = vadd.f32 %v8292, %v8358
    %v8390 = vadd.f32 %v8293, %v8358
    %v8391 = vadd.f32 %v8294, %v8358
    %v8392 = vadd.f32 %v8295, %v8358
    %v8393 = vadd.f32 %v8296, %v8358
    %v8394 = vadd.f32 %v8297, %v8358
    %v8395 = vadd.f32 %v8298, %v8358
    %v8396 = vadd.f32 %v8299, %v8358
    %v8397 = vadd.f32 %v8300, %v8362
    %v8398 = vadd.f32 %v8301, %v8362
    %v8399 = vadd.f32 %v8302, %v8362
    %v8400 = vadd.f32 %v8303, %v8362
    %v8401 = vadd.f32 %v8304, %v8362
    %v8402 = vadd.f32 %v8305, %v8362
    %v8403 = vadd.f32 %v8306, %v8362
    %v8404 = vadd.f32 %v8307, %v8362
    %v8405 = vadd.f32 %v8308, %v8362
    %v8406 = vadd.f32 %v8309, %v8362
    %v8407 = vadd.f32 %v8310, %v8362
    %v8408 = vadd.f32 %v8311, %v8362
    %v8409 = vadd.f32 %v8312, %v8362
    %v8410 = vadd.f32 %v8313, %v8362
    %v8411 = vadd.f32 %v8314, %v8362
    %v8412 = vadd.f32 %v8315, %v8362
    %v8413 = vadd.f32 %v8316, %v8362
    %v8414 = vadd.f32 %v8317, %v8362
    %v8415 = vadd.f32 %v8318, %v8362
    %v8416 = vadd.f32 %v8319, %v8362
    %v8417 = vadd.f32 %v8320, %v8362
    %v8418 = vadd.f32 %v8321, %v8362
    %v8419 = vadd.f32 %v8322, %v8362
    %v8420 = vadd.f32 %v8323, %v8362
    %v8421 = vadd.f32 %v8324, %v8362
    %v8422 = vadd.f32 %v8325, %v8362
    %v8423 = vadd.f32 %v8326, %v8362
    %v8424 = vadd.f32 %v8327, %v8362
    %v8425 = vadd.f32 %v8328, %v8362
    %v8426 = vadd.f32 %v8329, %v8362
    %v8427 = vadd.f32 %v8330, %v8362
    %v8428 = vadd.f32 %v8331, %v8362
    %vm8429 = vcmp.ge.f32.partialorder %v8365, 0.0
    %vm8430 = vcmp.ge.f32.partialorder %v8366, 0.0
    %vm8431 = vcmp.ge.f32.partialorder %v8367, 0.0
    %vm8432 = vcmp.ge.f32.partialorder %v8368, 0.0
    %vm8433 = vcmp.ge.f32.partialorder %v8369, 0.0
    %vm8434 = vcmp.ge.f32.partialorder %v8370, 0.0
    %vm8435 = vcmp.ge.f32.partialorder %v8371, 0.0
    %vm8436 = vcmp.ge.f32.partialorder %v8372, 0.0
    %vm8437 = vcmp.ge.f32.partialorder %v8373, 0.0
    %vm8438 = vcmp.ge.f32.partialorder %v8374, 0.0
    %vm8439 = vcmp.ge.f32.partialorder %v8375, 0.0
    %vm8440 = vcmp.ge.f32.partialorder %v8376, 0.0
    %vm8441 = vcmp.ge.f32.partialorder %v8377, 0.0
    %vm8442 = vcmp.ge.f32.partialorder %v8378, 0.0
    %vm8443 = vcmp.ge.f32.partialorder %v8379, 0.0
    %vm8444 = vcmp.ge.f32.partialorder %v8380, 0.0
    %vm8445 = vcmp.ge.f32.partialorder %v8381, 0.0
    %vm8446 = vcmp.ge.f32.partialorder %v8382, 0.0
    %vm8447 = vcmp.ge.f32.partialorder %v8383, 0.0
    %vm8448 = vcmp.ge.f32.partialorder %v8384, 0.0
    %vm8449 = vcmp.ge.f32.partialorder %v8385, 0.0
    %vm8450 = vcmp.ge.f32.partialorder %v8386, 0.0
    %vm8451 = vcmp.ge.f32.partialorder %v8387, 0.0
    %vm8452 = vcmp.ge.f32.partialorder %v8388, 0.0
    %vm8453 = vcmp.ge.f32.partialorder %v8389, 0.0
    %vm8454 = vcmp.ge.f32.partialorder %v8390, 0.0
    %vm8455 = vcmp.ge.f32.partialorder %v8391, 0.0
    %vm8456 = vcmp.ge.f32.partialorder %v8392, 0.0
    %vm8457 = vcmp.ge.f32.partialorder %v8393, 0.0
    %vm8458 = vcmp.ge.f32.partialorder %v8394, 0.0
    %vm8459 = vcmp.ge.f32.partialorder %v8395, 0.0
    %vm8460 = vcmp.ge.f32.partialorder %v8396, 0.0
    %vm8461 = vcmp.ge.f32.partialorder %v8397, 0.0
    %vm8462 = vcmp.ge.f32.partialorder %v8398, 0.0
    %vm8463 = vcmp.ge.f32.partialorder %v8399, 0.0
    %vm8464 = vcmp.ge.f32.partialorder %v8400, 0.0
    %vm8465 = vcmp.ge.f32.partialorder %v8401, 0.0
    %vm8466 = vcmp.ge.f32.partialorder %v8402, 0.0
    %vm8467 = vcmp.ge.f32.partialorder %v8403, 0.0
    %vm8468 = vcmp.ge.f32.partialorder %v8404, 0.0
    %vm8469 = vcmp.ge.f32.partialorder %v8405, 0.0
    %vm8470 = vcmp.ge.f32.partialorder %v8406, 0.0
    %vm8471 = vcmp.ge.f32.partialorder %v8407, 0.0
    %vm8472 = vcmp.ge.f32.partialorder %v8408, 0.0
    %vm8473 = vcmp.ge.f32.partialorder %v8409, 0.0
    %vm8474 = vcmp.ge.f32.partialorder %v8410, 0.0
    %vm8475 = vcmp.ge.f32.partialorder %v8411, 0.0
    %vm8476 = vcmp.ge.f32.partialorder %v8412, 0.0
    %vm8477 = vcmp.ge.f32.partialorder %v8413, 0.0
    %vm8478 = vcmp.ge.f32.partialorder %v8414, 0.0
    %vm8479 = vcmp.ge.f32.partialorder %v8415, 0.0
    %vm8480 = vcmp.ge.f32.partialorder %v8416, 0.0
    %vm8481 = vcmp.ge.f32.partialorder %v8417, 0.0
    %vm8482 = vcmp.ge.f32.partialorder %v8418, 0.0
    %vm8483 = vcmp.ge.f32.partialorder %v8419, 0.0
    %vm8484 = vcmp.ge.f32.partialorder %v8420, 0.0
    %vm8485 = vcmp.ge.f32.partialorder %v8421, 0.0
    %vm8486 = vcmp.ge.f32.partialorder %v8422, 0.0
    %vm8487 = vcmp.ge.f32.partialorder %v8423, 0.0
    %vm8488 = vcmp.ge.f32.partialorder %v8424, 0.0
    %vm8489 = vcmp.ge.f32.partialorder %v8425, 0.0
    %vm8490 = vcmp.ge.f32.partialorder %v8426, 0.0
    %vm8491 = vcmp.ge.f32.partialorder %v8427, 0.0
    %vm8492 = vcmp.ge.f32.partialorder %v8428, 0.0
    %v8493 = vmul.f32 %v8365, 0.2
    %v8494 = vmul.f32 %v8366, 0.2
    %v8495 = vmul.f32 %v8367, 0.2
    %v8496 = vmul.f32 %v8368, 0.2
    %v8497 = vmul.f32 %v8369, 0.2
    %v8498 = vmul.f32 %v8370, 0.2
    %v8499 = vmul.f32 %v8371, 0.2
    %v8500 = vmul.f32 %v8372, 0.2
    %v8501 = vmul.f32 %v8373, 0.2
    %v8502 = vmul.f32 %v8374, 0.2
    %v8503 = vmul.f32 %v8375, 0.2
    %v8504 = vmul.f32 %v8376, 0.2
    %v8505 = vmul.f32 %v8377, 0.2
    %v8506 = vmul.f32 %v8378, 0.2
    %v8507 = vmul.f32 %v8379, 0.2
    %v8508 = vmul.f32 %v8380, 0.2
    %v8509 = vmul.f32 %v8381, 0.2
    %v8510 = vmul.f32 %v8382, 0.2
    %v8511 = vmul.f32 %v8383, 0.2
    %v8512 = vmul.f32 %v8384, 0.2
    %v8513 = vmul.f32 %v8385, 0.2
    %v8514 = vmul.f32 %v8386, 0.2
    %v8515 = vmul.f32 %v8387, 0.2
    %v8516 = vmul.f32 %v8388, 0.2
    %v8517 = vmul.f32 %v8389, 0.2
    %v8518 = vmul.f32 %v8390, 0.2
    %v8519 = vmul.f32 %v8391, 0.2
    %v8520 = vmul.f32 %v8392, 0.2
    %v8521 = vmul.f32 %v8393, 0.2
    %v8522 = vmul.f32 %v8394, 0.2
    %v8523 = vmul.f32 %v8395, 0.2
    %v8524 = vmul.f32 %v8396, 0.2
    %v8525 = vmul.f32 %v8397, 0.2
    %v8526 = vmul.f32 %v8398, 0.2
    %v8527 = vmul.f32 %v8399, 0.2
    %v8528 = vmul.f32 %v8400, 0.2
    %v8529 = vmul.f32 %v8401, 0.2
    %v8530 = vmul.f32 %v8402, 0.2
    %v8531 = vmul.f32 %v8403, 0.2
    %v8532 = vmul.f32 %v8404, 0.2
    %v8533 = vmul.f32 %v8405, 0.2
    %v8534 = vmul.f32 %v8406, 0.2
    %v8535 = vmul.f32 %v8407, 0.2
    %v8536 = vmul.f32 %v8408, 0.2
    %v8537 = vmul.f32 %v8409, 0.2
    %v8538 = vmul.f32 %v8410, 0.2
    %v8539 = vmul.f32 %v8411, 0.2
    %v8540 = vmul.f32 %v8412, 0.2
    %v8541 = vmul.f32 %v8413, 0.2
    %v8542 = vmul.f32 %v8414, 0.2
    %v8543 = vmul.f32 %v8415, 0.2
    %v8544 = vmul.f32 %v8416, 0.2
    %v8545 = vmul.f32 %v8417, 0.2
    %v8546 = vmul.f32 %v8418, 0.2
    %v8547 = vmul.f32 %v8419, 0.2
    %v8548 = vmul.f32 %v8420, 0.2
    %v8549 = vmul.f32 %v8421, 0.2
    %v8550 = vmul.f32 %v8422, 0.2
    %v8551 = vmul.f32 %v8423, 0.2
    %v8552 = vmul.f32 %v8424, 0.2
    %v8553 = vmul.f32 %v8425, 0.2
    %v8554 = vmul.f32 %v8426, 0.2
    %v8555 = vmul.f32 %v8427, 0.2
    %v8556 = vmul.f32 %v8428, 0.2
    %v8557 = vsel %vm8429, %v8365, %v8493
    %v8558 = vsel %vm8430, %v8366, %v8494
    %v8559 = vsel %vm8431, %v8367, %v8495
    %v8560 = vsel %vm8432, %v8368, %v8496
    %v8561 = vsel %vm8433, %v8369, %v8497
    %v8562 = vsel %vm8434, %v8370, %v8498
    %v8563 = vsel %vm8435, %v8371, %v8499
    %v8564 = vsel %vm8436, %v8372, %v8500
    %v8565 = vsel %vm8437, %v8373, %v8501
    %v8566 = vsel %vm8438, %v8374, %v8502
    %v8567 = vsel %vm8439, %v8375, %v8503
    %v8568 = vsel %vm8440, %v8376, %v8504
    %v8569 = vsel %vm8441, %v8377, %v8505
    %v8570 = vsel %vm8442, %v8378, %v8506
    %v8571 = vsel %vm8443, %v8379, %v8507
    %v8572 = vsel %vm8444, %v8380, %v8508
    %v8573 = vsel %vm8445, %v8381, %v8509
    %v8574 = vsel %vm8446, %v8382, %v8510
    %v8575 = vsel %vm8447, %v8383, %v8511
    %v8576 = vsel %vm8448, %v8384, %v8512
    %v8577 = vsel %vm8449, %v8385, %v8513
    %v8578 = vsel %vm8450, %v8386, %v8514
    %v8579 = vsel %vm8451, %v8387, %v8515
    %v8580 = vsel %vm8452, %v8388, %v8516
    %v8581 = vsel %vm8453, %v8389, %v8517
    %v8582 = vsel %vm8454, %v8390, %v8518
    %v8583 = vsel %vm8455, %v8391, %v8519
    %v8584 = vsel %vm8456, %v8392, %v8520
    %v8585 = vsel %vm8457, %v8393, %v8521
    %v8586 = vsel %vm8458, %v8394, %v8522
    %v8587 = vsel %vm8459, %v8395, %v8523
    %v8588 = vsel %vm8460, %v8396, %v8524
    %v8589 = vsel %vm8461, %v8397, %v8525
    %v8590 = vsel %vm8462, %v8398, %v8526
    %v8591 = vsel %vm8463, %v8399, %v8527
    %v8592 = vsel %vm8464, %v8400, %v8528
    %v8593 = vsel %vm8465, %v8401, %v8529
    %v8594 = vsel %vm8466, %v8402, %v8530
    %v8595 = vsel %vm8467, %v8403, %v8531
    %v8596 = vsel %vm8468, %v8404, %v8532
    %v8597 = vsel %vm8469, %v8405, %v8533
    %v8598 = vsel %vm8470, %v8406, %v8534
    %v8599 = vsel %vm8471, %v8407, %v8535
    %v8600 = vsel %vm8472, %v8408, %v8536
    %v8601 = vsel %vm8473, %v8409, %v8537
    %v8602 = vsel %vm8474, %v8410, %v8538
    %v8603 = vsel %vm8475, %v8411, %v8539
    %v8604 = vsel %vm8476, %v8412, %v8540
    %v8605 = vsel %vm8477, %v8413, %v8541
    %v8606 = vsel %vm8478, %v8414, %v8542
    %v8607 = vsel %vm8479, %v8415, %v8543
    %v8608 = vsel %vm8480, %v8416, %v8544
    %v8609 = vsel %vm8481, %v8417, %v8545
    %v8610 = vsel %vm8482, %v8418, %v8546
    %v8611 = vsel %vm8483, %v8419, %v8547
    %v8612 = vsel %vm8484, %v8420, %v8548
    %v8613 = vsel %vm8485, %v8421, %v8549
    %v8614 = vsel %vm8486, %v8422, %v8550
    %v8615 = vsel %vm8487, %v8423, %v8551
    %v8616 = vsel %vm8488, %v8424, %v8552
    %v8617 = vsel %vm8489, %v8425, %v8553
    %v8618 = vsel %vm8490, %v8426, %v8554
    %v8619 = vsel %vm8491, %v8427, %v8555
    %v8620 = vsel %vm8492, %v8428, %v8556
    %v8621 = vrot.slane %v8557, 7
    %v8622 = vrot.slane %v8558, 7
    %v8623 = vrot.slane %v8559, 7
    %v8624 = vrot.slane %v8560, 7
    %v8625 = vrot.slane %v8561, 7
    %v8626 = vrot.slane %v8562, 7
    %v8627 = vrot.slane %v8563, 7
    %v8628 = vrot.slane %v8564, 7
    %v8629 = vrot.slane %v8565, 7
    %v8630 = vrot.slane %v8566, 7
    %v8631 = vrot.slane %v8567, 7
    %v8632 = vrot.slane %v8568, 7
    %v8633 = vrot.slane %v8569, 7
    %v8634 = vrot.slane %v8570, 7
    %v8635 = vrot.slane %v8571, 7
    %v8636 = vrot.slane %v8572, 7
    %v8637 = vrot.slane %v8573, 7
    %v8638 = vrot.slane %v8574, 7
    %v8639 = vrot.slane %v8575, 7
    %v8640 = vrot.slane %v8576, 7
    %v8641 = vrot.slane %v8577, 7
    %v8642 = vrot.slane %v8578, 7
    %v8643 = vrot.slane %v8579, 7
    %v8644 = vrot.slane %v8580, 7
    %v8645 = vrot.slane %v8581, 7
    %v8646 = vrot.slane %v8582, 7
    %v8647 = vrot.slane %v8583, 7
    %v8648 = vrot.slane %v8584, 7
    %v8649 = vrot.slane %v8585, 7
    %v8650 = vrot.slane %v8586, 7
    %v8651 = vrot.slane %v8587, 7
    %v8652 = vrot.slane %v8588, 7
    %v8653 = vrot.slane %v8589, 7
    %v8654 = vrot.slane %v8590, 7
    %v8655 = vrot.slane %v8591, 7
    %v8656 = vrot.slane %v8592, 7
    %v8657 = vrot.slane %v8593, 7
    %v8658 = vrot.slane %v8594, 7
    %v8659 = vrot.slane %v8595, 7
    %v8660 = vrot.slane %v8596, 7
    %v8661 = vrot.slane %v8597, 7
    %v8662 = vrot.slane %v8598, 7
    %v8663 = vrot.slane %v8599, 7
    %v8664 = vrot.slane %v8600, 7
    %v8665 = vrot.slane %v8601, 7
    %v8666 = vrot.slane %v8602, 7
    %v8667 = vrot.slane %v8603, 7
    %v8668 = vrot.slane %v8604, 7
    %v8669 = vrot.slane %v8605, 7
    %v8670 = vrot.slane %v8606, 7
    %v8671 = vrot.slane %v8607, 7
    %v8672 = vrot.slane %v8608, 7
    %v8673 = vrot.slane %v8609, 7
    %v8674 = vrot.slane %v8610, 7
    %v8675 = vrot.slane %v8611, 7
    %v8676 = vrot.slane %v8612, 7
    %v8677 = vrot.slane %v8613, 7
    %v8678 = vrot.slane %v8614, 7
    %v8679 = vrot.slane %v8615, 7
    %v8680 = vrot.slane %v8616, 7
    %v8681 = vrot.slane %v8617, 7
    %v8682 = vrot.slane %v8618, 7
    %v8683 = vrot.slane %v8619, 7
    %v8684 = vrot.slane %v8620, 7
    %v8685 = vsel %vm1416, %v8684, 0.0
    %v8686 = vsel %vm1416, %v8683, %v8684
    %v8687 = vsel %vm1416, %v8682, %v8683
    %v8688 = vsel %vm1416, %v8681, %v8682
    %v8689 = vsel %vm1416, %v8680, %v8681
    %v8690 = vsel %vm1416, %v8679, %v8680
    %v8691 = vsel %vm1416, %v8678, %v8679
    %v8692 = vsel %vm1416, %v8677, %v8678
    %v8693 = vsel %vm1416, %v8676, %v8677
    %v8694 = vsel %vm1416, %v8675, %v8676
    %v8695 = vsel %vm1416, %v8674, %v8675
    %v8696 = vsel %vm1416, %v8673, %v8674
    %v8697 = vsel %vm1416, %v8672, %v8673
    %v8698 = vsel %vm1416, %v8671, %v8672
    %v8699 = vsel %vm1416, %v8670, %v8671
    %v8700 = vsel %vm1416, %v8669, %v8670
    %v8701 = vsel %vm1416, %v8668, %v8669
    %v8702 = vsel %vm1416, %v8667, %v8668
    %v8703 = vsel %vm1416, %v8666, %v8667
    %v8704 = vsel %vm1416, %v8665, %v8666
    %v8705 = vsel %vm1416, %v8664, %v8665
    %v8706 = vsel %vm1416, %v8663, %v8664
    %v8707 = vsel %vm1416, %v8662, %v8663
    %v8708 = vsel %vm1416, %v8661, %v8662
    %v8709 = vsel %vm1416, %v8660, %v8661
    %v8710 = vsel %vm1416, %v8659, %v8660
    %v8711 = vsel %vm1416, %v8658, %v8659
    %v8712 = vsel %vm1416, %v8657, %v8658
    %v8713 = vsel %vm1416, %v8656, %v8657
    %v8714 = vsel %vm1416, %v8655, %v8656
    %v8715 = vsel %vm1416, %v8654, %v8655
    %v8716 = vsel %vm1416, %v8653, %v8654
    %v8717 = vsel %vm1416, 0.0, %v8653
    %v8718 = vsel %vm1416, %v8652, 0.0
    %v8719 = vsel %vm1416, %v8651, %v8652
    %v8720 = vsel %vm1416, %v8650, %v8651
    %v8721 = vsel %vm1416, %v8649, %v8650
    %v8722 = vsel %vm1416, %v8648, %v8649
    %v8723 = vsel %vm1416, %v8647, %v8648
    %v8724 = vsel %vm1416, %v8646, %v8647
    %v8725 = vsel %vm1416, %v8645, %v8646
    %v8726 = vsel %vm1416, %v8644, %v8645
    %v8727 = vsel %vm1416, %v8643, %v8644
    %v8728 = vsel %vm1416, %v8642, %v8643
    %v8729 = vsel %vm1416, %v8641, %v8642
    %v8730 = vsel %vm1416, %v8640, %v8641
    %v8731 = vsel %vm1416, %v8639, %v8640
    %v8732 = vsel %vm1416, %v8638, %v8639
    %v8733 = vsel %vm1416, %v8637, %v8638
    %v8734 = vsel %vm1416, %v8636, %v8637
    %v8735 = vsel %vm1416, %v8635, %v8636
    %v8736 = vsel %vm1416, %v8634, %v8635
    %v8737 = vsel %vm1416, %v8633, %v8634
    %v8738 = vsel %vm1416, %v8632, %v8633
    %v8739 = vsel %vm1416, %v8631, %v8632
    %v8740 = vsel %vm1416, %v8630, %v8631
    %v8741 = vsel %vm1416, %v8629, %v8630
    %v8742 = vsel %vm1416, %v8628, %v8629
    %v8743 = vsel %vm1416, %v8627, %v8628
    %v8744 = vsel %vm1416, %v8626, %v8627
    %v8745 = vsel %vm1416, %v8625, %v8626
    %v8746 = vsel %vm1416, %v8624, %v8625
    %v8747 = vsel %vm1416, %v8623, %v8624
    %v8748 = vsel %vm1416, %v8622, %v8623
    %v8749 = vsel %vm1416, %v8621, %v8622
    %v8750 = vsel %vm1416, 0.0, %v8621
    %v8751 = vsel %vm1437, %v8750, 0.0
    %v8752 = vsel %vm5171, %v8749, 0.0
    %v8753 = vsel %vm1437, %v8748, 0.0
    %v8754 = vsel %vm5171, %v8747, 0.0
    %v8755 = vsel %vm1437, %v8746, 0.0
    %v8756 = vsel %vm5171, %v8745, 0.0
    %v8757 = vsel %vm1437, %v8744, 0.0
    %v8758 = vsel %vm5171, %v8743, 0.0
    %v8759 = vsel %vm1437, %v8742, 0.0
    %v8760 = vsel %vm5171, %v8741, 0.0
    %v8761 = vsel %vm1437, %v8740, 0.0
    %v8762 = vsel %vm5171, %v8739, 0.0
    %v8763 = vsel %vm1437, %v8738, 0.0
    %v8764 = vsel %vm5171, %v8737, 0.0
    %v8765 = vsel %vm1437, %v8736, 0.0
    %v8766 = vsel %vm5171, %v8735, 0.0
    %v8767 = vsel %vm1437, %v8734, 0.0
    %v8768 = vsel %vm5171, %v8733, 0.0
    %v8769 = vsel %vm1437, %v8732, 0.0
    %v8770 = vsel %vm5171, %v8731, 0.0
    %v8771 = vsel %vm1437, %v8730, 0.0
    %v8772 = vsel %vm5171, %v8729, 0.0
    %v8773 = vsel %vm1437, %v8728, 0.0
    %v8774 = vsel %vm5171, %v8727, 0.0
    %v8775 = vsel %vm1437, %v8726, 0.0
    %v8776 = vsel %vm5171, %v8725, 0.0
    %v8777 = vsel %vm1437, %v8724, 0.0
    %v8778 = vsel %vm5171, %v8723, 0.0
    %v8779 = vsel %vm1437, %v8722, 0.0
    %v8780 = vsel %vm5171, %v8721, 0.0
    %v8781 = vsel %vm1437, %v8720, 0.0
    %v8782 = vsel %vm5171, %v8719, 0.0
    %v8783 = vsel %vm1437, %v8718, 0.0
    %v8784 = vsel %vm1437, %v8717, 0.0
    %v8785 = vsel %vm5171, %v8716, 0.0
    %v8786 = vsel %vm1437, %v8715, 0.0
    %v8787 = vsel %vm5171, %v8714, 0.0
    %v8788 = vsel %vm1437, %v8713, 0.0
    %v8789 = vsel %vm5171, %v8712, 0.0
    %v8790 = vsel %vm1437, %v8711, 0.0
    %v8791 = vsel %vm5171, %v8710, 0.0
    %v8792 = vsel %vm1437, %v8709, 0.0
    %v8793 = vsel %vm5171, %v8708, 0.0
    %v8794 = vsel %vm1437, %v8707, 0.0
    %v8795 = vsel %vm5171, %v8706, 0.0
    %v8796 = vsel %vm1437, %v8705, 0.0
    %v8797 = vsel %vm5171, %v8704, 0.0
    %v8798 = vsel %vm1437, %v8703, 0.0
    %v8799 = vsel %vm5171, %v8702, 0.0
    %v8800 = vsel %vm1437, %v8701, 0.0
    %v8801 = vsel %vm5171, %v8700, 0.0
    %v8802 = vsel %vm1437, %v8699, 0.0
    %v8803 = vsel %vm5171, %v8698, 0.0
    %v8804 = vsel %vm1437, %v8697, 0.0
    %v8805 = vsel %vm5171, %v8696, 0.0
    %v8806 = vsel %vm1437, %v8695, 0.0
    %v8807 = vsel %vm5171, %v8694, 0.0
    %v8808 = vsel %vm1437, %v8693, 0.0
    %v8809 = vsel %vm5171, %v8692, 0.0
    %v8810 = vsel %vm1437, %v8691, 0.0
    %v8811 = vsel %vm5171, %v8690, 0.0
    %v8812 = vsel %vm1437, %v8689, 0.0
    %v8813 = vsel %vm5171, %v8688, 0.0
    %v8814 = vsel %vm1437, %v8687, 0.0
    %v8815 = vsel %vm5171, %v8686, 0.0
    %v8816 = vsel %vm1437, %v8685, 0.0
    %v8817 = vpack.c.bf16 %v8752, %v8751
    %v8818 = vpack.c.bf16 %v8754, %v8753
    %v8819 = vpack.c.bf16 %v8756, %v8755
    %v8820 = vpack.c.bf16 %v8758, %v8757
    %v8821 = vpack.c.bf16 %v8760, %v8759
    %v8822 = vpack.c.bf16 %v8762, %v8761
    %v8823 = vpack.c.bf16 %v8764, %v8763
    %v8824 = vpack.c.bf16 %v8766, %v8765
    %v8825 = vpack.c.bf16 %v8768, %v8767
    %v8826 = vpack.c.bf16 %v8770, %v8769
    %v8827 = vpack.c.bf16 %v8772, %v8771
    %v8828 = vpack.c.bf16 %v8774, %v8773
    %v8829 = vpack.c.bf16 %v8776, %v8775
    %v8830 = vpack.c.bf16 %v8778, %v8777
    %v8831 = vpack.c.bf16 %v8780, %v8779
    %v8832 = vpack.c.bf16 %v8785, %v8784
    %v8833 = vpack.c.bf16 %v8787, %v8786
    %v8834 = vpack.c.bf16 %v8789, %v8788
    %v8835 = vpack.c.bf16 %v8791, %v8790
    %v8836 = vpack.c.bf16 %v8793, %v8792
    %v8837 = vpack.c.bf16 %v8795, %v8794
    %v8838 = vpack.c.bf16 %v8797, %v8796
    %v8839 = vpack.c.bf16 %v8799, %v8798
    %v8840 = vpack.c.bf16 %v8801, %v8800
    %v8841 = vpack.c.bf16 %v8803, %v8802
    %v8842 = vpack.c.bf16 %v8805, %v8804
    %v8843 = vpack.c.bf16 %v8807, %v8806
    %v8844 = vpack.c.bf16 %v8809, %v8808
    %v8845 = vpack.c.bf16 %v8811, %v8810
    %v8846 = vpack.c.bf16 %v8813, %v8812
    %v8847 = vpack.c.bf16 %v8782, %v8781
    %v8848 = vpack.c.bf16 %v8815, %v8814
    %v8849 = vpack.c.bf16 %v5172, %v8783
    %v8850 = vpack.c.bf16 %v5172, %v8816
    %v8851 = vld [vmem:[#allocation7] sm:$0xf]
    %v8852 = vld [vmem:[#allocation7 + $0x4] sm:$0xf]
    %v8853 = vld [vmem:[#allocation7 + $0x8] sm:$0xf]
    %v8854 = vld [vmem:[#allocation7 + $0xc] sm:$0xf]
    %v8855 = vld [vmem:[#allocation7 + $0x10] sm:$0xf]
    %v8856 = vld [vmem:[#allocation7 + $0x14] sm:$0xf]
    %v8857 = vld [vmem:[#allocation7 + $0x18] sm:$0xf]
    %v8858 = vld [vmem:[#allocation7 + $0x1c] sm:$0xf]
    %v8859 = vld [vmem:[#allocation7 + $0x20] sm:$0xf]
    %v8860 = vld [vmem:[#allocation7 + $0x24] sm:$0xf]
    %v8861 = vld [vmem:[#allocation7 + $0x28] sm:$0xf]
    %v8862 = vld [vmem:[#allocation7 + $0x2c] sm:$0xf]
    %v8863 = vld [vmem:[#allocation7 + $0x30] sm:$0xf]
    %v8864 = vld [vmem:[#allocation7 + $0x34] sm:$0xf]
    %v8865 = vld [vmem:[#allocation7 + $0x38] sm:$0xf]
    %v8866 = vld [vmem:[#allocation7 + $0x3c] sm:$0xf]
    %v8867 = vld [vmem:[#allocation7 + $0x40] sm:$0xf]
    %v8868 = vld [vmem:[#allocation7 + $0x44] sm:$0xf]
    %v8869 = vld [vmem:[#allocation7 + $0x48] sm:$0xf]
    %v8870 = vld [vmem:[#allocation7 + $0x4c] sm:$0xf]
    %v8871 = vld [vmem:[#allocation7 + $0x50] sm:$0xf]
    %v8872 = vld [vmem:[#allocation7 + $0x54] sm:$0xf]
    %v8873 = vld [vmem:[#allocation7 + $0x58] sm:$0xf]
    %v8874 = vld [vmem:[#allocation7 + $0x5c] sm:$0xf]
    %v8875 = vld [vmem:[#allocation7 + $0x60] sm:$0xf]
    %v8876 = vld [vmem:[#allocation7 + $0x64] sm:$0xf]
    %v8877 = vld [vmem:[#allocation7 + $0x68] sm:$0xf]
    %v8878 = vld [vmem:[#allocation7 + $0x6c] sm:$0xf]
    %v8879 = vld [vmem:[#allocation7 + $0x70] sm:$0xf]
    %v8880 = vld [vmem:[#allocation7 + $0x74] sm:$0xf]
    %v8881 = vld [vmem:[#allocation7 + $0x78] sm:$0xf]
    %v8882 = vld [vmem:[#allocation7 + $0x7c] sm:$0xf]
    %v8883 = vld [vmem:[#allocation7 + $0x80] sm:$0xf]
    %v8884 = vld [vmem:[#allocation7 + $0x84] sm:$0xf]
    %v8885 = vld [vmem:[#allocation7 + $0x88] sm:$0xf]
    %v8886 = vld [vmem:[#allocation7 + $0x8c] sm:$0xf]
    %v8887 = vld [vmem:[#allocation7 + $0x90] sm:$0xf]
    %v8888 = vld [vmem:[#allocation7 + $0x94] sm:$0xf]
    %v8889 = vld [vmem:[#allocation7 + $0x98] sm:$0xf]
    %v8890 = vld [vmem:[#allocation7 + $0x9c] sm:$0xf]
    %v8891 = vld [vmem:[#allocation7 + $0xa0] sm:$0xf]
    %v8892 = vld [vmem:[#allocation7 + $0xa4] sm:$0xf]
    %v8893 = vld [vmem:[#allocation7 + $0xa8] sm:$0xf]
    %v8894 = vld [vmem:[#allocation7 + $0xac] sm:$0xf]
    %v8895 = vld [vmem:[#allocation7 + $0xb0] sm:$0xf]
    %v8896 = vld [vmem:[#allocation7 + $0xb4] sm:$0xf]
    %v8897 = vld [vmem:[#allocation7 + $0xb8] sm:$0xf]
    %v8898 = vld [vmem:[#allocation7 + $0xbc] sm:$0xf]
    %v8899 = vpack.c.bf16 %v8558, %v8557
    %v8900 = vpack.c.bf16 %v8560, %v8559
    %v8901 = vpack.c.bf16 %v8562, %v8561
    %v8902 = vpack.c.bf16 %v8564, %v8563
    %v8903 = vpack.c.bf16 %v8566, %v8565
    %v8904 = vpack.c.bf16 %v8568, %v8567
    %v8905 = vpack.c.bf16 %v8570, %v8569
    %v8906 = vpack.c.bf16 %v8572, %v8571
    %v8907 = vpack.c.bf16 %v8574, %v8573
    %v8908 = vpack.c.bf16 %v8576, %v8575
    %v8909 = vpack.c.bf16 %v8578, %v8577
    %v8910 = vpack.c.bf16 %v8580, %v8579
    %v8911 = vpack.c.bf16 %v8582, %v8581
    %v8912 = vpack.c.bf16 %v8584, %v8583
    %v8913 = vpack.c.bf16 %v8586, %v8585
    %v8914 = vpack.c.bf16 %v8590, %v8589
    %v8915 = vpack.c.bf16 %v8592, %v8591
    %v8916 = vpack.c.bf16 %v8594, %v8593
    %v8917 = vpack.c.bf16 %v8596, %v8595
    %v8918 = vpack.c.bf16 %v8598, %v8597
    %v8919 = vpack.c.bf16 %v8600, %v8599
    %v8920 = vpack.c.bf16 %v8602, %v8601
    %v8921 = vpack.c.bf16 %v8604, %v8603
    %v8922 = vpack.c.bf16 %v8606, %v8605
    %v8923 = vpack.c.bf16 %v8608, %v8607
    %v8924 = vpack.c.bf16 %v8610, %v8609
    %v8925 = vpack.c.bf16 %v8612, %v8611
    %v8926 = vpack.c.bf16 %v8614, %v8613
    %v8927 = vpack.c.bf16 %v8616, %v8615
    %v8928 = vpack.c.bf16 %v8618, %v8617
    %v8929 = vpack.c.bf16 %v8588, %v8587
    %v8930 = vpack.c.bf16 %v8620, %v8619
    %s8931 = scalar_lea.vmem [#allocation7], 192
    %v8932 = vld [vmem:[%s8931] sm:$0xf]
    %v8933 = vld [vmem:[%s8931 + $0x4] sm:$0xf]
    %v8934 = vld [vmem:[%s8931 + $0x8] sm:$0xf]
    %v8935 = vld [vmem:[%s8931 + $0xc] sm:$0xf]
    %v8936 = vld [vmem:[%s8931 + $0x10] sm:$0xf]
    %v8937 = vld [vmem:[%s8931 + $0x14] sm:$0xf]
    %v8938 = vld [vmem:[%s8931 + $0x18] sm:$0xf]
    %v8939 = vld [vmem:[%s8931 + $0x1c] sm:$0xf]
    %v8940 = vld [vmem:[%s8931 + $0x20] sm:$0xf]
    %v8941 = vld [vmem:[%s8931 + $0x24] sm:$0xf]
    %v8942 = vld [vmem:[%s8931 + $0x28] sm:$0xf]
    %v8943 = vld [vmem:[%s8931 + $0x2c] sm:$0xf]
    %v8944 = vld [vmem:[%s8931 + $0x30] sm:$0xf]
    %v8945 = vld [vmem:[%s8931 + $0x34] sm:$0xf]
    %v8946 = vld [vmem:[%s8931 + $0x38] sm:$0xf]
    %v8947 = vld [vmem:[%s8931 + $0x3c] sm:$0xf]
    %v8948 = vld [vmem:[%s8931 + $0x40] sm:$0xf]
    %v8949 = vld [vmem:[%s8931 + $0x44] sm:$0xf]
    %v8950 = vld [vmem:[%s8931 + $0x48] sm:$0xf]
    %v8951 = vld [vmem:[%s8931 + $0x4c] sm:$0xf]
    %v8952 = vld [vmem:[%s8931 + $0x50] sm:$0xf]
    %v8953 = vld [vmem:[%s8931 + $0x54] sm:$0xf]
    %v8954 = vld [vmem:[%s8931 + $0x58] sm:$0xf]
    %v8955 = vld [vmem:[%s8931 + $0x5c] sm:$0xf]
    %v8956 = vld [vmem:[%s8931 + $0x60] sm:$0xf]
    %v8957 = vld [vmem:[%s8931 + $0x64] sm:$0xf]
    %v8958 = vld [vmem:[%s8931 + $0x68] sm:$0xf]
    %v8959 = vld [vmem:[%s8931 + $0x6c] sm:$0xf]
    %v8960 = vld [vmem:[%s8931 + $0x70] sm:$0xf]
    %v8961 = vld [vmem:[%s8931 + $0x74] sm:$0xf]
    %v8962 = vld [vmem:[%s8931 + $0x78] sm:$0xf]
    %v8963 = vld [vmem:[%s8931 + $0x7c] sm:$0xf]
    %v8964 = vld [vmem:[%s8931 + $0x80] sm:$0xf]
    %v8965 = vld [vmem:[%s8931 + $0x84] sm:$0xf]
    %v8966 = vld [vmem:[%s8931 + $0x88] sm:$0xf]
    %v8967 = vld [vmem:[%s8931 + $0x8c] sm:$0xf]
    %v8968 = vld [vmem:[%s8931 + $0x90] sm:$0xf]
    %v8969 = vld [vmem:[%s8931 + $0x94] sm:$0xf]
    %v8970 = vld [vmem:[%s8931 + $0x98] sm:$0xf]
    %v8971 = vld [vmem:[%s8931 + $0x9c] sm:$0xf]
    %v8972 = vld [vmem:[%s8931 + $0xa0] sm:$0xf]
    %v8973 = vld [vmem:[%s8931 + $0xa4] sm:$0xf]
    %v8974 = vld [vmem:[%s8931 + $0xa8] sm:$0xf]
    %v8975 = vld [vmem:[%s8931 + $0xac] sm:$0xf]
    %v8976 = vld [vmem:[%s8931 + $0xb0] sm:$0xf]
    %v8977 = vld [vmem:[%s8931 + $0xb4] sm:$0xf]
    %v8978 = vld [vmem:[%s8931 + $0xb8] sm:$0xf]
    %v8979 = vld [vmem:[%s8931 + $0xbc] sm:$0xf]
    %v9028 = vunpack.c.l.b16 %v8932
    %v9029 = vunpack.c.l.b16 %v8933
    %v9030 = vunpack.c.l.b16 %v8934
    %v9031 = vunpack.c.l.b16 %v8935
    %v9032 = vunpack.c.l.b16 %v8936
    %v9033 = vunpack.c.l.b16 %v8937
    %v9034 = vunpack.c.l.b16 %v8938
    %v9035 = vunpack.c.l.b16 %v8939
    %v9036 = vunpack.c.l.b16 %v8940
    %v9037 = vunpack.c.l.b16 %v8941
    %v9038 = vunpack.c.l.b16 %v8942
    %v9039 = vunpack.c.l.b16 %v8943
    %v9040 = vunpack.c.l.b16 %v8944
    %v9041 = vunpack.c.l.b16 %v8945
    %v9042 = vunpack.c.l.b16 %v8946
    %v9043 = vunpack.c.l.b16 %v8947
    %v9044 = vunpack.c.l.b16 %v8948
    %v9045 = vunpack.c.l.b16 %v8949
    %v9046 = vunpack.c.l.b16 %v8950
    %v9047 = vunpack.c.l.b16 %v8951
    %v9048 = vunpack.c.l.b16 %v8952
    %v9049 = vunpack.c.l.b16 %v8953
    %v9050 = vunpack.c.l.b16 %v8954
    %v9051 = vunpack.c.l.b16 %v8955
    %v9052 = vunpack.c.l.b16 %v8956
    %v9053 = vunpack.c.l.b16 %v8957
    %v9054 = vunpack.c.l.b16 %v8958
    %v9055 = vunpack.c.l.b16 %v8959
    %v9056 = vunpack.c.l.b16 %v8960
    %v9057 = vunpack.c.l.b16 %v8961
    %v9058 = vunpack.c.l.b16 %v8962
    %v9059 = vunpack.c.l.b16 %v8963
    %v9060 = vunpack.c.l.b16 %v8964
    %v9061 = vunpack.c.l.b16 %v8965
    %v9062 = vunpack.c.l.b16 %v8966
    %v9063 = vunpack.c.l.b16 %v8967
    %v9064 = vunpack.c.l.b16 %v8968
    %v9065 = vunpack.c.l.b16 %v8969
    %v9066 = vunpack.c.l.b16 %v8970
    %v9067 = vunpack.c.l.b16 %v8971
    %v9068 = vunpack.c.l.b16 %v8972
    %v9069 = vunpack.c.l.b16 %v8973
    %v9070 = vunpack.c.l.b16 %v8974
    %v9071 = vunpack.c.l.b16 %v8975
    %v9072 = vunpack.c.l.b16 %v8976
    %v9073 = vunpack.c.l.b16 %v8977
    %v9074 = vunpack.c.l.b16 %v8978
    %v9075 = vunpack.c.l.b16 %v8979
    %v9076 = vpack.c.b16 %v9029, %v9028
    %v9077 = vpack.c.b16 %v9031, %v9030
    %v9078 = vpack.c.b16 %v9033, %v9032
    %v9079 = vpack.c.b16 %v9035, %v9034
    %v9080 = vpack.c.b16 %v9037, %v9036
    %v9081 = vpack.c.b16 %v9039, %v9038
    %v9082 = vpack.c.b16 %v9041, %v9040
    %v9083 = vpack.c.b16 %v9043, %v9042
    %v9084 = vpack.c.b16 %v9045, %v9044
    %v9085 = vpack.c.b16 %v9047, %v9046
    %v9086 = vpack.c.b16 %v9049, %v9048
    %v9087 = vpack.c.b16 %v9051, %v9050
    %v9088 = vpack.c.b16 %v9053, %v9052
    %v9089 = vpack.c.b16 %v9055, %v9054
    %v9090 = vpack.c.b16 %v9057, %v9056
    %v9091 = vpack.c.b16 %v9059, %v9058
    %v9092 = vpack.c.b16 %v9061, %v9060
    %v9093 = vpack.c.b16 %v9063, %v9062
    %v9094 = vpack.c.b16 %v9065, %v9064
    %v9095 = vpack.c.b16 %v9067, %v9066
    %v9096 = vpack.c.b16 %v9069, %v9068
    %v9097 = vpack.c.b16 %v9071, %v9070
    %v9098 = vpack.c.b16 %v9073, %v9072
    %v9099 = vpack.c.b16 %v9075, %v9074
    %9124 = vmatprep.subr.bf16.mxu0 0
    %9125 = vmatpush1.bf16.msra.mxu0 %v9083
    %9126 = vmatprep.subr.bf16.mxu0 0
    %9127 = vmatpush1.bf16.msra.mxu0 %v9082
    %9128 = vmatprep.subr.bf16.mxu0 0
    %9129 = vmatpush1.bf16.msra.mxu0 %v9081
    %9130 = vmatprep.subr.bf16.mxu0 0
    %9131 = vmatpush1.bf16.msra.mxu0 %v9080
    %9132 = vmatprep.subr.bf16.mxu0 0
    %9133 = vmatpush1.bf16.msra.mxu0 %v9079
    %9134 = vmatprep.subr.bf16.mxu0 0
    %9135 = vmatpush1.bf16.msra.mxu0 %v9078
    %9136 = vmatprep.subr.bf16.mxu0 0
    %9137 = vmatpush1.bf16.msra.mxu0 %v9077
    %9138 = vmatprep.subr.bf16.mxu0 0
    %9139 = vmatpush1.bf16.msra.mxu0 %v9076
    %9140 = vmatprep.subr.bf16.mxu0 0
    %9141 = vmatpush2.bf16.msra.mxu0 %v9091
    %9142 = vmatprep.subr.bf16.mxu0 0
    %9143 = vmatpush2.bf16.msra.mxu0 %v9090
    %9144 = vmatprep.subr.bf16.mxu0 0
    %9145 = vmatpush2.bf16.msra.mxu0 %v9089
    %9146 = vmatprep.subr.bf16.mxu0 0
    %9147 = vmatpush2.bf16.msra.mxu0 %v9088
    %9148 = vmatprep.subr.bf16.mxu0 0
    %9149 = vmatpush2.bf16.msra.mxu0 %v9087
    %9150 = vmatprep.subr.bf16.mxu0 0
    %9151 = vmatpush2.bf16.msra.mxu0 %v9086
    %9152 = vmatprep.subr.bf16.mxu0 0
    %9153 = vmatpush2.bf16.msra.mxu0 %v9085
    %9154 = vmatprep.subr.bf16.mxu0 0
    %9155 = vmatpush2.bf16.msra.mxu0 %v9084
    %9156 = vmatprep.mubr.bf16.mxu0 %v8899
    %9157 = vmatmul.mubr.bf16.gmra.mxu0 %v1562
    %v9158 = vpop.f32.mrf.mxu0
    %v9159 = vadd.f32 0.0, %v9158
    %v9160 = vpop.f32.mrf.mxu0
    %v9161 = vpop.f32.mrf.mxu0
    %v9162 = vadd.f32 0.0, %v9161
    %v9163 = vpop.f32.mrf.mxu0
    %9164 = vmatprep.mubr.bf16.mxu0 %v8900
    %9165 = vmatmul.mubr.bf16.gmra.mxu0 %v8899
    %v9166 = vpop.f32.mrf.mxu0
    %v9167 = vadd.f32 0.0, %v9166
    %v9168 = vpop.f32.mrf.mxu0
    %v9169 = vpop.f32.mrf.mxu0
    %v9170 = vadd.f32 0.0, %v9169
    %v9171 = vpop.f32.mrf.mxu0
    %9172 = vmatprep.mubr.bf16.mxu0 %v8901
    %9173 = vmatmul.mubr.bf16.gmra.mxu0 %v8900
    %v9174 = vpop.f32.mrf.mxu0
    %v9175 = vadd.f32 0.0, %v9174
    %v9176 = vpop.f32.mrf.mxu0
    %v9177 = vpop.f32.mrf.mxu0
    %v9178 = vadd.f32 0.0, %v9177
    %v9179 = vpop.f32.mrf.mxu0
    %9180 = vmatprep.mubr.bf16.mxu0 %v8902
    %9181 = vmatmul.mubr.bf16.gmra.mxu0 %v8901
    %v9182 = vpop.f32.mrf.mxu0
    %v9183 = vadd.f32 0.0, %v9182
    %v9184 = vpop.f32.mrf.mxu0
    %v9185 = vpop.f32.mrf.mxu0
    %v9186 = vadd.f32 0.0, %v9185
    %v9187 = vpop.f32.mrf.mxu0
    %9188 = vmatprep.mubr.bf16.mxu0 %v8903
    %9189 = vmatmul.mubr.bf16.gmra.mxu0 %v8902
    %v9190 = vpop.f32.mrf.mxu0
    %v9191 = vadd.f32 0.0, %v9190
    %v9192 = vpop.f32.mrf.mxu0
    %v9193 = vpop.f32.mrf.mxu0
    %v9194 = vadd.f32 0.0, %v9193
    %v9195 = vpop.f32.mrf.mxu0
    %9196 = vmatprep.mubr.bf16.mxu0 %v8904
    %9197 = vmatmul.mubr.bf16.gmra.mxu0 %v8903
    %v9198 = vpop.f32.mrf.mxu0
    %v9199 = vadd.f32 0.0, %v9198
    %v9200 = vpop.f32.mrf.mxu0
    %v9201 = vpop.f32.mrf.mxu0
    %v9202 = vadd.f32 0.0, %v9201
    %v9203 = vpop.f32.mrf.mxu0
    %9204 = vmatprep.mubr.bf16.mxu0 %v8905
    %9205 = vmatmul.mubr.bf16.gmra.mxu0 %v8904
    %v9206 = vpop.f32.mrf.mxu0
    %v9207 = vadd.f32 0.0, %v9206
    %v9208 = vpop.f32.mrf.mxu0
    %v9209 = vpop.f32.mrf.mxu0
    %v9210 = vadd.f32 0.0, %v9209
    %v9211 = vpop.f32.mrf.mxu0
    %9212 = vmatprep.mubr.bf16.mxu0 %v8906
    %9213 = vmatmul.mubr.bf16.gmra.mxu0 %v8905
    %v9214 = vpop.f32.mrf.mxu0
    %v9215 = vadd.f32 0.0, %v9214
    %v9216 = vpop.f32.mrf.mxu0
    %v9217 = vpop.f32.mrf.mxu0
    %v9218 = vadd.f32 0.0, %v9217
    %v9219 = vpop.f32.mrf.mxu0
    %9220 = vmatprep.mubr.bf16.mxu0 %v8907
    %9221 = vmatmul.mubr.bf16.gmra.mxu0 %v8906
    %v9222 = vpop.f32.mrf.mxu0
    %v9223 = vadd.f32 0.0, %v9222
    %v9224 = vpop.f32.mrf.mxu0
    %v9225 = vpop.f32.mrf.mxu0
    %v9226 = vadd.f32 0.0, %v9225
    %v9227 = vpop.f32.mrf.mxu0
    %9228 = vmatprep.mubr.bf16.mxu0 %v8908
    %9229 = vmatmul.mubr.bf16.gmra.mxu0 %v8907
    %v9230 = vpop.f32.mrf.mxu0
    %v9231 = vadd.f32 0.0, %v9230
    %v9232 = vpop.f32.mrf.mxu0
    %v9233 = vpop.f32.mrf.mxu0
    %v9234 = vadd.f32 0.0, %v9233
    %v9235 = vpop.f32.mrf.mxu0
    %9236 = vmatprep.mubr.bf16.mxu0 %v8909
    %9237 = vmatmul.mubr.bf16.gmra.mxu0 %v8908
    %v9238 = vpop.f32.mrf.mxu0
    %v9239 = vadd.f32 0.0, %v9238
    %v9240 = vpop.f32.mrf.mxu0
    %v9241 = vpop.f32.mrf.mxu0
    %v9242 = vadd.f32 0.0, %v9241
    %v9243 = vpop.f32.mrf.mxu0
    %9244 = vmatprep.mubr.bf16.mxu0 %v8910
    %9245 = vmatmul.mubr.bf16.gmra.mxu0 %v8909
    %v9246 = vpop.f32.mrf.mxu0
    %v9247 = vadd.f32 0.0, %v9246
    %v9248 = vpop.f32.mrf.mxu0
    %v9249 = vpop.f32.mrf.mxu0
    %v9250 = vadd.f32 0.0, %v9249
    %v9251 = vpop.f32.mrf.mxu0
    %9252 = vmatprep.mubr.bf16.mxu0 %v8911
    %9253 = vmatmul.mubr.bf16.gmra.mxu0 %v8910
    %v9254 = vpop.f32.mrf.mxu0
    %v9255 = vadd.f32 0.0, %v9254
    %v9256 = vpop.f32.mrf.mxu0
    %v9257 = vpop.f32.mrf.mxu0
    %v9258 = vadd.f32 0.0, %v9257
    %v9259 = vpop.f32.mrf.mxu0
    %9260 = vmatprep.mubr.bf16.mxu0 %v8912
    %9261 = vmatmul.mubr.bf16.gmra.mxu0 %v8911
    %v9262 = vpop.f32.mrf.mxu0
    %v9263 = vadd.f32 0.0, %v9262
    %v9264 = vpop.f32.mrf.mxu0
    %v9265 = vpop.f32.mrf.mxu0
    %v9266 = vadd.f32 0.0, %v9265
    %v9267 = vpop.f32.mrf.mxu0
    %9268 = vmatprep.mubr.bf16.mxu0 %v8913
    %9269 = vmatmul.mubr.bf16.gmra.mxu0 %v8912
    %v9270 = vpop.f32.mrf.mxu0
    %v9271 = vadd.f32 0.0, %v9270
    %v9272 = vpop.f32.mrf.mxu0
    %v9273 = vpop.f32.mrf.mxu0
    %v9274 = vadd.f32 0.0, %v9273
    %v9275 = vpop.f32.mrf.mxu0
    %9276 = vmatprep.mubr.bf16.mxu0 %v8929
    %9277 = vmatmul.mubr.bf16.gmra.mxu0 %v8913
    %v9278 = vpop.f32.mrf.mxu0
    %v9279 = vadd.f32 0.0, %v9278
    %v9280 = vpop.f32.mrf.mxu0
    %v9281 = vpop.f32.mrf.mxu0
    %v9282 = vadd.f32 0.0, %v9281
    %v9283 = vpop.f32.mrf.mxu0
    %9284 = vmatprep.mubr.bf16.mxu0 %v8914
    %9285 = vmatmul.mubr.bf16.gmra.mxu0 %v1562
    %v9286 = vpop.f32.mrf.mxu0
    %v9287 = vadd.f32 0.0, %v9286
    %v9288 = vpop.f32.mrf.mxu0
    %v9289 = vpop.f32.mrf.mxu0
    %v9290 = vadd.f32 0.0, %v9289
    %v9291 = vpop.f32.mrf.mxu0
    %9292 = vmatprep.mubr.bf16.mxu0 %v8915
    %9293 = vmatmul.mubr.bf16.gmra.mxu0 %v8914
    %v9294 = vpop.f32.mrf.mxu0
    %v9295 = vadd.f32 0.0, %v9294
    %v9296 = vpop.f32.mrf.mxu0
    %v9297 = vpop.f32.mrf.mxu0
    %v9298 = vadd.f32 0.0, %v9297
    %v9299 = vpop.f32.mrf.mxu0
    %9300 = vmatprep.mubr.bf16.mxu0 %v8916
    %9301 = vmatmul.mubr.bf16.gmra.mxu0 %v8915
    %v9302 = vpop.f32.mrf.mxu0
    %v9303 = vadd.f32 0.0, %v9302
    %v9304 = vpop.f32.mrf.mxu0
    %v9305 = vpop.f32.mrf.mxu0
    %v9306 = vadd.f32 0.0, %v9305
    %v9307 = vpop.f32.mrf.mxu0
    %9308 = vmatprep.mubr.bf16.mxu0 %v8917
    %9309 = vmatmul.mubr.bf16.gmra.mxu0 %v8916
    %v9310 = vpop.f32.mrf.mxu0
    %v9311 = vadd.f32 0.0, %v9310
    %v9312 = vpop.f32.mrf.mxu0
    %v9313 = vpop.f32.mrf.mxu0
    %v9314 = vadd.f32 0.0, %v9313
    %v9315 = vpop.f32.mrf.mxu0
    %9316 = vmatprep.mubr.bf16.mxu0 %v8918
    %9317 = vmatmul.mubr.bf16.gmra.mxu0 %v8917
    %v9318 = vpop.f32.mrf.mxu0
    %v9319 = vadd.f32 0.0, %v9318
    %v9320 = vpop.f32.mrf.mxu0
    %v9321 = vpop.f32.mrf.mxu0
    %v9322 = vadd.f32 0.0, %v9321
    %v9323 = vpop.f32.mrf.mxu0
    %9324 = vmatprep.mubr.bf16.mxu0 %v8919
    %9325 = vmatmul.mubr.bf16.gmra.mxu0 %v8918
    %v9326 = vpop.f32.mrf.mxu0
    %v9327 = vadd.f32 0.0, %v9326
    %v9328 = vpop.f32.mrf.mxu0
    %v9329 = vpop.f32.mrf.mxu0
    %v9330 = vadd.f32 0.0, %v9329
    %v9331 = vpop.f32.mrf.mxu0
    %9332 = vmatprep.mubr.bf16.mxu0 %v8920
    %9333 = vmatmul.mubr.bf16.gmra.mxu0 %v8919
    %v9334 = vpop.f32.mrf.mxu0
    %v9335 = vadd.f32 0.0, %v9334
    %v9336 = vpop.f32.mrf.mxu0
    %v9337 = vpop.f32.mrf.mxu0
    %v9338 = vadd.f32 0.0, %v9337
    %v9339 = vpop.f32.mrf.mxu0
    %9340 = vmatprep.mubr.bf16.mxu0 %v8921
    %9341 = vmatmul.mubr.bf16.gmra.mxu0 %v8920
    %v9342 = vpop.f32.mrf.mxu0
    %v9343 = vadd.f32 0.0, %v9342
    %v9344 = vpop.f32.mrf.mxu0
    %v9345 = vpop.f32.mrf.mxu0
    %v9346 = vadd.f32 0.0, %v9345
    %v9347 = vpop.f32.mrf.mxu0
    %9348 = vmatprep.mubr.bf16.mxu0 %v8922
    %9349 = vmatmul.mubr.bf16.gmra.mxu0 %v8921
    %v9350 = vpop.f32.mrf.mxu0
    %v9351 = vadd.f32 0.0, %v9350
    %v9352 = vpop.f32.mrf.mxu0
    %v9353 = vpop.f32.mrf.mxu0
    %v9354 = vadd.f32 0.0, %v9353
    %v9355 = vpop.f32.mrf.mxu0
    %9356 = vmatprep.mubr.bf16.mxu0 %v8923
    %9357 = vmatmul.mubr.bf16.gmra.mxu0 %v8922
    %v9358 = vpop.f32.mrf.mxu0
    %v9359 = vadd.f32 0.0, %v9358
    %v9360 = vpop.f32.mrf.mxu0
    %v9361 = vpop.f32.mrf.mxu0
    %v9362 = vadd.f32 0.0, %v9361
    %v9363 = vpop.f32.mrf.mxu0
    %9364 = vmatprep.mubr.bf16.mxu0 %v8924
    %9365 = vmatmul.mubr.bf16.gmra.mxu0 %v8923
    %v9366 = vpop.f32.mrf.mxu0
    %v9367 = vadd.f32 0.0, %v9366
    %v9368 = vpop.f32.mrf.mxu0
    %v9369 = vpop.f32.mrf.mxu0
    %v9370 = vadd.f32 0.0, %v9369
    %v9371 = vpop.f32.mrf.mxu0
    %9372 = vmatprep.mubr.bf16.mxu0 %v8925
    %9373 = vmatmul.mubr.bf16.gmra.mxu0 %v8924
    %v9374 = vpop.f32.mrf.mxu0
    %v9375 = vadd.f32 0.0, %v9374
    %v9376 = vpop.f32.mrf.mxu0
    %v9377 = vpop.f32.mrf.mxu0
    %v9378 = vadd.f32 0.0, %v9377
    %v9379 = vpop.f32.mrf.mxu0
    %9380 = vmatprep.mubr.bf16.mxu0 %v8926
    %9381 = vmatmul.mubr.bf16.gmra.mxu0 %v8925
    %v9382 = vpop.f32.mrf.mxu0
    %v9383 = vadd.f32 0.0, %v9382
    %v9384 = vpop.f32.mrf.mxu0
    %v9385 = vpop.f32.mrf.mxu0
    %v9386 = vadd.f32 0.0, %v9385
    %v9387 = vpop.f32.mrf.mxu0
    %9388 = vmatprep.mubr.bf16.mxu0 %v8927
    %9389 = vmatmul.mubr.bf16.gmra.mxu0 %v8926
    %v9390 = vpop.f32.mrf.mxu0
    %v9391 = vadd.f32 0.0, %v9390
    %v9392 = vpop.f32.mrf.mxu0
    %v9393 = vpop.f32.mrf.mxu0
    %v9394 = vadd.f32 0.0, %v9393
    %v9395 = vpop.f32.mrf.mxu0
    %9396 = vmatprep.mubr.bf16.mxu0 %v8928
    %9397 = vmatmul.mubr.bf16.gmra.mxu0 %v8927
    %v9398 = vpop.f32.mrf.mxu0
    %v9399 = vadd.f32 0.0, %v9398
    %v9400 = vpop.f32.mrf.mxu0
    %v9401 = vpop.f32.mrf.mxu0
    %v9402 = vadd.f32 0.0, %v9401
    %v9403 = vpop.f32.mrf.mxu0
    %9404 = vmatprep.mubr.bf16.mxu0 %v8930
    %9405 = vmatmul.mubr.bf16.gmra.mxu0 %v8928
    %v9406 = vpop.f32.mrf.mxu0
    %v9407 = vadd.f32 0.0, %v9406
    %v9408 = vpop.f32.mrf.mxu0
    %v9409 = vpop.f32.mrf.mxu0
    %v9410 = vadd.f32 0.0, %v9409
    %v9411 = vpop.f32.mrf.mxu0
    %9412 = vdwg.mxu0
    %9413 = vmatprep.subr.bf16.mxu0 0
    %9414 = vmatpush1.bf16.msra.mxu0 %v9099
    %9415 = vmatprep.subr.bf16.mxu0 0
    %9416 = vmatpush1.bf16.msra.mxu0 %v9098
    %9417 = vmatprep.subr.bf16.mxu0 0
    %9418 = vmatpush1.bf16.msra.mxu0 %v9097
    %9419 = vmatprep.subr.bf16.mxu0 0
    %9420 = vmatpush1.bf16.msra.mxu0 %v9096
    %9421 = vmatprep.subr.bf16.mxu0 0
    %9422 = vmatpush1.bf16.msra.mxu0 %v9095
    %9423 = vmatprep.subr.bf16.mxu0 0
    %9424 = vmatpush1.bf16.msra.mxu0 %v9094
    %9425 = vmatprep.subr.bf16.mxu0 0
    %9426 = vmatpush1.bf16.msra.mxu0 %v9093
    %9427 = vmatprep.subr.bf16.mxu0 0
    %9428 = vmatpush1.bf16.msra.mxu0 %v9092
    %9429 = vmatprep.subr.bf16.mxu0 0
    %9430 = vmatpush2.bf16.msra.mxu0 0
    %9431 = vmatprep.subr.bf16.mxu0 0
    %9432 = vmatpush2.bf16.msra.mxu0 0
    %9433 = vmatprep.subr.bf16.mxu0 0
    %9434 = vmatpush2.bf16.msra.mxu0 0
    %9435 = vmatprep.subr.bf16.mxu0 0
    %9436 = vmatpush2.bf16.msra.mxu0 0
    %9437 = vmatprep.subr.bf16.mxu0 0
    %9438 = vmatpush2.bf16.msra.mxu0 0
    %9439 = vmatprep.subr.bf16.mxu0 0
    %9440 = vmatpush2.bf16.msra.mxu0 0
    %9441 = vmatprep.subr.bf16.mxu0 0
    %9442 = vmatpush2.bf16.msra.mxu0 0
    %9443 = vmatprep.subr.bf16.mxu0 0
    %9444 = vmatpush2.bf16.msra.mxu0 0
    %9445 = vmatprep.mubr.bf16.mxu0 0
    %9446 = vmatmul.mubr.bf16.gmra.mxu0 %v8900
    %v9447 = vpop.f32.mrf.mxu0
    %v9448 = vadd.f32 %v9159, %v9447
    %v9449 = vpop.f32.mrf.mxu0
    %v9450 = vpop.f32.mrf.mxu0
    %v9451 = vadd.f32 %v9162, %v9450
    %v9452 = vpop.f32.mrf.mxu0
    %9453 = vmatprep.mubr.bf16.mxu0 0
    %9454 = vmatmul.mubr.bf16.gmra.mxu0 %v8901
    %v9455 = vpop.f32.mrf.mxu0
    %v9456 = vadd.f32 %v9167, %v9455
    %v9457 = vpop.f32.mrf.mxu0
    %v9458 = vpop.f32.mrf.mxu0
    %v9459 = vadd.f32 %v9170, %v9458
    %v9460 = vpop.f32.mrf.mxu0
    %9461 = vmatprep.mubr.bf16.mxu0 0
    %9462 = vmatmul.mubr.bf16.gmra.mxu0 %v8902
    %v9463 = vpop.f32.mrf.mxu0
    %v9464 = vadd.f32 %v9175, %v9463
    %v9465 = vpop.f32.mrf.mxu0
    %v9466 = vpop.f32.mrf.mxu0
    %v9467 = vadd.f32 %v9178, %v9466
    %v9468 = vpop.f32.mrf.mxu0
    %9469 = vmatprep.mubr.bf16.mxu0 0
    %9470 = vmatmul.mubr.bf16.gmra.mxu0 %v8903
    %v9471 = vpop.f32.mrf.mxu0
    %v9472 = vadd.f32 %v9183, %v9471
    %v9473 = vpop.f32.mrf.mxu0
    %v9474 = vpop.f32.mrf.mxu0
    %v9475 = vadd.f32 %v9186, %v9474
    %v9476 = vpop.f32.mrf.mxu0
    %9477 = vmatprep.mubr.bf16.mxu0 0
    %9478 = vmatmul.mubr.bf16.gmra.mxu0 %v8904
    %v9479 = vpop.f32.mrf.mxu0
    %v9480 = vadd.f32 %v9191, %v9479
    %v9481 = vpop.f32.mrf.mxu0
    %v9482 = vpop.f32.mrf.mxu0
    %v9483 = vadd.f32 %v9194, %v9482
    %v9484 = vpop.f32.mrf.mxu0
    %9485 = vmatprep.mubr.bf16.mxu0 0
    %9486 = vmatmul.mubr.bf16.gmra.mxu0 %v8905
    %v9487 = vpop.f32.mrf.mxu0
    %v9488 = vadd.f32 %v9199, %v9487
    %v9489 = vpop.f32.mrf.mxu0
    %v9490 = vpop.f32.mrf.mxu0
    %v9491 = vadd.f32 %v9202, %v9490
    %v9492 = vpop.f32.mrf.mxu0
    %9493 = vmatprep.mubr.bf16.mxu0 0
    %9494 = vmatmul.mubr.bf16.gmra.mxu0 %v8906
    %v9495 = vpop.f32.mrf.mxu0
    %v9496 = vadd.f32 %v9207, %v9495
    %v9497 = vpop.f32.mrf.mxu0
    %v9498 = vpop.f32.mrf.mxu0
    %v9499 = vadd.f32 %v9210, %v9498
    %v9500 = vpop.f32.mrf.mxu0
    %9501 = vmatprep.mubr.bf16.mxu0 0
    %9502 = vmatmul.mubr.bf16.gmra.mxu0 %v8907
    %v9503 = vpop.f32.mrf.mxu0
    %v9504 = vadd.f32 %v9215, %v9503
    %v9505 = vpop.f32.mrf.mxu0
    %v9506 = vpop.f32.mrf.mxu0
    %v9507 = vadd.f32 %v9218, %v9506
    %v9508 = vpop.f32.mrf.mxu0
    %9509 = vmatprep.mubr.bf16.mxu0 0
    %9510 = vmatmul.mubr.bf16.gmra.mxu0 %v8908
    %v9511 = vpop.f32.mrf.mxu0
    %v9512 = vadd.f32 %v9223, %v9511
    %v9513 = vpop.f32.mrf.mxu0
    %v9514 = vpop.f32.mrf.mxu0
    %v9515 = vadd.f32 %v9226, %v9514
    %v9516 = vpop.f32.mrf.mxu0
    %9517 = vmatprep.mubr.bf16.mxu0 0
    %9518 = vmatmul.mubr.bf16.gmra.mxu0 %v8909
    %v9519 = vpop.f32.mrf.mxu0
    %v9520 = vadd.f32 %v9231, %v9519
    %v9521 = vpop.f32.mrf.mxu0
    %v9522 = vpop.f32.mrf.mxu0
    %v9523 = vadd.f32 %v9234, %v9522
    %v9524 = vpop.f32.mrf.mxu0
    %9525 = vmatprep.mubr.bf16.mxu0 0
    %9526 = vmatmul.mubr.bf16.gmra.mxu0 %v8910
    %v9527 = vpop.f32.mrf.mxu0
    %v9528 = vadd.f32 %v9239, %v9527
    %v9529 = vpop.f32.mrf.mxu0
    %v9530 = vpop.f32.mrf.mxu0
    %v9531 = vadd.f32 %v9242, %v9530
    %v9532 = vpop.f32.mrf.mxu0
    %9533 = vmatprep.mubr.bf16.mxu0 0
    %9534 = vmatmul.mubr.bf16.gmra.mxu0 %v8911
    %v9535 = vpop.f32.mrf.mxu0
    %v9536 = vadd.f32 %v9247, %v9535
    %v9537 = vpop.f32.mrf.mxu0
    %v9538 = vpop.f32.mrf.mxu0
    %v9539 = vadd.f32 %v9250, %v9538
    %v9540 = vpop.f32.mrf.mxu0
    %9541 = vmatprep.mubr.bf16.mxu0 0
    %9542 = vmatmul.mubr.bf16.gmra.mxu0 %v8912
    %v9543 = vpop.f32.mrf.mxu0
    %v9544 = vadd.f32 %v9255, %v9543
    %v9545 = vpop.f32.mrf.mxu0
    %v9546 = vpop.f32.mrf.mxu0
    %v9547 = vadd.f32 %v9258, %v9546
    %v9548 = vpop.f32.mrf.mxu0
    %9549 = vmatprep.mubr.bf16.mxu0 0
    %9550 = vmatmul.mubr.bf16.gmra.mxu0 %v8913
    %v9551 = vpop.f32.mrf.mxu0
    %v9552 = vadd.f32 %v9263, %v9551
    %v9553 = vpop.f32.mrf.mxu0
    %v9554 = vpop.f32.mrf.mxu0
    %v9555 = vadd.f32 %v9266, %v9554
    %v9556 = vpop.f32.mrf.mxu0
    %9557 = vmatprep.mubr.bf16.mxu0 0
    %9558 = vmatmul.mubr.bf16.gmra.mxu0 %v8929
    %v9559 = vpop.f32.mrf.mxu0
    %v9560 = vadd.f32 %v9271, %v9559
    %v9561 = vpop.f32.mrf.mxu0
    %v9562 = vpop.f32.mrf.mxu0
    %v9563 = vadd.f32 %v9274, %v9562
    %v9564 = vpop.f32.mrf.mxu0
    %9565 = vmatprep.mubr.bf16.mxu0 0
    %9566 = vmatmul.mubr.bf16.gmra.mxu0 %v1562
    %v9567 = vpop.f32.mrf.mxu0
    %v9568 = vadd.f32 %v9279, %v9567
    %v9569 = vpop.f32.mrf.mxu0
    %v9570 = vpop.f32.mrf.mxu0
    %v9571 = vadd.f32 %v9282, %v9570
    %v9572 = vpop.f32.mrf.mxu0
    %9573 = vmatprep.mubr.bf16.mxu0 0
    %9574 = vmatmul.mubr.bf16.gmra.mxu0 %v8915
    %v9575 = vpop.f32.mrf.mxu0
    %v9576 = vadd.f32 %v9287, %v9575
    %v9577 = vpop.f32.mrf.mxu0
    %v9578 = vpop.f32.mrf.mxu0
    %v9579 = vadd.f32 %v9290, %v9578
    %v9580 = vpop.f32.mrf.mxu0
    %9581 = vmatprep.mubr.bf16.mxu0 0
    %9582 = vmatmul.mubr.bf16.gmra.mxu0 %v8916
    %v9583 = vpop.f32.mrf.mxu0
    %v9584 = vadd.f32 %v9295, %v9583
    %v9585 = vpop.f32.mrf.mxu0
    %v9586 = vpop.f32.mrf.mxu0
    %v9587 = vadd.f32 %v9298, %v9586
    %v9588 = vpop.f32.mrf.mxu0
    %9589 = vmatprep.mubr.bf16.mxu0 0
    %9590 = vmatmul.mubr.bf16.gmra.mxu0 %v8917
    %v9591 = vpop.f32.mrf.mxu0
    %v9592 = vadd.f32 %v9303, %v9591
    %v9593 = vpop.f32.mrf.mxu0
    %v9594 = vpop.f32.mrf.mxu0
    %v9595 = vadd.f32 %v9306, %v9594
    %v9596 = vpop.f32.mrf.mxu0
    %9597 = vmatprep.mubr.bf16.mxu0 0
    %9598 = vmatmul.mubr.bf16.gmra.mxu0 %v8918
    %v9599 = vpop.f32.mrf.mxu0
    %v9600 = vadd.f32 %v9311, %v9599
    %v9601 = vpop.f32.mrf.mxu0
    %v9602 = vpop.f32.mrf.mxu0
    %v9603 = vadd.f32 %v9314, %v9602
    %v9604 = vpop.f32.mrf.mxu0
    %9605 = vmatprep.mubr.bf16.mxu0 0
    %9606 = vmatmul.mubr.bf16.gmra.mxu0 %v8919
    %v9607 = vpop.f32.mrf.mxu0
    %v9608 = vadd.f32 %v9319, %v9607
    %v9609 = vpop.f32.mrf.mxu0
    %v9610 = vpop.f32.mrf.mxu0
    %v9611 = vadd.f32 %v9322, %v9610
    %v9612 = vpop.f32.mrf.mxu0
    %9613 = vmatprep.mubr.bf16.mxu0 0
    %9614 = vmatmul.mubr.bf16.gmra.mxu0 %v8920
    %v9615 = vpop.f32.mrf.mxu0
    %v9616 = vadd.f32 %v9327, %v9615
    %v9617 = vpop.f32.mrf.mxu0
    %v9618 = vpop.f32.mrf.mxu0
    %v9619 = vadd.f32 %v9330, %v9618
    %v9620 = vpop.f32.mrf.mxu0
    %9621 = vmatprep.mubr.bf16.mxu0 0
    %9622 = vmatmul.mubr.bf16.gmra.mxu0 %v8921
    %v9623 = vpop.f32.mrf.mxu0
    %v9624 = vadd.f32 %v9335, %v9623
    %v9625 = vpop.f32.mrf.mxu0
    %v9626 = vpop.f32.mrf.mxu0
    %v9627 = vadd.f32 %v9338, %v9626
    %v9628 = vpop.f32.mrf.mxu0
    %9629 = vmatprep.mubr.bf16.mxu0 0
    %9630 = vmatmul.mubr.bf16.gmra.mxu0 %v8922
    %v9631 = vpop.f32.mrf.mxu0
    %v9632 = vadd.f32 %v9343, %v9631
    %v9633 = vpop.f32.mrf.mxu0
    %v9634 = vpop.f32.mrf.mxu0
    %v9635 = vadd.f32 %v9346, %v9634
    %v9636 = vpop.f32.mrf.mxu0
    %9637 = vmatprep.mubr.bf16.mxu0 0
    %9638 = vmatmul.mubr.bf16.gmra.mxu0 %v8923
    %v9639 = vpop.f32.mrf.mxu0
    %v9640 = vadd.f32 %v9351, %v9639
    %v9641 = vpop.f32.mrf.mxu0
    %v9642 = vpop.f32.mrf.mxu0
    %v9643 = vadd.f32 %v9354, %v9642
    %v9644 = vpop.f32.mrf.mxu0
    %9645 = vmatprep.mubr.bf16.mxu0 0
    %9646 = vmatmul.mubr.bf16.gmra.mxu0 %v8924
    %v9647 = vpop.f32.mrf.mxu0
    %v9648 = vadd.f32 %v9359, %v9647
    %v9649 = vpop.f32.mrf.mxu0
    %v9650 = vpop.f32.mrf.mxu0
    %v9651 = vadd.f32 %v9362, %v9650
    %v9652 = vpop.f32.mrf.mxu0
    %9653 = vmatprep.mubr.bf16.mxu0 0
    %9654 = vmatmul.mubr.bf16.gmra.mxu0 %v8925
    %v9655 = vpop.f32.mrf.mxu0
    %v9656 = vadd.f32 %v9367, %v9655
    %v9657 = vpop.f32.mrf.mxu0
    %v9658 = vpop.f32.mrf.mxu0
    %v9659 = vadd.f32 %v9370, %v9658
    %v9660 = vpop.f32.mrf.mxu0
    %9661 = vmatprep.mubr.bf16.mxu0 0
    %9662 = vmatmul.mubr.bf16.gmra.mxu0 %v8926
    %v9663 = vpop.f32.mrf.mxu0
    %v9664 = vadd.f32 %v9375, %v9663
    %v9665 = vpop.f32.mrf.mxu0
    %v9666 = vpop.f32.mrf.mxu0
    %v9667 = vadd.f32 %v9378, %v9666
    %v9668 = vpop.f32.mrf.mxu0
    %9669 = vmatprep.mubr.bf16.mxu0 0
    %9670 = vmatmul.mubr.bf16.gmra.mxu0 %v8927
    %v9671 = vpop.f32.mrf.mxu0
    %v9672 = vadd.f32 %v9383, %v9671
    %v9673 = vpop.f32.mrf.mxu0
    %v9674 = vpop.f32.mrf.mxu0
    %v9675 = vadd.f32 %v9386, %v9674
    %v9676 = vpop.f32.mrf.mxu0
    %9677 = vmatprep.mubr.bf16.mxu0 0
    %9678 = vmatmul.mubr.bf16.gmra.mxu0 %v8928
    %v9679 = vpop.f32.mrf.mxu0
    %v9680 = vadd.f32 %v9391, %v9679
    %v9681 = vpop.f32.mrf.mxu0
    %v9682 = vpop.f32.mrf.mxu0
    %v9683 = vadd.f32 %v9394, %v9682
    %v9684 = vpop.f32.mrf.mxu0
    %9685 = vmatprep.mubr.bf16.mxu0 0
    %9686 = vmatmul.mubr.bf16.gmra.mxu0 %v8930
    %v9687 = vpop.f32.mrf.mxu0
    %v9688 = vadd.f32 %v9399, %v9687
    %v9689 = vpop.f32.mrf.mxu0
    %v9690 = vpop.f32.mrf.mxu0
    %v9691 = vadd.f32 %v9402, %v9690
    %v9692 = vpop.f32.mrf.mxu0
    %9693 = vmatprep.mubr.bf16.mxu0 0
    %9694 = vmatmul.mubr.bf16.gmra.mxu0 %v1562
    %v9695 = vpop.f32.mrf.mxu0
    %v9696 = vadd.f32 %v9407, %v9695
    %v9697 = vpop.f32.mrf.mxu0
    %v9698 = vpop.f32.mrf.mxu0
    %v9699 = vadd.f32 %v9410, %v9698
    %v9700 = vpop.f32.mrf.mxu0
    %9701 = vdwg.mxu0
    %v9750 = vunpack.c.l.b16 %v8851
    %v9751 = vunpack.c.l.b16 %v8852
    %v9752 = vunpack.c.l.b16 %v8853
    %v9753 = vunpack.c.l.b16 %v8854
    %v9754 = vunpack.c.l.b16 %v8855
    %v9755 = vunpack.c.l.b16 %v8856
    %v9756 = vunpack.c.l.b16 %v8857
    %v9757 = vunpack.c.l.b16 %v8858
    %v9758 = vunpack.c.l.b16 %v8859
    %v9759 = vunpack.c.l.b16 %v8860
    %v9760 = vunpack.c.l.b16 %v8861
    %v9761 = vunpack.c.l.b16 %v8862
    %v9762 = vunpack.c.l.b16 %v8863
    %v9763 = vunpack.c.l.b16 %v8864
    %v9764 = vunpack.c.l.b16 %v8865
    %v9765 = vunpack.c.l.b16 %v8866
    %v9766 = vunpack.c.l.b16 %v8867
    %v9767 = vunpack.c.l.b16 %v8868
    %v9768 = vunpack.c.l.b16 %v8869
    %v9769 = vunpack.c.l.b16 %v8870
    %v9770 = vunpack.c.l.b16 %v8871
    %v9771 = vunpack.c.l.b16 %v8872
    %v9772 = vunpack.c.l.b16 %v8873
    %v9773 = vunpack.c.l.b16 %v8874
    %v9774 = vunpack.c.l.b16 %v8875
    %v9775 = vunpack.c.l.b16 %v8876
    %v9776 = vunpack.c.l.b16 %v8877
    %v9777 = vunpack.c.l.b16 %v8878
    %v9778 = vunpack.c.l.b16 %v8879
    %v9779 = vunpack.c.l.b16 %v8880
    %v9780 = vunpack.c.l.b16 %v8881
    %v9781 = vunpack.c.l.b16 %v8882
    %v9782 = vunpack.c.l.b16 %v8883
    %v9783 = vunpack.c.l.b16 %v8884
    %v9784 = vunpack.c.l.b16 %v8885
    %v9785 = vunpack.c.l.b16 %v8886
    %v9786 = vunpack.c.l.b16 %v8887
    %v9787 = vunpack.c.l.b16 %v8888
    %v9788 = vunpack.c.l.b16 %v8889
    %v9789 = vunpack.c.l.b16 %v8890
    %v9790 = vunpack.c.l.b16 %v8891
    %v9791 = vunpack.c.l.b16 %v8892
    %v9792 = vunpack.c.l.b16 %v8893
    %v9793 = vunpack.c.l.b16 %v8894
    %v9794 = vunpack.c.l.b16 %v8895
    %v9795 = vunpack.c.l.b16 %v8896
    %v9796 = vunpack.c.l.b16 %v8897
    %v9797 = vunpack.c.l.b16 %v8898
    %v9798 = vpack.c.b16 %v9751, %v9750
    %v9799 = vpack.c.b16 %v9753, %v9752
    %v9800 = vpack.c.b16 %v9755, %v9754
    %v9801 = vpack.c.b16 %v9757, %v9756
    %v9802 = vpack.c.b16 %v9759, %v9758
    %v9803 = vpack.c.b16 %v9761, %v9760
    %v9804 = vpack.c.b16 %v9763, %v9762
    %v9805 = vpack.c.b16 %v9765, %v9764
    %v9806 = vpack.c.b16 %v9767, %v9766
    %v9807 = vpack.c.b16 %v9769, %v9768
    %v9808 = vpack.c.b16 %v9771, %v9770
    %v9809 = vpack.c.b16 %v9773, %v9772
    %v9810 = vpack.c.b16 %v9775, %v9774
    %v9811 = vpack.c.b16 %v9777, %v9776
    %v9812 = vpack.c.b16 %v9779, %v9778
    %v9813 = vpack.c.b16 %v9781, %v9780
    %v9814 = vpack.c.b16 %v9783, %v9782
    %v9815 = vpack.c.b16 %v9785, %v9784
    %v9816 = vpack.c.b16 %v9787, %v9786
    %v9817 = vpack.c.b16 %v9789, %v9788
    %v9818 = vpack.c.b16 %v9791, %v9790
    %v9819 = vpack.c.b16 %v9793, %v9792
    %v9820 = vpack.c.b16 %v9795, %v9794
    %v9821 = vpack.c.b16 %v9797, %v9796
    %9846 = vmatprep.subr.bf16.mxu0 0
    %9847 = vmatpush1.bf16.msra.mxu0 %v9805
    %9848 = vmatprep.subr.bf16.mxu0 0
    %9849 = vmatpush1.bf16.msra.mxu0 %v9804
    %9850 = vmatprep.subr.bf16.mxu0 0
    %9851 = vmatpush1.bf16.msra.mxu0 %v9803
    %9852 = vmatprep.subr.bf16.mxu0 0
    %9853 = vmatpush1.bf16.msra.mxu0 %v9802
    %9854 = vmatprep.subr.bf16.mxu0 0
    %9855 = vmatpush1.bf16.msra.mxu0 %v9801
    %9856 = vmatprep.subr.bf16.mxu0 0
    %9857 = vmatpush1.bf16.msra.mxu0 %v9800
    %9858 = vmatprep.subr.bf16.mxu0 0
    %9859 = vmatpush1.bf16.msra.mxu0 %v9799
    %9860 = vmatprep.subr.bf16.mxu0 0
    %9861 = vmatpush1.bf16.msra.mxu0 %v9798
    %9862 = vmatprep.subr.bf16.mxu0 0
    %9863 = vmatpush2.bf16.msra.mxu0 %v9813
    %9864 = vmatprep.subr.bf16.mxu0 0
    %9865 = vmatpush2.bf16.msra.mxu0 %v9812
    %9866 = vmatprep.subr.bf16.mxu0 0
    %9867 = vmatpush2.bf16.msra.mxu0 %v9811
    %9868 = vmatprep.subr.bf16.mxu0 0
    %9869 = vmatpush2.bf16.msra.mxu0 %v9810
    %9870 = vmatprep.subr.bf16.mxu0 0
    %9871 = vmatpush2.bf16.msra.mxu0 %v9809
    %9872 = vmatprep.subr.bf16.mxu0 0
    %9873 = vmatpush2.bf16.msra.mxu0 %v9808
    %9874 = vmatprep.subr.bf16.mxu0 0
    %9875 = vmatpush2.bf16.msra.mxu0 %v9807
    %9876 = vmatprep.subr.bf16.mxu0 0
    %9877 = vmatpush2.bf16.msra.mxu0 %v9806
    %9878 = vmatprep.mubr.bf16.mxu0 %v8817
    %9879 = vmatmul.mubr.bf16.gmra.mxu0 %v5223
    %v9880 = vpop.f32.mrf.mxu0
    %v9881 = vadd.f32 %v9448, %v9880
    %v9882 = vpop.f32.mrf.mxu0
    %v9883 = vpop.f32.mrf.mxu0
    %v9884 = vadd.f32 %v9451, %v9883
    %v9885 = vpop.f32.mrf.mxu0
    %9886 = vmatprep.mubr.bf16.mxu0 %v8818
    %9887 = vmatmul.mubr.bf16.gmra.mxu0 %v8817
    %v9888 = vpop.f32.mrf.mxu0
    %v9889 = vadd.f32 %v9456, %v9888
    %v9890 = vpop.f32.mrf.mxu0
    %v9891 = vpop.f32.mrf.mxu0
    %v9892 = vadd.f32 %v9459, %v9891
    %v9893 = vpop.f32.mrf.mxu0
    %9894 = vmatprep.mubr.bf16.mxu0 %v8819
    %9895 = vmatmul.mubr.bf16.gmra.mxu0 %v8818
    %v9896 = vpop.f32.mrf.mxu0
    %v9897 = vadd.f32 %v9464, %v9896
    %v9898 = vpop.f32.mrf.mxu0
    %v9899 = vpop.f32.mrf.mxu0
    %v9900 = vadd.f32 %v9467, %v9899
    %v9901 = vpop.f32.mrf.mxu0
    %9902 = vmatprep.mubr.bf16.mxu0 %v8820
    %9903 = vmatmul.mubr.bf16.gmra.mxu0 %v8819
    %v9904 = vpop.f32.mrf.mxu0
    %v9905 = vadd.f32 %v9472, %v9904
    %v9906 = vpop.f32.mrf.mxu0
    %v9907 = vpop.f32.mrf.mxu0
    %v9908 = vadd.f32 %v9475, %v9907
    %v9909 = vpop.f32.mrf.mxu0
    %9910 = vmatprep.mubr.bf16.mxu0 %v8821
    %9911 = vmatmul.mubr.bf16.gmra.mxu0 %v8820
    %v9912 = vpop.f32.mrf.mxu0
    %v9913 = vadd.f32 %v9480, %v9912
    %v9914 = vpop.f32.mrf.mxu0
    %v9915 = vpop.f32.mrf.mxu0
    %v9916 = vadd.f32 %v9483, %v9915
    %v9917 = vpop.f32.mrf.mxu0
    %9918 = vmatprep.mubr.bf16.mxu0 %v8822
    %9919 = vmatmul.mubr.bf16.gmra.mxu0 %v8821
    %v9920 = vpop.f32.mrf.mxu0
    %v9921 = vadd.f32 %v9488, %v9920
    %v9922 = vpop.f32.mrf.mxu0
    %v9923 = vpop.f32.mrf.mxu0
    %v9924 = vadd.f32 %v9491, %v9923
    %v9925 = vpop.f32.mrf.mxu0
    %9926 = vmatprep.mubr.bf16.mxu0 %v8823
    %9927 = vmatmul.mubr.bf16.gmra.mxu0 %v8822
    %v9928 = vpop.f32.mrf.mxu0
    %v9929 = vadd.f32 %v9496, %v9928
    %v9930 = vpop.f32.mrf.mxu0
    %v9931 = vpop.f32.mrf.mxu0
    %v9932 = vadd.f32 %v9499, %v9931
    %v9933 = vpop.f32.mrf.mxu0
    %9934 = vmatprep.mubr.bf16.mxu0 %v8824
    %9935 = vmatmul.mubr.bf16.gmra.mxu0 %v8823
    %v9936 = vpop.f32.mrf.mxu0
    %v9937 = vadd.f32 %v9504, %v9936
    %v9938 = vpop.f32.mrf.mxu0
    %v9939 = vpop.f32.mrf.mxu0
    %v9940 = vadd.f32 %v9507, %v9939
    %v9941 = vpop.f32.mrf.mxu0
    %9942 = vmatprep.mubr.bf16.mxu0 %v8825
    %9943 = vmatmul.mubr.bf16.gmra.mxu0 %v8824
    %v9944 = vpop.f32.mrf.mxu0
    %v9945 = vadd.f32 %v9512, %v9944
    %v9946 = vpop.f32.mrf.mxu0
    %v9947 = vpop.f32.mrf.mxu0
    %v9948 = vadd.f32 %v9515, %v9947
    %v9949 = vpop.f32.mrf.mxu0
    %9950 = vmatprep.mubr.bf16.mxu0 %v8826
    %9951 = vmatmul.mubr.bf16.gmra.mxu0 %v8825
    %v9952 = vpop.f32.mrf.mxu0
    %v9953 = vadd.f32 %v9520, %v9952
    %v9954 = vpop.f32.mrf.mxu0
    %v9955 = vpop.f32.mrf.mxu0
    %v9956 = vadd.f32 %v9523, %v9955
    %v9957 = vpop.f32.mrf.mxu0
    %9958 = vmatprep.mubr.bf16.mxu0 %v8827
    %9959 = vmatmul.mubr.bf16.gmra.mxu0 %v8826
    %v9960 = vpop.f32.mrf.mxu0
    %v9961 = vadd.f32 %v9528, %v9960
    %v9962 = vpop.f32.mrf.mxu0
    %v9963 = vpop.f32.mrf.mxu0
    %v9964 = vadd.f32 %v9531, %v9963
    %v9965 = vpop.f32.mrf.mxu0
    %9966 = vmatprep.mubr.bf16.mxu0 %v8828
    %9967 = vmatmul.mubr.bf16.gmra.mxu0 %v8827
    %v9968 = vpop.f32.mrf.mxu0
    %v9969 = vadd.f32 %v9536, %v9968
    %v9970 = vpop.f32.mrf.mxu0
    %v9971 = vpop.f32.mrf.mxu0
    %v9972 = vadd.f32 %v9539, %v9971
    %v9973 = vpop.f32.mrf.mxu0
    %9974 = vmatprep.mubr.bf16.mxu0 %v8829
    %9975 = vmatmul.mubr.bf16.gmra.mxu0 %v8828
    %v9976 = vpop.f32.mrf.mxu0
    %v9977 = vadd.f32 %v9544, %v9976
    %v9978 = vpop.f32.mrf.mxu0
    %v9979 = vpop.f32.mrf.mxu0
    %v9980 = vadd.f32 %v9547, %v9979
    %v9981 = vpop.f32.mrf.mxu0
    %9982 = vmatprep.mubr.bf16.mxu0 %v8830
    %9983 = vmatmul.mubr.bf16.gmra.mxu0 %v8829
    %v9984 = vpop.f32.mrf.mxu0
    %v9985 = vadd.f32 %v9552, %v9984
    %v9986 = vpop.f32.mrf.mxu0
    %v9987 = vpop.f32.mrf.mxu0
    %v9988 = vadd.f32 %v9555, %v9987
    %v9989 = vpop.f32.mrf.mxu0
    %9990 = vmatprep.mubr.bf16.mxu0 %v8831
    %9991 = vmatmul.mubr.bf16.gmra.mxu0 %v8830
    %v9992 = vpop.f32.mrf.mxu0
    %v9993 = vadd.f32 %v9560, %v9992
    %v9994 = vpop.f32.mrf.mxu0
    %v9995 = vpop.f32.mrf.mxu0
    %v9996 = vadd.f32 %v9563, %v9995
    %v9997 = vpop.f32.mrf.mxu0
    %9998 = vmatprep.mubr.bf16.mxu0 %v8847
    %9999 = vmatmul.mubr.bf16.gmra.mxu0 %v8831
    %v10000 = vpop.f32.mrf.mxu0
    %v10001 = vadd.f32 %v9568, %v10000
    %v10002 = vpop.f32.mrf.mxu0
    %v10003 = vpop.f32.mrf.mxu0
    %v10004 = vadd.f32 %v9571, %v10003
    %v10005 = vpop.f32.mrf.mxu0
    %10006 = vmatprep.mubr.bf16.mxu0 %v8832
    %10007 = vmatmul.mubr.bf16.gmra.mxu0 %v5223
    %v10008 = vpop.f32.mrf.mxu0
    %v10009 = vadd.f32 %v9576, %v10008
    %v10010 = vpop.f32.mrf.mxu0
    %v10011 = vpop.f32.mrf.mxu0
    %v10012 = vadd.f32 %v9579, %v10011
    %v10013 = vpop.f32.mrf.mxu0
    %10014 = vmatprep.mubr.bf16.mxu0 %v8833
    %10015 = vmatmul.mubr.bf16.gmra.mxu0 %v8832
    %v10016 = vpop.f32.mrf.mxu0
    %v10017 = vadd.f32 %v9584, %v10016
    %v10018 = vpop.f32.mrf.mxu0
    %v10019 = vpop.f32.mrf.mxu0
    %v10020 = vadd.f32 %v9587, %v10019
    %v10021 = vpop.f32.mrf.mxu0
    %10022 = vmatprep.mubr.bf16.mxu0 %v8834
    %10023 = vmatmul.mubr.bf16.gmra.mxu0 %v8833
    %v10024 = vpop.f32.mrf.mxu0
    %v10025 = vadd.f32 %v9592, %v10024
    %v10026 = vpop.f32.mrf.mxu0
    %v10027 = vpop.f32.mrf.mxu0
    %v10028 = vadd.f32 %v9595, %v10027
    %v10029 = vpop.f32.mrf.mxu0
    %10030 = vmatprep.mubr.bf16.mxu0 %v8835
    %10031 = vmatmul.mubr.bf16.gmra.mxu0 %v8834
    %v10032 = vpop.f32.mrf.mxu0
    %v10033 = vadd.f32 %v9600, %v10032
    %v10034 = vpop.f32.mrf.mxu0
    %v10035 = vpop.f32.mrf.mxu0
    %v10036 = vadd.f32 %v9603, %v10035
    %v10037 = vpop.f32.mrf.mxu0
    %10038 = vmatprep.mubr.bf16.mxu0 %v8836
    %10039 = vmatmul.mubr.bf16.gmra.mxu0 %v8835
    %v10040 = vpop.f32.mrf.mxu0
    %v10041 = vadd.f32 %v9608, %v10040
    %v10042 = vpop.f32.mrf.mxu0
    %v10043 = vpop.f32.mrf.mxu0
    %v10044 = vadd.f32 %v9611, %v10043
    %v10045 = vpop.f32.mrf.mxu0
    %10046 = vmatprep.mubr.bf16.mxu0 %v8837
    %10047 = vmatmul.mubr.bf16.gmra.mxu0 %v8836
    %v10048 = vpop.f32.mrf.mxu0
    %v10049 = vadd.f32 %v9616, %v10048
    %v10050 = vpop.f32.mrf.mxu0
    %v10051 = vpop.f32.mrf.mxu0
    %v10052 = vadd.f32 %v9619, %v10051
    %v10053 = vpop.f32.mrf.mxu0
    %10054 = vmatprep.mubr.bf16.mxu0 %v8838
    %10055 = vmatmul.mubr.bf16.gmra.mxu0 %v8837
    %v10056 = vpop.f32.mrf.mxu0
    %v10057 = vadd.f32 %v9624, %v10056
    %v10058 = vpop.f32.mrf.mxu0
    %v10059 = vpop.f32.mrf.mxu0
    %v10060 = vadd.f32 %v9627, %v10059
    %v10061 = vpop.f32.mrf.mxu0
    %10062 = vmatprep.mubr.bf16.mxu0 %v8839
    %10063 = vmatmul.mubr.bf16.gmra.mxu0 %v8838
    %v10064 = vpop.f32.mrf.mxu0
    %v10065 = vadd.f32 %v9632, %v10064
    %v10066 = vpop.f32.mrf.mxu0
    %v10067 = vpop.f32.mrf.mxu0
    %v10068 = vadd.f32 %v9635, %v10067
    %v10069 = vpop.f32.mrf.mxu0
    %10070 = vmatprep.mubr.bf16.mxu0 %v8840
    %10071 = vmatmul.mubr.bf16.gmra.mxu0 %v8839
    %v10072 = vpop.f32.mrf.mxu0
    %v10073 = vadd.f32 %v9640, %v10072
    %v10074 = vpop.f32.mrf.mxu0
    %v10075 = vpop.f32.mrf.mxu0
    %v10076 = vadd.f32 %v9643, %v10075
    %v10077 = vpop.f32.mrf.mxu0
    %10078 = vmatprep.mubr.bf16.mxu0 %v8841
    %10079 = vmatmul.mubr.bf16.gmra.mxu0 %v8840
    %v10080 = vpop.f32.mrf.mxu0
    %v10081 = vadd.f32 %v9648, %v10080
    %v10082 = vpop.f32.mrf.mxu0
    %v10083 = vpop.f32.mrf.mxu0
    %v10084 = vadd.f32 %v9651, %v10083
    %v10085 = vpop.f32.mrf.mxu0
    %10086 = vmatprep.mubr.bf16.mxu0 %v8842
    %10087 = vmatmul.mubr.bf16.gmra.mxu0 %v8841
    %v10088 = vpop.f32.mrf.mxu0
    %v10089 = vadd.f32 %v9656, %v10088
    %v10090 = vpop.f32.mrf.mxu0
    %v10091 = vpop.f32.mrf.mxu0
    %v10092 = vadd.f32 %v9659, %v10091
    %v10093 = vpop.f32.mrf.mxu0
    %10094 = vmatprep.mubr.bf16.mxu0 %v8843
    %10095 = vmatmul.mubr.bf16.gmra.mxu0 %v8842
    %v10096 = vpop.f32.mrf.mxu0
    %v10097 = vadd.f32 %v9664, %v10096
    %v10098 = vpop.f32.mrf.mxu0
    %v10099 = vpop.f32.mrf.mxu0
    %v10100 = vadd.f32 %v9667, %v10099
    %v10101 = vpop.f32.mrf.mxu0
    %10102 = vmatprep.mubr.bf16.mxu0 %v8844
    %10103 = vmatmul.mubr.bf16.gmra.mxu0 %v8843
    %v10104 = vpop.f32.mrf.mxu0
    %v10105 = vadd.f32 %v9672, %v10104
    %v10106 = vpop.f32.mrf.mxu0
    %v10107 = vpop.f32.mrf.mxu0
    %v10108 = vadd.f32 %v9675, %v10107
    %v10109 = vpop.f32.mrf.mxu0
    %10110 = vmatprep.mubr.bf16.mxu0 %v8845
    %10111 = vmatmul.mubr.bf16.gmra.mxu0 %v8844
    %v10112 = vpop.f32.mrf.mxu0
    %v10113 = vadd.f32 %v9680, %v10112
    %v10114 = vpop.f32.mrf.mxu0
    %v10115 = vpop.f32.mrf.mxu0
    %v10116 = vadd.f32 %v9683, %v10115
    %v10117 = vpop.f32.mrf.mxu0
    %10118 = vmatprep.mubr.bf16.mxu0 %v8846
    %10119 = vmatmul.mubr.bf16.gmra.mxu0 %v8845
    %v10120 = vpop.f32.mrf.mxu0
    %v10121 = vadd.f32 %v9688, %v10120
    %v10122 = vpop.f32.mrf.mxu0
    %v10123 = vpop.f32.mrf.mxu0
    %v10124 = vadd.f32 %v9691, %v10123
    %v10125 = vpop.f32.mrf.mxu0
    %10126 = vmatprep.mubr.bf16.mxu0 %v8848
    %10127 = vmatmul.mubr.bf16.gmra.mxu0 %v8846
    %v10128 = vpop.f32.mrf.mxu0
    %v10129 = vadd.f32 %v9696, %v10128
    %v10130 = vpop.f32.mrf.mxu0
    %v10131 = vpop.f32.mrf.mxu0
    %v10132 = vadd.f32 %v9699, %v10131
    %v10133 = vpop.f32.mrf.mxu0
    %10134 = vdwg.mxu0
    %10135 = vmatprep.subr.bf16.mxu0 0
    %10136 = vmatpush1.bf16.msra.mxu0 %v9821
    %10137 = vmatprep.subr.bf16.mxu0 0
    %10138 = vmatpush1.bf16.msra.mxu0 %v9820
    %10139 = vmatprep.subr.bf16.mxu0 0
    %10140 = vmatpush1.bf16.msra.mxu0 %v9819
    %10141 = vmatprep.subr.bf16.mxu0 0
    %10142 = vmatpush1.bf16.msra.mxu0 %v9818
    %10143 = vmatprep.subr.bf16.mxu0 0
    %10144 = vmatpush1.bf16.msra.mxu0 %v9817
    %10145 = vmatprep.subr.bf16.mxu0 0
    %10146 = vmatpush1.bf16.msra.mxu0 %v9816
    %10147 = vmatprep.subr.bf16.mxu0 0
    %10148 = vmatpush1.bf16.msra.mxu0 %v9815
    %10149 = vmatprep.subr.bf16.mxu0 0
    %10150 = vmatpush1.bf16.msra.mxu0 %v9814
    %10151 = vmatprep.subr.bf16.mxu0 0
    %10152 = vmatpush2.bf16.msra.mxu0 0
    %10153 = vmatprep.subr.bf16.mxu0 0
    %10154 = vmatpush2.bf16.msra.mxu0 0
    %10155 = vmatprep.subr.bf16.mxu0 0
    %10156 = vmatpush2.bf16.msra.mxu0 0
    %10157 = vmatprep.subr.bf16.mxu0 0
    %10158 = vmatpush2.bf16.msra.mxu0 0
    %10159 = vmatprep.subr.bf16.mxu0 0
    %10160 = vmatpush2.bf16.msra.mxu0 0
    %10161 = vmatprep.subr.bf16.mxu0 0
    %10162 = vmatpush2.bf16.msra.mxu0 0
    %10163 = vmatprep.subr.bf16.mxu0 0
    %10164 = vmatpush2.bf16.msra.mxu0 0
    %10165 = vmatprep.subr.bf16.mxu0 0
    %10166 = vmatpush2.bf16.msra.mxu0 0
    %10167 = vmatprep.mubr.bf16.mxu0 0
    %10168 = vmatmul.mubr.bf16.gmra.mxu0 %v8818
    %v10169 = vpop.f32.mrf.mxu0
    %v10170 = vadd.f32 %v9881, %v10169
    %v10171 = vpop.f32.mrf.mxu0
    %v10172 = vpop.f32.mrf.mxu0
    %v10173 = vadd.f32 %v9884, %v10172
    %v10174 = vpop.f32.mrf.mxu0
    %10175 = vmatprep.mubr.bf16.mxu0 0
    %10176 = vmatmul.mubr.bf16.gmra.mxu0 %v8819
    %v10177 = vpop.f32.mrf.mxu0
    %v10178 = vadd.f32 %v9889, %v10177
    %v10179 = vpop.f32.mrf.mxu0
    %v10180 = vpop.f32.mrf.mxu0
    %v10181 = vadd.f32 %v9892, %v10180
    %v10182 = vpop.f32.mrf.mxu0
    %10183 = vmatprep.mubr.bf16.mxu0 0
    %10184 = vmatmul.mubr.bf16.gmra.mxu0 %v8820
    %v10185 = vpop.f32.mrf.mxu0
    %v10186 = vadd.f32 %v9897, %v10185
    %v10187 = vpop.f32.mrf.mxu0
    %v10188 = vpop.f32.mrf.mxu0
    %v10189 = vadd.f32 %v9900, %v10188
    %v10190 = vpop.f32.mrf.mxu0
    %10191 = vmatprep.mubr.bf16.mxu0 0
    %10192 = vmatmul.mubr.bf16.gmra.mxu0 %v8821
    %v10193 = vpop.f32.mrf.mxu0
    %v10194 = vadd.f32 %v9905, %v10193
    %v10195 = vpop.f32.mrf.mxu0
    %v10196 = vpop.f32.mrf.mxu0
    %v10197 = vadd.f32 %v9908, %v10196
    %v10198 = vpop.f32.mrf.mxu0
    %10199 = vmatprep.mubr.bf16.mxu0 0
    %10200 = vmatmul.mubr.bf16.gmra.mxu0 %v8822
    %v10201 = vpop.f32.mrf.mxu0
    %v10202 = vadd.f32 %v9913, %v10201
    %v10203 = vpop.f32.mrf.mxu0
    %v10204 = vpop.f32.mrf.mxu0
    %v10205 = vadd.f32 %v9916, %v10204
    %v10206 = vpop.f32.mrf.mxu0
    %10207 = vmatprep.mubr.bf16.mxu0 0
    %10208 = vmatmul.mubr.bf16.gmra.mxu0 %v8823
    %v10209 = vpop.f32.mrf.mxu0
    %v10210 = vadd.f32 %v9921, %v10209
    %v10211 = vpop.f32.mrf.mxu0
    %v10212 = vpop.f32.mrf.mxu0
    %v10213 = vadd.f32 %v9924, %v10212
    %v10214 = vpop.f32.mrf.mxu0
    %10215 = vmatprep.mubr.bf16.mxu0 0
    %10216 = vmatmul.mubr.bf16.gmra.mxu0 %v8824
    %v10217 = vpop.f32.mrf.mxu0
    %v10218 = vadd.f32 %v9929, %v10217
    %v10219 = vpop.f32.mrf.mxu0
    %v10220 = vpop.f32.mrf.mxu0
    %v10221 = vadd.f32 %v9932, %v10220
    %v10222 = vpop.f32.mrf.mxu0
    %10223 = vmatprep.mubr.bf16.mxu0 0
    %10224 = vmatmul.mubr.bf16.gmra.mxu0 %v8825
    %v10225 = vpop.f32.mrf.mxu0
    %v10226 = vadd.f32 %v9937, %v10225
    %v10227 = vpop.f32.mrf.mxu0
    %v10228 = vpop.f32.mrf.mxu0
    %v10229 = vadd.f32 %v9940, %v10228
    %v10230 = vpop.f32.mrf.mxu0
    %10231 = vmatprep.mubr.bf16.mxu0 0
    %10232 = vmatmul.mubr.bf16.gmra.mxu0 %v8826
    %v10233 = vpop.f32.mrf.mxu0
    %v10234 = vadd.f32 %v9945, %v10233
    %v10235 = vpop.f32.mrf.mxu0
    %v10236 = vpop.f32.mrf.mxu0
    %v10237 = vadd.f32 %v9948, %v10236
    %v10238 = vpop.f32.mrf.mxu0
    %10239 = vmatprep.mubr.bf16.mxu0 0
    %10240 = vmatmul.mubr.bf16.gmra.mxu0 %v8827
    %v10241 = vpop.f32.mrf.mxu0
    %v10242 = vadd.f32 %v9953, %v10241
    %v10243 = vpop.f32.mrf.mxu0
    %v10244 = vpop.f32.mrf.mxu0
    %v10245 = vadd.f32 %v9956, %v10244
    %v10246 = vpop.f32.mrf.mxu0
    %10247 = vmatprep.mubr.bf16.mxu0 0
    %10248 = vmatmul.mubr.bf16.gmra.mxu0 %v8828
    %v10249 = vpop.f32.mrf.mxu0
    %v10250 = vadd.f32 %v9961, %v10249
    %v10251 = vpop.f32.mrf.mxu0
    %v10252 = vpop.f32.mrf.mxu0
    %v10253 = vadd.f32 %v9964, %v10252
    %v10254 = vpop.f32.mrf.mxu0
    %10255 = vmatprep.mubr.bf16.mxu0 0
    %10256 = vmatmul.mubr.bf16.gmra.mxu0 %v8829
    %v10257 = vpop.f32.mrf.mxu0
    %v10258 = vadd.f32 %v9969, %v10257
    %v10259 = vpop.f32.mrf.mxu0
    %v10260 = vpop.f32.mrf.mxu0
    %v10261 = vadd.f32 %v9972, %v10260
    %v10262 = vpop.f32.mrf.mxu0
    %10263 = vmatprep.mubr.bf16.mxu0 0
    %10264 = vmatmul.mubr.bf16.gmra.mxu0 %v8830
    %v10265 = vpop.f32.mrf.mxu0
    %v10266 = vadd.f32 %v9977, %v10265
    %v10267 = vpop.f32.mrf.mxu0
    %v10268 = vpop.f32.mrf.mxu0
    %v10269 = vadd.f32 %v9980, %v10268
    %v10270 = vpop.f32.mrf.mxu0
    %10271 = vmatprep.mubr.bf16.mxu0 0
    %10272 = vmatmul.mubr.bf16.gmra.mxu0 %v8831
    %v10273 = vpop.f32.mrf.mxu0
    %v10274 = vadd.f32 %v9985, %v10273
    %v10275 = vpop.f32.mrf.mxu0
    %v10276 = vpop.f32.mrf.mxu0
    %v10277 = vadd.f32 %v9988, %v10276
    %v10278 = vpop.f32.mrf.mxu0
    %10279 = vmatprep.mubr.bf16.mxu0 0
    %10280 = vmatmul.mubr.bf16.gmra.mxu0 %v8847
    %v10281 = vpop.f32.mrf.mxu0
    %v10282 = vadd.f32 %v9993, %v10281
    %v10283 = vpop.f32.mrf.mxu0
    %v10284 = vpop.f32.mrf.mxu0
    %v10285 = vadd.f32 %v9996, %v10284
    %v10286 = vpop.f32.mrf.mxu0
    %10287 = vmatprep.mubr.bf16.mxu0 0
    %10288 = vmatmul.mubr.bf16.gmra.mxu0 %v8849
    %v10289 = vpop.f32.mrf.mxu0
    %v10290 = vadd.f32 %v10001, %v10289
    %v10291 = vpop.f32.mrf.mxu0
    %v10292 = vpop.f32.mrf.mxu0
    %v10293 = vadd.f32 %v10004, %v10292
    %v10294 = vpop.f32.mrf.mxu0
    %10295 = vmatprep.mubr.bf16.mxu0 0
    %10296 = vmatmul.mubr.bf16.gmra.mxu0 %v8833
    %v10297 = vpop.f32.mrf.mxu0
    %v10298 = vadd.f32 %v10009, %v10297
    %v10299 = vpop.f32.mrf.mxu0
    %v10300 = vpop.f32.mrf.mxu0
    %v10301 = vadd.f32 %v10012, %v10300
    %v10302 = vpop.f32.mrf.mxu0
    %10303 = vmatprep.mubr.bf16.mxu0 0
    %10304 = vmatmul.mubr.bf16.gmra.mxu0 %v8834
    %v10305 = vpop.f32.mrf.mxu0
    %v10306 = vadd.f32 %v10017, %v10305
    %v10307 = vpop.f32.mrf.mxu0
    %v10308 = vpop.f32.mrf.mxu0
    %v10309 = vadd.f32 %v10020, %v10308
    %v10310 = vpop.f32.mrf.mxu0
    %10311 = vmatprep.mubr.bf16.mxu0 0
    %10312 = vmatmul.mubr.bf16.gmra.mxu0 %v8835
    %v10313 = vpop.f32.mrf.mxu0
    %v10314 = vadd.f32 %v10025, %v10313
    %v10315 = vpop.f32.mrf.mxu0
    %v10316 = vpop.f32.mrf.mxu0
    %v10317 = vadd.f32 %v10028, %v10316
    %v10318 = vpop.f32.mrf.mxu0
    %10319 = vmatprep.mubr.bf16.mxu0 0
    %10320 = vmatmul.mubr.bf16.gmra.mxu0 %v8836
    %v10321 = vpop.f32.mrf.mxu0
    %v10322 = vadd.f32 %v10033, %v10321
    %v10323 = vpop.f32.mrf.mxu0
    %v10324 = vpop.f32.mrf.mxu0
    %v10325 = vadd.f32 %v10036, %v10324
    %v10326 = vpop.f32.mrf.mxu0
    %10327 = vmatprep.mubr.bf16.mxu0 0
    %10328 = vmatmul.mubr.bf16.gmra.mxu0 %v8837
    %v10329 = vpop.f32.mrf.mxu0
    %v10330 = vadd.f32 %v10041, %v10329
    %v10331 = vpop.f32.mrf.mxu0
    %v10332 = vpop.f32.mrf.mxu0
    %v10333 = vadd.f32 %v10044, %v10332
    %v10334 = vpop.f32.mrf.mxu0
    %10335 = vmatprep.mubr.bf16.mxu0 0
    %10336 = vmatmul.mubr.bf16.gmra.mxu0 %v8838
    %v10337 = vpop.f32.mrf.mxu0
    %v10338 = vadd.f32 %v10049, %v10337
    %v10339 = vpop.f32.mrf.mxu0
    %v10340 = vpop.f32.mrf.mxu0
    %v10341 = vadd.f32 %v10052, %v10340
    %v10342 = vpop.f32.mrf.mxu0
    %10343 = vmatprep.mubr.bf16.mxu0 0
    %10344 = vmatmul.mubr.bf16.gmra.mxu0 %v8839
    %v10345 = vpop.f32.mrf.mxu0
    %v10346 = vadd.f32 %v10057, %v10345
    %v10347 = vpop.f32.mrf.mxu0
    %v10348 = vpop.f32.mrf.mxu0
    %v10349 = vadd.f32 %v10060, %v10348
    %v10350 = vpop.f32.mrf.mxu0
    %10351 = vmatprep.mubr.bf16.mxu0 0
    %10352 = vmatmul.mubr.bf16.gmra.mxu0 %v8840
    %v10353 = vpop.f32.mrf.mxu0
    %v10354 = vadd.f32 %v10065, %v10353
    %v10355 = vpop.f32.mrf.mxu0
    %v10356 = vpop.f32.mrf.mxu0
    %v10357 = vadd.f32 %v10068, %v10356
    %v10358 = vpop.f32.mrf.mxu0
    %10359 = vmatprep.mubr.bf16.mxu0 0
    %10360 = vmatmul.mubr.bf16.gmra.mxu0 %v8841
    %v10361 = vpop.f32.mrf.mxu0
    %v10362 = vadd.f32 %v10073, %v10361
    %v10363 = vpop.f32.mrf.mxu0
    %v10364 = vpop.f32.mrf.mxu0
    %v10365 = vadd.f32 %v10076, %v10364
    %v10366 = vpop.f32.mrf.mxu0
    %10367 = vmatprep.mubr.bf16.mxu0 0
    %10368 = vmatmul.mubr.bf16.gmra.mxu0 %v8842
    %v10369 = vpop.f32.mrf.mxu0
    %v10370 = vadd.f32 %v10081, %v10369
    %v10371 = vpop.f32.mrf.mxu0
    %v10372 = vpop.f32.mrf.mxu0
    %v10373 = vadd.f32 %v10084, %v10372
    %v10374 = vpop.f32.mrf.mxu0
    %10375 = vmatprep.mubr.bf16.mxu0 0
    %10376 = vmatmul.mubr.bf16.gmra.mxu0 %v8843
    %v10377 = vpop.f32.mrf.mxu0
    %v10378 = vadd.f32 %v10089, %v10377
    %v10379 = vpop.f32.mrf.mxu0
    %v10380 = vpop.f32.mrf.mxu0
    %v10381 = vadd.f32 %v10092, %v10380
    %v10382 = vpop.f32.mrf.mxu0
    %10383 = vmatprep.mubr.bf16.mxu0 0
    %10384 = vmatmul.mubr.bf16.gmra.mxu0 %v8844
    %v10385 = vpop.f32.mrf.mxu0
    %v10386 = vadd.f32 %v10097, %v10385
    %v10387 = vpop.f32.mrf.mxu0
    %v10388 = vpop.f32.mrf.mxu0
    %v10389 = vadd.f32 %v10100, %v10388
    %v10390 = vpop.f32.mrf.mxu0
    %10391 = vmatprep.mubr.bf16.mxu0 0
    %10392 = vmatmul.mubr.bf16.gmra.mxu0 %v8845
    %v10393 = vpop.f32.mrf.mxu0
    %v10394 = vadd.f32 %v10105, %v10393
    %v10395 = vpop.f32.mrf.mxu0
    %v10396 = vpop.f32.mrf.mxu0
    %v10397 = vadd.f32 %v10108, %v10396
    %v10398 = vpop.f32.mrf.mxu0
    %10399 = vmatprep.mubr.bf16.mxu0 0
    %10400 = vmatmul.mubr.bf16.gmra.mxu0 %v8846
    %v10401 = vpop.f32.mrf.mxu0
    %v10402 = vadd.f32 %v10113, %v10401
    %v10403 = vpop.f32.mrf.mxu0
    %v10404 = vpop.f32.mrf.mxu0
    %v10405 = vadd.f32 %v10116, %v10404
    %v10406 = vpop.f32.mrf.mxu0
    %10407 = vmatprep.mubr.bf16.mxu0 0
    %10408 = vmatmul.mubr.bf16.gmra.mxu0 %v8848
    %v10409 = vpop.f32.mrf.mxu0
    %v10410 = vadd.f32 %v10121, %v10409
    %v10411 = vpop.f32.mrf.mxu0
    %v10412 = vpop.f32.mrf.mxu0
    %v10413 = vadd.f32 %v10124, %v10412
    %v10414 = vpop.f32.mrf.mxu0
    %10415 = vmatprep.mubr.bf16.mxu0 0
    %10416 = vmatmul.mubr.bf16.gmra.mxu0 %v8850
    %v10417 = vpop.f32.mrf.mxu0
    %v10418 = vadd.f32 %v10129, %v10417
    %v10419 = vpop.f32.mrf.mxu0
    %v10420 = vpop.f32.mrf.mxu0
    %v10421 = vadd.f32 %v10132, %v10420
    %v10422 = vpop.f32.mrf.mxu0
    %10423 = vdwg.mxu0
    %v10424 = vrot.slane %v8557, 1
    %v10425 = vrot.slane %v8558, 1
    %v10426 = vrot.slane %v8559, 1
    %v10427 = vrot.slane %v8560, 1
    %v10428 = vrot.slane %v8561, 1
    %v10429 = vrot.slane %v8562, 1
    %v10430 = vrot.slane %v8563, 1
    %v10431 = vrot.slane %v8564, 1
    %v10432 = vrot.slane %v8565, 1
    %v10433 = vrot.slane %v8566, 1
    %v10434 = vrot.slane %v8567, 1
    %v10435 = vrot.slane %v8568, 1
    %v10436 = vrot.slane %v8569, 1
    %v10437 = vrot.slane %v8570, 1
    %v10438 = vrot.slane %v8571, 1
    %v10439 = vrot.slane %v8572, 1
    %v10440 = vrot.slane %v8573, 1
    %v10441 = vrot.slane %v8574, 1
    %v10442 = vrot.slane %v8575, 1
    %v10443 = vrot.slane %v8576, 1
    %v10444 = vrot.slane %v8577, 1
    %v10445 = vrot.slane %v8578, 1
    %v10446 = vrot.slane %v8579, 1
    %v10447 = vrot.slane %v8580, 1
    %v10448 = vrot.slane %v8581, 1
    %v10449 = vrot.slane %v8582, 1
    %v10450 = vrot.slane %v8583, 1
    %v10451 = vrot.slane %v8584, 1
    %v10452 = vrot.slane %v8585, 1
    %v10453 = vrot.slane %v8586, 1
    %v10454 = vrot.slane %v8587, 1
    %v10455 = vrot.slane %v8588, 1
    %v10456 = vrot.slane %v8589, 1
    %v10457 = vrot.slane %v8590, 1
    %v10458 = vrot.slane %v8591, 1
    %v10459 = vrot.slane %v8592, 1
    %v10460 = vrot.slane %v8593, 1
    %v10461 = vrot.slane %v8594, 1
    %v10462 = vrot.slane %v8595, 1
    %v10463 = vrot.slane %v8596, 1
    %v10464 = vrot.slane %v8597, 1
    %v10465 = vrot.slane %v8598, 1
    %v10466 = vrot.slane %v8599, 1
    %v10467 = vrot.slane %v8600, 1
    %v10468 = vrot.slane %v8601, 1
    %v10469 = vrot.slane %v8602, 1
    %v10470 = vrot.slane %v8603, 1
    %v10471 = vrot.slane %v8604, 1
    %v10472 = vrot.slane %v8605, 1
    %v10473 = vrot.slane %v8606, 1
    %v10474 = vrot.slane %v8607, 1
    %v10475 = vrot.slane %v8608, 1
    %v10476 = vrot.slane %v8609, 1
    %v10477 = vrot.slane %v8610, 1
    %v10478 = vrot.slane %v8611, 1
    %v10479 = vrot.slane %v8612, 1
    %v10480 = vrot.slane %v8613, 1
    %v10481 = vrot.slane %v8614, 1
    %v10482 = vrot.slane %v8615, 1
    %v10483 = vrot.slane %v8616, 1
    %v10484 = vrot.slane %v8617, 1
    %v10485 = vrot.slane %v8618, 1
    %v10486 = vrot.slane %v8619, 1
    %v10487 = vrot.slane %v8620, 1
    %v10488 = vsel %vm2394, %v10487, 0.0
    %v10489 = vsel %vm2394, %v10486, %v10487
    %v10490 = vsel %vm2394, %v10485, %v10486
    %v10491 = vsel %vm2394, %v10484, %v10485
    %v10492 = vsel %vm2394, %v10483, %v10484
    %v10493 = vsel %vm2394, %v10482, %v10483
    %v10494 = vsel %vm2394, %v10481, %v10482
    %v10495 = vsel %vm2394, %v10480, %v10481
    %v10496 = vsel %vm2394, %v10479, %v10480
    %v10497 = vsel %vm2394, %v10478, %v10479
    %v10498 = vsel %vm2394, %v10477, %v10478
    %v10499 = vsel %vm2394, %v10476, %v10477
    %v10500 = vsel %vm2394, %v10475, %v10476
    %v10501 = vsel %vm2394, %v10474, %v10475
    %v10502 = vsel %vm2394, %v10473, %v10474
    %v10503 = vsel %vm2394, %v10472, %v10473
    %v10504 = vsel %vm2394, %v10471, %v10472
    %v10505 = vsel %vm2394, %v10470, %v10471
    %v10506 = vsel %vm2394, %v10469, %v10470
    %v10507 = vsel %vm2394, %v10468, %v10469
    %v10508 = vsel %vm2394, %v10467, %v10468
    %v10509 = vsel %vm2394, %v10466, %v10467
    %v10510 = vsel %vm2394, %v10465, %v10466
    %v10511 = vsel %vm2394, %v10464, %v10465
    %v10512 = vsel %vm2394, %v10463, %v10464
    %v10513 = vsel %vm2394, %v10462, %v10463
    %v10514 = vsel %vm2394, %v10461, %v10462
    %v10515 = vsel %vm2394, %v10460, %v10461
    %v10516 = vsel %vm2394, %v10459, %v10460
    %v10517 = vsel %vm2394, %v10458, %v10459
    %v10518 = vsel %vm2394, %v10457, %v10458
    %v10519 = vsel %vm2394, %v10456, %v10457
    %v10520 = vsel %vm2394, 0.0, %v10456
    %v10521 = vsel %vm2394, %v10455, 0.0
    %v10522 = vsel %vm2394, %v10454, %v10455
    %v10523 = vsel %vm2394, %v10453, %v10454
    %v10524 = vsel %vm2394, %v10452, %v10453
    %v10525 = vsel %vm2394, %v10451, %v10452
    %v10526 = vsel %vm2394, %v10450, %v10451
    %v10527 = vsel %vm2394, %v10449, %v10450
    %v10528 = vsel %vm2394, %v10448, %v10449
    %v10529 = vsel %vm2394, %v10447, %v10448
    %v10530 = vsel %vm2394, %v10446, %v10447
    %v10531 = vsel %vm2394, %v10445, %v10446
    %v10532 = vsel %vm2394, %v10444, %v10445
    %v10533 = vsel %vm2394, %v10443, %v10444
    %v10534 = vsel %vm2394, %v10442, %v10443
    %v10535 = vsel %vm2394, %v10441, %v10442
    %v10536 = vsel %vm2394, %v10440, %v10441
    %v10537 = vsel %vm2394, %v10439, %v10440
    %v10538 = vsel %vm2394, %v10438, %v10439
    %v10539 = vsel %vm2394, %v10437, %v10438
    %v10540 = vsel %vm2394, %v10436, %v10437
    %v10541 = vsel %vm2394, %v10435, %v10436
    %v10542 = vsel %vm2394, %v10434, %v10435
    %v10543 = vsel %vm2394, %v10433, %v10434
    %v10544 = vsel %vm2394, %v10432, %v10433
    %v10545 = vsel %vm2394, %v10431, %v10432
    %v10546 = vsel %vm2394, %v10430, %v10431
    %v10547 = vsel %vm2394, %v10429, %v10430
    %v10548 = vsel %vm2394, %v10428, %v10429
    %v10549 = vsel %vm2394, %v10427, %v10428
    %v10550 = vsel %vm2394, %v10426, %v10427
    %v10551 = vsel %vm2394, %v10425, %v10426
    %v10552 = vsel %vm2394, %v10424, %v10425
    %v10553 = vsel %vm2394, 0.0, %v10424
    %v10554 = vsel %vm6902, %v10553, 0.0
    %v10555 = vsel %vm6901, %v10552, 0.0
    %v10556 = vsel %vm6902, %v10551, 0.0
    %v10557 = vsel %vm6901, %v10550, 0.0
    %v10558 = vsel %vm6902, %v10549, 0.0
    %v10559 = vsel %vm6901, %v10548, 0.0
    %v10560 = vsel %vm6902, %v10547, 0.0
    %v10561 = vsel %vm6901, %v10546, 0.0
    %v10562 = vsel %vm6902, %v10545, 0.0
    %v10563 = vsel %vm6901, %v10544, 0.0
    %v10564 = vsel %vm6902, %v10543, 0.0
    %v10565 = vsel %vm6901, %v10542, 0.0
    %v10566 = vsel %vm6902, %v10541, 0.0
    %v10567 = vsel %vm6901, %v10540, 0.0
    %v10568 = vsel %vm6902, %v10539, 0.0
    %v10569 = vsel %vm6901, %v10538, 0.0
    %v10570 = vsel %vm6902, %v10537, 0.0
    %v10571 = vsel %vm6901, %v10536, 0.0
    %v10572 = vsel %vm6902, %v10535, 0.0
    %v10573 = vsel %vm6901, %v10534, 0.0
    %v10574 = vsel %vm6902, %v10533, 0.0
    %v10575 = vsel %vm6901, %v10532, 0.0
    %v10576 = vsel %vm6902, %v10531, 0.0
    %v10577 = vsel %vm6901, %v10530, 0.0
    %v10578 = vsel %vm6902, %v10529, 0.0
    %v10579 = vsel %vm6901, %v10528, 0.0
    %v10580 = vsel %vm6902, %v10527, 0.0
    %v10581 = vsel %vm6901, %v10526, 0.0
    %v10582 = vsel %vm6902, %v10525, 0.0
    %v10583 = vsel %vm6901, %v10524, 0.0
    %v10584 = vsel %vm6902, %v10523, 0.0
    %v10585 = vsel %vm6901, %v10522, 0.0
    %v10586 = vsel %vm6902, %v10521, 0.0
    %v10587 = vsel %vm6902, %v10520, 0.0
    %v10588 = vsel %vm6901, %v10519, 0.0
    %v10589 = vsel %vm6902, %v10518, 0.0
    %v10590 = vsel %vm6901, %v10517, 0.0
    %v10591 = vsel %vm6902, %v10516, 0.0
    %v10592 = vsel %vm6901, %v10515, 0.0
    %v10593 = vsel %vm6902, %v10514, 0.0
    %v10594 = vsel %vm6901, %v10513, 0.0
    %v10595 = vsel %vm6902, %v10512, 0.0
    %v10596 = vsel %vm6901, %v10511, 0.0
    %v10597 = vsel %vm6902, %v10510, 0.0
    %v10598 = vsel %vm6901, %v10509, 0.0
    %v10599 = vsel %vm6902, %v10508, 0.0
    %v10600 = vsel %vm6901, %v10507, 0.0
    %v10601 = vsel %vm6902, %v10506, 0.0
    %v10602 = vsel %vm6901, %v10505, 0.0
    %v10603 = vsel %vm6902, %v10504, 0.0
    %v10604 = vsel %vm6901, %v10503, 0.0
    %v10605 = vsel %vm6902, %v10502, 0.0
    %v10606 = vsel %vm6901, %v10501, 0.0
    %v10607 = vsel %vm6902, %v10500, 0.0
    %v10608 = vsel %vm6901, %v10499, 0.0
    %v10609 = vsel %vm6902, %v10498, 0.0
    %v10610 = vsel %vm6901, %v10497, 0.0
    %v10611 = vsel %vm6902, %v10496, 0.0
    %v10612 = vsel %vm6901, %v10495, 0.0
    %v10613 = vsel %vm6902, %v10494, 0.0
    %v10614 = vsel %vm6901, %v10493, 0.0
    %v10615 = vsel %vm6902, %v10492, 0.0
    %v10616 = vsel %vm6901, %v10491, 0.0
    %v10617 = vsel %vm6902, %v10490, 0.0
    %v10618 = vsel %vm6901, %v10489, 0.0
    %v10619 = vsel %vm6902, %v10488, 0.0
    %v10620 = vpack.c.bf16 %v10554, %v6903
    %v10621 = vpack.c.bf16 %v10556, %v10555
    %v10622 = vpack.c.bf16 %v10558, %v10557
    %v10623 = vpack.c.bf16 %v10560, %v10559
    %v10624 = vpack.c.bf16 %v10562, %v10561
    %v10625 = vpack.c.bf16 %v10564, %v10563
    %v10626 = vpack.c.bf16 %v10566, %v10565
    %v10627 = vpack.c.bf16 %v10568, %v10567
    %v10628 = vpack.c.bf16 %v10570, %v10569
    %v10629 = vpack.c.bf16 %v10572, %v10571
    %v10630 = vpack.c.bf16 %v10574, %v10573
    %v10631 = vpack.c.bf16 %v10576, %v10575
    %v10632 = vpack.c.bf16 %v10578, %v10577
    %v10633 = vpack.c.bf16 %v10580, %v10579
    %v10634 = vpack.c.bf16 %v10582, %v10581
    %v10635 = vpack.c.bf16 %v10584, %v10583
    %v10636 = vpack.c.bf16 %v10587, %v6903
    %v10637 = vpack.c.bf16 %v10589, %v10588
    %v10638 = vpack.c.bf16 %v10591, %v10590
    %v10639 = vpack.c.bf16 %v10593, %v10592
    %v10640 = vpack.c.bf16 %v10595, %v10594
    %v10641 = vpack.c.bf16 %v10597, %v10596
    %v10642 = vpack.c.bf16 %v10599, %v10598
    %v10643 = vpack.c.bf16 %v10601, %v10600
    %v10644 = vpack.c.bf16 %v10603, %v10602
    %v10645 = vpack.c.bf16 %v10605, %v10604
    %v10646 = vpack.c.bf16 %v10607, %v10606
    %v10647 = vpack.c.bf16 %v10609, %v10608
    %v10648 = vpack.c.bf16 %v10611, %v10610
    %v10649 = vpack.c.bf16 %v10613, %v10612
    %v10650 = vpack.c.bf16 %v10615, %v10614
    %v10651 = vpack.c.bf16 %v10617, %v10616
    %v10652 = vpack.c.bf16 %v10586, %v10585
    %v10653 = vpack.c.bf16 %v10619, %v10618
    %s10654 = scalar_lea.vmem [#allocation7], 384
    %v10655 = vld [vmem:[%s10654] sm:$0xf]
    %v10656 = vld [vmem:[%s10654 + $0x4] sm:$0xf]
    %v10657 = vld [vmem:[%s10654 + $0x8] sm:$0xf]
    %v10658 = vld [vmem:[%s10654 + $0xc] sm:$0xf]
    %v10659 = vld [vmem:[%s10654 + $0x10] sm:$0xf]
    %v10660 = vld [vmem:[%s10654 + $0x14] sm:$0xf]
    %v10661 = vld [vmem:[%s10654 + $0x18] sm:$0xf]
    %v10662 = vld [vmem:[%s10654 + $0x1c] sm:$0xf]
    %v10663 = vld [vmem:[%s10654 + $0x20] sm:$0xf]
    %v10664 = vld [vmem:[%s10654 + $0x24] sm:$0xf]
    %v10665 = vld [vmem:[%s10654 + $0x28] sm:$0xf]
    %v10666 = vld [vmem:[%s10654 + $0x2c] sm:$0xf]
    %v10667 = vld [vmem:[%s10654 + $0x30] sm:$0xf]
    %v10668 = vld [vmem:[%s10654 + $0x34] sm:$0xf]
    %v10669 = vld [vmem:[%s10654 + $0x38] sm:$0xf]
    %v10670 = vld [vmem:[%s10654 + $0x3c] sm:$0xf]
    %v10671 = vld [vmem:[%s10654 + $0x40] sm:$0xf]
    %v10672 = vld [vmem:[%s10654 + $0x44] sm:$0xf]
    %v10673 = vld [vmem:[%s10654 + $0x48] sm:$0xf]
    %v10674 = vld [vmem:[%s10654 + $0x4c] sm:$0xf]
    %v10675 = vld [vmem:[%s10654 + $0x50] sm:$0xf]
    %v10676 = vld [vmem:[%s10654 + $0x54] sm:$0xf]
    %v10677 = vld [vmem:[%s10654 + $0x58] sm:$0xf]
    %v10678 = vld [vmem:[%s10654 + $0x5c] sm:$0xf]
    %v10679 = vld [vmem:[%s10654 + $0x60] sm:$0xf]
    %v10680 = vld [vmem:[%s10654 + $0x64] sm:$0xf]
    %v10681 = vld [vmem:[%s10654 + $0x68] sm:$0xf]
    %v10682 = vld [vmem:[%s10654 + $0x6c] sm:$0xf]
    %v10683 = vld [vmem:[%s10654 + $0x70] sm:$0xf]
    %v10684 = vld [vmem:[%s10654 + $0x74] sm:$0xf]
    %v10685 = vld [vmem:[%s10654 + $0x78] sm:$0xf]
    %v10686 = vld [vmem:[%s10654 + $0x7c] sm:$0xf]
    %v10687 = vld [vmem:[%s10654 + $0x80] sm:$0xf]
    %v10688 = vld [vmem:[%s10654 + $0x84] sm:$0xf]
    %v10689 = vld [vmem:[%s10654 + $0x88] sm:$0xf]
    %v10690 = vld [vmem:[%s10654 + $0x8c] sm:$0xf]
    %v10691 = vld [vmem:[%s10654 + $0x90] sm:$0xf]
    %v10692 = vld [vmem:[%s10654 + $0x94] sm:$0xf]
    %v10693 = vld [vmem:[%s10654 + $0x98] sm:$0xf]
    %v10694 = vld [vmem:[%s10654 + $0x9c] sm:$0xf]
    %v10695 = vld [vmem:[%s10654 + $0xa0] sm:$0xf]
    %v10696 = vld [vmem:[%s10654 + $0xa4] sm:$0xf]
    %v10697 = vld [vmem:[%s10654 + $0xa8] sm:$0xf]
    %v10698 = vld [vmem:[%s10654 + $0xac] sm:$0xf]
    %v10699 = vld [vmem:[%s10654 + $0xb0] sm:$0xf]
    %v10700 = vld [vmem:[%s10654 + $0xb4] sm:$0xf]
    %v10701 = vld [vmem:[%s10654 + $0xb8] sm:$0xf]
    %v10702 = vld [vmem:[%s10654 + $0xbc] sm:$0xf]
    %v10751 = vunpack.c.l.b16 %v10655
    %v10752 = vunpack.c.l.b16 %v10656
    %v10753 = vunpack.c.l.b16 %v10657
    %v10754 = vunpack.c.l.b16 %v10658
    %v10755 = vunpack.c.l.b16 %v10659
    %v10756 = vunpack.c.l.b16 %v10660
    %v10757 = vunpack.c.l.b16 %v10661
    %v10758 = vunpack.c.l.b16 %v10662
    %v10759 = vunpack.c.l.b16 %v10663
    %v10760 = vunpack.c.l.b16 %v10664
    %v10761 = vunpack.c.l.b16 %v10665
    %v10762 = vunpack.c.l.b16 %v10666
    %v10763 = vunpack.c.l.b16 %v10667
    %v10764 = vunpack.c.l.b16 %v10668
    %v10765 = vunpack.c.l.b16 %v10669
    %v10766 = vunpack.c.l.b16 %v10670
    %v10767 = vunpack.c.l.b16 %v10671
    %v10768 = vunpack.c.l.b16 %v10672
    %v10769 = vunpack.c.l.b16 %v10673
    %v10770 = vunpack.c.l.b16 %v10674
    %v10771 = vunpack.c.l.b16 %v10675
    %v10772 = vunpack.c.l.b16 %v10676
    %v10773 = vunpack.c.l.b16 %v10677
    %v10774 = vunpack.c.l.b16 %v10678
    %v10775 = vunpack.c.l.b16 %v10679
    %v10776 = vunpack.c.l.b16 %v10680
    %v10777 = vunpack.c.l.b16 %v10681
    %v10778 = vunpack.c.l.b16 %v10682
    %v10779 = vunpack.c.l.b16 %v10683
    %v10780 = vunpack.c.l.b16 %v10684
    %v10781 = vunpack.c.l.b16 %v10685
    %v10782 = vunpack.c.l.b16 %v10686
    %v10783 = vunpack.c.l.b16 %v10687
    %v10784 = vunpack.c.l.b16 %v10688
    %v10785 = vunpack.c.l.b16 %v10689
    %v10786 = vunpack.c.l.b16 %v10690
    %v10787 = vunpack.c.l.b16 %v10691
    %v10788 = vunpack.c.l.b16 %v10692
    %v10789 = vunpack.c.l.b16 %v10693
    %v10790 = vunpack.c.l.b16 %v10694
    %v10791 = vunpack.c.l.b16 %v10695
    %v10792 = vunpack.c.l.b16 %v10696
    %v10793 = vunpack.c.l.b16 %v10697
    %v10794 = vunpack.c.l.b16 %v10698
    %v10795 = vunpack.c.l.b16 %v10699
    %v10796 = vunpack.c.l.b16 %v10700
    %v10797 = vunpack.c.l.b16 %v10701
    %v10798 = vunpack.c.l.b16 %v10702
    %v10799 = vpack.c.b16 %v10752, %v10751
    %v10800 = vpack.c.b16 %v10754, %v10753
    %v10801 = vpack.c.b16 %v10756, %v10755
    %v10802 = vpack.c.b16 %v10758, %v10757
    %v10803 = vpack.c.b16 %v10760, %v10759
    %v10804 = vpack.c.b16 %v10762, %v10761
    %v10805 = vpack.c.b16 %v10764, %v10763
    %v10806 = vpack.c.b16 %v10766, %v10765
    %v10807 = vpack.c.b16 %v10768, %v10767
    %v10808 = vpack.c.b16 %v10770, %v10769
    %v10809 = vpack.c.b16 %v10772, %v10771
    %v10810 = vpack.c.b16 %v10774, %v10773
    %v10811 = vpack.c.b16 %v10776, %v10775
    %v10812 = vpack.c.b16 %v10778, %v10777
    %v10813 = vpack.c.b16 %v10780, %v10779
    %v10814 = vpack.c.b16 %v10782, %v10781
    %v10815 = vpack.c.b16 %v10784, %v10783
    %v10816 = vpack.c.b16 %v10786, %v10785
    %v10817 = vpack.c.b16 %v10788, %v10787
    %v10818 = vpack.c.b16 %v10790, %v10789
    %v10819 = vpack.c.b16 %v10792, %v10791
    %v10820 = vpack.c.b16 %v10794, %v10793
    %v10821 = vpack.c.b16 %v10796, %v10795
    %v10822 = vpack.c.b16 %v10798, %v10797
    %10847 = vmatprep.subr.bf16.mxu0 0
    %10848 = vmatpush1.bf16.msra.mxu0 %v10806
    %10849 = vmatprep.subr.bf16.mxu0 0
    %10850 = vmatpush1.bf16.msra.mxu0 %v10805
    %10851 = vmatprep.subr.bf16.mxu0 0
    %10852 = vmatpush1.bf16.msra.mxu0 %v10804
    %10853 = vmatprep.subr.bf16.mxu0 0
    %10854 = vmatpush1.bf16.msra.mxu0 %v10803
    %10855 = vmatprep.subr.bf16.mxu0 0
    %10856 = vmatpush1.bf16.msra.mxu0 %v10802
    %10857 = vmatprep.subr.bf16.mxu0 0
    %10858 = vmatpush1.bf16.msra.mxu0 %v10801
    %10859 = vmatprep.subr.bf16.mxu0 0
    %10860 = vmatpush1.bf16.msra.mxu0 %v10800
    %10861 = vmatprep.subr.bf16.mxu0 0
    %10862 = vmatpush1.bf16.msra.mxu0 %v10799
    %10863 = vmatprep.subr.bf16.mxu0 0
    %10864 = vmatpush2.bf16.msra.mxu0 %v10814
    %10865 = vmatprep.subr.bf16.mxu0 0
    %10866 = vmatpush2.bf16.msra.mxu0 %v10813
    %10867 = vmatprep.subr.bf16.mxu0 0
    %10868 = vmatpush2.bf16.msra.mxu0 %v10812
    %10869 = vmatprep.subr.bf16.mxu0 0
    %10870 = vmatpush2.bf16.msra.mxu0 %v10811
    %10871 = vmatprep.subr.bf16.mxu0 0
    %10872 = vmatpush2.bf16.msra.mxu0 %v10810
    %10873 = vmatprep.subr.bf16.mxu0 0
    %10874 = vmatpush2.bf16.msra.mxu0 %v10809
    %10875 = vmatprep.subr.bf16.mxu0 0
    %10876 = vmatpush2.bf16.msra.mxu0 %v10808
    %10877 = vmatprep.subr.bf16.mxu0 0
    %10878 = vmatpush2.bf16.msra.mxu0 %v10807
    %10879 = vmatprep.mubr.bf16.mxu0 %v10621
    %10880 = vmatmul.mubr.bf16.gmra.mxu0 %v10620
    %v10881 = vpop.f32.mrf.mxu0
    %v10882 = vadd.f32 0.0, %v10881
    %v10883 = vpop.f32.mrf.mxu0
    %v10884 = vpop.f32.mrf.mxu0
    %v10885 = vadd.f32 0.0, %v10884
    %v10886 = vpop.f32.mrf.mxu0
    %10887 = vmatprep.mubr.bf16.mxu0 %v10622
    %10888 = vmatmul.mubr.bf16.gmra.mxu0 %v10621
    %v10889 = vpop.f32.mrf.mxu0
    %v10890 = vadd.f32 0.0, %v10889
    %v10891 = vpop.f32.mrf.mxu0
    %v10892 = vpop.f32.mrf.mxu0
    %v10893 = vadd.f32 0.0, %v10892
    %v10894 = vpop.f32.mrf.mxu0
    %10895 = vmatprep.mubr.bf16.mxu0 %v10623
    %10896 = vmatmul.mubr.bf16.gmra.mxu0 %v10622
    %v10897 = vpop.f32.mrf.mxu0
    %v10898 = vadd.f32 0.0, %v10897
    %v10899 = vpop.f32.mrf.mxu0
    %v10900 = vpop.f32.mrf.mxu0
    %v10901 = vadd.f32 0.0, %v10900
    %v10902 = vpop.f32.mrf.mxu0
    %10903 = vmatprep.mubr.bf16.mxu0 %v10624
    %10904 = vmatmul.mubr.bf16.gmra.mxu0 %v10623
    %v10905 = vpop.f32.mrf.mxu0
    %v10906 = vadd.f32 0.0, %v10905
    %v10907 = vpop.f32.mrf.mxu0
    %v10908 = vpop.f32.mrf.mxu0
    %v10909 = vadd.f32 0.0, %v10908
    %v10910 = vpop.f32.mrf.mxu0
    %10911 = vmatprep.mubr.bf16.mxu0 %v10625
    %10912 = vmatmul.mubr.bf16.gmra.mxu0 %v10624
    %v10913 = vpop.f32.mrf.mxu0
    %v10914 = vadd.f32 0.0, %v10913
    %v10915 = vpop.f32.mrf.mxu0
    %v10916 = vpop.f32.mrf.mxu0
    %v10917 = vadd.f32 0.0, %v10916
    %v10918 = vpop.f32.mrf.mxu0
    %10919 = vmatprep.mubr.bf16.mxu0 %v10626
    %10920 = vmatmul.mubr.bf16.gmra.mxu0 %v10625
    %v10921 = vpop.f32.mrf.mxu0
    %v10922 = vadd.f32 0.0, %v10921
    %v10923 = vpop.f32.mrf.mxu0
    %v10924 = vpop.f32.mrf.mxu0
    %v10925 = vadd.f32 0.0, %v10924
    %v10926 = vpop.f32.mrf.mxu0
    %10927 = vmatprep.mubr.bf16.mxu0 %v10627
    %10928 = vmatmul.mubr.bf16.gmra.mxu0 %v10626
    %v10929 = vpop.f32.mrf.mxu0
    %v10930 = vadd.f32 0.0, %v10929
    %v10931 = vpop.f32.mrf.mxu0
    %v10932 = vpop.f32.mrf.mxu0
    %v10933 = vadd.f32 0.0, %v10932
    %v10934 = vpop.f32.mrf.mxu0
    %10935 = vmatprep.mubr.bf16.mxu0 %v10628
    %10936 = vmatmul.mubr.bf16.gmra.mxu0 %v10627
    %v10937 = vpop.f32.mrf.mxu0
    %v10938 = vadd.f32 0.0, %v10937
    %v10939 = vpop.f32.mrf.mxu0
    %v10940 = vpop.f32.mrf.mxu0
    %v10941 = vadd.f32 0.0, %v10940
    %v10942 = vpop.f32.mrf.mxu0
    %10943 = vmatprep.mubr.bf16.mxu0 %v10629
    %10944 = vmatmul.mubr.bf16.gmra.mxu0 %v10628
    %v10945 = vpop.f32.mrf.mxu0
    %v10946 = vadd.f32 0.0, %v10945
    %v10947 = vpop.f32.mrf.mxu0
    %v10948 = vpop.f32.mrf.mxu0
    %v10949 = vadd.f32 0.0, %v10948
    %v10950 = vpop.f32.mrf.mxu0
    %10951 = vmatprep.mubr.bf16.mxu0 %v10630
    %10952 = vmatmul.mubr.bf16.gmra.mxu0 %v10629
    %v10953 = vpop.f32.mrf.mxu0
    %v10954 = vadd.f32 0.0, %v10953
    %v10955 = vpop.f32.mrf.mxu0
    %v10956 = vpop.f32.mrf.mxu0
    %v10957 = vadd.f32 0.0, %v10956
    %v10958 = vpop.f32.mrf.mxu0
    %10959 = vmatprep.mubr.bf16.mxu0 %v10631
    %10960 = vmatmul.mubr.bf16.gmra.mxu0 %v10630
    %v10961 = vpop.f32.mrf.mxu0
    %v10962 = vadd.f32 0.0, %v10961
    %v10963 = vpop.f32.mrf.mxu0
    %v10964 = vpop.f32.mrf.mxu0
    %v10965 = vadd.f32 0.0, %v10964
    %v10966 = vpop.f32.mrf.mxu0
    %10967 = vmatprep.mubr.bf16.mxu0 %v10632
    %10968 = vmatmul.mubr.bf16.gmra.mxu0 %v10631
    %v10969 = vpop.f32.mrf.mxu0
    %v10970 = vadd.f32 0.0, %v10969
    %v10971 = vpop.f32.mrf.mxu0
    %v10972 = vpop.f32.mrf.mxu0
    %v10973 = vadd.f32 0.0, %v10972
    %v10974 = vpop.f32.mrf.mxu0
    %10975 = vmatprep.mubr.bf16.mxu0 %v10633
    %10976 = vmatmul.mubr.bf16.gmra.mxu0 %v10632
    %v10977 = vpop.f32.mrf.mxu0
    %v10978 = vadd.f32 0.0, %v10977
    %v10979 = vpop.f32.mrf.mxu0
    %v10980 = vpop.f32.mrf.mxu0
    %v10981 = vadd.f32 0.0, %v10980
    %v10982 = vpop.f32.mrf.mxu0
    %10983 = vmatprep.mubr.bf16.mxu0 %v10634
    %10984 = vmatmul.mubr.bf16.gmra.mxu0 %v10633
    %v10985 = vpop.f32.mrf.mxu0
    %v10986 = vadd.f32 0.0, %v10985
    %v10987 = vpop.f32.mrf.mxu0
    %v10988 = vpop.f32.mrf.mxu0
    %v10989 = vadd.f32 0.0, %v10988
    %v10990 = vpop.f32.mrf.mxu0
    %10991 = vmatprep.mubr.bf16.mxu0 %v10635
    %10992 = vmatmul.mubr.bf16.gmra.mxu0 %v10634
    %v10993 = vpop.f32.mrf.mxu0
    %v10994 = vadd.f32 0.0, %v10993
    %v10995 = vpop.f32.mrf.mxu0
    %v10996 = vpop.f32.mrf.mxu0
    %v10997 = vadd.f32 0.0, %v10996
    %v10998 = vpop.f32.mrf.mxu0
    %10999 = vmatprep.mubr.bf16.mxu0 %v10652
    %11000 = vmatmul.mubr.bf16.gmra.mxu0 %v10635
    %v11001 = vpop.f32.mrf.mxu0
    %v11002 = vadd.f32 0.0, %v11001
    %v11003 = vpop.f32.mrf.mxu0
    %v11004 = vpop.f32.mrf.mxu0
    %v11005 = vadd.f32 0.0, %v11004
    %v11006 = vpop.f32.mrf.mxu0
    %11007 = vmatprep.mubr.bf16.mxu0 %v10637
    %11008 = vmatmul.mubr.bf16.gmra.mxu0 %v10636
    %v11009 = vpop.f32.mrf.mxu0
    %v11010 = vadd.f32 0.0, %v11009
    %v11011 = vpop.f32.mrf.mxu0
    %v11012 = vpop.f32.mrf.mxu0
    %v11013 = vadd.f32 0.0, %v11012
    %v11014 = vpop.f32.mrf.mxu0
    %11015 = vmatprep.mubr.bf16.mxu0 %v10638
    %11016 = vmatmul.mubr.bf16.gmra.mxu0 %v10637
    %v11017 = vpop.f32.mrf.mxu0
    %v11018 = vadd.f32 0.0, %v11017
    %v11019 = vpop.f32.mrf.mxu0
    %v11020 = vpop.f32.mrf.mxu0
    %v11021 = vadd.f32 0.0, %v11020
    %v11022 = vpop.f32.mrf.mxu0
    %11023 = vmatprep.mubr.bf16.mxu0 %v10639
    %11024 = vmatmul.mubr.bf16.gmra.mxu0 %v10638
    %v11025 = vpop.f32.mrf.mxu0
    %v11026 = vadd.f32 0.0, %v11025
    %v11027 = vpop.f32.mrf.mxu0
    %v11028 = vpop.f32.mrf.mxu0
    %v11029 = vadd.f32 0.0, %v11028
    %v11030 = vpop.f32.mrf.mxu0
    %11031 = vmatprep.mubr.bf16.mxu0 %v10640
    %11032 = vmatmul.mubr.bf16.gmra.mxu0 %v10639
    %v11033 = vpop.f32.mrf.mxu0
    %v11034 = vadd.f32 0.0, %v11033
    %v11035 = vpop.f32.mrf.mxu0
    %v11036 = vpop.f32.mrf.mxu0
    %v11037 = vadd.f32 0.0, %v11036
    %v11038 = vpop.f32.mrf.mxu0
    %11039 = vmatprep.mubr.bf16.mxu0 %v10641
    %11040 = vmatmul.mubr.bf16.gmra.mxu0 %v10640
    %v11041 = vpop.f32.mrf.mxu0
    %v11042 = vadd.f32 0.0, %v11041
    %v11043 = vpop.f32.mrf.mxu0
    %v11044 = vpop.f32.mrf.mxu0
    %v11045 = vadd.f32 0.0, %v11044
    %v11046 = vpop.f32.mrf.mxu0
    %11047 = vmatprep.mubr.bf16.mxu0 %v10642
    %11048 = vmatmul.mubr.bf16.gmra.mxu0 %v10641
    %v11049 = vpop.f32.mrf.mxu0
    %v11050 = vadd.f32 0.0, %v11049
    %v11051 = vpop.f32.mrf.mxu0
    %v11052 = vpop.f32.mrf.mxu0
    %v11053 = vadd.f32 0.0, %v11052
    %v11054 = vpop.f32.mrf.mxu0
    %11055 = vmatprep.mubr.bf16.mxu0 %v10643
    %11056 = vmatmul.mubr.bf16.gmra.mxu0 %v10642
    %v11057 = vpop.f32.mrf.mxu0
    %v11058 = vadd.f32 0.0, %v11057
    %v11059 = vpop.f32.mrf.mxu0
    %v11060 = vpop.f32.mrf.mxu0
    %v11061 = vadd.f32 0.0, %v11060
    %v11062 = vpop.f32.mrf.mxu0
    %11063 = vmatprep.mubr.bf16.mxu0 %v10644
    %11064 = vmatmul.mubr.bf16.gmra.mxu0 %v10643
    %v11065 = vpop.f32.mrf.mxu0
    %v11066 = vadd.f32 0.0, %v11065
    %v11067 = vpop.f32.mrf.mxu0
    %v11068 = vpop.f32.mrf.mxu0
    %v11069 = vadd.f32 0.0, %v11068
    %v11070 = vpop.f32.mrf.mxu0
    %11071 = vmatprep.mubr.bf16.mxu0 %v10645
    %11072 = vmatmul.mubr.bf16.gmra.mxu0 %v10644
    %v11073 = vpop.f32.mrf.mxu0
    %v11074 = vadd.f32 0.0, %v11073
    %v11075 = vpop.f32.mrf.mxu0
    %v11076 = vpop.f32.mrf.mxu0
    %v11077 = vadd.f32 0.0, %v11076
    %v11078 = vpop.f32.mrf.mxu0
    %11079 = vmatprep.mubr.bf16.mxu0 %v10646
    %11080 = vmatmul.mubr.bf16.gmra.mxu0 %v10645
    %v11081 = vpop.f32.mrf.mxu0
    %v11082 = vadd.f32 0.0, %v11081
    %v11083 = vpop.f32.mrf.mxu0
    %v11084 = vpop.f32.mrf.mxu0
    %v11085 = vadd.f32 0.0, %v11084
    %v11086 = vpop.f32.mrf.mxu0
    %11087 = vmatprep.mubr.bf16.mxu0 %v10647
    %11088 = vmatmul.mubr.bf16.gmra.mxu0 %v10646
    %v11089 = vpop.f32.mrf.mxu0
    %v11090 = vadd.f32 0.0, %v11089
    %v11091 = vpop.f32.mrf.mxu0
    %v11092 = vpop.f32.mrf.mxu0
    %v11093 = vadd.f32 0.0, %v11092
    %v11094 = vpop.f32.mrf.mxu0
    %11095 = vmatprep.mubr.bf16.mxu0 %v10648
    %11096 = vmatmul.mubr.bf16.gmra.mxu0 %v10647
    %v11097 = vpop.f32.mrf.mxu0
    %v11098 = vadd.f32 0.0, %v11097
    %v11099 = vpop.f32.mrf.mxu0
    %v11100 = vpop.f32.mrf.mxu0
    %v11101 = vadd.f32 0.0, %v11100
    %v11102 = vpop.f32.mrf.mxu0
    %11103 = vmatprep.mubr.bf16.mxu0 %v10649
    %11104 = vmatmul.mubr.bf16.gmra.mxu0 %v10648
    %v11105 = vpop.f32.mrf.mxu0
    %v11106 = vadd.f32 0.0, %v11105
    %v11107 = vpop.f32.mrf.mxu0
    %v11108 = vpop.f32.mrf.mxu0
    %v11109 = vadd.f32 0.0, %v11108
    %v11110 = vpop.f32.mrf.mxu0
    %11111 = vmatprep.mubr.bf16.mxu0 %v10650
    %11112 = vmatmul.mubr.bf16.gmra.mxu0 %v10649
    %v11113 = vpop.f32.mrf.mxu0
    %v11114 = vadd.f32 0.0, %v11113
    %v11115 = vpop.f32.mrf.mxu0
    %v11116 = vpop.f32.mrf.mxu0
    %v11117 = vadd.f32 0.0, %v11116
    %v11118 = vpop.f32.mrf.mxu0
    %11119 = vmatprep.mubr.bf16.mxu0 %v10651
    %11120 = vmatmul.mubr.bf16.gmra.mxu0 %v10650
    %v11121 = vpop.f32.mrf.mxu0
    %v11122 = vadd.f32 0.0, %v11121
    %v11123 = vpop.f32.mrf.mxu0
    %v11124 = vpop.f32.mrf.mxu0
    %v11125 = vadd.f32 0.0, %v11124
    %v11126 = vpop.f32.mrf.mxu0
    %11127 = vmatprep.mubr.bf16.mxu0 %v10653
    %11128 = vmatmul.mubr.bf16.gmra.mxu0 %v10651
    %v11129 = vpop.f32.mrf.mxu0
    %v11130 = vadd.f32 0.0, %v11129
    %v11131 = vpop.f32.mrf.mxu0
    %v11132 = vpop.f32.mrf.mxu0
    %v11133 = vadd.f32 0.0, %v11132
    %v11134 = vpop.f32.mrf.mxu0
    %11135 = vdwg.mxu0
    %11136 = vmatprep.subr.bf16.mxu0 0
    %11137 = vmatpush1.bf16.msra.mxu0 %v10822
    %11138 = vmatprep.subr.bf16.mxu0 0
    %11139 = vmatpush1.bf16.msra.mxu0 %v10821
    %11140 = vmatprep.subr.bf16.mxu0 0
    %11141 = vmatpush1.bf16.msra.mxu0 %v10820
    %11142 = vmatprep.subr.bf16.mxu0 0
    %11143 = vmatpush1.bf16.msra.mxu0 %v10819
    %11144 = vmatprep.subr.bf16.mxu0 0
    %11145 = vmatpush1.bf16.msra.mxu0 %v10818
    %11146 = vmatprep.subr.bf16.mxu0 0
    %11147 = vmatpush1.bf16.msra.mxu0 %v10817
    %11148 = vmatprep.subr.bf16.mxu0 0
    %11149 = vmatpush1.bf16.msra.mxu0 %v10816
    %11150 = vmatprep.subr.bf16.mxu0 0
    %11151 = vmatpush1.bf16.msra.mxu0 %v10815
    %11152 = vmatprep.subr.bf16.mxu0 0
    %11153 = vmatpush2.bf16.msra.mxu0 0
    %11154 = vmatprep.subr.bf16.mxu0 0
    %11155 = vmatpush2.bf16.msra.mxu0 0
    %11156 = vmatprep.subr.bf16.mxu0 0
    %11157 = vmatpush2.bf16.msra.mxu0 0
    %11158 = vmatprep.subr.bf16.mxu0 0
    %11159 = vmatpush2.bf16.msra.mxu0 0
    %11160 = vmatprep.subr.bf16.mxu0 0
    %11161 = vmatpush2.bf16.msra.mxu0 0
    %11162 = vmatprep.subr.bf16.mxu0 0
    %11163 = vmatpush2.bf16.msra.mxu0 0
    %11164 = vmatprep.subr.bf16.mxu0 0
    %11165 = vmatpush2.bf16.msra.mxu0 0
    %11166 = vmatprep.subr.bf16.mxu0 0
    %11167 = vmatpush2.bf16.msra.mxu0 0
    %11168 = vmatprep.mubr.bf16.mxu0 0
    %11169 = vmatmul.mubr.bf16.gmra.mxu0 %v10622
    %v11170 = vpop.f32.mrf.mxu0
    %v11171 = vadd.f32 %v10882, %v11170
    %v11172 = vpop.f32.mrf.mxu0
    %v11173 = vpop.f32.mrf.mxu0
    %v11174 = vadd.f32 %v10885, %v11173
    %v11175 = vpop.f32.mrf.mxu0
    %11176 = vmatprep.mubr.bf16.mxu0 0
    %11177 = vmatmul.mubr.bf16.gmra.mxu0 %v10623
    %v11178 = vpop.f32.mrf.mxu0
    %v11179 = vadd.f32 %v10890, %v11178
    %v11180 = vpop.f32.mrf.mxu0
    %v11181 = vpop.f32.mrf.mxu0
    %v11182 = vadd.f32 %v10893, %v11181
    %v11183 = vpop.f32.mrf.mxu0
    %11184 = vmatprep.mubr.bf16.mxu0 0
    %11185 = vmatmul.mubr.bf16.gmra.mxu0 %v10624
    %v11186 = vpop.f32.mrf.mxu0
    %v11187 = vadd.f32 %v10898, %v11186
    %v11188 = vpop.f32.mrf.mxu0
    %v11189 = vpop.f32.mrf.mxu0
    %v11190 = vadd.f32 %v10901, %v11189
    %v11191 = vpop.f32.mrf.mxu0
    %11192 = vmatprep.mubr.bf16.mxu0 0
    %11193 = vmatmul.mubr.bf16.gmra.mxu0 %v10625
    %v11194 = vpop.f32.mrf.mxu0
    %v11195 = vadd.f32 %v10906, %v11194
    %v11196 = vpop.f32.mrf.mxu0
    %v11197 = vpop.f32.mrf.mxu0
    %v11198 = vadd.f32 %v10909, %v11197
    %v11199 = vpop.f32.mrf.mxu0
    %11200 = vmatprep.mubr.bf16.mxu0 0
    %11201 = vmatmul.mubr.bf16.gmra.mxu0 %v10626
    %v11202 = vpop.f32.mrf.mxu0
    %v11203 = vadd.f32 %v10914, %v11202
    %v11204 = vpop.f32.mrf.mxu0
    %v11205 = vpop.f32.mrf.mxu0
    %v11206 = vadd.f32 %v10917, %v11205
    %v11207 = vpop.f32.mrf.mxu0
    %11208 = vmatprep.mubr.bf16.mxu0 0
    %11209 = vmatmul.mubr.bf16.gmra.mxu0 %v10627
    %v11210 = vpop.f32.mrf.mxu0
    %v11211 = vadd.f32 %v10922, %v11210
    %v11212 = vpop.f32.mrf.mxu0
    %v11213 = vpop.f32.mrf.mxu0
    %v11214 = vadd.f32 %v10925, %v11213
    %v11215 = vpop.f32.mrf.mxu0
    %11216 = vmatprep.mubr.bf16.mxu0 0
    %11217 = vmatmul.mubr.bf16.gmra.mxu0 %v10628
    %v11218 = vpop.f32.mrf.mxu0
    %v11219 = vadd.f32 %v10930, %v11218
    %v11220 = vpop.f32.mrf.mxu0
    %v11221 = vpop.f32.mrf.mxu0
    %v11222 = vadd.f32 %v10933, %v11221
    %v11223 = vpop.f32.mrf.mxu0
    %11224 = vmatprep.mubr.bf16.mxu0 0
    %11225 = vmatmul.mubr.bf16.gmra.mxu0 %v10629
    %v11226 = vpop.f32.mrf.mxu0
    %v11227 = vadd.f32 %v10938, %v11226
    %v11228 = vpop.f32.mrf.mxu0
    %v11229 = vpop.f32.mrf.mxu0
    %v11230 = vadd.f32 %v10941, %v11229
    %v11231 = vpop.f32.mrf.mxu0
    %11232 = vmatprep.mubr.bf16.mxu0 0
    %11233 = vmatmul.mubr.bf16.gmra.mxu0 %v10630
    %v11234 = vpop.f32.mrf.mxu0
    %v11235 = vadd.f32 %v10946, %v11234
    %v11236 = vpop.f32.mrf.mxu0
    %v11237 = vpop.f32.mrf.mxu0
    %v11238 = vadd.f32 %v10949, %v11237
    %v11239 = vpop.f32.mrf.mxu0
    %11240 = vmatprep.mubr.bf16.mxu0 0
    %11241 = vmatmul.mubr.bf16.gmra.mxu0 %v10631
    %v11242 = vpop.f32.mrf.mxu0
    %v11243 = vadd.f32 %v10954, %v11242
    %v11244 = vpop.f32.mrf.mxu0
    %v11245 = vpop.f32.mrf.mxu0
    %v11246 = vadd.f32 %v10957, %v11245
    %v11247 = vpop.f32.mrf.mxu0
    %11248 = vmatprep.mubr.bf16.mxu0 0
    %11249 = vmatmul.mubr.bf16.gmra.mxu0 %v10632
    %v11250 = vpop.f32.mrf.mxu0
    %v11251 = vadd.f32 %v10962, %v11250
    %v11252 = vpop.f32.mrf.mxu0
    %v11253 = vpop.f32.mrf.mxu0
    %v11254 = vadd.f32 %v10965, %v11253
    %v11255 = vpop.f32.mrf.mxu0
    %11256 = vmatprep.mubr.bf16.mxu0 0
    %11257 = vmatmul.mubr.bf16.gmra.mxu0 %v10633
    %v11258 = vpop.f32.mrf.mxu0
    %v11259 = vadd.f32 %v10970, %v11258
    %v11260 = vpop.f32.mrf.mxu0
    %v11261 = vpop.f32.mrf.mxu0
    %v11262 = vadd.f32 %v10973, %v11261
    %v11263 = vpop.f32.mrf.mxu0
    %11264 = vmatprep.mubr.bf16.mxu0 0
    %11265 = vmatmul.mubr.bf16.gmra.mxu0 %v10634
    %v11266 = vpop.f32.mrf.mxu0
    %v11267 = vadd.f32 %v10978, %v11266
    %v11268 = vpop.f32.mrf.mxu0
    %v11269 = vpop.f32.mrf.mxu0
    %v11270 = vadd.f32 %v10981, %v11269
    %v11271 = vpop.f32.mrf.mxu0
    %11272 = vmatprep.mubr.bf16.mxu0 0
    %11273 = vmatmul.mubr.bf16.gmra.mxu0 %v10635
    %v11274 = vpop.f32.mrf.mxu0
    %v11275 = vadd.f32 %v10986, %v11274
    %v11276 = vpop.f32.mrf.mxu0
    %v11277 = vpop.f32.mrf.mxu0
    %v11278 = vadd.f32 %v10989, %v11277
    %v11279 = vpop.f32.mrf.mxu0
    %11280 = vmatprep.mubr.bf16.mxu0 0
    %11281 = vmatmul.mubr.bf16.gmra.mxu0 %v10652
    %v11282 = vpop.f32.mrf.mxu0
    %v11283 = vadd.f32 %v10994, %v11282
    %v11284 = vpop.f32.mrf.mxu0
    %v11285 = vpop.f32.mrf.mxu0
    %v11286 = vadd.f32 %v10997, %v11285
    %v11287 = vpop.f32.mrf.mxu0
    %11288 = vmatprep.mubr.bf16.mxu0 0
    %11289 = vmatmul.mubr.bf16.gmra.mxu0 %v6989
    %v11290 = vpop.f32.mrf.mxu0
    %v11291 = vadd.f32 %v11002, %v11290
    %v11292 = vpop.f32.mrf.mxu0
    %v11293 = vpop.f32.mrf.mxu0
    %v11294 = vadd.f32 %v11005, %v11293
    %v11295 = vpop.f32.mrf.mxu0
    %11296 = vmatprep.mubr.bf16.mxu0 0
    %11297 = vmatmul.mubr.bf16.gmra.mxu0 %v10638
    %v11298 = vpop.f32.mrf.mxu0
    %v11299 = vadd.f32 %v11010, %v11298
    %v11300 = vpop.f32.mrf.mxu0
    %v11301 = vpop.f32.mrf.mxu0
    %v11302 = vadd.f32 %v11013, %v11301
    %v11303 = vpop.f32.mrf.mxu0
    %11304 = vmatprep.mubr.bf16.mxu0 0
    %11305 = vmatmul.mubr.bf16.gmra.mxu0 %v10639
    %v11306 = vpop.f32.mrf.mxu0
    %v11307 = vadd.f32 %v11018, %v11306
    %v11308 = vpop.f32.mrf.mxu0
    %v11309 = vpop.f32.mrf.mxu0
    %v11310 = vadd.f32 %v11021, %v11309
    %v11311 = vpop.f32.mrf.mxu0
    %11312 = vmatprep.mubr.bf16.mxu0 0
    %11313 = vmatmul.mubr.bf16.gmra.mxu0 %v10640
    %v11314 = vpop.f32.mrf.mxu0
    %v11315 = vadd.f32 %v11026, %v11314
    %v11316 = vpop.f32.mrf.mxu0
    %v11317 = vpop.f32.mrf.mxu0
    %v11318 = vadd.f32 %v11029, %v11317
    %v11319 = vpop.f32.mrf.mxu0
    %11320 = vmatprep.mubr.bf16.mxu0 0
    %11321 = vmatmul.mubr.bf16.gmra.mxu0 %v10641
    %v11322 = vpop.f32.mrf.mxu0
    %v11323 = vadd.f32 %v11034, %v11322
    %v11324 = vpop.f32.mrf.mxu0
    %v11325 = vpop.f32.mrf.mxu0
    %v11326 = vadd.f32 %v11037, %v11325
    %v11327 = vpop.f32.mrf.mxu0
    %11328 = vmatprep.mubr.bf16.mxu0 0
    %11329 = vmatmul.mubr.bf16.gmra.mxu0 %v10642
    %v11330 = vpop.f32.mrf.mxu0
    %v11331 = vadd.f32 %v11042, %v11330
    %v11332 = vpop.f32.mrf.mxu0
    %v11333 = vpop.f32.mrf.mxu0
    %v11334 = vadd.f32 %v11045, %v11333
    %v11335 = vpop.f32.mrf.mxu0
    %11336 = vmatprep.mubr.bf16.mxu0 0
    %11337 = vmatmul.mubr.bf16.gmra.mxu0 %v10643
    %v11338 = vpop.f32.mrf.mxu0
    %v11339 = vadd.f32 %v11050, %v11338
    %v11340 = vpop.f32.mrf.mxu0
    %v11341 = vpop.f32.mrf.mxu0
    %v11342 = vadd.f32 %v11053, %v11341
    %v11343 = vpop.f32.mrf.mxu0
    %11344 = vmatprep.mubr.bf16.mxu0 0
    %11345 = vmatmul.mubr.bf16.gmra.mxu0 %v10644
    %v11346 = vpop.f32.mrf.mxu0
    %v11347 = vadd.f32 %v11058, %v11346
    %v11348 = vpop.f32.mrf.mxu0
    %v11349 = vpop.f32.mrf.mxu0
    %v11350 = vadd.f32 %v11061, %v11349
    %v11351 = vpop.f32.mrf.mxu0
    %11352 = vmatprep.mubr.bf16.mxu0 0
    %11353 = vmatmul.mubr.bf16.gmra.mxu0 %v10645
    %v11354 = vpop.f32.mrf.mxu0
    %v11355 = vadd.f32 %v11066, %v11354
    %v11356 = vpop.f32.mrf.mxu0
    %v11357 = vpop.f32.mrf.mxu0
    %v11358 = vadd.f32 %v11069, %v11357
    %v11359 = vpop.f32.mrf.mxu0
    %11360 = vmatprep.mubr.bf16.mxu0 0
    %11361 = vmatmul.mubr.bf16.gmra.mxu0 %v10646
    %v11362 = vpop.f32.mrf.mxu0
    %v11363 = vadd.f32 %v11074, %v11362
    %v11364 = vpop.f32.mrf.mxu0
    %v11365 = vpop.f32.mrf.mxu0
    %v11366 = vadd.f32 %v11077, %v11365
    %v11367 = vpop.f32.mrf.mxu0
    %11368 = vmatprep.mubr.bf16.mxu0 0
    %11369 = vmatmul.mubr.bf16.gmra.mxu0 %v10647
    %v11370 = vpop.f32.mrf.mxu0
    %v11371 = vadd.f32 %v11082, %v11370
    %v11372 = vpop.f32.mrf.mxu0
    %v11373 = vpop.f32.mrf.mxu0
    %v11374 = vadd.f32 %v11085, %v11373
    %v11375 = vpop.f32.mrf.mxu0
    %11376 = vmatprep.mubr.bf16.mxu0 0
    %11377 = vmatmul.mubr.bf16.gmra.mxu0 %v10648
    %v11378 = vpop.f32.mrf.mxu0
    %v11379 = vadd.f32 %v11090, %v11378
    %v11380 = vpop.f32.mrf.mxu0
    %v11381 = vpop.f32.mrf.mxu0
    %v11382 = vadd.f32 %v11093, %v11381
    %v11383 = vpop.f32.mrf.mxu0
    %11384 = vmatprep.mubr.bf16.mxu0 0
    %11385 = vmatmul.mubr.bf16.gmra.mxu0 %v10649
    %v11386 = vpop.f32.mrf.mxu0
    %v11387 = vadd.f32 %v11098, %v11386
    %v11388 = vpop.f32.mrf.mxu0
    %v11389 = vpop.f32.mrf.mxu0
    %v11390 = vadd.f32 %v11101, %v11389
    %v11391 = vpop.f32.mrf.mxu0
    %11392 = vmatprep.mubr.bf16.mxu0 0
    %11393 = vmatmul.mubr.bf16.gmra.mxu0 %v10650
    %v11394 = vpop.f32.mrf.mxu0
    %v11395 = vadd.f32 %v11106, %v11394
    %v11396 = vpop.f32.mrf.mxu0
    %v11397 = vpop.f32.mrf.mxu0
    %v11398 = vadd.f32 %v11109, %v11397
    %v11399 = vpop.f32.mrf.mxu0
    %11400 = vmatprep.mubr.bf16.mxu0 0
    %11401 = vmatmul.mubr.bf16.gmra.mxu0 %v10651
    %v11402 = vpop.f32.mrf.mxu0
    %v11403 = vadd.f32 %v11114, %v11402
    %v11404 = vpop.f32.mrf.mxu0
    %v11405 = vpop.f32.mrf.mxu0
    %v11406 = vadd.f32 %v11117, %v11405
    %v11407 = vpop.f32.mrf.mxu0
    %11408 = vmatprep.mubr.bf16.mxu0 0
    %11409 = vmatmul.mubr.bf16.gmra.mxu0 %v10653
    %v11410 = vpop.f32.mrf.mxu0
    %v11411 = vadd.f32 %v11122, %v11410
    %v11412 = vpop.f32.mrf.mxu0
    %v11413 = vpop.f32.mrf.mxu0
    %v11414 = vadd.f32 %v11125, %v11413
    %v11415 = vpop.f32.mrf.mxu0
    %11416 = vmatprep.mubr.bf16.mxu0 0
    %11417 = vmatmul.mubr.bf16.gmra.mxu0 %v6989
    %v11418 = vpop.f32.mrf.mxu0
    %v11419 = vadd.f32 %v11130, %v11418
    %v11420 = vpop.f32.mrf.mxu0
    %v11421 = vpop.f32.mrf.mxu0
    %v11422 = vadd.f32 %v11133, %v11421
    %v11423 = vpop.f32.mrf.mxu0
    %11424 = vdwg.mxu0
    %v11425 = vadd.f32 %v10170, %v11171
    %v11426 = vadd.f32 %v10173, %v11174
    %v11427 = vadd.f32 %v10178, %v11179
    %v11428 = vadd.f32 %v10181, %v11182
    %v11429 = vadd.f32 %v10186, %v11187
    %v11430 = vadd.f32 %v10189, %v11190
    %v11431 = vadd.f32 %v10194, %v11195
    %v11432 = vadd.f32 %v10197, %v11198
    %v11433 = vadd.f32 %v10202, %v11203
    %v11434 = vadd.f32 %v10205, %v11206
    %v11435 = vadd.f32 %v10210, %v11211
    %v11436 = vadd.f32 %v10213, %v11214
    %v11437 = vadd.f32 %v10218, %v11219
    %v11438 = vadd.f32 %v10221, %v11222
    %v11439 = vadd.f32 %v10226, %v11227
    %v11440 = vadd.f32 %v10229, %v11230
    %v11441 = vadd.f32 %v10234, %v11235
    %v11442 = vadd.f32 %v10237, %v11238
    %v11443 = vadd.f32 %v10242, %v11243
    %v11444 = vadd.f32 %v10245, %v11246
    %v11445 = vadd.f32 %v10250, %v11251
    %v11446 = vadd.f32 %v10253, %v11254
    %v11447 = vadd.f32 %v10258, %v11259
    %v11448 = vadd.f32 %v10261, %v11262
    %v11449 = vadd.f32 %v10266, %v11267
    %v11450 = vadd.f32 %v10269, %v11270
    %v11451 = vadd.f32 %v10274, %v11275
    %v11452 = vadd.f32 %v10277, %v11278
    %v11453 = vadd.f32 %v10282, %v11283
    %v11454 = vadd.f32 %v10285, %v11286
    %v11455 = vadd.f32 %v10290, %v11291
    %v11456 = vadd.f32 %v10293, %v11294
    %v11457 = vadd.f32 %v10298, %v11299
    %v11458 = vadd.f32 %v10301, %v11302
    %v11459 = vadd.f32 %v10306, %v11307
    %v11460 = vadd.f32 %v10309, %v11310
    %v11461 = vadd.f32 %v10314, %v11315
    %v11462 = vadd.f32 %v10317, %v11318
    %v11463 = vadd.f32 %v10322, %v11323
    %v11464 = vadd.f32 %v10325, %v11326
    %v11465 = vadd.f32 %v10330, %v11331
    %v11466 = vadd.f32 %v10333, %v11334
    %v11467 = vadd.f32 %v10338, %v11339
    %v11468 = vadd.f32 %v10341, %v11342
    %v11469 = vadd.f32 %v10346, %v11347
    %v11470 = vadd.f32 %v10349, %v11350
    %v11471 = vadd.f32 %v10354, %v11355
    %v11472 = vadd.f32 %v10357, %v11358
    %v11473 = vadd.f32 %v10362, %v11363
    %v11474 = vadd.f32 %v10365, %v11366
    %v11475 = vadd.f32 %v10370, %v11371
    %v11476 = vadd.f32 %v10373, %v11374
    %v11477 = vadd.f32 %v10378, %v11379
    %v11478 = vadd.f32 %v10381, %v11382
    %v11479 = vadd.f32 %v10386, %v11387
    %v11480 = vadd.f32 %v10389, %v11390
    %v11481 = vadd.f32 %v10394, %v11395
    %v11482 = vadd.f32 %v10397, %v11398
    %v11483 = vadd.f32 %v10402, %v11403
    %v11484 = vadd.f32 %v10405, %v11406
    %v11485 = vadd.f32 %v10410, %v11411
    %v11486 = vadd.f32 %v10413, %v11414
    %v11487 = vadd.f32 %v10418, %v11419
    %v11488 = vadd.f32 %v10421, %v11422
    %v11489 = vld [vmem:[%s14] sm:$0x1]
    %v11491 = vlaneseq
    %v11492 = vshrl.u32 %v11491, 7
    %v11493 = vsub.s32 0, %v11492
    %v11494 = vrot.slane %v11489, %v11493
    %v11496 = vadd.f32 %v11425, %v11494
    %v11497 = vadd.f32 %v11426, %v11494
    %v11498 = vadd.f32 %v11427, %v11494
    %v11499 = vadd.f32 %v11428, %v11494
    %v11500 = vadd.f32 %v11429, %v11494
    %v11501 = vadd.f32 %v11430, %v11494
    %v11502 = vadd.f32 %v11431, %v11494
    %v11503 = vadd.f32 %v11432, %v11494
    %v11504 = vadd.f32 %v11433, %v11494
    %v11505 = vadd.f32 %v11434, %v11494
    %v11506 = vadd.f32 %v11435, %v11494
    %v11507 = vadd.f32 %v11436, %v11494
    %v11508 = vadd.f32 %v11437, %v11494
    %v11509 = vadd.f32 %v11438, %v11494
    %v11510 = vadd.f32 %v11439, %v11494
    %v11511 = vadd.f32 %v11440, %v11494
    %v11512 = vadd.f32 %v11441, %v11494
    %v11513 = vadd.f32 %v11442, %v11494
    %v11514 = vadd.f32 %v11443, %v11494
    %v11515 = vadd.f32 %v11444, %v11494
    %v11516 = vadd.f32 %v11445, %v11494
    %v11517 = vadd.f32 %v11446, %v11494
    %v11518 = vadd.f32 %v11447, %v11494
    %v11519 = vadd.f32 %v11448, %v11494
    %v11520 = vadd.f32 %v11449, %v11494
    %v11521 = vadd.f32 %v11450, %v11494
    %v11522 = vadd.f32 %v11451, %v11494
    %v11523 = vadd.f32 %v11452, %v11494
    %v11524 = vadd.f32 %v11453, %v11494
    %v11525 = vadd.f32 %v11454, %v11494
    %v11526 = vadd.f32 %v11455, %v11494
    %v11527 = vadd.f32 %v11456, %v11494
    %v11528 = vadd.f32 %v11457, %v11494
    %v11529 = vadd.f32 %v11458, %v11494
    %v11530 = vadd.f32 %v11459, %v11494
    %v11531 = vadd.f32 %v11460, %v11494
    %v11532 = vadd.f32 %v11461, %v11494
    %v11533 = vadd.f32 %v11462, %v11494
    %v11534 = vadd.f32 %v11463, %v11494
    %v11535 = vadd.f32 %v11464, %v11494
    %v11536 = vadd.f32 %v11465, %v11494
    %v11537 = vadd.f32 %v11466, %v11494
    %v11538 = vadd.f32 %v11467, %v11494
    %v11539 = vadd.f32 %v11468, %v11494
    %v11540 = vadd.f32 %v11469, %v11494
    %v11541 = vadd.f32 %v11470, %v11494
    %v11542 = vadd.f32 %v11471, %v11494
    %v11543 = vadd.f32 %v11472, %v11494
    %v11544 = vadd.f32 %v11473, %v11494
    %v11545 = vadd.f32 %v11474, %v11494
    %v11546 = vadd.f32 %v11475, %v11494
    %v11547 = vadd.f32 %v11476, %v11494
    %v11548 = vadd.f32 %v11477, %v11494
    %v11549 = vadd.f32 %v11478, %v11494
    %v11550 = vadd.f32 %v11479, %v11494
    %v11551 = vadd.f32 %v11480, %v11494
    %v11552 = vadd.f32 %v11481, %v11494
    %v11553 = vadd.f32 %v11482, %v11494
    %v11554 = vadd.f32 %v11483, %v11494
    %v11555 = vadd.f32 %v11484, %v11494
    %v11556 = vadd.f32 %v11485, %v11494
    %v11557 = vadd.f32 %v11486, %v11494
    %v11558 = vadd.f32 %v11487, %v11494
    %v11559 = vadd.f32 %v11488, %v11494
    %v11560 = vtanh.pop %v11496
    %v11561 = vtanh.pop %v11497
    %v11562 = vtanh.pop %v11498
    %v11563 = vtanh.pop %v11499
    %v11564 = vtanh.pop %v11500
    %v11565 = vtanh.pop %v11501
    %v11566 = vtanh.pop %v11502
    %v11567 = vtanh.pop %v11503
    %v11568 = vtanh.pop %v11504
    %v11569 = vtanh.pop %v11505
    %v11570 = vtanh.pop %v11506
    %v11571 = vtanh.pop %v11507
    %v11572 = vtanh.pop %v11508
    %v11573 = vtanh.pop %v11509
    %v11574 = vtanh.pop %v11510
    %v11575 = vtanh.pop %v11511
    %v11576 = vtanh.pop %v11512
    %v11577 = vtanh.pop %v11513
    %v11578 = vtanh.pop %v11514
    %v11579 = vtanh.pop %v11515
    %v11580 = vtanh.pop %v11516
    %v11581 = vtanh.pop %v11517
    %v11582 = vtanh.pop %v11518
    %v11583 = vtanh.pop %v11519
    %v11584 = vtanh.pop %v11520
    %v11585 = vtanh.pop %v11521
    %v11586 = vtanh.pop %v11522
    %v11587 = vtanh.pop %v11523
    %v11588 = vtanh.pop %v11524
    %v11589 = vtanh.pop %v11525
    %v11590 = vtanh.pop %v11526
    %v11591 = vtanh.pop %v11527
    %v11592 = vtanh.pop %v11528
    %v11593 = vtanh.pop %v11529
    %v11594 = vtanh.pop %v11530
    %v11595 = vtanh.pop %v11531
    %v11596 = vtanh.pop %v11532
    %v11597 = vtanh.pop %v11533
    %v11598 = vtanh.pop %v11534
    %v11599 = vtanh.pop %v11535
    %v11600 = vtanh.pop %v11536
    %v11601 = vtanh.pop %v11537
    %v11602 = vtanh.pop %v11538
    %v11603 = vtanh.pop %v11539
    %v11604 = vtanh.pop %v11540
    %v11605 = vtanh.pop %v11541
    %v11606 = vtanh.pop %v11542
    %v11607 = vtanh.pop %v11543
    %v11608 = vtanh.pop %v11544
    %v11609 = vtanh.pop %v11545
    %v11610 = vtanh.pop %v11546
    %v11611 = vtanh.pop %v11547
    %v11612 = vtanh.pop %v11548
    %v11613 = vtanh.pop %v11549
    %v11614 = vtanh.pop %v11550
    %v11615 = vtanh.pop %v11551
    %v11616 = vtanh.pop %v11552
    %v11617 = vtanh.pop %v11553
    %v11618 = vtanh.pop %v11554
    %v11619 = vtanh.pop %v11555
    %v11620 = vtanh.pop %v11556
    %v11621 = vtanh.pop %v11557
    %v11622 = vtanh.pop %v11558
    %v11623 = vtanh.pop %v11559
    %v11624 = vadd.f32 %v11560, %v11561
    %v11625 = vadd.f32 %v11624, %v11562
    %v11626 = vadd.f32 %v11625, %v11563
    %v11627 = vadd.f32 %v11626, %v11564
    %v11628 = vadd.f32 %v11627, %v11565
    %v11629 = vadd.f32 %v11628, %v11566
    %v11630 = vadd.f32 %v11629, %v11567
    %v11631 = vadd.f32 %v11630, %v11568
    %v11632 = vadd.f32 %v11631, %v11569
    %v11633 = vadd.f32 %v11632, %v11570
    %v11634 = vadd.f32 %v11633, %v11571
    %v11635 = vadd.f32 %v11634, %v11572
    %v11636 = vadd.f32 %v11635, %v11573
    %v11637 = vadd.f32 %v11636, %v11574
    %v11638 = vadd.f32 %v11637, %v11575
    %v11639 = vadd.f32 %v11638, %v11576
    %v11640 = vadd.f32 %v11639, %v11577
    %v11641 = vadd.f32 %v11640, %v11578
    %v11642 = vadd.f32 %v11641, %v11579
    %v11643 = vadd.f32 %v11642, %v11580
    %v11644 = vadd.f32 %v11643, %v11581
    %v11645 = vadd.f32 %v11644, %v11582
    %v11646 = vadd.f32 %v11645, %v11583
    %v11647 = vadd.f32 %v11646, %v11584
    %v11648 = vadd.f32 %v11647, %v11585
    %v11649 = vadd.f32 %v11648, %v11586
    %v11650 = vadd.f32 %v11649, %v11587
    %v11651 = vadd.f32 %v11650, %v11588
    %v11652 = vadd.f32 %v11651, %v11589
    %v11653 = vadd.f32 %v11652, %v11590
    %v11654 = vadd.f32 %v11653, %v11591
    %v11655 = vadd.f32 %v11654, %v11592
    %v11656 = vadd.f32 %v11655, %v11593
    %v11657 = vadd.f32 %v11656, %v11594
    %v11658 = vadd.f32 %v11657, %v11595
    %v11659 = vadd.f32 %v11658, %v11596
    %v11660 = vadd.f32 %v11659, %v11597
    %v11661 = vadd.f32 %v11660, %v11598
    %v11662 = vadd.f32 %v11661, %v11599
    %v11663 = vadd.f32 %v11662, %v11600
    %v11664 = vadd.f32 %v11663, %v11601
    %v11665 = vadd.f32 %v11664, %v11602
    %v11666 = vadd.f32 %v11665, %v11603
    %v11667 = vadd.f32 %v11666, %v11604
    %v11668 = vadd.f32 %v11667, %v11605
    %v11669 = vadd.f32 %v11668, %v11606
    %v11670 = vadd.f32 %v11669, %v11607
    %v11671 = vadd.f32 %v11670, %v11608
    %v11672 = vadd.f32 %v11671, %v11609
    %v11673 = vadd.f32 %v11672, %v11610
    %v11674 = vadd.f32 %v11673, %v11611
    %v11675 = vadd.f32 %v11674, %v11612
    %v11676 = vadd.f32 %v11675, %v11613
    %v11677 = vadd.f32 %v11676, %v11614
    %v11678 = vadd.f32 %v11677, %v11615
    %v11679 = vadd.f32 %v11678, %v11616
    %v11680 = vadd.f32 %v11679, %v11617
    %v11681 = vadd.f32 %v11680, %v11618
    %v11682 = vadd.f32 %v11681, %v11619
    %v11683 = vadd.f32 %v11682, %v11620
    %v11684 = vadd.f32 %v11683, %v11621
    %v11685 = vadd.f32 %v11684, %v11622
    %v11686 = vadd.f32 %v11685, %v11623
    %v11687 = vrot.slane %v11686, 4
    %v11688 = vadd.f32 %v11686, %v11687
    %v11689 = vrot.slane %v11688, 2
    %v11690 = vadd.f32 %v11688, %v11689
    %v11691 = vrot.slane %v11690, 1
    %v11692 = vadd.f32 %v11690, %v11691
    %v11693 = vmul.f32 %v11560, %v11560
    %v11694 = vmul.f32 %v11561, %v11561
    %v11695 = vmul.f32 %v11562, %v11562
    %v11696 = vmul.f32 %v11563, %v11563
    %v11697 = vmul.f32 %v11564, %v11564
    %v11698 = vmul.f32 %v11565, %v11565
    %v11699 = vmul.f32 %v11566, %v11566
    %v11700 = vmul.f32 %v11567, %v11567
    %v11701 = vmul.f32 %v11568, %v11568
    %v11702 = vmul.f32 %v11569, %v11569
    %v11703 = vmul.f32 %v11570, %v11570
    %v11704 = vmul.f32 %v11571, %v11571
    %v11705 = vmul.f32 %v11572, %v11572
    %v11706 = vmul.f32 %v11573, %v11573
    %v11707 = vmul.f32 %v11574, %v11574
    %v11708 = vmul.f32 %v11575, %v11575
    %v11709 = vmul.f32 %v11576, %v11576
    %v11710 = vmul.f32 %v11577, %v11577
    %v11711 = vmul.f32 %v11578, %v11578
    %v11712 = vmul.f32 %v11579, %v11579
    %v11713 = vmul.f32 %v11580, %v11580
    %v11714 = vmul.f32 %v11581, %v11581
    %v11715 = vmul.f32 %v11582, %v11582
    %v11716 = vmul.f32 %v11583, %v11583
    %v11717 = vmul.f32 %v11584, %v11584
    %v11718 = vmul.f32 %v11585, %v11585
    %v11719 = vmul.f32 %v11586, %v11586
    %v11720 = vmul.f32 %v11587, %v11587
    %v11721 = vmul.f32 %v11588, %v11588
    %v11722 = vmul.f32 %v11589, %v11589
    %v11723 = vmul.f32 %v11590, %v11590
    %v11724 = vmul.f32 %v11591, %v11591
    %v11725 = vmul.f32 %v11592, %v11592
    %v11726 = vmul.f32 %v11593, %v11593
    %v11727 = vmul.f32 %v11594, %v11594
    %v11728 = vmul.f32 %v11595, %v11595
    %v11729 = vmul.f32 %v11596, %v11596
    %v11730 = vmul.f32 %v11597, %v11597
    %v11731 = vmul.f32 %v11598, %v11598
    %v11732 = vmul.f32 %v11599, %v11599
    %v11733 = vmul.f32 %v11600, %v11600
    %v11734 = vmul.f32 %v11601, %v11601
    %v11735 = vmul.f32 %v11602, %v11602
    %v11736 = vmul.f32 %v11603, %v11603
    %v11737 = vmul.f32 %v11604, %v11604
    %v11738 = vmul.f32 %v11605, %v11605
    %v11739 = vmul.f32 %v11606, %v11606
    %v11740 = vmul.f32 %v11607, %v11607
    %v11741 = vmul.f32 %v11608, %v11608
    %v11742 = vmul.f32 %v11609, %v11609
    %v11743 = vmul.f32 %v11610, %v11610
    %v11744 = vmul.f32 %v11611, %v11611
    %v11745 = vmul.f32 %v11612, %v11612
    %v11746 = vmul.f32 %v11613, %v11613
    %v11747 = vmul.f32 %v11614, %v11614
    %v11748 = vmul.f32 %v11615, %v11615
    %v11749 = vmul.f32 %v11616, %v11616
    %v11750 = vmul.f32 %v11617, %v11617
    %v11751 = vmul.f32 %v11618, %v11618
    %v11752 = vmul.f32 %v11619, %v11619
    %v11753 = vmul.f32 %v11620, %v11620
    %v11754 = vmul.f32 %v11621, %v11621
    %v11755 = vmul.f32 %v11622, %v11622
    %v11756 = vmul.f32 %v11623, %v11623
    %v11757 = vadd.f32 %v11693, %v11694
    %v11758 = vadd.f32 %v11757, %v11695
    %v11759 = vadd.f32 %v11758, %v11696
    %v11760 = vadd.f32 %v11759, %v11697
    %v11761 = vadd.f32 %v11760, %v11698
    %v11762 = vadd.f32 %v11761, %v11699
    %v11763 = vadd.f32 %v11762, %v11700
    %v11764 = vadd.f32 %v11763, %v11701
    %v11765 = vadd.f32 %v11764, %v11702
    %v11766 = vadd.f32 %v11765, %v11703
    %v11767 = vadd.f32 %v11766, %v11704
    %v11768 = vadd.f32 %v11767, %v11705
    %v11769 = vadd.f32 %v11768, %v11706
    %v11770 = vadd.f32 %v11769, %v11707
    %v11771 = vadd.f32 %v11770, %v11708
    %v11772 = vadd.f32 %v11771, %v11709
    %v11773 = vadd.f32 %v11772, %v11710
    %v11774 = vadd.f32 %v11773, %v11711
    %v11775 = vadd.f32 %v11774, %v11712
    %v11776 = vadd.f32 %v11775, %v11713
    %v11777 = vadd.f32 %v11776, %v11714
    %v11778 = vadd.f32 %v11777, %v11715
    %v11779 = vadd.f32 %v11778, %v11716
    %v11780 = vadd.f32 %v11779, %v11717
    %v11781 = vadd.f32 %v11780, %v11718
    %v11782 = vadd.f32 %v11781, %v11719
    %v11783 = vadd.f32 %v11782, %v11720
    %v11784 = vadd.f32 %v11783, %v11721
    %v11785 = vadd.f32 %v11784, %v11722
    %v11786 = vadd.f32 %v11785, %v11723
    %v11787 = vadd.f32 %v11786, %v11724
    %v11788 = vadd.f32 %v11787, %v11725
    %v11789 = vadd.f32 %v11788, %v11726
    %v11790 = vadd.f32 %v11789, %v11727
    %v11791 = vadd.f32 %v11790, %v11728
    %v11792 = vadd.f32 %v11791, %v11729
    %v11793 = vadd.f32 %v11792, %v11730
    %v11794 = vadd.f32 %v11793, %v11731
    %v11795 = vadd.f32 %v11794, %v11732
    %v11796 = vadd.f32 %v11795, %v11733
    %v11797 = vadd.f32 %v11796, %v11734
    %v11798 = vadd.f32 %v11797, %v11735
    %v11799 = vadd.f32 %v11798, %v11736
    %v11800 = vadd.f32 %v11799, %v11737
    %v11801 = vadd.f32 %v11800, %v11738
    %v11802 = vadd.f32 %v11801, %v11739
    %v11803 = vadd.f32 %v11802, %v11740
    %v11804 = vadd.f32 %v11803, %v11741
    %v11805 = vadd.f32 %v11804, %v11742
    %v11806 = vadd.f32 %v11805, %v11743
    %v11807 = vadd.f32 %v11806, %v11744
    %v11808 = vadd.f32 %v11807, %v11745
    %v11809 = vadd.f32 %v11808, %v11746
    %v11810 = vadd.f32 %v11809, %v11747
    %v11811 = vadd.f32 %v11810, %v11748
    %v11812 = vadd.f32 %v11811, %v11749
    %v11813 = vadd.f32 %v11812, %v11750
    %v11814 = vadd.f32 %v11813, %v11751
    %v11815 = vadd.f32 %v11814, %v11752
    %v11816 = vadd.f32 %v11815, %v11753
    %v11817 = vadd.f32 %v11816, %v11754
    %v11818 = vadd.f32 %v11817, %v11755
    %v11819 = vadd.f32 %v11818, %v11756
    %v11820 = vrot.slane %v11819, 4
    %v11821 = vadd.f32 %v11819, %v11820
    %v11822 = vrot.slane %v11821, 2
    %v11823 = vadd.f32 %v11821, %v11822
    %v11824 = vrot.slane %v11823, 1
    %v11825 = vadd.f32 %v11823, %v11824
    %v11826 = vmul.f32 %v11692, 0.001953125
    %v11827 = vmul.f32 %v11825, 0.001953125
    %v11828 = vmul.f32 %v11826, %v11826
    %v11829 = vsub.f32 %v11827, %v11828
    %v11830 = vmax.f32 %v11829, 0.0
    %v11831 = vsub.f32 %v11560, %v11826
    %v11832 = vsub.f32 %v11561, %v11826
    %v11833 = vsub.f32 %v11562, %v11826
    %v11834 = vsub.f32 %v11563, %v11826
    %v11835 = vsub.f32 %v11564, %v11826
    %v11836 = vsub.f32 %v11565, %v11826
    %v11837 = vsub.f32 %v11566, %v11826
    %v11838 = vsub.f32 %v11567, %v11826
    %v11839 = vsub.f32 %v11568, %v11826
    %v11840 = vsub.f32 %v11569, %v11826
    %v11841 = vsub.f32 %v11570, %v11826
    %v11842 = vsub.f32 %v11571, %v11826
    %v11843 = vsub.f32 %v11572, %v11826
    %v11844 = vsub.f32 %v11573, %v11826
    %v11845 = vsub.f32 %v11574, %v11826
    %v11846 = vsub.f32 %v11575, %v11826
    %v11847 = vsub.f32 %v11576, %v11826
    %v11848 = vsub.f32 %v11577, %v11826
    %v11849 = vsub.f32 %v11578, %v11826
    %v11850 = vsub.f32 %v11579, %v11826
    %v11851 = vsub.f32 %v11580, %v11826
    %v11852 = vsub.f32 %v11581, %v11826
    %v11853 = vsub.f32 %v11582, %v11826
    %v11854 = vsub.f32 %v11583, %v11826
    %v11855 = vsub.f32 %v11584, %v11826
    %v11856 = vsub.f32 %v11585, %v11826
    %v11857 = vsub.f32 %v11586, %v11826
    %v11858 = vsub.f32 %v11587, %v11826
    %v11859 = vsub.f32 %v11588, %v11826
    %v11860 = vsub.f32 %v11589, %v11826
    %v11861 = vsub.f32 %v11590, %v11826
    %v11862 = vsub.f32 %v11591, %v11826
    %v11863 = vsub.f32 %v11592, %v11826
    %v11864 = vsub.f32 %v11593, %v11826
    %v11865 = vsub.f32 %v11594, %v11826
    %v11866 = vsub.f32 %v11595, %v11826
    %v11867 = vsub.f32 %v11596, %v11826
    %v11868 = vsub.f32 %v11597, %v11826
    %v11869 = vsub.f32 %v11598, %v11826
    %v11870 = vsub.f32 %v11599, %v11826
    %v11871 = vsub.f32 %v11600, %v11826
    %v11872 = vsub.f32 %v11601, %v11826
    %v11873 = vsub.f32 %v11602, %v11826
    %v11874 = vsub.f32 %v11603, %v11826
    %v11875 = vsub.f32 %v11604, %v11826
    %v11876 = vsub.f32 %v11605, %v11826
    %v11877 = vsub.f32 %v11606, %v11826
    %v11878 = vsub.f32 %v11607, %v11826
    %v11879 = vsub.f32 %v11608, %v11826
    %v11880 = vsub.f32 %v11609, %v11826
    %v11881 = vsub.f32 %v11610, %v11826
    %v11882 = vsub.f32 %v11611, %v11826
    %v11883 = vsub.f32 %v11612, %v11826
    %v11884 = vsub.f32 %v11613, %v11826
    %v11885 = vsub.f32 %v11614, %v11826
    %v11886 = vsub.f32 %v11615, %v11826
    %v11887 = vsub.f32 %v11616, %v11826
    %v11888 = vsub.f32 %v11617, %v11826
    %v11889 = vsub.f32 %v11618, %v11826
    %v11890 = vsub.f32 %v11619, %v11826
    %v11891 = vsub.f32 %v11620, %v11826
    %v11892 = vsub.f32 %v11621, %v11826
    %v11893 = vsub.f32 %v11622, %v11826
    %v11894 = vsub.f32 %v11623, %v11826
    %v11895 = vadd.f32 %v11830, 1e-05
    %v11896 = vrsqrt.pop %v11895
    %v11897 = vmul.f32 %v11831, %v11896
    %v11898 = vmul.f32 %v11832, %v11896
    %v11899 = vmul.f32 %v11833, %v11896
    %v11900 = vmul.f32 %v11834, %v11896
    %v11901 = vmul.f32 %v11835, %v11896
    %v11902 = vmul.f32 %v11836, %v11896
    %v11903 = vmul.f32 %v11837, %v11896
    %v11904 = vmul.f32 %v11838, %v11896
    %v11905 = vmul.f32 %v11839, %v11896
    %v11906 = vmul.f32 %v11840, %v11896
    %v11907 = vmul.f32 %v11841, %v11896
    %v11908 = vmul.f32 %v11842, %v11896
    %v11909 = vmul.f32 %v11843, %v11896
    %v11910 = vmul.f32 %v11844, %v11896
    %v11911 = vmul.f32 %v11845, %v11896
    %v11912 = vmul.f32 %v11846, %v11896
    %v11913 = vmul.f32 %v11847, %v11896
    %v11914 = vmul.f32 %v11848, %v11896
    %v11915 = vmul.f32 %v11849, %v11896
    %v11916 = vmul.f32 %v11850, %v11896
    %v11917 = vmul.f32 %v11851, %v11896
    %v11918 = vmul.f32 %v11852, %v11896
    %v11919 = vmul.f32 %v11853, %v11896
    %v11920 = vmul.f32 %v11854, %v11896
    %v11921 = vmul.f32 %v11855, %v11896
    %v11922 = vmul.f32 %v11856, %v11896
    %v11923 = vmul.f32 %v11857, %v11896
    %v11924 = vmul.f32 %v11858, %v11896
    %v11925 = vmul.f32 %v11859, %v11896
    %v11926 = vmul.f32 %v11860, %v11896
    %v11927 = vmul.f32 %v11861, %v11896
    %v11928 = vmul.f32 %v11862, %v11896
    %v11929 = vmul.f32 %v11863, %v11896
    %v11930 = vmul.f32 %v11864, %v11896
    %v11931 = vmul.f32 %v11865, %v11896
    %v11932 = vmul.f32 %v11866, %v11896
    %v11933 = vmul.f32 %v11867, %v11896
    %v11934 = vmul.f32 %v11868, %v11896
    %v11935 = vmul.f32 %v11869, %v11896
    %v11936 = vmul.f32 %v11870, %v11896
    %v11937 = vmul.f32 %v11871, %v11896
    %v11938 = vmul.f32 %v11872, %v11896
    %v11939 = vmul.f32 %v11873, %v11896
    %v11940 = vmul.f32 %v11874, %v11896
    %v11941 = vmul.f32 %v11875, %v11896
    %v11942 = vmul.f32 %v11876, %v11896
    %v11943 = vmul.f32 %v11877, %v11896
    %v11944 = vmul.f32 %v11878, %v11896
    %v11945 = vmul.f32 %v11879, %v11896
    %v11946 = vmul.f32 %v11880, %v11896
    %v11947 = vmul.f32 %v11881, %v11896
    %v11948 = vmul.f32 %v11882, %v11896
    %v11949 = vmul.f32 %v11883, %v11896
    %v11950 = vmul.f32 %v11884, %v11896
    %v11951 = vmul.f32 %v11885, %v11896
    %v11952 = vmul.f32 %v11886, %v11896
    %v11953 = vmul.f32 %v11887, %v11896
    %v11954 = vmul.f32 %v11888, %v11896
    %v11955 = vmul.f32 %v11889, %v11896
    %v11956 = vmul.f32 %v11890, %v11896
    %v11957 = vmul.f32 %v11891, %v11896
    %v11958 = vmul.f32 %v11892, %v11896
    %v11959 = vmul.f32 %v11893, %v11896
    %v11960 = vmul.f32 %v11894, %v11896
    %11961 = vst [vmem:[%s15] sm:$0xff] %v11897
    %11962 = vst [vmem:[%s15 + $0x8] sm:$0xff] %v11898
    %11963 = vst [vmem:[%s15 + $0x10] sm:$0xff] %v11899
    %11964 = vst [vmem:[%s15 + $0x18] sm:$0xff] %v11900
    %11965 = vst [vmem:[%s15 + $0x20] sm:$0xff] %v11901
    %11966 = vst [vmem:[%s15 + $0x28] sm:$0xff] %v11902
    %11967 = vst [vmem:[%s15 + $0x30] sm:$0xff] %v11903
    %11968 = vst [vmem:[%s15 + $0x38] sm:$0xff] %v11904
    %11969 = vst [vmem:[%s15 + $0x40] sm:$0xff] %v11905
    %11970 = vst [vmem:[%s15 + $0x48] sm:$0xff] %v11906
    %11971 = vst [vmem:[%s15 + $0x50] sm:$0xff] %v11907
    %11972 = vst [vmem:[%s15 + $0x58] sm:$0xff] %v11908
    %11973 = vst [vmem:[%s15 + $0x60] sm:$0xff] %v11909
    %11974 = vst [vmem:[%s15 + $0x68] sm:$0xff] %v11910
    %11975 = vst [vmem:[%s15 + $0x70] sm:$0xff] %v11911
    %11976 = vst [vmem:[%s15 + $0x78] sm:$0xff] %v11912
    %11977 = vst [vmem:[%s15 + $0x80] sm:$0xff] %v11913
    %11978 = vst [vmem:[%s15 + $0x88] sm:$0xff] %v11914
    %11979 = vst [vmem:[%s15 + $0x90] sm:$0xff] %v11915
    %11980 = vst [vmem:[%s15 + $0x98] sm:$0xff] %v11916
    %11981 = vst [vmem:[%s15 + $0xa0] sm:$0xff] %v11917
    %11982 = vst [vmem:[%s15 + $0xa8] sm:$0xff] %v11918
    %11983 = vst [vmem:[%s15 + $0xb0] sm:$0xff] %v11919
    %11984 = vst [vmem:[%s15 + $0xb8] sm:$0xff] %v11920
    %11985 = vst [vmem:[%s15 + $0xc0] sm:$0xff] %v11921
    %11986 = vst [vmem:[%s15 + $0xc8] sm:$0xff] %v11922
    %11987 = vst [vmem:[%s15 + $0xd0] sm:$0xff] %v11923
    %11988 = vst [vmem:[%s15 + $0xd8] sm:$0xff] %v11924
    %11989 = vst [vmem:[%s15 + $0xe0] sm:$0xff] %v11925
    %11990 = vst [vmem:[%s15 + $0xe8] sm:$0xff] %v11926
    %11991 = vst [vmem:[%s15 + $0xf0] sm:$0xff] %v11927
    %11992 = vst [vmem:[%s15 + $0xf8] sm:$0xff] %v11928
    %11993 = vst [vmem:[%s15 + $0x100] sm:$0xff] %v11929
    %11994 = vst [vmem:[%s15 + $0x108] sm:$0xff] %v11930
    %11995 = vst [vmem:[%s15 + $0x110] sm:$0xff] %v11931
    %11996 = vst [vmem:[%s15 + $0x118] sm:$0xff] %v11932
    %11997 = vst [vmem:[%s15 + $0x120] sm:$0xff] %v11933
    %11998 = vst [vmem:[%s15 + $0x128] sm:$0xff] %v11934
    %11999 = vst [vmem:[%s15 + $0x130] sm:$0xff] %v11935
    %12000 = vst [vmem:[%s15 + $0x138] sm:$0xff] %v11936
    %12001 = vst [vmem:[%s15 + $0x140] sm:$0xff] %v11937
    %12002 = vst [vmem:[%s15 + $0x148] sm:$0xff] %v11938
    %12003 = vst [vmem:[%s15 + $0x150] sm:$0xff] %v11939
    %12004 = vst [vmem:[%s15 + $0x158] sm:$0xff] %v11940
    %12005 = vst [vmem:[%s15 + $0x160] sm:$0xff] %v11941
    %12006 = vst [vmem:[%s15 + $0x168] sm:$0xff] %v11942
    %12007 = vst [vmem:[%s15 + $0x170] sm:$0xff] %v11943
    %12008 = vst [vmem:[%s15 + $0x178] sm:$0xff] %v11944
    %12009 = vst [vmem:[%s15 + $0x180] sm:$0xff] %v11945
    %12010 = vst [vmem:[%s15 + $0x188] sm:$0xff] %v11946
    %12011 = vst [vmem:[%s15 + $0x190] sm:$0xff] %v11947
    %12012 = vst [vmem:[%s15 + $0x198] sm:$0xff] %v11948
    %12013 = vst [vmem:[%s15 + $0x1a0] sm:$0xff] %v11949
    %12014 = vst [vmem:[%s15 + $0x1a8] sm:$0xff] %v11950
    %12015 = vst [vmem:[%s15 + $0x1b0] sm:$0xff] %v11951
    %12016 = vst [vmem:[%s15 + $0x1b8] sm:$0xff] %v11952
    %12017 = vst [vmem:[%s15 + $0x1c0] sm:$0xff] %v11953
    %12018 = vst [vmem:[%s15 + $0x1c8] sm:$0xff] %v11954
    %12019 = vst [vmem:[%s15 + $0x1d0] sm:$0xff] %v11955
    %12020 = vst [vmem:[%s15 + $0x1d8] sm:$0xff] %v11956
    %12021 = vst [vmem:[%s15 + $0x1e0] sm:$0xff] %v11957
    %12022 = vst [vmem:[%s15 + $0x1e8] sm:$0xff] %v11958
    %12023 = vst [vmem:[%s15 + $0x1f0] sm:$0xff] %v11959
    %12024 = vst [vmem:[%s15 + $0x1f8] sm:$0xff] %v11960
    // Predicated region
    $region78: #{generator_forward.1} parent=1 // pred_check
      _
    $region79: #{generator_forward.1} parent=1 // pred_check_branch
      %12026 = sbr.rel (0) target = $region81
    $region80: #{generator_forward.1} parent=1 // pred_region
      _
    $region81: #{generator_forward.1} parent=1 // pred_fallthru
      _
    // Predicated region
    $region82: #{generator_forward.1} parent=1 // pred_check
      _
    $region83: #{generator_forward.1} parent=1 // pred_check_branch
      %12028 = sbr.rel (0) target = $region85
    $region84: #{generator_forward.1} parent=1 // pred_region
      _
    $region85: #{generator_forward.1} parent=1 // pred_fallthru
      _
    %12029 = vsyncpa [#allocation3], 1
    %12030 = vsyncpa [#allocation5], 1
    %12031 = vsyncpa [#allocation8], 1

</llo_original>
